<compile_context>
chip_gen: v5e
topology: v5e:2x2
jax: 0.10.0
libtpu: 0.0.40
codegen_flags: <defaults>
</compile_context>

<pallas_src>
import functools

import jax
import jax.numpy as jnp
import numpy as np
from jax.experimental import pallas as pl
from jax.experimental.pallas import tpu as pltpu

_MAX_ROW_TILE = 1024  # rows per grid step (multiple of 8)


def _cdiv(a, b):
    return (a + b - 1) // b


def _round_up(x, m):
    return _cdiv(x, m) * m


def _tiling(rows, max_tile=_MAX_ROW_TILE):
    """Balanced row tiling: tile multiple of 8, grid >= 2 when rows allow (v7x)."""
    min_tiles = 2 if rows >= 16 else 1
    n_tiles = max(min_tiles, _cdiv(rows, max_tile))
    tile = _round_up(_cdiv(rows, n_tiles), 8)
    n_tiles = max(min_tiles, _cdiv(rows, tile))
    return tile, n_tiles


def _pad_rows(x, rows_p):
    pad = rows_p - x.shape[0]
    if pad:
        x = jnp.pad(x, ((0, pad),) + ((0, 0),) * (x.ndim - 1))
    return x


def _elu_f32(x):
    return jnp.where(x > 0.0, x, jnp.exp(jnp.minimum(x, 0.0)) - 1.0)


def _softplus_f32(x):  # torch Softplus(beta=1, threshold=20)
    return jnp.where(x > 20.0, x, jnp.log(1.0 + jnp.exp(jnp.minimum(x, 20.0))))


# ----------------------------------------------------------------------------
# Pallas kernels
# ----------------------------------------------------------------------------
def _layer_kernel(z_ref, bprev_ref, s_ref, watt_ref, batt_ref,
                  wpsi_ref, bpsi_ref, wcat_ref, o_ref, *, pre_act):
    """One decoder layer: (prev bias+ELU) + Attention_Block + channel-concat +
    ConvTranspose2d matmul (BN scale folded).  Output = 10*Cout taps, bf16.

    z   : previous layer's assembled pre-activation (or raw decoder input)
    s   : encoder skip feature tile
    """
    g = z_ref[...].astype(jnp.float32)
    if pre_act:                                   # fused bias + ELU of prev layer
        g = g + bprev_ref[...]
        g = jnp.where(g > 0.0, g, jnp.exp(jnp.minimum(g, 0.0)) - 1.0)
    g16 = g.astype(jnp.bfloat16)
    s = s_ref[...].astype(jnp.float32)

    # Attention: relu([g|s] @ Watt + batt); psi on the VPU (mul + lane reduce)
    gs = jnp.concatenate([g16, s.astype(jnp.bfloat16)], axis=-1)
    r = jnp.dot(gs, watt_ref[...], preferred_element_type=jnp.float32) + batt_ref[...]
    r = jnp.maximum(r, 0.0)
    psi = jnp.sum(r * wpsi_ref[...], axis=-1, keepdims=True) + bpsi_ref[...]
    a = s * jax.nn.sigmoid(psi)                   # attention output (f32)

    # concat([g, a]) @ Wflat  ->  all 10 transposed-conv taps, f32 accumulation
    ga = jnp.concatenate([g16, a.astype(jnp.bfloat16)], axis=-1)
    o_ref[...] = jnp.dot(ga, wcat_ref[...],
                         preferred_element_type=jnp.float32).astype(jnp.bfloat16)


def _head_kernel(z_ref, b5_ref, wh_ref, bh_ref, o_ref):
    """de5 bias + ELU fused with the de6 1x1 conv-transpose + Softplus head.

    z  : (tile, 16, W5) de5 assembled pre-activation, C on sublanes, W on lanes
    out: (tile, W5)     lane-dense final slab (f32)
    """
    z = z_ref[...].astype(jnp.float32) + b5_ref[...]
    z = jnp.where(z > 0.0, z, jnp.exp(jnp.minimum(z, 0.0)) - 1.0)      # ELU
    h = jnp.sum(z * wh_ref[...], axis=1) + bh_ref[...]                  # 16 -> 1
    o_ref[...] = jnp.where(h > 20.0, h,
                           jnp.log(1.0 + jnp.exp(jnp.minimum(h, 20.0))))  # Softplus


# ----------------------------------------------------------------------------
# Transposed-conv tap assembly (pure data movement, XLA glue, no bias/ELU)
# ----------------------------------------------------------------------------
def _deconv_assemble(y, chomp_f):
    """Assemble ConvTranspose2d(k=(2,5), s=(1,2)) taps + chomps (no bias).

    y: (N, T, F, 2, 5, Cout) bf16 taps. Output: (N, T, Wout, Cout) bf16,
    Wout = 2F+1 (freq chomps) or 2F+3 (no freq chomps)."""
    N, T, F, _, _, Cout = y.shape
    y = y.astype(jnp.float32)
    y0 = y[:, :, :, 0]                       # kt = 0
    y1 = y[:, :, :, 1]                       # kt = 1
    # Chomp_T(1): out_t[t] = y0[t] + y1[t-1]
    yt = y0 + jnp.pad(y1[:, :T - 1], ((0, 0), (1, 0), (0, 0), (0, 0), (0, 0)))
    k0, k1, k2, k3, k4 = [yt[:, :, :, kw] for kw in range(5)]
    z = jnp.zeros((N, T, 1, Cout), jnp.float32)
    # even output columns w=2j: k0[j] + k2[j-1] + k4[j-2]
    even = (jnp.concatenate([k0, z, z], axis=2)
            + jnp.concatenate([z, k2, z], axis=2)
            + jnp.concatenate([z, z, k4], axis=2))                  # (N,T,F+2,Cout)
    # odd output columns w=2j+1: k1[j] + k3[j-1]
    odd = (jnp.concatenate([k1, z], axis=2)
           + jnp.concatenate([z, k3], axis=2))                      # (N,T,F+1,Cout)
    if chomp_f:
        # up_Chomp_F(1) + down_Chomp_F(1): keep columns 1..2F+1
        pairs = jnp.stack([odd[:, :, :F], even[:, :, 1:F + 1]], axis=3)
        out = jnp.concatenate([pairs.reshape(N, T, 2 * F, Cout),
                               odd[:, :, F:F + 1]], axis=2)         # width 2F+1
    else:
        pairs = jnp.stack([even[:, :, :F + 1], odd], axis=3)
        out = jnp.concatenate([pairs.reshape(N, T, 2 * (F + 1), Cout),
                               even[:, :, F + 1:F + 2]], axis=2)    # width 2F+3
    return out.astype(jnp.bfloat16)


# ----------------------------------------------------------------------------
# Wrappers
# ----------------------------------------------------------------------------
def decoder_layer(g_nhwc, prev_bias, skip_nhwc, att_p, de_p, chomp_f):
    """One decoder layer.  Returns the assembled PRE-activation (bf16, NHWC);
    the bias + ELU of this layer is applied by the next kernel / head kernel."""
    N, T, W, Cg = g_nhwc.shape
    Cx = skip_nhwc.shape[-1]
    Cint = att_p["watt"].shape[1]
    Cout = de_p["bias"].shape[1]
    Kout = de_p["wflat"].shape[1]                # 10 * Cout
    pre_act = prev_bias is not None
    if prev_bias is None:
        prev_bias = jnp.zeros((1, Cg), jnp.float32)

    rows = N * T * W
    tile, n_tiles = _tiling(rows)
    rows_p = tile * n_tiles
    g2 = _pad_rows(g_nhwc.reshape(rows, Cg), rows_p)
    s2 = _pad_rows(skip_nhwc.reshape(rows, Cx), rows_p)

    watt = att_p["watt"].astype(jnp.bfloat16)
    wcat = de_p["wflat"].astype(jnp.bfloat16)

    rep = lambda r, c: pl.BlockSpec((r, c), lambda i: (0, 0))
    kern = functools.partial(_layer_kernel, pre_act=pre_act)
    taps = pl.pallas_call(
        kern,
        out_shape=jax.ShapeDtypeStruct((rows_p, Kout), jnp.bfloat16),
        grid=(n_tiles,),
        in_specs=[pl.BlockSpec((tile, Cg), lambda i: (i, 0)),
                  rep(1, Cg),
                  pl.BlockSpec((tile, Cx), lambda i: (i, 0)),
                  rep(Cg + Cx, Cint), rep(1, Cint),
                  rep(1, Cint), rep(1, 1),
                  rep(Cg + Cx, Kout)],
        out_specs=pl.BlockSpec((tile, Kout), lambda i: (i, 0)),
        compiler_params=pltpu.CompilerParams(dimension_semantics=("parallel",)),
        cost_estimate=pl.CostEstimate(
            flops=2 * rows_p * (Cg + Cx) * (Cint + Kout),
            transcendentals=2 * rows_p,
            bytes_accessed=rows_p * (2 * Cg + 4 * Cx + 2 * Kout)
            + 2 * (Cg + Cx) * (Cint + Kout)),
    )(g2, prev_bias, s2, watt, att_p["batt"], att_p["wpsi"], att_p["bpsi"], wcat)

    y = taps[:rows].reshape(N, T, W, 2, 5, Cout)
    return _deconv_assemble(y, chomp_f)


def head_block(z5_nhwc, bias5, p6):
    """de5 bias+ELU fused with de6 head.  z5: (N,T,W5,16) bf16 -> (N,T,W5) f32."""
    N, T, W5, C = z5_nhwc.shape
    NT = N * T
    tile, n_tiles = _tiling(NT, max_tile=256)
    NTp = tile * n_tiles
    # channels on sublanes, frequency on lanes -> lane-dense output stores
    z3 = _pad_rows(jnp.transpose(z5_nhwc, (0, 1, 3, 2)).reshape(NT, C, W5), NTp)
    b5 = bias5.reshape(1, C, 1)
    wh = p6["w"].reshape(1, C, 1)
    bh = p6["b"].reshape(1, 1)
    out = pl.pallas_call(
        _head_kernel,
        out_shape=jax.ShapeDtypeStruct((NTp, W5), jnp.float32),
        grid=(n_tiles,),
        in_specs=[pl.BlockSpec((tile, C, W5), lambda i: (i, 0, 0)),
                  pl.BlockSpec((1, C, 1), lambda i: (0, 0, 0)),
                  pl.BlockSpec((1, C, 1), lambda i: (0, 0, 0)),
                  pl.BlockSpec((1, 1), lambda i: (0, 0))],
        out_specs=pl.BlockSpec((tile, W5), lambda i: (i, 0)),
        compiler_params=pltpu.CompilerParams(dimension_semantics=("parallel",)),
    )(z3, b5, wh, bh)
    return out[:NT].reshape(N, T, W5)


def decoder_forward(x, en_list, params):
    """x: (N, 64, T, F) NCHW; en_list: NCHW skips (as in the PyTorch module)."""
    g = jnp.transpose(x, (0, 2, 3, 1))                    # NHWC once at entry
    skips = [jnp.transpose(e, (0, 2, 3, 1)) for e in en_list]

    z = decoder_layer(g, None, skips[-1], params["att1"], params["de1"], True)
    z = decoder_layer(z, params["de1"]["bias"], skips[-2], params["att2"], params["de2"], True)
    z = decoder_layer(z, params["de2"]["bias"], skips[-3], params["att3"], params["de3"], True)
    z = decoder_layer(z, params["de3"]["bias"], skips[-4], params["att4"], params["de4"], True)
    z = decoder_layer(z, params["de4"]["bias"], skips[-5], params["att5"], params["de5"], False)
    out = head_block(z, params["de5"]["bias"], params["de6"])         # (N, T, W)
    return out[:, None, :, :]                                          # NCHW out


# ----------------------------------------------------------------------------
# Deterministic parameter construction (BN folded, eval-mode running stats)
# ----------------------------------------------------------------------------
def _nrm(key, shape, scale=0.08):
    return scale * jax.random.normal(key, shape, jnp.float32)


def _bf16_round(w):  # store bf16-representable values (kernel casts to bf16)
    return w.astype(jnp.bfloat16).astype(jnp.float32)


def _bn_stats(key, c):
    k1, k2, k3, k4 = jax.random.split(key, 4)
    gamma = 1.0 + 0.1 * jax.random.normal(k1, (c,), jnp.float32)
    beta = 0.05 * jax.random.normal(k2, (c,), jnp.float32)
    mean = 0.05 * jax.random.normal(k3, (c,), jnp.float32)
    var = 1.0 + 0.1 * jax.random.uniform(k4, (c,), jnp.float32)
    s = gamma / jnp.sqrt(var + 1e-5)
    return s, beta - mean * s


def make_attention_params(key, Cg, Cx, Cint):
    ks = jax.random.split(key, 9)
    wg, bg = _nrm(ks[0], (Cg, Cint)), _nrm(ks[1], (Cint,), 0.02)
    wx, bx = _nrm(ks[2], (Cx, Cint)), _nrm(ks[3], (Cint,), 0.02)
    wpsi, bpsi = _nrm(ks[4], (Cint, 1)), _nrm(ks[5], (1,), 0.02)
    sg, tg = _bn_stats(ks[6], Cint)
    sx, tx = _bn_stats(ks[7], Cint)
    sp, tp_ = _bn_stats(ks[8], 1)
    watt = jnp.concatenate([wg * sg[None, :], wx * sx[None, :]], axis=0)
    batt = ((bg * sg + tg) + (bx * sx + tx)).reshape(1, Cint)
    return dict(
        watt=_bf16_round(watt),                          # (Cg+Cx, Cint)
        batt=batt,                                       # (1, Cint) f32
        wpsi=(wpsi[:, 0] * sp[0]).reshape(1, Cint),      # (1, Cint) f32, VPU path
        bpsi=(bpsi * sp + tp_).reshape(1, 1),
    )


def make_deconv_params(key, Cin, Cout):
    ks = jax.random.split(key, 3)
    w = _nrm(ks[0], (Cin, Cout, 2, 5))                   # torch ConvTranspose2d weight
    b = _nrm(ks[1], (Cout,), 0.02)
    s, t = _bn_stats(ks[2], Cout)
    # (Cin, Cout, 2, 5) -> (Cin, 2, 5, Cout), fold BN scale, flatten taps.
    wflat = (jnp.transpose(w, (0, 2, 3, 1)) * s).reshape(Cin, 2 * 5 * Cout)
    bias = (b * s + t).reshape(1, Cout)                  # applied in the next kernel
    return dict(wflat=_bf16_round(wflat), bias=bias)


def make_head_params(key, Cin):
    k1, k2 = jax.random.split(key, 2)
    return dict(w=_nrm(k1, (Cin,)), b=_nrm(k2, (1,), 0.02))


def make_decoder_params(key):
    ks = jax.random.split(key, 11)
    return dict(
        att1=make_attention_params(ks[0], 64, 64, 64),
        att2=make_attention_params(ks[1], 64, 64, 64),
        att3=make_attention_params(ks[2], 32, 32, 32),
        att4=make_attention_params(ks[3], 32, 32, 32),
        att5=make_attention_params(ks[4], 16, 16, 16),
        de1=make_deconv_params(ks[5], 128, 64),
        de2=make_deconv_params(ks[6], 128, 32),
        de3=make_deconv_params(ks[7], 64, 32),
        de4=make_deconv_params(ks[8], 64, 16),
        de5=make_deconv_params(ks[9], 32, 16),
        de6=make_head_params(ks[10], 16),
    )


# ----------------------------------------------------------------------------
# Pure-JAX f32 reference (same folded params; scatter-based deconv)
# ----------------------------------------------------------------------------
def _attention_ref(g, s, p):
    gs = jnp.concatenate([g, s], axis=-1)
    r = jnp.maximum(gs @ p["watt"] + p["batt"][0], 0.0)
    psi = jax.nn.sigmoid(jnp.sum(r * p["wpsi"][0], -1, keepdims=True) + p["bpsi"][0, 0])
    return s * psi


def _deconv_scatter_ref(y, chomp_f):
    N, T, F, _, _, Cout = y.shape
    out = jnp.zeros((N, T + 1, 2 * F + 3, Cout), jnp.float32)
    for kt in range(2):
        for kw in range(5):
            out = out.at[:, kt:kt + T, kw:kw + 2 * F:2, :].add(y[:, :, :, kt, kw, :])
    out = out[:, :T]                 # Chomp_T(1)
    if chomp_f:
        out = out[:, :, 1:-1]        # up_Chomp_F(1) + down_Chomp_F(1)
    return out


def _layer_ref(g, s, ap, dp, chomp_f):
    a = _attention_ref(g, s, ap)
    x2 = jnp.concatenate([g, a], axis=-1)
    N, T, W, Cin = x2.shape
    Cout = dp["bias"].shape[1]
    y = (x2.reshape(-1, Cin) @ dp["wflat"]).reshape(N, T, W, 2, 5, Cout)
    z = _deconv_scatter_ref(y, chomp_f) + dp["bias"][0]
    return _elu_f32(z)


def decoder_ref(x, en_list, params):
    g = jnp.transpose(x, (0, 2, 3, 1))
    sk = [jnp.transpose(e, (0, 2, 3, 1)) for e in en_list]
    g = _layer_ref(g, sk[-1], params["att1"], params["de1"], True)
    g = _layer_ref(g, sk[-2], params["att2"], params["de2"], True)
    g = _layer_ref(g, sk[-3], params["att3"], params["de3"], True)
    g = _layer_ref(g, sk[-4], params["att4"], params["de4"], True)
    g = _layer_ref(g, sk[-5], params["att5"], params["de5"], False)
    h = jnp.sum(g * params["de6"]["w"], -1, keepdims=True) + params["de6"]["b"][0]
    h = _softplus_f32(h)
    return jnp.transpose(h, (0, 3, 1, 2))


# ----------------------------------------------------------------------------
if __name__ == "__main__":
    key = jax.random.PRNGKey(0)
    N, T, F = 2, 4, 3
    kx, k1, k2, k3, k4, k5 = jax.random.split(key, 6)

    # Decoder input x and the five skip features (en_list[-1] ... en_list[-5]);
    # spatial widths chain as F -> 2F+1 -> 4F+3 -> 8F+7 -> 16F+15.
    x = 0.5 * jax.random.normal(kx, (N, 64, T, F), jnp.float32)
    en_list = [
        0.5 * jax.random.normal(k5, (N, 16, T, 16 * F + 15), jnp.float32),  # en_list[-5]
        0.5 * jax.random.normal(k4, (N, 32, T, 8 * F + 7), jnp.float32),    # en_list[-4]
        0.5 * jax.random.normal(k3, (N, 32, T, 4 * F + 3), jnp.float32),    # en_list[-3]
        0.5 * jax.random.normal(k2, (N, 64, T, 2 * F + 1), jnp.float32),    # en_list[-2]
        0.5 * jax.random.normal(k1, (N, 64, T, F), jnp.float32),            # en_list[-1]
    ]

    params = make_decoder_params(jax.random.PRNGKey(1))

    fwd = jax.jit(decoder_forward)
    out = jax.block_until_ready(fwd(x, en_list, params))

    expected_w = 2 * (16 * F + 15) + 3  # de5 has no frequency chomps
    assert out.shape == (N, 1, T, expected_w), out.shape
    assert bool(jnp.all(jnp.isfinite(out)))

    ref = jax.block_until_ready(decoder_ref(x, en_list, params))
    # bf16 activations/taps in the kernel path vs f32 reference -> slightly
    # looser tolerance than pure-f32 (weights are pre-rounded to bf16 values).
    np.testing.assert_allclose(np.asarray(out), np.asarray(ref), rtol=3e-2, atol=3e-2)

    print("KERNEL_OK")
</pallas_src>

<mosaic_0001>
module attributes {stable_mosaic.version = 11 : i64} {
  func.func @_layer_kernel(%arg0: i32, %arg1: memref<16x64xf32, #tpu.memory_space<vmem>>, %arg2: memref<1x64xf32, #tpu.memory_space<vmem>>, %arg3: memref<16x64xf32, #tpu.memory_space<vmem>>, %arg4: memref<128x64xbf16, #tpu.memory_space<vmem>>, %arg5: memref<1x64xf32, #tpu.memory_space<vmem>>, %arg6: memref<1x64xf32, #tpu.memory_space<vmem>>, %arg7: memref<1x1xf32, #tpu.memory_space<vmem>>, %arg8: memref<128x640xbf16, #tpu.memory_space<vmem>>, %arg9: memref<16x640xbf16, #tpu.memory_space<vmem>>) attributes {dimension_semantics = [#tpu.dimension_semantics<parallel>], iteration_bounds = array<i64: 2>, scalar_prefetch = 0 : i64, scratch_operands = 0 : i64, tpu.core_type = #tpu.core_type<tc>, window_params = [{transform_indices = @transform_0, window_bounds = array<i64: 16, 64>}, {pipeline_mode = #tpu.pipeline_mode<synchronous>, transform_indices = @transform_1, window_bounds = array<i64: 1, 64>}, {transform_indices = @transform_2, window_bounds = array<i64: 16, 64>}, {pipeline_mode = #tpu.pipeline_mode<synchronous>, transform_indices = @transform_3, window_bounds = array<i64: 128, 64>}, {pipeline_mode = #tpu.pipeline_mode<synchronous>, transform_indices = @transform_4, window_bounds = array<i64: 1, 64>}, {pipeline_mode = #tpu.pipeline_mode<synchronous>, transform_indices = @transform_5, window_bounds = array<i64: 1, 64>}, {pipeline_mode = #tpu.pipeline_mode<synchronous>, transform_indices = @transform_6, window_bounds = array<i64: 1, 1>}, {pipeline_mode = #tpu.pipeline_mode<synchronous>, transform_indices = @transform_7, window_bounds = array<i64: 128, 640>}, {transform_indices = @transform_8, window_bounds = array<i64: 16, 640>}]} {
    %c0 = arith.constant 0 : index
    %c0_0 = arith.constant 0 : index
    %0 = vector.load %arg1[%c0, %c0_0] : memref<16x64xf32, #tpu.memory_space<vmem>>, vector<16x64xf32>
    %1 = arith.truncf %0 : vector<16x64xf32> to vector<16x64xbf16>
    %c0_1 = arith.constant 0 : index
    %c0_2 = arith.constant 0 : index
    %2 = vector.load %arg3[%c0_1, %c0_2] : memref<16x64xf32, #tpu.memory_space<vmem>>, vector<16x64xf32>
    %3 = arith.truncf %2 : vector<16x64xf32> to vector<16x64xbf16>
    %4 = tpu.concatenate %1, %3 in 1 : vector<16x64xbf16>, vector<16x64xbf16> -> vector<16x128xbf16>
    %c0_3 = arith.constant 0 : index
    %c0_4 = arith.constant 0 : index
    %5 = vector.load %arg4[%c0_3, %c0_4] : memref<128x64xbf16, #tpu.memory_space<vmem>>, vector<128x64xbf16>
    %cst = arith.constant dense<0.000000e+00> : vector<16x64xf32>
    %6 = tpu.matmul %4, %5, %cst {dimension_numbers = #tpu.dot_dimension_numbers<[1], [0], [0], [1], [0, 0, 1, 1], [], []>} : vector<16x128xbf16>, vector<128x64xbf16>, vector<16x64xf32> -> vector<16x64xf32>
    %c0_5 = arith.constant 0 : index
    %c0_6 = arith.constant 0 : index
    %7 = vector.load %arg5[%c0_5, %c0_6] : memref<1x64xf32, #tpu.memory_space<vmem>>, vector<1x64xf32>
    %8 = vector.broadcast %7 : vector<1x64xf32> to vector<16x64xf32>
    %9 = arith.addf %6, %8 : vector<16x64xf32>
    %cst_7 = arith.constant 0.000000e+00 : f32
    %10 = vector.broadcast %cst_7 : f32 to vector<16x64xf32>
    %11 = arith.maximumf %9, %10 : vector<16x64xf32>
    %c0_8 = arith.constant 0 : index
    %c0_9 = arith.constant 0 : index
    %12 = vector.load %arg6[%c0_8, %c0_9] : memref<1x64xf32, #tpu.memory_space<vmem>>, vector<1x64xf32>
    %13 = vector.broadcast %12 : vector<1x64xf32> to vector<16x64xf32>
    %14 = arith.mulf %11, %13 : vector<16x64xf32>
    %cst_10 = arith.constant dense<0.000000e+00> : vector<16xf32>
    %15 = vector.multi_reduction <add>, %14, %cst_10 [1] : vector<16x64xf32> to vector<16xf32>
    %16 = vector.shape_cast %15 : vector<16xf32> to vector<16x1xf32>
    %c0_11 = arith.constant 0 : index
    %c0_12 = arith.constant 0 : index
    %17 = vector.load %arg7[%c0_11, %c0_12] : memref<1x1xf32, #tpu.memory_space<vmem>>, vector<1x1xf32>
    %18 = vector.broadcast %17 : vector<1x1xf32> to vector<16x1xf32>
    %19 = arith.addf %16, %18 : vector<16x1xf32>
    %20 = arith.negf %19 : vector<16x1xf32>
    %21 = math.exp %20 : vector<16x1xf32>
    %cst_13 = arith.constant 1.000000e+00 : f32
    %22 = vector.broadcast %cst_13 : f32 to vector<16x1xf32>
    %23 = arith.addf %22, %21 : vector<16x1xf32>
    %24 = arith.divf %22, %23 : vector<16x1xf32>
    %25 = vector.broadcast %24 : vector<16x1xf32> to vector<16x64xf32>
    %26 = arith.mulf %2, %25 : vector<16x64xf32>
    %27 = arith.truncf %26 : vector<16x64xf32> to vector<16x64xbf16>
    %28 = tpu.concatenate %1, %27 in 1 : vector<16x64xbf16>, vector<16x64xbf16> -> vector<16x128xbf16>
    %c0_14 = arith.constant 0 : index
    %c0_15 = arith.constant 0 : index
    %29 = vector.load %arg8[%c0_14, %c0_15] : memref<128x640xbf16, #tpu.memory_space<vmem>>, vector<128x640xbf16>
    %cst_16 = arith.constant dense<0.000000e+00> : vector<16x640xf32>
    %30 = tpu.matmul %28, %29, %cst_16 {dimension_numbers = #tpu.dot_dimension_numbers<[1], [0], [0], [1], [0, 0, 1, 1], [], []>} : vector<16x128xbf16>, vector<128x640xbf16>, vector<16x640xf32> -> vector<16x640xf32>
    %31 = arith.truncf %30 : vector<16x640xf32> to vector<16x640xbf16>
    %c0_17 = arith.constant 0 : index
    %c0_18 = arith.constant 0 : index
    %32 = vector.load %arg9[%c0_17, %c0_18] : memref<16x640xbf16, #tpu.memory_space<vmem>>, vector<16x640xbf16>
    tpu.vector_store %arg9[%c0_17, %c0_18], %31 {strides = array<i32>} : memref<16x640xbf16, #tpu.memory_space<vmem>>, vector<16x640xbf16>,
    return
  }
  func.func @transform_0(%arg0: i32) -> (i32, i32) {
    %c0_i32 = arith.constant 0 : i32
    %c0_i32_0 = arith.constant 0 : i32
    return %arg0, %c0_i32 : i32, i32
  }
  func.func @transform_1(%arg0: i32) -> (i32, i32) {
    %c0_i32 = arith.constant 0 : i32
    %c0_i32_0 = arith.constant 0 : i32
    %c0_i32_1 = arith.constant 0 : i32
    return %c0_i32, %c0_i32_0 : i32, i32
  }
  func.func @transform_2(%arg0: i32) -> (i32, i32) {
    %c0_i32 = arith.constant 0 : i32
    %c0_i32_0 = arith.constant 0 : i32
    return %arg0, %c0_i32 : i32, i32
  }
  func.func @transform_3(%arg0: i32) -> (i32, i32) {
    %c0_i32 = arith.constant 0 : i32
    %c0_i32_0 = arith.constant 0 : i32
    %c0_i32_1 = arith.constant 0 : i32
    return %c0_i32, %c0_i32_0 : i32, i32
  }
  func.func @transform_4(%arg0: i32) -> (i32, i32) {
    %c0_i32 = arith.constant 0 : i32
    %c0_i32_0 = arith.constant 0 : i32
    %c0_i32_1 = arith.constant 0 : i32
    return %c0_i32, %c0_i32_0 : i32, i32
  }
  func.func @transform_5(%arg0: i32) -> (i32, i32) {
    %c0_i32 = arith.constant 0 : i32
    %c0_i32_0 = arith.constant 0 : i32
    %c0_i32_1 = arith.constant 0 : i32
    return %c0_i32, %c0_i32_0 : i32, i32
  }
  func.func @transform_6(%arg0: i32) -> (i32, i32) {
    %c0_i32 = arith.constant 0 : i32
    %c0_i32_0 = arith.constant 0 : i32
    %c0_i32_1 = arith.constant 0 : i32
    return %c0_i32, %c0_i32_0 : i32, i32
  }
  func.func @transform_7(%arg0: i32) -> (i32, i32) {
    %c0_i32 = arith.constant 0 : i32
    %c0_i32_0 = arith.constant 0 : i32
    %c0_i32_1 = arith.constant 0 : i32
    return %c0_i32, %c0_i32_0 : i32, i32
  }
  func.func @transform_8(%arg0: i32) -> (i32, i32) {
    %c0_i32 = arith.constant 0 : i32
    %c0_i32_0 = arith.constant 0 : i32
    return %arg0, %c0_i32 : i32, i32
  }
}

module attributes {stable_mosaic.version = 11 : i64} {
  func.func @_layer_kernel(%arg0: i32, %arg1: memref<32x64xbf16, #tpu.memory_space<vmem>>, %arg2: memref<1x64xf32, #tpu.memory_space<vmem>>, %arg3: memref<32x64xf32, #tpu.memory_space<vmem>>, %arg4: memref<128x64xbf16, #tpu.memory_space<vmem>>, %arg5: memref<1x64xf32, #tpu.memory_space<vmem>>, %arg6: memref<1x64xf32, #tpu.memory_space<vmem>>, %arg7: memref<1x1xf32, #tpu.memory_space<vmem>>, %arg8: memref<128x320xbf16, #tpu.memory_space<vmem>>, %arg9: memref<32x320xbf16, #tpu.memory_space<vmem>>) attributes {dimension_semantics = [#tpu.dimension_semantics<parallel>], iteration_bounds = array<i64: 2>, scalar_prefetch = 0 : i64, scratch_operands = 0 : i64, tpu.core_type = #tpu.core_type<tc>, window_params = [{transform_indices = @transform_0, window_bounds = array<i64: 32, 64>}, {pipeline_mode = #tpu.pipeline_mode<synchronous>, transform_indices = @transform_1, window_bounds = array<i64: 1, 64>}, {transform_indices = @transform_2, window_bounds = array<i64: 32, 64>}, {pipeline_mode = #tpu.pipeline_mode<synchronous>, transform_indices = @transform_3, window_bounds = array<i64: 128, 64>}, {pipeline_mode = #tpu.pipeline_mode<synchronous>, transform_indices = @transform_4, window_bounds = array<i64: 1, 64>}, {pipeline_mode = #tpu.pipeline_mode<synchronous>, transform_indices = @transform_5, window_bounds = array<i64: 1, 64>}, {pipeline_mode = #tpu.pipeline_mode<synchronous>, transform_indices = @transform_6, window_bounds = array<i64: 1, 1>}, {pipeline_mode = #tpu.pipeline_mode<synchronous>, transform_indices = @transform_7, window_bounds = array<i64: 128, 320>}, {transform_indices = @transform_8, window_bounds = array<i64: 32, 320>}]} {
    %c0 = arith.constant 0 : index
    %c0_0 = arith.constant 0 : index
    %0 = vector.load %arg1[%c0, %c0_0] : memref<32x64xbf16, #tpu.memory_space<vmem>>, vector<32x64xbf16>
    %1 = arith.extf %0 : vector<32x64xbf16> to vector<32x64xf32>
    %c0_1 = arith.constant 0 : index
    %c0_2 = arith.constant 0 : index
    %2 = vector.load %arg2[%c0_1, %c0_2] : memref<1x64xf32, #tpu.memory_space<vmem>>, vector<1x64xf32>
    %3 = vector.broadcast %2 : vector<1x64xf32> to vector<32x64xf32>
    %4 = arith.addf %1, %3 : vector<32x64xf32>
    %cst = arith.constant 0.000000e+00 : f32
    %5 = vector.broadcast %cst : f32 to vector<32x64xf32>
    %6 = arith.cmpf ogt, %4, %5 : vector<32x64xf32>
    %cst_3 = arith.constant 0.000000e+00 : f32
    %7 = vector.broadcast %cst_3 : f32 to vector<32x64xf32>
    %8 = arith.minimumf %4, %7 : vector<32x64xf32>
    %9 = math.exp %8 : vector<32x64xf32>
    %cst_4 = arith.constant 1.000000e+00 : f32
    %10 = vector.broadcast %cst_4 : f32 to vector<32x64xf32>
    %11 = arith.subf %9, %10 : vector<32x64xf32>
    %12 = arith.select %6, %4, %11 : vector<32x64xi1>, vector<32x64xf32>
    %13 = arith.truncf %12 : vector<32x64xf32> to vector<32x64xbf16>
    %c0_5 = arith.constant 0 : index
    %c0_6 = arith.constant 0 : index
    %14 = vector.load %arg3[%c0_5, %c0_6] : memref<32x64xf32, #tpu.memory_space<vmem>>, vector<32x64xf32>
    %15 = arith.truncf %14 : vector<32x64xf32> to vector<32x64xbf16>
    %16 = tpu.concatenate %13, %15 in 1 : vector<32x64xbf16>, vector<32x64xbf16> -> vector<32x128xbf16>
    %c0_7 = arith.constant 0 : index
    %c0_8 = arith.constant 0 : index
    %17 = vector.load %arg4[%c0_7, %c0_8] : memref<128x64xbf16, #tpu.memory_space<vmem>>, vector<128x64xbf16>
    %cst_9 = arith.constant dense<0.000000e+00> : vector<32x64xf32>
    %18 = tpu.matmul %16, %17, %cst_9 {dimension_numbers = #tpu.dot_dimension_numbers<[1], [0], [0], [1], [0, 0, 1, 1], [], []>} : vector<32x128xbf16>, vector<128x64xbf16>, vector<32x64xf32> -> vector<32x64xf32>
    %c0_10 = arith.constant 0 : index
    %c0_11 = arith.constant 0 : index
    %19 = vector.load %arg5[%c0_10, %c0_11] : memref<1x64xf32, #tpu.memory_space<vmem>>, vector<1x64xf32>
    %20 = vector.broadcast %19 : vector<1x64xf32> to vector<32x64xf32>
    %21 = arith.addf %18, %20 : vector<32x64xf32>
    %cst_12 = arith.constant 0.000000e+00 : f32
    %22 = vector.broadcast %cst_12 : f32 to vector<32x64xf32>
    %23 = arith.maximumf %21, %22 : vector<32x64xf32>
    %c0_13 = arith.constant 0 : index
    %c0_14 = arith.constant 0 : index
    %24 = vector.load %arg6[%c0_13, %c0_14] : memref<1x64xf32, #tpu.memory_space<vmem>>, vector<1x64xf32>
    %25 = vector.broadcast %24 : vector<1x64xf32> to vector<32x64xf32>
    %26 = arith.mulf %23, %25 : vector<32x64xf32>
    %cst_15 = arith.constant dense<0.000000e+00> : vector<32xf32>
    %27 = vector.multi_reduction <add>, %26, %cst_15 [1] : vector<32x64xf32> to vector<32xf32>
    %28 = vector.shape_cast %27 : vector<32xf32> to vector<32x1xf32>
    %c0_16 = arith.constant 0 : index
    %c0_17 = arith.constant 0 : index
    %29 = vector.load %arg7[%c0_16, %c0_17] : memref<1x1xf32, #tpu.memory_space<vmem>>, vector<1x1xf32>
    %30 = vector.broadcast %29 : vector<1x1xf32> to vector<32x1xf32>
    %31 = arith.addf %28, %30 : vector<32x1xf32>
    %32 = arith.negf %31 : vector<32x1xf32>
    %33 = math.exp %32 : vector<32x1xf32>
    %cst_18 = arith.constant 1.000000e+00 : f32
    %34 = vector.broadcast %cst_18 : f32 to vector<32x1xf32>
    %35 = arith.addf %34, %33 : vector<32x1xf32>
    %36 = arith.divf %34, %35 : vector<32x1xf32>
    %37 = vector.broadcast %36 : vector<32x1xf32> to vector<32x64xf32>
    %38 = arith.mulf %14, %37 : vector<32x64xf32>
    %39 = arith.truncf %38 : vector<32x64xf32> to vector<32x64xbf16>
    %40 = tpu.concatenate %13, %39 in 1 : vector<32x64xbf16>, vector<32x64xbf16> -> vector<32x128xbf16>
    %c0_19 = arith.constant 0 : index
    %c0_20 = arith.constant 0 : index
    %41 = vector.load %arg8[%c0_19, %c0_20] : memref<128x320xbf16, #tpu.memory_space<vmem>>, vector<128x320xbf16>
    %cst_21 = arith.constant dense<0.000000e+00> : vector<32x320xf32>
    %42 = tpu.matmul %40, %41, %cst_21 {dimension_numbers = #tpu.dot_dimension_numbers<[1], [0], [0], [1], [0, 0, 1, 1], [], []>} : vector<32x128xbf16>, vector<128x320xbf16>, vector<32x320xf32> -> vector<32x320xf32>
    %43 = arith.truncf %42 : vector<32x320xf32> to vector<32x320xbf16>
    %c0_22 = arith.constant 0 : index
    %c0_23 = arith.constant 0 : index
    %44 = vector.load %arg9[%c0_22, %c0_23] : memref<32x320xbf16, #tpu.memory_space<vmem>>, vector<32x320xbf16>
    tpu.vector_store %arg9[%c0_22, %c0_23], %43 {strides = array<i32>} : memref<32x320xbf16, #tpu.memory_space<vmem>>, vector<32x320xbf16>,
    return
  }
  func.func @transform_0(%arg0: i32) -> (i32, i32) {
    %c0_i32 = arith.constant 0 : i32
    %c0_i32_0 = arith.constant 0 : i32
    return %arg0, %c0_i32 : i32, i32
  }
  func.func @transform_1(%arg0: i32) -> (i32, i32) {
    %c0_i32 = arith.constant 0 : i32
    %c0_i32_0 = arith.constant 0 : i32
    %c0_i32_1 = arith.constant 0 : i32
    return %c0_i32, %c0_i32_0 : i32, i32
  }
  func.func @transform_2(%arg0: i32) -> (i32, i32) {
    %c0_i32 = arith.constant 0 : i32
    %c0_i32_0 = arith.constant 0 : i32
    return %arg0, %c0_i32 : i32, i32
  }
  func.func @transform_3(%arg0: i32) -> (i32, i32) {
    %c0_i32 = arith.constant 0 : i32
    %c0_i32_0 = arith.constant 0 : i32
    %c0_i32_1 = arith.constant 0 : i32
    return %c0_i32, %c0_i32_0 : i32, i32
  }
  func.func @transform_4(%arg0: i32) -> (i32, i32) {
    %c0_i32 = arith.constant 0 : i32
    %c0_i32_0 = arith.constant 0 : i32
    %c0_i32_1 = arith.constant 0 : i32
    return %c0_i32, %c0_i32_0 : i32, i32
  }
  func.func @transform_5(%arg0: i32) -> (i32, i32) {
    %c0_i32 = arith.constant 0 : i32
    %c0_i32_0 = arith.constant 0 : i32
    %c0_i32_1 = arith.constant 0 : i32
    return %c0_i32, %c0_i32_0 : i32, i32
  }
  func.func @transform_6(%arg0: i32) -> (i32, i32) {
    %c0_i32 = arith.constant 0 : i32
    %c0_i32_0 = arith.constant 0 : i32
    %c0_i32_1 = arith.constant 0 : i32
    return %c0_i32, %c0_i32_0 : i32, i32
  }
  func.func @transform_7(%arg0: i32) -> (i32, i32) {
    %c0_i32 = arith.constant 0 : i32
    %c0_i32_0 = arith.constant 0 : i32
    %c0_i32_1 = arith.constant 0 : i32
    return %c0_i32, %c0_i32_0 : i32, i32
  }
  func.func @transform_8(%arg0: i32) -> (i32, i32) {
    %c0_i32 = arith.constant 0 : i32
    %c0_i32_0 = arith.constant 0 : i32
    return %arg0, %c0_i32 : i32, i32
  }
}

module attributes {stable_mosaic.version = 11 : i64} {
  func.func @_layer_kernel(%arg0: i32, %arg1: memref<64x32xbf16, #tpu.memory_space<vmem>>, %arg2: memref<1x32xf32, #tpu.memory_space<vmem>>, %arg3: memref<64x32xf32, #tpu.memory_space<vmem>>, %arg4: memref<64x32xbf16, #tpu.memory_space<vmem>>, %arg5: memref<1x32xf32, #tpu.memory_space<vmem>>, %arg6: memref<1x32xf32, #tpu.memory_space<vmem>>, %arg7: memref<1x1xf32, #tpu.memory_space<vmem>>, %arg8: memref<64x320xbf16, #tpu.memory_space<vmem>>, %arg9: memref<64x320xbf16, #tpu.memory_space<vmem>>) attributes {dimension_semantics = [#tpu.dimension_semantics<parallel>], iteration_bounds = array<i64: 2>, scalar_prefetch = 0 : i64, scratch_operands = 0 : i64, tpu.core_type = #tpu.core_type<tc>, window_params = [{transform_indices = @transform_0, window_bounds = array<i64: 64, 32>}, {pipeline_mode = #tpu.pipeline_mode<synchronous>, transform_indices = @transform_1, window_bounds = array<i64: 1, 32>}, {transform_indices = @transform_2, window_bounds = array<i64: 64, 32>}, {pipeline_mode = #tpu.pipeline_mode<synchronous>, transform_indices = @transform_3, window_bounds = array<i64: 64, 32>}, {pipeline_mode = #tpu.pipeline_mode<synchronous>, transform_indices = @transform_4, window_bounds = array<i64: 1, 32>}, {pipeline_mode = #tpu.pipeline_mode<synchronous>, transform_indices = @transform_5, window_bounds = array<i64: 1, 32>}, {pipeline_mode = #tpu.pipeline_mode<synchronous>, transform_indices = @transform_6, window_bounds = array<i64: 1, 1>}, {pipeline_mode = #tpu.pipeline_mode<synchronous>, transform_indices = @transform_7, window_bounds = array<i64: 64, 320>}, {transform_indices = @transform_8, window_bounds = array<i64: 64, 320>}]} {
    %c0 = arith.constant 0 : index
    %c0_0 = arith.constant 0 : index
    %0 = vector.load %arg1[%c0, %c0_0] : memref<64x32xbf16, #tpu.memory_space<vmem>>, vector<64x32xbf16>
    %1 = arith.extf %0 : vector<64x32xbf16> to vector<64x32xf32>
    %c0_1 = arith.constant 0 : index
    %c0_2 = arith.constant 0 : index
    %2 = vector.load %arg2[%c0_1, %c0_2] : memref<1x32xf32, #tpu.memory_space<vmem>>, vector<1x32xf32>
    %3 = vector.broadcast %2 : vector<1x32xf32> to vector<64x32xf32>
    %4 = arith.addf %1, %3 : vector<64x32xf32>
    %cst = arith.constant 0.000000e+00 : f32
    %5 = vector.broadcast %cst : f32 to vector<64x32xf32>
    %6 = arith.cmpf ogt, %4, %5 : vector<64x32xf32>
    %cst_3 = arith.constant 0.000000e+00 : f32
    %7 = vector.broadcast %cst_3 : f32 to vector<64x32xf32>
    %8 = arith.minimumf %4, %7 : vector<64x32xf32>
    %9 = math.exp %8 : vector<64x32xf32>
    %cst_4 = arith.constant 1.000000e+00 : f32
    %10 = vector.broadcast %cst_4 : f32 to vector<64x32xf32>
    %11 = arith.subf %9, %10 : vector<64x32xf32>
    %12 = arith.select %6, %4, %11 : vector<64x32xi1>, vector<64x32xf32>
    %13 = arith.truncf %12 : vector<64x32xf32> to vector<64x32xbf16>
    %c0_5 = arith.constant 0 : index
    %c0_6 = arith.constant 0 : index
    %14 = vector.load %arg3[%c0_5, %c0_6] : memref<64x32xf32, #tpu.memory_space<vmem>>, vector<64x32xf32>
    %15 = arith.truncf %14 : vector<64x32xf32> to vector<64x32xbf16>
    %16 = tpu.concatenate %13, %15 in 1 : vector<64x32xbf16>, vector<64x32xbf16> -> vector<64x64xbf16>
    %c0_7 = arith.constant 0 : index
    %c0_8 = arith.constant 0 : index
    %17 = vector.load %arg4[%c0_7, %c0_8] : memref<64x32xbf16, #tpu.memory_space<vmem>>, vector<64x32xbf16>
    %cst_9 = arith.constant dense<0.000000e+00> : vector<64x32xf32>
    %18 = tpu.matmul %16, %17, %cst_9 {dimension_numbers = #tpu.dot_dimension_numbers<[1], [0], [0], [1], [0, 0, 1, 1], [], []>} : vector<64x64xbf16>, vector<64x32xbf16>, vector<64x32xf32> -> vector<64x32xf32>
    %c0_10 = arith.constant 0 : index
    %c0_11 = arith.constant 0 : index
    %19 = vector.load %arg5[%c0_10, %c0_11] : memref<1x32xf32, #tpu.memory_space<vmem>>, vector<1x32xf32>
    %20 = vector.broadcast %19 : vector<1x32xf32> to vector<64x32xf32>
    %21 = arith.addf %18, %20 : vector<64x32xf32>
    %cst_12 = arith.constant 0.000000e+00 : f32
    %22 = vector.broadcast %cst_12 : f32 to vector<64x32xf32>
    %23 = arith.maximumf %21, %22 : vector<64x32xf32>
    %c0_13 = arith.constant 0 : index
    %c0_14 = arith.constant 0 : index
    %24 = vector.load %arg6[%c0_13, %c0_14] : memref<1x32xf32, #tpu.memory_space<vmem>>, vector<1x32xf32>
    %25 = vector.broadcast %24 : vector<1x32xf32> to vector<64x32xf32>
    %26 = arith.mulf %23, %25 : vector<64x32xf32>
    %cst_15 = arith.constant dense<0.000000e+00> : vector<64xf32>
    %27 = vector.multi_reduction <add>, %26, %cst_15 [1] : vector<64x32xf32> to vector<64xf32>
    %28 = vector.shape_cast %27 : vector<64xf32> to vector<64x1xf32>
    %c0_16 = arith.constant 0 : index
    %c0_17 = arith.constant 0 : index
    %29 = vector.load %arg7[%c0_16, %c0_17] : memref<1x1xf32, #tpu.memory_space<vmem>>, vector<1x1xf32>
    %30 = vector.broadcast %29 : vector<1x1xf32> to vector<64x1xf32>
    %31 = arith.addf %28, %30 : vector<64x1xf32>
    %32 = arith.negf %31 : vector<64x1xf32>
    %33 = math.exp %32 : vector<64x1xf32>
    %cst_18 = arith.constant 1.000000e+00 : f32
    %34 = vector.broadcast %cst_18 : f32 to vector<64x1xf32>
    %35 = arith.addf %34, %33 : vector<64x1xf32>
    %36 = arith.divf %34, %35 : vector<64x1xf32>
    %37 = vector.broadcast %36 : vector<64x1xf32> to vector<64x32xf32>
    %38 = arith.mulf %14, %37 : vector<64x32xf32>
    %39 = arith.truncf %38 : vector<64x32xf32> to vector<64x32xbf16>
    %40 = tpu.concatenate %13, %39 in 1 : vector<64x32xbf16>, vector<64x32xbf16> -> vector<64x64xbf16>
    %c0_19 = arith.constant 0 : index
    %c0_20 = arith.constant 0 : index
    %41 = vector.load %arg8[%c0_19, %c0_20] : memref<64x320xbf16, #tpu.memory_space<vmem>>, vector<64x320xbf16>
    %cst_21 = arith.constant dense<0.000000e+00> : vector<64x320xf32>
    %42 = tpu.matmul %40, %41, %cst_21 {dimension_numbers = #tpu.dot_dimension_numbers<[1], [0], [0], [1], [0, 0, 1, 1], [], []>} : vector<64x64xbf16>, vector<64x320xbf16>, vector<64x320xf32> -> vector<64x320xf32>
    %43 = arith.truncf %42 : vector<64x320xf32> to vector<64x320xbf16>
    %c0_22 = arith.constant 0 : index
    %c0_23 = arith.constant 0 : index
    %44 = vector.load %arg9[%c0_22, %c0_23] : memref<64x320xbf16, #tpu.memory_space<vmem>>, vector<64x320xbf16>
    tpu.vector_store %arg9[%c0_22, %c0_23], %43 {strides = array<i32>} : memref<64x320xbf16, #tpu.memory_space<vmem>>, vector<64x320xbf16>,
    return
  }
  func.func @transform_0(%arg0: i32) -> (i32, i32) {
    %c0_i32 = arith.constant 0 : i32
    %c0_i32_0 = arith.constant 0 : i32
    return %arg0, %c0_i32 : i32, i32
  }
  func.func @transform_1(%arg0: i32) -> (i32, i32) {
    %c0_i32 = arith.constant 0 : i32
    %c0_i32_0 = arith.constant 0 : i32
    %c0_i32_1 = arith.constant 0 : i32
    return %c0_i32, %c0_i32_0 : i32, i32
  }
  func.func @transform_2(%arg0: i32) -> (i32, i32) {
    %c0_i32 = arith.constant 0 : i32
    %c0_i32_0 = arith.constant 0 : i32
    return %arg0, %c0_i32 : i32, i32
  }
  func.func @transform_3(%arg0: i32) -> (i32, i32) {
    %c0_i32 = arith.constant 0 : i32
    %c0_i32_0 = arith.constant 0 : i32
    %c0_i32_1 = arith.constant 0 : i32
    return %c0_i32, %c0_i32_0 : i32, i32
  }
  func.func @transform_4(%arg0: i32) -> (i32, i32) {
    %c0_i32 = arith.constant 0 : i32
    %c0_i32_0 = arith.constant 0 : i32
    %c0_i32_1 = arith.constant 0 : i32
    return %c0_i32, %c0_i32_0 : i32, i32
  }
  func.func @transform_5(%arg0: i32) -> (i32, i32) {
    %c0_i32 = arith.constant 0 : i32
    %c0_i32_0 = arith.constant 0 : i32
    %c0_i32_1 = arith.constant 0 : i32
    return %c0_i32, %c0_i32_0 : i32, i32
  }
  func.func @transform_6(%arg0: i32) -> (i32, i32) {
    %c0_i32 = arith.constant 0 : i32
    %c0_i32_0 = arith.constant 0 : i32
    %c0_i32_1 = arith.constant 0 : i32
    return %c0_i32, %c0_i32_0 : i32, i32
  }
  func.func @transform_7(%arg0: i32) -> (i32, i32) {
    %c0_i32 = arith.constant 0 : i32
    %c0_i32_0 = arith.constant 0 : i32
    %c0_i32_1 = arith.constant 0 : i32
    return %c0_i32, %c0_i32_0 : i32, i32
  }
  func.func @transform_8(%arg0: i32) -> (i32, i32) {
    %c0_i32 = arith.constant 0 : i32
    %c0_i32_0 = arith.constant 0 : i32
    return %arg0, %c0_i32 : i32, i32
  }
}

module attributes {stable_mosaic.version = 11 : i64} {
  func.func @_layer_kernel(%arg0: i32, %arg1: memref<128x32xbf16, #tpu.memory_space<vmem>>, %arg2: memref<1x32xf32, #tpu.memory_space<vmem>>, %arg3: memref<128x32xf32, #tpu.memory_space<vmem>>, %arg4: memref<64x32xbf16, #tpu.memory_space<vmem>>, %arg5: memref<1x32xf32, #tpu.memory_space<vmem>>, %arg6: memref<1x32xf32, #tpu.memory_space<vmem>>, %arg7: memref<1x1xf32, #tpu.memory_space<vmem>>, %arg8: memref<64x160xbf16, #tpu.memory_space<vmem>>, %arg9: memref<128x160xbf16, #tpu.memory_space<vmem>>) attributes {dimension_semantics = [#tpu.dimension_semantics<parallel>], iteration_bounds = array<i64: 2>, scalar_prefetch = 0 : i64, scratch_operands = 0 : i64, tpu.core_type = #tpu.core_type<tc>, window_params = [{transform_indices = @transform_0, window_bounds = array<i64: 128, 32>}, {pipeline_mode = #tpu.pipeline_mode<synchronous>, transform_indices = @transform_1, window_bounds = array<i64: 1, 32>}, {transform_indices = @transform_2, window_bounds = array<i64: 128, 32>}, {pipeline_mode = #tpu.pipeline_mode<synchronous>, transform_indices = @transform_3, window_bounds = array<i64: 64, 32>}, {pipeline_mode = #tpu.pipeline_mode<synchronous>, transform_indices = @transform_4, window_bounds = array<i64: 1, 32>}, {pipeline_mode = #tpu.pipeline_mode<synchronous>, transform_indices = @transform_5, window_bounds = array<i64: 1, 32>}, {pipeline_mode = #tpu.pipeline_mode<synchronous>, transform_indices = @transform_6, window_bounds = array<i64: 1, 1>}, {pipeline_mode = #tpu.pipeline_mode<synchronous>, transform_indices = @transform_7, window_bounds = array<i64: 64, 160>}, {transform_indices = @transform_8, window_bounds = array<i64: 128, 160>}]} {
    %c0 = arith.constant 0 : index
    %c0_0 = arith.constant 0 : index
    %0 = vector.load %arg1[%c0, %c0_0] : memref<128x32xbf16, #tpu.memory_space<vmem>>, vector<128x32xbf16>
    %1 = arith.extf %0 : vector<128x32xbf16> to vector<128x32xf32>
    %c0_1 = arith.constant 0 : index
    %c0_2 = arith.constant 0 : index
    %2 = vector.load %arg2[%c0_1, %c0_2] : memref<1x32xf32, #tpu.memory_space<vmem>>, vector<1x32xf32>
    %3 = vector.broadcast %2 : vector<1x32xf32> to vector<128x32xf32>
    %4 = arith.addf %1, %3 : vector<128x32xf32>
    %cst = arith.constant 0.000000e+00 : f32
    %5 = vector.broadcast %cst : f32 to vector<128x32xf32>
    %6 = arith.cmpf ogt, %4, %5 : vector<128x32xf32>
    %cst_3 = arith.constant 0.000000e+00 : f32
    %7 = vector.broadcast %cst_3 : f32 to vector<128x32xf32>
    %8 = arith.minimumf %4, %7 : vector<128x32xf32>
    %9 = math.exp %8 : vector<128x32xf32>
    %cst_4 = arith.constant 1.000000e+00 : f32
    %10 = vector.broadcast %cst_4 : f32 to vector<128x32xf32>
    %11 = arith.subf %9, %10 : vector<128x32xf32>
    %12 = arith.select %6, %4, %11 : vector<128x32xi1>, vector<128x32xf32>
    %13 = arith.truncf %12 : vector<128x32xf32> to vector<128x32xbf16>
    %c0_5 = arith.constant 0 : index
    %c0_6 = arith.constant 0 : index
    %14 = vector.load %arg3[%c0_5, %c0_6] : memref<128x32xf32, #tpu.memory_space<vmem>>, vector<128x32xf32>
    %15 = arith.truncf %14 : vector<128x32xf32> to vector<128x32xbf16>
    %16 = tpu.concatenate %13, %15 in 1 : vector<128x32xbf16>, vector<128x32xbf16> -> vector<128x64xbf16>
    %c0_7 = arith.constant 0 : index
    %c0_8 = arith.constant 0 : index
    %17 = vector.load %arg4[%c0_7, %c0_8] : memref<64x32xbf16, #tpu.memory_space<vmem>>, vector<64x32xbf16>
    %cst_9 = arith.constant dense<0.000000e+00> : vector<128x32xf32>
    %18 = tpu.matmul %16, %17, %cst_9 {dimension_numbers = #tpu.dot_dimension_numbers<[1], [0], [0], [1], [0, 0, 1, 1], [], []>} : vector<128x64xbf16>, vector<64x32xbf16>, vector<128x32xf32> -> vector<128x32xf32>
    %c0_10 = arith.constant 0 : index
    %c0_11 = arith.constant 0 : index
    %19 = vector.load %arg5[%c0_10, %c0_11] : memref<1x32xf32, #tpu.memory_space<vmem>>, vector<1x32xf32>
    %20 = vector.broadcast %19 : vector<1x32xf32> to vector<128x32xf32>
    %21 = arith.addf %18, %20 : vector<128x32xf32>
    %cst_12 = arith.constant 0.000000e+00 : f32
    %22 = vector.broadcast %cst_12 : f32 to vector<128x32xf32>
    %23 = arith.maximumf %21, %22 : vector<128x32xf32>
    %c0_13 = arith.constant 0 : index
    %c0_14 = arith.constant 0 : index
    %24 = vector.load %arg6[%c0_13, %c0_14] : memref<1x32xf32, #tpu.memory_space<vmem>>, vector<1x32xf32>
    %25 = vector.broadcast %24 : vector<1x32xf32> to vector<128x32xf32>
    %26 = arith.mulf %23, %25 : vector<128x32xf32>
    %cst_15 = arith.constant dense<0.000000e+00> : vector<128xf32>
    %27 = vector.multi_reduction <add>, %26, %cst_15 [1] : vector<128x32xf32> to vector<128xf32>
    %28 = vector.shape_cast %27 : vector<128xf32> to vector<128x1xf32>
    %c0_16 = arith.constant 0 : index
    %c0_17 = arith.constant 0 : index
    %29 = vector.load %arg7[%c0_16, %c0_17] : memref<1x1xf32, #tpu.memory_space<vmem>>, vector<1x1xf32>
    %30 = vector.broadcast %29 : vector<1x1xf32> to vector<128x1xf32>
    %31 = arith.addf %28, %30 : vector<128x1xf32>
    %32 = arith.negf %31 : vector<128x1xf32>
    %33 = math.exp %32 : vector<128x1xf32>
    %cst_18 = arith.constant 1.000000e+00 : f32
    %34 = vector.broadcast %cst_18 : f32 to vector<128x1xf32>
    %35 = arith.addf %34, %33 : vector<128x1xf32>
    %36 = arith.divf %34, %35 : vector<128x1xf32>
    %37 = vector.broadcast %36 : vector<128x1xf32> to vector<128x32xf32>
    %38 = arith.mulf %14, %37 : vector<128x32xf32>
    %39 = arith.truncf %38 : vector<128x32xf32> to vector<128x32xbf16>
    %40 = tpu.concatenate %13, %39 in 1 : vector<128x32xbf16>, vector<128x32xbf16> -> vector<128x64xbf16>
    %c0_19 = arith.constant 0 : index
    %c0_20 = arith.constant 0 : index
    %41 = vector.load %arg8[%c0_19, %c0_20] : memref<64x160xbf16, #tpu.memory_space<vmem>>, vector<64x160xbf16>
    %cst_21 = arith.constant dense<0.000000e+00> : vector<128x160xf32>
    %42 = tpu.matmul %40, %41, %cst_21 {dimension_numbers = #tpu.dot_dimension_numbers<[1], [0], [0], [1], [0, 0, 1, 1], [], []>} : vector<128x64xbf16>, vector<64x160xbf16>, vector<128x160xf32> -> vector<128x160xf32>
    %43 = arith.truncf %42 : vector<128x160xf32> to vector<128x160xbf16>
    %c0_22 = arith.constant 0 : index
    %c0_23 = arith.constant 0 : index
    %44 = vector.load %arg9[%c0_22, %c0_23] : memref<128x160xbf16, #tpu.memory_space<vmem>>, vector<128x160xbf16>
    tpu.vector_store %arg9[%c0_22, %c0_23], %43 {strides = array<i32>} : memref<128x160xbf16, #tpu.memory_space<vmem>>, vector<128x160xbf16>,
    return
  }
  func.func @transform_0(%arg0: i32) -> (i32, i32) {
    %c0_i32 = arith.constant 0 : i32
    %c0_i32_0 = arith.constant 0 : i32
    return %arg0, %c0_i32 : i32, i32
  }
  func.func @transform_1(%arg0: i32) -> (i32, i32) {
    %c0_i32 = arith.constant 0 : i32
    %c0_i32_0 = arith.constant 0 : i32
    %c0_i32_1 = arith.constant 0 : i32
    return %c0_i32, %c0_i32_0 : i32, i32
  }
  func.func @transform_2(%arg0: i32) -> (i32, i32) {
    %c0_i32 = arith.constant 0 : i32
    %c0_i32_0 = arith.constant 0 : i32
    return %arg0, %c0_i32 : i32, i32
  }
  func.func @transform_3(%arg0: i32) -> (i32, i32) {
    %c0_i32 = arith.constant 0 : i32
    %c0_i32_0 = arith.constant 0 : i32
    %c0_i32_1 = arith.constant 0 : i32
    return %c0_i32, %c0_i32_0 : i32, i32
  }
  func.func @transform_4(%arg0: i32) -> (i32, i32) {
    %c0_i32 = arith.constant 0 : i32
    %c0_i32_0 = arith.constant 0 : i32
    %c0_i32_1 = arith.constant 0 : i32
    return %c0_i32, %c0_i32_0 : i32, i32
  }
  func.func @transform_5(%arg0: i32) -> (i32, i32) {
    %c0_i32 = arith.constant 0 : i32
    %c0_i32_0 = arith.constant 0 : i32
    %c0_i32_1 = arith.constant 0 : i32
    return %c0_i32, %c0_i32_0 : i32, i32
  }
  func.func @transform_6(%arg0: i32) -> (i32, i32) {
    %c0_i32 = arith.constant 0 : i32
    %c0_i32_0 = arith.constant 0 : i32
    %c0_i32_1 = arith.constant 0 : i32
    return %c0_i32, %c0_i32_0 : i32, i32
  }
  func.func @transform_7(%arg0: i32) -> (i32, i32) {
    %c0_i32 = arith.constant 0 : i32
    %c0_i32_0 = arith.constant 0 : i32
    %c0_i32_1 = arith.constant 0 : i32
    return %c0_i32, %c0_i32_0 : i32, i32
  }
  func.func @transform_8(%arg0: i32) -> (i32, i32) {
    %c0_i32 = arith.constant 0 : i32
    %c0_i32_0 = arith.constant 0 : i32
    return %arg0, %c0_i32 : i32, i32
  }
}

module attributes {stable_mosaic.version = 11 : i64} {
  func.func @_layer_kernel(%arg0: i32, %arg1: memref<256x16xbf16, #tpu.memory_space<vmem>>, %arg2: memref<1x16xf32, #tpu.memory_space<vmem>>, %arg3: memref<256x16xf32, #tpu.memory_space<vmem>>, %arg4: memref<32x16xbf16, #tpu.memory_space<vmem>>, %arg5: memref<1x16xf32, #tpu.memory_space<vmem>>, %arg6: memref<1x16xf32, #tpu.memory_space<vmem>>, %arg7: memref<1x1xf32, #tpu.memory_space<vmem>>, %arg8: memref<32x160xbf16, #tpu.memory_space<vmem>>, %arg9: memref<256x160xbf16, #tpu.memory_space<vmem>>) attributes {dimension_semantics = [#tpu.dimension_semantics<parallel>], iteration_bounds = array<i64: 2>, scalar_prefetch = 0 : i64, scratch_operands = 0 : i64, tpu.core_type = #tpu.core_type<tc>, window_params = [{transform_indices = @transform_0, window_bounds = array<i64: 256, 16>}, {pipeline_mode = #tpu.pipeline_mode<synchronous>, transform_indices = @transform_1, window_bounds = array<i64: 1, 16>}, {transform_indices = @transform_2, window_bounds = array<i64: 256, 16>}, {pipeline_mode = #tpu.pipeline_mode<synchronous>, transform_indices = @transform_3, window_bounds = array<i64: 32, 16>}, {pipeline_mode = #tpu.pipeline_mode<synchronous>, transform_indices = @transform_4, window_bounds = array<i64: 1, 16>}, {pipeline_mode = #tpu.pipeline_mode<synchronous>, transform_indices = @transform_5, window_bounds = array<i64: 1, 16>}, {pipeline_mode = #tpu.pipeline_mode<synchronous>, transform_indices = @transform_6, window_bounds = array<i64: 1, 1>}, {pipeline_mode = #tpu.pipeline_mode<synchronous>, transform_indices = @transform_7, window_bounds = array<i64: 32, 160>}, {transform_indices = @transform_8, window_bounds = array<i64: 256, 160>}]} {
    %c0 = arith.constant 0 : index
    %c0_0 = arith.constant 0 : index
    %0 = vector.load %arg1[%c0, %c0_0] : memref<256x16xbf16, #tpu.memory_space<vmem>>, vector<256x16xbf16>
    %1 = arith.extf %0 : vector<256x16xbf16> to vector<256x16xf32>
    %c0_1 = arith.constant 0 : index
    %c0_2 = arith.constant 0 : index
    %2 = vector.load %arg2[%c0_1, %c0_2] : memref<1x16xf32, #tpu.memory_space<vmem>>, vector<1x16xf32>
    %3 = vector.broadcast %2 : vector<1x16xf32> to vector<256x16xf32>
    %4 = arith.addf %1, %3 : vector<256x16xf32>
    %cst = arith.constant 0.000000e+00 : f32
    %5 = vector.broadcast %cst : f32 to vector<256x16xf32>
    %6 = arith.cmpf ogt, %4, %5 : vector<256x16xf32>
    %cst_3 = arith.constant 0.000000e+00 : f32
    %7 = vector.broadcast %cst_3 : f32 to vector<256x16xf32>
    %8 = arith.minimumf %4, %7 : vector<256x16xf32>
    %9 = math.exp %8 : vector<256x16xf32>
    %cst_4 = arith.constant 1.000000e+00 : f32
    %10 = vector.broadcast %cst_4 : f32 to vector<256x16xf32>
    %11 = arith.subf %9, %10 : vector<256x16xf32>
    %12 = arith.select %6, %4, %11 : vector<256x16xi1>, vector<256x16xf32>
    %13 = arith.truncf %12 : vector<256x16xf32> to vector<256x16xbf16>
    %c0_5 = arith.constant 0 : index
    %c0_6 = arith.constant 0 : index
    %14 = vector.load %arg3[%c0_5, %c0_6] : memref<256x16xf32, #tpu.memory_space<vmem>>, vector<256x16xf32>
    %15 = arith.truncf %14 : vector<256x16xf32> to vector<256x16xbf16>
    %16 = tpu.concatenate %13, %15 in 1 : vector<256x16xbf16>, vector<256x16xbf16> -> vector<256x32xbf16>
    %c0_7 = arith.constant 0 : index
    %c0_8 = arith.constant 0 : index
    %17 = vector.load %arg4[%c0_7, %c0_8] : memref<32x16xbf16, #tpu.memory_space<vmem>>, vector<32x16xbf16>
    %cst_9 = arith.constant dense<0.000000e+00> : vector<256x16xf32>
    %18 = tpu.matmul %16, %17, %cst_9 {dimension_numbers = #tpu.dot_dimension_numbers<[1], [0], [0], [1], [0, 0, 1, 1], [], []>} : vector<256x32xbf16>, vector<32x16xbf16>, vector<256x16xf32> -> vector<256x16xf32>
    %c0_10 = arith.constant 0 : index
    %c0_11 = arith.constant 0 : index
    %19 = vector.load %arg5[%c0_10, %c0_11] : memref<1x16xf32, #tpu.memory_space<vmem>>, vector<1x16xf32>
    %20 = vector.broadcast %19 : vector<1x16xf32> to vector<256x16xf32>
    %21 = arith.addf %18, %20 : vector<256x16xf32>
    %cst_12 = arith.constant 0.000000e+00 : f32
    %22 = vector.broadcast %cst_12 : f32 to vector<256x16xf32>
    %23 = arith.maximumf %21, %22 : vector<256x16xf32>
    %c0_13 = arith.constant 0 : index
    %c0_14 = arith.constant 0 : index
    %24 = vector.load %arg6[%c0_13, %c0_14] : memref<1x16xf32, #tpu.memory_space<vmem>>, vector<1x16xf32>
    %25 = vector.broadcast %24 : vector<1x16xf32> to vector<256x16xf32>
    %26 = arith.mulf %23, %25 : vector<256x16xf32>
    %cst_15 = arith.constant dense<0.000000e+00> : vector<256xf32>
    %27 = vector.multi_reduction <add>, %26, %cst_15 [1] : vector<256x16xf32> to vector<256xf32>
    %28 = vector.shape_cast %27 : vector<256xf32> to vector<256x1xf32>
    %c0_16 = arith.constant 0 : index
    %c0_17 = arith.constant 0 : index
    %29 = vector.load %arg7[%c0_16, %c0_17] : memref<1x1xf32, #tpu.memory_space<vmem>>, vector<1x1xf32>
    %30 = vector.broadcast %29 : vector<1x1xf32> to vector<256x1xf32>
    %31 = arith.addf %28, %30 : vector<256x1xf32>
    %32 = arith.negf %31 : vector<256x1xf32>
    %33 = math.exp %32 : vector<256x1xf32>
    %cst_18 = arith.constant 1.000000e+00 : f32
    %34 = vector.broadcast %cst_18 : f32 to vector<256x1xf32>
    %35 = arith.addf %34, %33 : vector<256x1xf32>
    %36 = arith.divf %34, %35 : vector<256x1xf32>
    %37 = vector.broadcast %36 : vector<256x1xf32> to vector<256x16xf32>
    %38 = arith.mulf %14, %37 : vector<256x16xf32>
    %39 = arith.truncf %38 : vector<256x16xf32> to vector<256x16xbf16>
    %40 = tpu.concatenate %13, %39 in 1 : vector<256x16xbf16>, vector<256x16xbf16> -> vector<256x32xbf16>
    %c0_19 = arith.constant 0 : index
    %c0_20 = arith.constant 0 : index
    %41 = vector.load %arg8[%c0_19, %c0_20] : memref<32x160xbf16, #tpu.memory_space<vmem>>, vector<32x160xbf16>
    %cst_21 = arith.constant dense<0.000000e+00> : vector<256x160xf32>
    %42 = tpu.matmul %40, %41, %cst_21 {dimension_numbers = #tpu.dot_dimension_numbers<[1], [0], [0], [1], [0, 0, 1, 1], [], []>} : vector<256x32xbf16>, vector<32x160xbf16>, vector<256x160xf32> -> vector<256x160xf32>
    %43 = arith.truncf %42 : vector<256x160xf32> to vector<256x160xbf16>
    %c0_22 = arith.constant 0 : index
    %c0_23 = arith.constant 0 : index
    %44 = vector.load %arg9[%c0_22, %c0_23] : memref<256x160xbf16, #tpu.memory_space<vmem>>, vector<256x160xbf16>
    tpu.vector_store %arg9[%c0_22, %c0_23], %43 {strides = array<i32>} : memref<256x160xbf16, #tpu.memory_space<vmem>>, vector<256x160xbf16>,
    return
  }
  func.func @transform_0(%arg0: i32) -> (i32, i32) {
    %c0_i32 = arith.constant 0 : i32
    %c0_i32_0 = arith.constant 0 : i32
    return %arg0, %c0_i32 : i32, i32
  }
  func.func @transform_1(%arg0: i32) -> (i32, i32) {
    %c0_i32 = arith.constant 0 : i32
    %c0_i32_0 = arith.constant 0 : i32
    %c0_i32_1 = arith.constant 0 : i32
    return %c0_i32, %c0_i32_0 : i32, i32
  }
  func.func @transform_2(%arg0: i32) -> (i32, i32) {
    %c0_i32 = arith.constant 0 : i32
    %c0_i32_0 = arith.constant 0 : i32
    return %arg0, %c0_i32 : i32, i32
  }
  func.func @transform_3(%arg0: i32) -> (i32, i32) {
    %c0_i32 = arith.constant 0 : i32
    %c0_i32_0 = arith.constant 0 : i32
    %c0_i32_1 = arith.constant 0 : i32
    return %c0_i32, %c0_i32_0 : i32, i32
  }
  func.func @transform_4(%arg0: i32) -> (i32, i32) {
    %c0_i32 = arith.constant 0 : i32
    %c0_i32_0 = arith.constant 0 : i32
    %c0_i32_1 = arith.constant 0 : i32
    return %c0_i32, %c0_i32_0 : i32, i32
  }
  func.func @transform_5(%arg0: i32) -> (i32, i32) {
    %c0_i32 = arith.constant 0 : i32
    %c0_i32_0 = arith.constant 0 : i32
    %c0_i32_1 = arith.constant 0 : i32
    return %c0_i32, %c0_i32_0 : i32, i32
  }
  func.func @transform_6(%arg0: i32) -> (i32, i32) {
    %c0_i32 = arith.constant 0 : i32
    %c0_i32_0 = arith.constant 0 : i32
    %c0_i32_1 = arith.constant 0 : i32
    return %c0_i32, %c0_i32_0 : i32, i32
  }
  func.func @transform_7(%arg0: i32) -> (i32, i32) {
    %c0_i32 = arith.constant 0 : i32
    %c0_i32_0 = arith.constant 0 : i32
    %c0_i32_1 = arith.constant 0 : i32
    return %c0_i32, %c0_i32_0 : i32, i32
  }
  func.func @transform_8(%arg0: i32) -> (i32, i32) {
    %c0_i32 = arith.constant 0 : i32
    %c0_i32_0 = arith.constant 0 : i32
    return %arg0, %c0_i32 : i32, i32
  }
}

module attributes {stable_mosaic.version = 11 : i64} {
  func.func @_head_kernel(%arg0: i32, %arg1: memref<8x16x129xbf16, #tpu.memory_space<vmem>>, %arg2: memref<1x16x1xf32, #tpu.memory_space<vmem>>, %arg3: memref<1x16x1xf32, #tpu.memory_space<vmem>>, %arg4: memref<1x1xf32, #tpu.memory_space<vmem>>, %arg5: memref<8x129xf32, #tpu.memory_space<vmem>>) attributes {dimension_semantics = [#tpu.dimension_semantics<parallel>], iteration_bounds = array<i64: 1>, scalar_prefetch = 0 : i64, scratch_operands = 0 : i64, tpu.core_type = #tpu.core_type<tc>, window_params = [{transform_indices = @transform_0, window_bounds = array<i64: 8, 16, 129>}, {pipeline_mode = #tpu.pipeline_mode<synchronous>, transform_indices = @transform_1, window_bounds = array<i64: 1, 16, 1>}, {pipeline_mode = #tpu.pipeline_mode<synchronous>, transform_indices = @transform_2, window_bounds = array<i64: 1, 16, 1>}, {pipeline_mode = #tpu.pipeline_mode<synchronous>, transform_indices = @transform_3, window_bounds = array<i64: 1, 1>}, {transform_indices = @transform_4, window_bounds = array<i64: 8, 129>}]} {
    %c0 = arith.constant 0 : index
    %c0_0 = arith.constant 0 : index
    %c0_1 = arith.constant 0 : index
    %0 = vector.load %arg1[%c0, %c0_0, %c0_1] : memref<8x16x129xbf16, #tpu.memory_space<vmem>>, vector<8x16x129xbf16>
    %1 = arith.extf %0 : vector<8x16x129xbf16> to vector<8x16x129xf32>
    %c0_2 = arith.constant 0 : index
    %c0_3 = arith.constant 0 : index
    %c0_4 = arith.constant 0 : index
    %2 = vector.load %arg2[%c0_2, %c0_3, %c0_4] : memref<1x16x1xf32, #tpu.memory_space<vmem>>, vector<1x16x1xf32>
    %3 = vector.broadcast %2 : vector<1x16x1xf32> to vector<8x16x129xf32>
    %4 = arith.addf %1, %3 : vector<8x16x129xf32>
    %cst = arith.constant 0.000000e+00 : f32
    %5 = vector.broadcast %cst : f32 to vector<8x16x129xf32>
    %6 = arith.cmpf ogt, %4, %5 : vector<8x16x129xf32>
    %cst_5 = arith.constant 0.000000e+00 : f32
    %7 = vector.broadcast %cst_5 : f32 to vector<8x16x129xf32>
    %8 = arith.minimumf %4, %7 : vector<8x16x129xf32>
    %9 = math.exp %8 : vector<8x16x129xf32>
    %cst_6 = arith.constant 1.000000e+00 : f32
    %10 = vector.broadcast %cst_6 : f32 to vector<8x16x129xf32>
    %11 = arith.subf %9, %10 : vector<8x16x129xf32>
    %12 = arith.select %6, %4, %11 : vector<8x16x129xi1>, vector<8x16x129xf32>
    %c0_7 = arith.constant 0 : index
    %c0_8 = arith.constant 0 : index
    %c0_9 = arith.constant 0 : index
    %13 = vector.load %arg3[%c0_7, %c0_8, %c0_9] : memref<1x16x1xf32, #tpu.memory_space<vmem>>, vector<1x16x1xf32>
    %14 = vector.broadcast %13 : vector<1x16x1xf32> to vector<8x16x129xf32>
    %15 = arith.mulf %12, %14 : vector<8x16x129xf32>
    %cst_10 = arith.constant dense<0.000000e+00> : vector<8x129xf32>
    %16 = vector.multi_reduction <add>, %15, %cst_10 [1] : vector<8x16x129xf32> to vector<8x129xf32>
    %c0_11 = arith.constant 0 : index
    %c0_12 = arith.constant 0 : index
    %17 = vector.load %arg4[%c0_11, %c0_12] : memref<1x1xf32, #tpu.memory_space<vmem>>, vector<1x1xf32>
    %18 = vector.broadcast %17 : vector<1x1xf32> to vector<8x129xf32>
    %19 = arith.addf %16, %18 : vector<8x129xf32>
    %cst_13 = arith.constant 2.000000e+01 : f32
    %20 = vector.broadcast %cst_13 : f32 to vector<8x129xf32>
    %21 = arith.cmpf ogt, %19, %20 : vector<8x129xf32>
    %cst_14 = arith.constant 2.000000e+01 : f32
    %22 = vector.broadcast %cst_14 : f32 to vector<8x129xf32>
    %23 = arith.minimumf %19, %22 : vector<8x129xf32>
    %24 = math.exp %23 : vector<8x129xf32>
    %cst_15 = arith.constant 1.000000e+00 : f32
    %25 = vector.broadcast %cst_15 : f32 to vector<8x129xf32>
    %26 = arith.addf %25, %24 : vector<8x129xf32>
    %27 = math.log %26 : vector<8x129xf32>
    %28 = arith.select %21, %19, %27 : vector<8x129xi1>, vector<8x129xf32>
    %c0_16 = arith.constant 0 : index
    %c0_17 = arith.constant 0 : index
    %29 = vector.load %arg5[%c0_16, %c0_17] : memref<8x129xf32, #tpu.memory_space<vmem>>, vector<8x129xf32>
    tpu.vector_store %arg5[%c0_16, %c0_17], %28 {strides = array<i32>} : memref<8x129xf32, #tpu.memory_space<vmem>>, vector<8x129xf32>,
    return
  }
  func.func @transform_0(%arg0: i32) -> (i32, i32, i32) {
    %c0_i32 = arith.constant 0 : i32
    %c0_i32_0 = arith.constant 0 : i32
    %c0_i32_1 = arith.constant 0 : i32
    return %arg0, %c0_i32, %c0_i32_0 : i32, i32, i32
  }
  func.func @transform_1(%arg0: i32) -> (i32, i32, i32) {
    %c0_i32 = arith.constant 0 : i32
    %c0_i32_0 = arith.constant 0 : i32
    %c0_i32_1 = arith.constant 0 : i32
    %c0_i32_2 = arith.constant 0 : i32
    return %c0_i32, %c0_i32_0, %c0_i32_1 : i32, i32, i32
  }
  func.func @transform_2(%arg0: i32) -> (i32, i32, i32) {
    %c0_i32 = arith.constant 0 : i32
    %c0_i32_0 = arith.constant 0 : i32
    %c0_i32_1 = arith.constant 0 : i32
    %c0_i32_2 = arith.constant 0 : i32
    return %c0_i32, %c0_i32_0, %c0_i32_1 : i32, i32, i32
  }
  func.func @transform_3(%arg0: i32) -> (i32, i32) {
    %c0_i32 = arith.constant 0 : i32
    %c0_i32_0 = arith.constant 0 : i32
    %c0_i32_1 = arith.constant 0 : i32
    return %c0_i32, %c0_i32_0 : i32, i32
  }
  func.func @transform_4(%arg0: i32) -> (i32, i32) {
    %c0_i32 = arith.constant 0 : i32
    %c0_i32_0 = arith.constant 0 : i32
    return %arg0, %c0_i32 : i32, i32
  }
}

</mosaic_0001>

<llo_original>
// kernel: decoder_forward.6
$region0: #{decoder_forward.6}
  #allocation0 [shape = 'u32[]', space=smem, size = 0x4, offset = 0x4, fixed_abs, tag = 'smem constant byte address 0x4 - core index']
  #allocation1 [shape = 'u32[72,128]{1,0:T(1,128)}', space=vmem, size = 0x9000, scoped, tag = 'internal scratch']
  #allocation2 [shape = 'f32[1,1]{1,0:T(1,128)S(1)}', space=vmem, size = 0x200, scoped, tag = 'scoped memory for decoder_forward.6']
  %s0 = inlined_call_operand.vmem [shape: f32[32,64], index: 0, kind: input, shape index: {}]
  %s1 = inlined_call_operand.vmem [shape: f32[1,64], index: 1, kind: input, shape index: {}]
  %s2 = inlined_call_operand.vmem [shape: f32[32,64], index: 2, kind: input, shape index: {}]
  %s3 = inlined_call_operand.vmem [shape: bf16[128,64], index: 3, kind: input, shape index: {}]
  %s4 = inlined_call_operand.vmem [shape: f32[1,64], index: 4, kind: input, shape index: {}]
  %s5 = inlined_call_operand.vmem [shape: f32[1,64], index: 5, kind: input, shape index: {}]
  %s6 = inlined_call_operand.<no memory space> [shape: f32[1,1], index: 6, kind: input, shape index: {}]
  %s7 = inlined_call_operand.vmem [shape: bf16[128,640], index: 7, kind: input, shape index: {}]
  %s8 = inlined_call_operand.vmem [shape: bf16[32,640], index: 8, kind: output, shape index: {}]
  %s9 = sld [smem:[#allocation0]]
  $region65: #{decoder_forward.6} parent=0
    _
  %s11 = ssub.s32 1, %s9
  %s12 = scalar_select 0, %s11, %s9
  %v13 = vstv %s6
  %14 = vst [vmem:[#allocation2] sm:$0x1] %v13
  loop: start=0, step=1, limit=4
  $region2: #{decoder_forward.6} parent=0 // loop_pre_header
    _
  $region3: #{decoder_forward.6} parent=0 // loop_header
    %s16 = sphi 0, %s20
    %p17 = scmp.ge.s32.totalorder %s16, 4
    %s26 = sphi 0, %s28
    %s29 = sphi 0, %s26
    %s30 = sphi 0, %s29
    %s46 = sphi 0, %s30
    %s50 = sphi 0, %s50
    %s52 = sphi 0, %s50
    %s53 = sphi 0, %s52
    %s67 = sphi 0, %s53
    %s73 = sphi 0, %s75
    %s76 = sphi 0, %s73
    %s77 = sphi 0, %s76
    %s93 = sphi 0, %s77
    %s97 = sphi 0, %s97
    %s99 = sphi 0, %s97
    %s100 = sphi 0, %s99
    %s114 = sphi 0, %s100
    %s118 = sphi 0, %s118
    %s120 = sphi 0, %s118
    %s121 = sphi 0, %s120
    %s135 = sphi 0, %s121
    %s139 = sphi 0, %s139
    %s141 = sphi 0, %s139
    %s142 = sphi 0, %s141
    %s156 = sphi 0, %s142
    %s160 = sphi 0, %s160
    %s162 = sphi 0, %s160
    %s163 = sphi 0, %s162
    %s177 = sphi 0, %s163
    %s181 = sphi 0, %s181
    %s183 = sphi 0, %s181
    %s184 = sphi 0, %s183
    %s198 = sphi 0, %s184
    %s204 = sphi 0, %s206
    %s207 = sphi 0, %s204
    %s208 = sphi 0, %s207
    %s224 = sphi 0, %s208
  $region4: #{decoder_forward.6} parent=0 // loop_header_branch
    %19 = sbr.rel (%p17) target = $region8
  $region5: #{decoder_forward.6} parent=0 // loop_body
    %s21 = ssub.s32 %s16, 1
    %s22 = ssub.s32 %s16, 2
    %s23 = sadd.s32 %s16, 1
    %s24 = ssub.s32 %s16, %s23
    %p25 = scmp.eq.s32.totalorder %s24, 0
    %s27 = sadd.s32 %s26, 1
    %s28 = scalar_select %p25, %s26, %s27
    %p31 = pneg %p25
    %p32 = scmp.eq.s32.totalorder %s16, 1
    %p33 = por %p31, %p32
    %p34 = scmp.ne.s32.totalorder %s26, %s29
    %p35 = scmp.eq.s32.totalorder %s16, 0
    %p36 = por %p34, %p35
    %p37 = scmp.ne.s32.totalorder %s26, %s29
    %p38 = scmp.eq.s32.totalorder %s21, 1
    %p39 = por %p37, %p38
    %p40 = scmp.ne.s32.totalorder %s29, %s30
    %p41 = scmp.eq.s32.totalorder %s21, 0
    %p42 = por %p40, %p41
    %p43 = scmp.ne.s32.totalorder %s29, %s30
    %p44 = scmp.eq.s32.totalorder %s22, 1
    %p45 = por %p43, %p44
    %p47 = scmp.ne.s32.totalorder %s30, %s46
    %p48 = scmp.eq.s32.totalorder %s22, 0
    %p49 = por %p47, %p48
    %s51 = sadd.s32 %s50, 1
    %p54 = scmp.eq.s32.totalorder %s16, 1
    %p55 = scmp.ne.s32.totalorder %s50, %s52
    %p56 = scmp.eq.s32.totalorder %s16, 0
    %p57 = por %p55, %p56
    %p58 = scmp.ne.s32.totalorder %s50, %s52
    %p59 = scmp.eq.s32.totalorder %s21, 1
    %p60 = por %p58, %p59
    %p61 = scmp.ne.s32.totalorder %s52, %s53
    %p62 = scmp.eq.s32.totalorder %s21, 0
    %p63 = por %p61, %p62
    %p64 = scmp.ne.s32.totalorder %s52, %s53
    %p65 = scmp.eq.s32.totalorder %s22, 1
    %p66 = por %p64, %p65
    %p68 = scmp.ne.s32.totalorder %s53, %s67
    %p69 = scmp.eq.s32.totalorder %s22, 0
    %p70 = por %p68, %p69
    %s71 = ssub.s32 %s16, %s23
    %p72 = scmp.eq.s32.totalorder %s71, 0
    %s74 = sadd.s32 %s73, 1
    %s75 = scalar_select %p72, %s73, %s74
    %p78 = pneg %p72
    %p79 = scmp.eq.s32.totalorder %s16, 1
    %p80 = por %p78, %p79
    %p81 = scmp.ne.s32.totalorder %s73, %s76
    %p82 = scmp.eq.s32.totalorder %s16, 0
    %p83 = por %p81, %p82
    %p84 = scmp.ne.s32.totalorder %s73, %s76
    %p85 = scmp.eq.s32.totalorder %s21, 1
    %p86 = por %p84, %p85
    %p87 = scmp.ne.s32.totalorder %s76, %s77
    %p88 = scmp.eq.s32.totalorder %s21, 0
    %p89 = por %p87, %p88
    %p90 = scmp.ne.s32.totalorder %s76, %s77
    %p91 = scmp.eq.s32.totalorder %s22, 1
    %p92 = por %p90, %p91
    %p94 = scmp.ne.s32.totalorder %s77, %s93
    %p95 = scmp.eq.s32.totalorder %s22, 0
    %p96 = por %p94, %p95
    %s98 = sadd.s32 %s97, 1
    %p101 = scmp.eq.s32.totalorder %s16, 1
    %p102 = scmp.ne.s32.totalorder %s97, %s99
    %p103 = scmp.eq.s32.totalorder %s16, 0
    %p104 = por %p102, %p103
    %p105 = scmp.ne.s32.totalorder %s97, %s99
    %p106 = scmp.eq.s32.totalorder %s21, 1
    %p107 = por %p105, %p106
    %p108 = scmp.ne.s32.totalorder %s99, %s100
    %p109 = scmp.eq.s32.totalorder %s21, 0
    %p110 = por %p108, %p109
    %p111 = scmp.ne.s32.totalorder %s99, %s100
    %p112 = scmp.eq.s32.totalorder %s22, 1
    %p113 = por %p111, %p112
    %p115 = scmp.ne.s32.totalorder %s100, %s114
    %p116 = scmp.eq.s32.totalorder %s22, 0
    %p117 = por %p115, %p116
    %s119 = sadd.s32 %s118, 1
    %p122 = scmp.eq.s32.totalorder %s16, 1
    %p123 = scmp.ne.s32.totalorder %s118, %s120
    %p124 = scmp.eq.s32.totalorder %s16, 0
    %p125 = por %p123, %p124
    %p126 = scmp.ne.s32.totalorder %s118, %s120
    %p127 = scmp.eq.s32.totalorder %s21, 1
    %p128 = por %p126, %p127
    %p129 = scmp.ne.s32.totalorder %s120, %s121
    %p130 = scmp.eq.s32.totalorder %s21, 0
    %p131 = por %p129, %p130
    %p132 = scmp.ne.s32.totalorder %s120, %s121
    %p133 = scmp.eq.s32.totalorder %s22, 1
    %p134 = por %p132, %p133
    %p136 = scmp.ne.s32.totalorder %s121, %s135
    %p137 = scmp.eq.s32.totalorder %s22, 0
    %p138 = por %p136, %p137
    %s140 = sadd.s32 %s139, 1
    %p143 = scmp.eq.s32.totalorder %s16, 1
    %p144 = scmp.ne.s32.totalorder %s139, %s141
    %p145 = scmp.eq.s32.totalorder %s16, 0
    %p146 = por %p144, %p145
    %p147 = scmp.ne.s32.totalorder %s139, %s141
    %p148 = scmp.eq.s32.totalorder %s21, 1
    %p149 = por %p147, %p148
    %p150 = scmp.ne.s32.totalorder %s141, %s142
    %p151 = scmp.eq.s32.totalorder %s21, 0
    %p152 = por %p150, %p151
    %p153 = scmp.ne.s32.totalorder %s141, %s142
    %p154 = scmp.eq.s32.totalorder %s22, 1
    %p155 = por %p153, %p154
    %p157 = scmp.ne.s32.totalorder %s142, %s156
    %p158 = scmp.eq.s32.totalorder %s22, 0
    %p159 = por %p157, %p158
    %s161 = sadd.s32 %s160, 1
    %p164 = scmp.eq.s32.totalorder %s16, 1
    %p165 = scmp.ne.s32.totalorder %s160, %s162
    %p166 = scmp.eq.s32.totalorder %s16, 0
    %p167 = por %p165, %p166
    %p168 = scmp.ne.s32.totalorder %s160, %s162
    %p169 = scmp.eq.s32.totalorder %s21, 1
    %p170 = por %p168, %p169
    %p171 = scmp.ne.s32.totalorder %s162, %s163
    %p172 = scmp.eq.s32.totalorder %s21, 0
    %p173 = por %p171, %p172
    %p174 = scmp.ne.s32.totalorder %s162, %s163
    %p175 = scmp.eq.s32.totalorder %s22, 1
    %p176 = por %p174, %p175
    %p178 = scmp.ne.s32.totalorder %s163, %s177
    %p179 = scmp.eq.s32.totalorder %s22, 0
    %p180 = por %p178, %p179
    %s182 = sadd.s32 %s181, 1
    %p185 = scmp.eq.s32.totalorder %s16, 1
    %p186 = scmp.ne.s32.totalorder %s181, %s183
    %p187 = scmp.eq.s32.totalorder %s16, 0
    %p188 = por %p186, %p187
    %p189 = scmp.ne.s32.totalorder %s181, %s183
    %p190 = scmp.eq.s32.totalorder %s21, 1
    %p191 = por %p189, %p190
    %p192 = scmp.ne.s32.totalorder %s183, %s184
    %p193 = scmp.eq.s32.totalorder %s21, 0
    %p194 = por %p192, %p193
    %p195 = scmp.ne.s32.totalorder %s183, %s184
    %p196 = scmp.eq.s32.totalorder %s22, 1
    %p197 = por %p195, %p196
    %p199 = scmp.ne.s32.totalorder %s184, %s198
    %p200 = scmp.eq.s32.totalorder %s22, 0
    %p201 = por %p199, %p200
    %s202 = ssub.s32 %s16, %s23
    %p203 = scmp.eq.s32.totalorder %s202, 0
    %s205 = sadd.s32 %s204, 1
    %s206 = scalar_select %p203, %s204, %s205
    %p209 = pneg %p203
    %p210 = scmp.eq.s32.totalorder %s16, 1
    %p211 = por %p209, %p210
    %p212 = scmp.ne.s32.totalorder %s204, %s207
    %p213 = scmp.eq.s32.totalorder %s16, 0
    %p214 = por %p212, %p213
    %p215 = scmp.ne.s32.totalorder %s204, %s207
    %p216 = scmp.eq.s32.totalorder %s21, 1
    %p217 = por %p215, %p216
    %p218 = scmp.ne.s32.totalorder %s207, %s208
    %p219 = scmp.eq.s32.totalorder %s21, 0
    %p220 = por %p218, %p219
    %p221 = scmp.ne.s32.totalorder %s207, %s208
    %p222 = scmp.eq.s32.totalorder %s22, 1
    %p223 = por %p221, %p222
    %p225 = scmp.ne.s32.totalorder %s208, %s224
    %p226 = scmp.eq.s32.totalorder %s22, 0
    %p227 = por %p225, %p226
    %p228 = scmp.le.s32.totalorder 1, %s16
    %p229 = scmp.lt.s32.totalorder %s16, 3
    %p230 = pnand %p228, %p229
    %p231 = pneg %p230
    // Predicated region
    $region9: #{decoder_forward.6} parent=5 // pred_check
      _
    $region10: #{decoder_forward.6} parent=5 // pred_check_branch
      %233 = sbr.rel (%p230) target = $region12
    $region11: #{decoder_forward.6} parent=5 // pred_region
      %s234 = ssub.s32 %s16, 1
      // Predicated region
      $region13: #{decoder_forward.6} parent=11 // pred_check
        %p235 = pneg %p63
      $region14: #{decoder_forward.6} parent=11 // pred_check_branch
        %237 = sbr.rel (%p235) target = $region16
      $region15: #{decoder_forward.6} parent=11 // pred_region
        _
      $region16: #{decoder_forward.6} parent=11 // pred_fallthru
        _
      // Predicated region
      $region17: #{decoder_forward.6} parent=11 // pred_check
        %p238 = pneg %p110
      $region18: #{decoder_forward.6} parent=11 // pred_check_branch
        %240 = sbr.rel (%p238) target = $region20
      $region19: #{decoder_forward.6} parent=11 // pred_region
        _
      $region20: #{decoder_forward.6} parent=11 // pred_fallthru
        _
      // Predicated region
      $region21: #{decoder_forward.6} parent=11 // pred_check
        %p241 = pneg %p131
      $region22: #{decoder_forward.6} parent=11 // pred_check_branch
        %243 = sbr.rel (%p241) target = $region24
      $region23: #{decoder_forward.6} parent=11 // pred_region
        _
      $region24: #{decoder_forward.6} parent=11 // pred_fallthru
        _
      // Predicated region
      $region25: #{decoder_forward.6} parent=11 // pred_check
        %p244 = pneg %p152
      $region26: #{decoder_forward.6} parent=11 // pred_check_branch
        %246 = sbr.rel (%p244) target = $region28
      $region27: #{decoder_forward.6} parent=11 // pred_region
        _
      $region28: #{decoder_forward.6} parent=11 // pred_fallthru
        _
      // Predicated region
      $region29: #{decoder_forward.6} parent=11 // pred_check
        %p247 = pneg %p173
      $region30: #{decoder_forward.6} parent=11 // pred_check_branch
        %249 = sbr.rel (%p247) target = $region32
      $region31: #{decoder_forward.6} parent=11 // pred_region
        _
      $region32: #{decoder_forward.6} parent=11 // pred_fallthru
        _
      // Predicated region
      $region33: #{decoder_forward.6} parent=11 // pred_check
        %p250 = pneg %p194
      $region34: #{decoder_forward.6} parent=11 // pred_check_branch
        %252 = sbr.rel (%p250) target = $region36
      $region35: #{decoder_forward.6} parent=11 // pred_region
        _
      $region36: #{decoder_forward.6} parent=11 // pred_fallthru
        _
    $region12: #{decoder_forward.6} parent=5 // pred_fallthru
      _
    %p253 = scmp.lt.s32.totalorder %s16, 2
    // Predicated region
    $region37: #{decoder_forward.6} parent=5 // pred_check
      %p254 = pneg %p253
    $region38: #{decoder_forward.6} parent=5 // pred_check_branch
      %256 = sbr.rel (%p254) target = $region40
    $region39: #{decoder_forward.6} parent=5 // pred_region
      // Predicated region
      $region41: #{decoder_forward.6} parent=39 // pred_check
        %p257 = pneg %p36
      $region42: #{decoder_forward.6} parent=39 // pred_check_branch
        %259 = sbr.rel (%p257) target = $region44
      $region43: #{decoder_forward.6} parent=39 // pred_region
        %s260 = smul.u32 2, %s16
        %p261 = scmp.lt.s32.totalorder %s260, 3
        %s262 = scalar_select %p261, %s260, 3
        %s263 = smul.addr %s262, 8
        %s264 = scalar_lea.vmem %s0, %s263
        %s265 = smul.u32 2, %s16
      $region44: #{decoder_forward.6} parent=39 // pred_fallthru
        _
      // Predicated region
      $region45: #{decoder_forward.6} parent=39 // pred_check
        %p266 = pneg %p83
      $region46: #{decoder_forward.6} parent=39 // pred_check_branch
        %268 = sbr.rel (%p266) target = $region48
      $region47: #{decoder_forward.6} parent=39 // pred_region
        %s269 = smul.u32 2, %s16
        %p270 = scmp.lt.s32.totalorder %s269, 3
        %s271 = scalar_select %p270, %s269, 3
        %s272 = smul.addr %s271, 8
        %s273 = scalar_lea.vmem %s2, %s272
        %s274 = smul.u32 2, %s16
      $region48: #{decoder_forward.6} parent=39 // pred_fallthru
        _
    $region40: #{decoder_forward.6} parent=5 // pred_fallthru
      _
    %p275 = scmp.le.s32.totalorder 1, %s16
    %p276 = scmp.lt.s32.totalorder %s16, 3
    %p277 = pnand %p275, %p276
    %p278 = pneg %p277
    // Predicated region
    $region49: #{decoder_forward.6} parent=5 // pred_check
      _
    $region50: #{decoder_forward.6} parent=5 // pred_check_branch
      %280 = sbr.rel (%p277) target = $region52
    $region51: #{decoder_forward.6} parent=5 // pred_region
      %s281 = ssub.s32 %s16, 1
      %s282 = smul.u32 2, %s21
      %p283 = scmp.lt.s32.totalorder %s282, 3
      %s284 = scalar_select %p283, %s282, 3
      %s285 = smul.addr %s284, 8
      %s286 = scalar_lea.vmem %s0, %s285
      %p287 = pneg %p42
      %p288 = pneg %p39
      %p289 = pneg %p63
      %p290 = pneg %p60
      %s291 = smul.u32 2, %s21
      %p292 = scmp.lt.s32.totalorder %s291, 3
      %s293 = scalar_select %p292, %s291, 3
      %s294 = smul.addr %s293, 8
      %s295 = scalar_lea.vmem %s2, %s294
      %p296 = pneg %p89
      %p297 = pneg %p86
      %p298 = pneg %p110
      %p299 = pneg %p107
      %p300 = pneg %p131
      %p301 = pneg %p128
      %p302 = pneg %p152
      %p303 = pneg %p149
      %p304 = pneg %p173
      %p305 = pneg %p170
      %p306 = pneg %p194
      %p307 = pneg %p191
      %p308 = pneg %p220
      %p309 = pneg %p217
      %s310 = smul.u32 2, %s21
      %p311 = scmp.lt.s32.totalorder %s310, 3
      %s312 = scalar_select %p311, %s310, 3
      %s313 = smul.addr %s312, 5
      %s314 = smul.addr %s313, 4
      %s315 = scalar_lea.vmem %s8, %s314
      %s316 = smul.u32 2, %s21
      %p317 = scmp.lt.s32.totalorder %s316, 3
      %s318 = scalar_select %p317, %s316, 3
      %s319 = smul.addr %s318, 8
      %s320 = scalar_lea.vmem %s0, %s319
      %s321 = smul.u32 2, %s21
      %s322 = smul.u32 2, %s21
      %p323 = scmp.lt.s32.totalorder %s322, 3
      %s324 = scalar_select %p323, %s322, 3
      %s325 = smul.addr %s324, 8
      %s326 = scalar_lea.vmem %s2, %s325
      %s327 = smul.u32 2, %s21
      %s328 = smul.u32 2, %s21
      %p329 = scmp.lt.s32.totalorder %s328, 3
      %s330 = scalar_select %p329, %s328, 3
      %s331 = smul.addr %s330, 5
      %s332 = smul.addr %s331, 4
      %s333 = scalar_lea.vmem %s8, %s332
      %s334 = smul.u32 2, %s21
      %v335 = vld [vmem:[%s320] sm:$0xff]
      %v336 = vld [vmem:[%s320 + $0x8] sm:$0xff]
      %v337 = vpack.c.bf16 %v335, %v335
      %v338 = vpack.c.bf16 %v336, %v336
      %v339 = vld [vmem:[%s326] sm:$0xff]
      %v340 = vld [vmem:[%s326 + $0x8] sm:$0xff]
      %v341 = vpack.c.bf16 %v339, %v339
      %v342 = vpack.c.bf16 %v340, %v340
      %v345 = vunpack.c.l.b16 %v337
      %v346 = vunpack.c.l.b16 %v338
      %v347 = vpack.c.b16 %v346, %v345
      %v350 = vunpack.c.l.b16 %v341
      %v351 = vunpack.c.l.b16 %v342
      %v352 = vpack.c.b16 %v351, %v350
      %353 = vrot.lane.b32.xlu0 %v352, 64
      %v354 = vpop.permute.xlu0 %353
      %vm355 = vcmask 523264
      %v358 = vsel %vm355, %v347, %v354
      %v360 = vld [vmem:[%s3] sm:$0xf]
      %v361 = vld [vmem:[%s3 + $0x4] sm:$0xf]
      %v362 = vld [vmem:[%s3 + $0x8] sm:$0xf]
      %v363 = vld [vmem:[%s3 + $0xc] sm:$0xf]
      %v364 = vld [vmem:[%s3 + $0x10] sm:$0xf]
      %v365 = vld [vmem:[%s3 + $0x14] sm:$0xf]
      %v366 = vld [vmem:[%s3 + $0x18] sm:$0xf]
      %v367 = vld [vmem:[%s3 + $0x1c] sm:$0xf]
      %v368 = vld [vmem:[%s3 + $0x20] sm:$0xf]
      %v369 = vld [vmem:[%s3 + $0x24] sm:$0xf]
      %v370 = vld [vmem:[%s3 + $0x28] sm:$0xf]
      %v371 = vld [vmem:[%s3 + $0x2c] sm:$0xf]
      %v372 = vld [vmem:[%s3 + $0x30] sm:$0xf]
      %v373 = vld [vmem:[%s3 + $0x34] sm:$0xf]
      %v374 = vld [vmem:[%s3 + $0x38] sm:$0xf]
      %v375 = vld [vmem:[%s3 + $0x3c] sm:$0xf]
      %v376 = vld [vmem:[%s4] sm:$0x1]
      %v378 = vperm.slane %v376, 0
      %v396 = vunpack.c.l.b16 %v360
      %v397 = vunpack.c.l.b16 %v361
      %v398 = vunpack.c.l.b16 %v362
      %v399 = vunpack.c.l.b16 %v363
      %v400 = vunpack.c.l.b16 %v364
      %v401 = vunpack.c.l.b16 %v365
      %v402 = vunpack.c.l.b16 %v366
      %v403 = vunpack.c.l.b16 %v367
      %v404 = vunpack.c.l.b16 %v368
      %v405 = vunpack.c.l.b16 %v369
      %v406 = vunpack.c.l.b16 %v370
      %v407 = vunpack.c.l.b16 %v371
      %v408 = vunpack.c.l.b16 %v372
      %v409 = vunpack.c.l.b16 %v373
      %v410 = vunpack.c.l.b16 %v374
      %v411 = vunpack.c.l.b16 %v375
      %v412 = vpack.c.b16 %v397, %v396
      %v413 = vpack.c.b16 %v399, %v398
      %v414 = vpack.c.b16 %v401, %v400
      %v415 = vpack.c.b16 %v403, %v402
      %v416 = vpack.c.b16 %v405, %v404
      %v417 = vpack.c.b16 %v407, %v406
      %v418 = vpack.c.b16 %v409, %v408
      %v419 = vpack.c.b16 %v411, %v410
      %428 = vmatpush.bf16.msra.mxu0 %v419
      %429 = vmatpush.bf16.msra.mxu0 %v418
      %430 = vmatpush.bf16.msra.mxu0 %v417
      %431 = vmatpush.bf16.msra.mxu0 %v416
      %432 = vmatpush.bf16.msra.mxu0 %v415
      %433 = vmatpush.bf16.msra.mxu0 %v414
      %434 = vmatpush.bf16.msra.mxu0 %v413
      %435 = vmatpush.bf16.msra.mxu0 %v412
      %436 = vmatmul.bf16.gmra.mxu0 %v358
      %v437 = vpop.f32.mrf.mxu0
      %v438 = vadd.f32 %v378, %v437
      %v439 = vpop.f32.mrf.mxu0
      %v440 = vadd.f32 %v378, %v439
      %441 = vdwg.mxu0
      %v442 = vmax.f32 %v438, 0.0
      %v443 = vmax.f32 %v440, 0.0
      %v444 = vld [vmem:[%s5] sm:$0x1]
      %v446 = vperm.slane %v444, 0
      %v448 = vmul.f32 %v442, %v446
      %v449 = vmul.f32 %v443, %v446
      %v450 = vsel %vm355, %v448, 0.0
      %451 = vadd.xlane.f32.xlu0 %v450
      %v452 = vpop.xlane.xlu0 %451
      %v453 = vsel %vm355, %v449, 0.0
      %454 = vadd.xlane.f32.xlu0 %v453
      %v455 = vpop.xlane.xlu0 %454
      %v456 = vld [vmem:[#allocation2] sm:$0x1]
      %v458 = vperm.slane %v456, 0
      %v460 = vadd.f32 %v452, %v458
      %v461 = vadd.f32 %v455, %v458
      %v462 = vxor.u32 %v460, 2147483648
      %v463 = vxor.u32 %v461, 2147483648
      %v464 = vmul.f32 %v462, 1.442695
      %v465 = vpow.pop %v464
      %v466 = vmul.f32 %v463, 1.442695
      %v467 = vpow.pop %v466
      %v468 = vadd.f32 %v465, 1.0
      %v469 = vadd.f32 %v467, 1.0
      %v470 = vrcp.pop %v468
      %v471 = vmul.f32 %v468, %v470
      %v472 = vsub.f32 1.0, %v471
      %v473 = vmul.f32 %v470, %v472
      %v474 = vadd.f32 %v470, %v473
      %vm475 = vweird.f32 %v468
      %vm476 = vweird.f32 %v470
      %vm477 = vmor %vm475, %vm476
      %v478 = vsel %vm477, %v470, %v474
      %v479 = vand.u32 2147483647, %v468
      %vm480 = vcmp.eq.f32.partialorder %v479, 8.507059e+37
      %v481 = vand.u32 %v468, 2147483648
      %v482 = vor.u32 1.1754944e-38, %v481
      %v483 = vsel %vm480, %v482, %v478
      %v484 = vmul.f32 1.0, %v483
      %v485 = vrcp.pop %v469
      %v486 = vmul.f32 %v469, %v485
      %v487 = vsub.f32 1.0, %v486
      %v488 = vmul.f32 %v485, %v487
      %v489 = vadd.f32 %v485, %v488
      %vm490 = vweird.f32 %v469
      %vm491 = vweird.f32 %v485
      %vm492 = vmor %vm490, %vm491
      %v493 = vsel %vm492, %v485, %v489
      %v494 = vand.u32 2147483647, %v469
      %vm495 = vcmp.eq.f32.partialorder %v494, 8.507059e+37
      %v496 = vand.u32 %v469, 2147483648
      %v497 = vor.u32 1.1754944e-38, %v496
      %v498 = vsel %vm495, %v497, %v493
      %v499 = vmul.f32 1.0, %v498
      %501 = vset.pattern.permute.xlu0 0
      %502 = vperm.xlu0 %501, %v484
      %v503 = vpop.permute.xlu0 %502
      %506 = vset.pattern.permute.xlu0 0
      %507 = vperm.xlu0 %506, %v499
      %v508 = vpop.permute.xlu0 %507
      %v510 = vmul.f32 %v339, %v503
      %v511 = vmul.f32 %v340, %v508
      %v512 = vpack.c.bf16 %v510, %v510
      %v513 = vpack.c.bf16 %v511, %v511
      %v516 = vunpack.c.l.b16 %v512
      %v517 = vunpack.c.l.b16 %v513
      %v518 = vpack.c.b16 %v517, %v516
      %519 = vrot.lane.b32.xlu0 %v518, 64
      %v520 = vpop.permute.xlu0 %519
      %v522 = vsel %vm355, %v347, %v520
      %v524 = vld [vmem:[%s7] sm:$0xff]
      %v525 = vld [vmem:[%s7 + $0x8] sm:$0xff]
      %v526 = vld [vmem:[%s7 + $0x10] sm:$0xf]
      %v527 = vld [vmem:[%s7 + $0x14] sm:$0xff]
      %v528 = vld [vmem:[%s7 + $0x1c] sm:$0xff]
      %v529 = vld [vmem:[%s7 + $0x24] sm:$0xf]
      %v530 = vld [vmem:[%s7 + $0x28] sm:$0xff]
      %v531 = vld [vmem:[%s7 + $0x30] sm:$0xff]
      %v532 = vld [vmem:[%s7 + $0x38] sm:$0xf]
      %v533 = vld [vmem:[%s7 + $0x3c] sm:$0xff]
      %v534 = vld [vmem:[%s7 + $0x44] sm:$0xff]
      %v535 = vld [vmem:[%s7 + $0x4c] sm:$0xf]
      %v536 = vld [vmem:[%s7 + $0x50] sm:$0xff]
      %v537 = vld [vmem:[%s7 + $0x58] sm:$0xff]
      %v538 = vld [vmem:[%s7 + $0x60] sm:$0xf]
      %v539 = vld [vmem:[%s7 + $0x64] sm:$0xff]
      %v540 = vld [vmem:[%s7 + $0x6c] sm:$0xff]
      %v541 = vld [vmem:[%s7 + $0x74] sm:$0xf]
      %v542 = vld [vmem:[%s7 + $0x78] sm:$0xff]
      %v543 = vld [vmem:[%s7 + $0x80] sm:$0xff]
      %v544 = vld [vmem:[%s7 + $0x88] sm:$0xf]
      %v545 = vld [vmem:[%s7 + $0x8c] sm:$0xff]
      %v546 = vld [vmem:[%s7 + $0x94] sm:$0xff]
      %v547 = vld [vmem:[%s7 + $0x9c] sm:$0xf]
      %v548 = vld [vmem:[%s7 + $0xa0] sm:$0xff]
      %v549 = vld [vmem:[%s7 + $0xa8] sm:$0xff]
      %v550 = vld [vmem:[%s7 + $0xb0] sm:$0xf]
      %v551 = vld [vmem:[%s7 + $0xb4] sm:$0xff]
      %v552 = vld [vmem:[%s7 + $0xbc] sm:$0xff]
      %v553 = vld [vmem:[%s7 + $0xc4] sm:$0xf]
      %v554 = vld [vmem:[%s7 + $0xc8] sm:$0xff]
      %v555 = vld [vmem:[%s7 + $0xd0] sm:$0xff]
      %v556 = vld [vmem:[%s7 + $0xd8] sm:$0xf]
      %v557 = vld [vmem:[%s7 + $0xdc] sm:$0xff]
      %v558 = vld [vmem:[%s7 + $0xe4] sm:$0xff]
      %v559 = vld [vmem:[%s7 + $0xec] sm:$0xf]
      %v560 = vld [vmem:[%s7 + $0xf0] sm:$0xff]
      %v561 = vld [vmem:[%s7 + $0xf8] sm:$0xff]
      %v562 = vld [vmem:[%s7 + $0x100] sm:$0xf]
      %v563 = vld [vmem:[%s7 + $0x104] sm:$0xff]
      %v564 = vld [vmem:[%s7 + $0x10c] sm:$0xff]
      %v565 = vld [vmem:[%s7 + $0x114] sm:$0xf]
      %v566 = vld [vmem:[%s7 + $0x118] sm:$0xff]
      %v567 = vld [vmem:[%s7 + $0x120] sm:$0xff]
      %v568 = vld [vmem:[%s7 + $0x128] sm:$0xf]
      %v569 = vld [vmem:[%s7 + $0x12c] sm:$0xff]
      %v570 = vld [vmem:[%s7 + $0x134] sm:$0xff]
      %v571 = vld [vmem:[%s7 + $0x13c] sm:$0xf]
      %v620 = vunpack.c.l.b16 %v524
      %v621 = vunpack.c.h.b16 %v524
      %v622 = vunpack.c.l.b16 %v525
      %v623 = vunpack.c.h.b16 %v525
      %v624 = vunpack.c.l.b16 %v526
      %v625 = vunpack.c.l.b16 %v527
      %v626 = vunpack.c.h.b16 %v527
      %v627 = vunpack.c.l.b16 %v528
      %v628 = vunpack.c.h.b16 %v528
      %v629 = vunpack.c.l.b16 %v529
      %v630 = vunpack.c.l.b16 %v530
      %v631 = vunpack.c.h.b16 %v530
      %v632 = vunpack.c.l.b16 %v531
      %v633 = vunpack.c.h.b16 %v531
      %v634 = vunpack.c.l.b16 %v532
      %v635 = vunpack.c.l.b16 %v533
      %v636 = vunpack.c.h.b16 %v533
      %v637 = vunpack.c.l.b16 %v534
      %v638 = vunpack.c.h.b16 %v534
      %v639 = vunpack.c.l.b16 %v535
      %v640 = vunpack.c.l.b16 %v536
      %v641 = vunpack.c.h.b16 %v536
      %v642 = vunpack.c.l.b16 %v537
      %v643 = vunpack.c.h.b16 %v537
      %v644 = vunpack.c.l.b16 %v538
      %v645 = vunpack.c.l.b16 %v539
      %v646 = vunpack.c.h.b16 %v539
      %v647 = vunpack.c.l.b16 %v540
      %v648 = vunpack.c.h.b16 %v540
      %v649 = vunpack.c.l.b16 %v541
      %v650 = vunpack.c.l.b16 %v542
      %v651 = vunpack.c.h.b16 %v542
      %v652 = vunpack.c.l.b16 %v543
      %v653 = vunpack.c.h.b16 %v543
      %v654 = vunpack.c.l.b16 %v544
      %v655 = vunpack.c.l.b16 %v545
      %v656 = vunpack.c.h.b16 %v545
      %v657 = vunpack.c.l.b16 %v546
      %v658 = vunpack.c.h.b16 %v546
      %v659 = vunpack.c.l.b16 %v547
      %v660 = vunpack.c.l.b16 %v548
      %v661 = vunpack.c.h.b16 %v548
      %v662 = vunpack.c.l.b16 %v549
      %v663 = vunpack.c.h.b16 %v549
      %v664 = vunpack.c.l.b16 %v550
      %v665 = vunpack.c.l.b16 %v551
      %v666 = vunpack.c.h.b16 %v551
      %v667 = vunpack.c.l.b16 %v552
      %v668 = vunpack.c.h.b16 %v552
      %v669 = vunpack.c.l.b16 %v553
      %v670 = vunpack.c.l.b16 %v554
      %v671 = vunpack.c.h.b16 %v554
      %v672 = vunpack.c.l.b16 %v555
      %v673 = vunpack.c.h.b16 %v555
      %v674 = vunpack.c.l.b16 %v556
      %v675 = vunpack.c.l.b16 %v557
      %v676 = vunpack.c.h.b16 %v557
      %v677 = vunpack.c.l.b16 %v558
      %v678 = vunpack.c.h.b16 %v558
      %v679 = vunpack.c.l.b16 %v559
      %v680 = vunpack.c.l.b16 %v560
      %v681 = vunpack.c.h.b16 %v560
      %v682 = vunpack.c.l.b16 %v561
      %v683 = vunpack.c.h.b16 %v561
      %v684 = vunpack.c.l.b16 %v562
      %v685 = vunpack.c.l.b16 %v563
      %v686 = vunpack.c.h.b16 %v563
      %v687 = vunpack.c.l.b16 %v564
      %v688 = vunpack.c.h.b16 %v564
      %v689 = vunpack.c.l.b16 %v565
      %v690 = vunpack.c.l.b16 %v566
      %v691 = vunpack.c.h.b16 %v566
      %v692 = vunpack.c.l.b16 %v567
      %v693 = vunpack.c.h.b16 %v567
      %v694 = vunpack.c.l.b16 %v568
      %v695 = vunpack.c.l.b16 %v569
      %v696 = vunpack.c.h.b16 %v569
      %v697 = vunpack.c.l.b16 %v570
      %v698 = vunpack.c.h.b16 %v570
      %v699 = vunpack.c.l.b16 %v571
      %v700 = vpack.c.b16 %v625, %v620
      %v701 = vpack.c.b16 %v626, %v621
      %v702 = vpack.c.b16 %v627, %v622
      %v703 = vpack.c.b16 %v628, %v623
      %v704 = vpack.c.b16 %v629, %v624
      %v705 = vpack.c.b16 %v635, %v630
      %v706 = vpack.c.b16 %v636, %v631
      %v707 = vpack.c.b16 %v637, %v632
      %v708 = vpack.c.b16 %v638, %v633
      %v709 = vpack.c.b16 %v639, %v634
      %v710 = vpack.c.b16 %v645, %v640
      %v711 = vpack.c.b16 %v646, %v641
      %v712 = vpack.c.b16 %v647, %v642
      %v713 = vpack.c.b16 %v648, %v643
      %v714 = vpack.c.b16 %v649, %v644
      %v715 = vpack.c.b16 %v655, %v650
      %v716 = vpack.c.b16 %v656, %v651
      %v717 = vpack.c.b16 %v657, %v652
      %v718 = vpack.c.b16 %v658, %v653
      %v719 = vpack.c.b16 %v659, %v654
      %v720 = vpack.c.b16 %v665, %v660
      %v721 = vpack.c.b16 %v666, %v661
      %v722 = vpack.c.b16 %v667, %v662
      %v723 = vpack.c.b16 %v668, %v663
      %v724 = vpack.c.b16 %v669, %v664
      %v725 = vpack.c.b16 %v675, %v670
      %v726 = vpack.c.b16 %v676, %v671
      %v727 = vpack.c.b16 %v677, %v672
      %v728 = vpack.c.b16 %v678, %v673
      %v729 = vpack.c.b16 %v679, %v674
      %v730 = vpack.c.b16 %v685, %v680
      %v731 = vpack.c.b16 %v686, %v681
      %v732 = vpack.c.b16 %v687, %v682
      %v733 = vpack.c.b16 %v688, %v683
      %v734 = vpack.c.b16 %v689, %v684
      %v735 = vpack.c.b16 %v695, %v690
      %v736 = vpack.c.b16 %v696, %v691
      %v737 = vpack.c.b16 %v697, %v692
      %v738 = vpack.c.b16 %v698, %v693
      %v739 = vpack.c.b16 %v699, %v694
      %780 = vmatpush.bf16.msra.mxu0 %v735
      %781 = vmatpush.bf16.msra.mxu0 %v730
      %782 = vmatpush.bf16.msra.mxu0 %v725
      %783 = vmatpush.bf16.msra.mxu0 %v720
      %784 = vmatpush.bf16.msra.mxu0 %v715
      %785 = vmatpush.bf16.msra.mxu0 %v710
      %786 = vmatpush.bf16.msra.mxu0 %v705
      %787 = vmatpush.bf16.msra.mxu0 %v700
      %788 = vmatmul.bf16.gmra.mxu0 %v522
      %v789 = vpop.f32.mrf.mxu0
      %v790 = vadd.f32 0.0, %v789
      %v791 = vpop.f32.mrf.mxu0
      %v792 = vadd.f32 0.0, %v791
      %793 = vdwg.mxu0
      %794 = vmatpush.bf16.msra.mxu0 %v736
      %795 = vmatpush.bf16.msra.mxu0 %v731
      %796 = vmatpush.bf16.msra.mxu0 %v726
      %797 = vmatpush.bf16.msra.mxu0 %v721
      %798 = vmatpush.bf16.msra.mxu0 %v716
      %799 = vmatpush.bf16.msra.mxu0 %v711
      %800 = vmatpush.bf16.msra.mxu0 %v706
      %801 = vmatpush.bf16.msra.mxu0 %v701
      %802 = vmatmul.bf16.gmra.mxu0 %v522
      %v803 = vpop.f32.mrf.mxu0
      %v804 = vadd.f32 0.0, %v803
      %v805 = vpop.f32.mrf.mxu0
      %v806 = vadd.f32 0.0, %v805
      %807 = vdwg.mxu0
      %808 = vmatpush.bf16.msra.mxu0 %v737
      %809 = vmatpush.bf16.msra.mxu0 %v732
      %810 = vmatpush.bf16.msra.mxu0 %v727
      %811 = vmatpush.bf16.msra.mxu0 %v722
      %812 = vmatpush.bf16.msra.mxu0 %v717
      %813 = vmatpush.bf16.msra.mxu0 %v712
      %814 = vmatpush.bf16.msra.mxu0 %v707
      %815 = vmatpush.bf16.msra.mxu0 %v702
      %816 = vmatmul.bf16.gmra.mxu0 %v522
      %v817 = vpop.f32.mrf.mxu0
      %v818 = vadd.f32 0.0, %v817
      %v819 = vpop.f32.mrf.mxu0
      %v820 = vadd.f32 0.0, %v819
      %821 = vdwg.mxu0
      %822 = vmatpush.bf16.msra.mxu0 %v738
      %823 = vmatpush.bf16.msra.mxu0 %v733
      %824 = vmatpush.bf16.msra.mxu0 %v728
      %825 = vmatpush.bf16.msra.mxu0 %v723
      %826 = vmatpush.bf16.msra.mxu0 %v718
      %827 = vmatpush.bf16.msra.mxu0 %v713
      %828 = vmatpush.bf16.msra.mxu0 %v708
      %829 = vmatpush.bf16.msra.mxu0 %v703
      %830 = vmatmul.bf16.gmra.mxu0 %v522
      %v831 = vpop.f32.mrf.mxu0
      %v832 = vadd.f32 0.0, %v831
      %v833 = vpop.f32.mrf.mxu0
      %v834 = vadd.f32 0.0, %v833
      %835 = vdwg.mxu0
      %836 = vmatpush.bf16.msra.mxu0 %v739
      %837 = vmatpush.bf16.msra.mxu0 %v734
      %838 = vmatpush.bf16.msra.mxu0 %v729
      %839 = vmatpush.bf16.msra.mxu0 %v724
      %840 = vmatpush.bf16.msra.mxu0 %v719
      %841 = vmatpush.bf16.msra.mxu0 %v714
      %842 = vmatpush.bf16.msra.mxu0 %v709
      %843 = vmatpush.bf16.msra.mxu0 %v704
      %844 = vmatmul.bf16.gmra.mxu0 %v522
      %v845 = vpop.f32.mrf.mxu0
      %v846 = vadd.f32 0.0, %v845
      %v847 = vpop.f32.mrf.mxu0
      %v848 = vadd.f32 0.0, %v847
      %849 = vdwg.mxu0
      %v850 = vpack.c.bf16 %v804, %v790
      %v851 = vpack.c.bf16 %v832, %v818
      %v852 = vpack.c.bf16 %v846, %v846
      %v853 = vpack.c.bf16 %v806, %v792
      %v854 = vpack.c.bf16 %v834, %v820
      %v855 = vpack.c.bf16 %v848, %v848
      %856 = vst [vmem:[%s333] sm:$0xff] %v850
      %857 = vst [vmem:[%s333 + $0x8] sm:$0xff] %v851
      %858 = vst [vmem:[%s333 + $0x10] sm:$0xf] %v852
      %859 = vst [vmem:[%s333 + $0x14] sm:$0xff] %v853
      %860 = vst [vmem:[%s333 + $0x1c] sm:$0xff] %v854
      %861 = vst [vmem:[%s333 + $0x24] sm:$0xf] %v855
      %s862 = smul.u32 2, %s21
      %p863 = scmp.lt.s32.totalorder %s862, 3
      %s864 = scalar_select %p863, %s862, 3
      %s865 = smul.addr %s864, 5
      %s866 = smul.addr %s865, 4
      %s867 = scalar_lea.vmem %s8, %s866
      // Predicated region
      $region53: #{decoder_forward.6} parent=51 // pred_check
        %p868 = pneg %p217
      $region54: #{decoder_forward.6} parent=51 // pred_check_branch
        %870 = sbr.rel (%p868) target = $region56
      $region55: #{decoder_forward.6} parent=51 // pred_region
        %s871 = smul.u32 2, %s21
      $region56: #{decoder_forward.6} parent=51 // pred_fallthru
        _
    $region52: #{decoder_forward.6} parent=5 // pred_fallthru
      _
    %p872 = scmp.le.s32.totalorder 2, %s16
    // Predicated region
    $region57: #{decoder_forward.6} parent=5 // pred_check
      %p873 = pneg %p872
    $region58: #{decoder_forward.6} parent=5 // pred_check_branch
      %875 = sbr.rel (%p873) target = $region60
    $region59: #{decoder_forward.6} parent=5 // pred_region
      %s876 = ssub.s32 %s16, 2
      // Predicated region
      $region61: #{decoder_forward.6} parent=59 // pred_check
        %p877 = pneg %p223
      $region62: #{decoder_forward.6} parent=59 // pred_check_branch
        %879 = sbr.rel (%p877) target = $region64
      $region63: #{decoder_forward.6} parent=59 // pred_region
        %s880 = smul.u32 2, %s22
        %p881 = scmp.lt.s32.totalorder %s880, 3
        %s882 = scalar_select %p881, %s880, 3
        %s883 = smul.addr %s882, 5
        %s884 = smul.addr %s883, 4
        %s885 = scalar_lea.vmem %s8, %s884
      $region64: #{decoder_forward.6} parent=59 // pred_fallthru
        _
    $region60: #{decoder_forward.6} parent=5 // pred_fallthru
      _
  $region6: #{decoder_forward.6} parent=0 // loop_footer
    %s20 = sadd.s32 1, %s16
  $region7: #{decoder_forward.6} parent=0 // loop_footer_branch
    %15 = sbr.rel target = $region3
  $region8: #{decoder_forward.6} parent=0 // loop_exit
    _

// kernel: decoder_forward.7
$region0: #{decoder_forward.7}
  #allocation0 [shape = 'u32[]', space=smem, size = 0x4, offset = 0x4, fixed_abs, tag = 'smem constant byte address 0x4 - core index']
  #allocation1 [shape = 'u32[72,128]{1,0:T(1,128)}', space=vmem, size = 0x9000, scoped, tag = 'internal scratch']
  #allocation2 [shape = 'f32[1,1]{1,0:T(1,128)S(1)}', space=vmem, size = 0x200, scoped, tag = 'scoped memory for decoder_forward.7']
  %s0 = inlined_call_operand.vmem [shape: bf16[64,64], index: 0, kind: input, shape index: {}]
  %s1 = inlined_call_operand.vmem [shape: f32[1,64], index: 1, kind: input, shape index: {}]
  %s2 = inlined_call_operand.vmem [shape: f32[64,64], index: 2, kind: input, shape index: {}]
  %s3 = inlined_call_operand.vmem [shape: bf16[128,64], index: 3, kind: input, shape index: {}]
  %s4 = inlined_call_operand.vmem [shape: f32[1,64], index: 4, kind: input, shape index: {}]
  %s5 = inlined_call_operand.vmem [shape: f32[1,64], index: 5, kind: input, shape index: {}]
  %s6 = inlined_call_operand.<no memory space> [shape: f32[1,1], index: 6, kind: input, shape index: {}]
  %s7 = inlined_call_operand.vmem [shape: bf16[128,320], index: 7, kind: input, shape index: {}]
  %s8 = inlined_call_operand.vmem [shape: bf16[64,320], index: 8, kind: output, shape index: {}]
  %s9 = sld [smem:[#allocation0]]
  $region65: #{decoder_forward.7} parent=0
    _
  %s11 = ssub.s32 1, %s9
  %s12 = scalar_select 0, %s11, %s9
  %v13 = vstv %s6
  %14 = vst [vmem:[#allocation2] sm:$0x1] %v13
  loop: start=0, step=1, limit=4
  $region2: #{decoder_forward.7} parent=0 // loop_pre_header
    _
  $region3: #{decoder_forward.7} parent=0 // loop_header
    %s16 = sphi 0, %s20
    %p17 = scmp.ge.s32.totalorder %s16, 4
    %s26 = sphi 0, %s28
    %s29 = sphi 0, %s26
    %s30 = sphi 0, %s29
    %s46 = sphi 0, %s30
    %s50 = sphi 0, %s50
    %s52 = sphi 0, %s50
    %s53 = sphi 0, %s52
    %s67 = sphi 0, %s53
    %s73 = sphi 0, %s75
    %s76 = sphi 0, %s73
    %s77 = sphi 0, %s76
    %s93 = sphi 0, %s77
    %s97 = sphi 0, %s97
    %s99 = sphi 0, %s97
    %s100 = sphi 0, %s99
    %s114 = sphi 0, %s100
    %s118 = sphi 0, %s118
    %s120 = sphi 0, %s118
    %s121 = sphi 0, %s120
    %s135 = sphi 0, %s121
    %s139 = sphi 0, %s139
    %s141 = sphi 0, %s139
    %s142 = sphi 0, %s141
    %s156 = sphi 0, %s142
    %s160 = sphi 0, %s160
    %s162 = sphi 0, %s160
    %s163 = sphi 0, %s162
    %s177 = sphi 0, %s163
    %s181 = sphi 0, %s181
    %s183 = sphi 0, %s181
    %s184 = sphi 0, %s183
    %s198 = sphi 0, %s184
    %s204 = sphi 0, %s206
    %s207 = sphi 0, %s204
    %s208 = sphi 0, %s207
    %s224 = sphi 0, %s208
  $region4: #{decoder_forward.7} parent=0 // loop_header_branch
    %19 = sbr.rel (%p17) target = $region8
  $region5: #{decoder_forward.7} parent=0 // loop_body
    %s21 = ssub.s32 %s16, 1
    %s22 = ssub.s32 %s16, 2
    %s23 = sadd.s32 %s16, 1
    %s24 = ssub.s32 %s16, %s23
    %p25 = scmp.eq.s32.totalorder %s24, 0
    %s27 = sadd.s32 %s26, 1
    %s28 = scalar_select %p25, %s26, %s27
    %p31 = pneg %p25
    %p32 = scmp.eq.s32.totalorder %s16, 1
    %p33 = por %p31, %p32
    %p34 = scmp.ne.s32.totalorder %s26, %s29
    %p35 = scmp.eq.s32.totalorder %s16, 0
    %p36 = por %p34, %p35
    %p37 = scmp.ne.s32.totalorder %s26, %s29
    %p38 = scmp.eq.s32.totalorder %s21, 1
    %p39 = por %p37, %p38
    %p40 = scmp.ne.s32.totalorder %s29, %s30
    %p41 = scmp.eq.s32.totalorder %s21, 0
    %p42 = por %p40, %p41
    %p43 = scmp.ne.s32.totalorder %s29, %s30
    %p44 = scmp.eq.s32.totalorder %s22, 1
    %p45 = por %p43, %p44
    %p47 = scmp.ne.s32.totalorder %s30, %s46
    %p48 = scmp.eq.s32.totalorder %s22, 0
    %p49 = por %p47, %p48
    %s51 = sadd.s32 %s50, 1
    %p54 = scmp.eq.s32.totalorder %s16, 1
    %p55 = scmp.ne.s32.totalorder %s50, %s52
    %p56 = scmp.eq.s32.totalorder %s16, 0
    %p57 = por %p55, %p56
    %p58 = scmp.ne.s32.totalorder %s50, %s52
    %p59 = scmp.eq.s32.totalorder %s21, 1
    %p60 = por %p58, %p59
    %p61 = scmp.ne.s32.totalorder %s52, %s53
    %p62 = scmp.eq.s32.totalorder %s21, 0
    %p63 = por %p61, %p62
    %p64 = scmp.ne.s32.totalorder %s52, %s53
    %p65 = scmp.eq.s32.totalorder %s22, 1
    %p66 = por %p64, %p65
    %p68 = scmp.ne.s32.totalorder %s53, %s67
    %p69 = scmp.eq.s32.totalorder %s22, 0
    %p70 = por %p68, %p69
    %s71 = ssub.s32 %s16, %s23
    %p72 = scmp.eq.s32.totalorder %s71, 0
    %s74 = sadd.s32 %s73, 1
    %s75 = scalar_select %p72, %s73, %s74
    %p78 = pneg %p72
    %p79 = scmp.eq.s32.totalorder %s16, 1
    %p80 = por %p78, %p79
    %p81 = scmp.ne.s32.totalorder %s73, %s76
    %p82 = scmp.eq.s32.totalorder %s16, 0
    %p83 = por %p81, %p82
    %p84 = scmp.ne.s32.totalorder %s73, %s76
    %p85 = scmp.eq.s32.totalorder %s21, 1
    %p86 = por %p84, %p85
    %p87 = scmp.ne.s32.totalorder %s76, %s77
    %p88 = scmp.eq.s32.totalorder %s21, 0
    %p89 = por %p87, %p88
    %p90 = scmp.ne.s32.totalorder %s76, %s77
    %p91 = scmp.eq.s32.totalorder %s22, 1
    %p92 = por %p90, %p91
    %p94 = scmp.ne.s32.totalorder %s77, %s93
    %p95 = scmp.eq.s32.totalorder %s22, 0
    %p96 = por %p94, %p95
    %s98 = sadd.s32 %s97, 1
    %p101 = scmp.eq.s32.totalorder %s16, 1
    %p102 = scmp.ne.s32.totalorder %s97, %s99
    %p103 = scmp.eq.s32.totalorder %s16, 0
    %p104 = por %p102, %p103
    %p105 = scmp.ne.s32.totalorder %s97, %s99
    %p106 = scmp.eq.s32.totalorder %s21, 1
    %p107 = por %p105, %p106
    %p108 = scmp.ne.s32.totalorder %s99, %s100
    %p109 = scmp.eq.s32.totalorder %s21, 0
    %p110 = por %p108, %p109
    %p111 = scmp.ne.s32.totalorder %s99, %s100
    %p112 = scmp.eq.s32.totalorder %s22, 1
    %p113 = por %p111, %p112
    %p115 = scmp.ne.s32.totalorder %s100, %s114
    %p116 = scmp.eq.s32.totalorder %s22, 0
    %p117 = por %p115, %p116
    %s119 = sadd.s32 %s118, 1
    %p122 = scmp.eq.s32.totalorder %s16, 1
    %p123 = scmp.ne.s32.totalorder %s118, %s120
    %p124 = scmp.eq.s32.totalorder %s16, 0
    %p125 = por %p123, %p124
    %p126 = scmp.ne.s32.totalorder %s118, %s120
    %p127 = scmp.eq.s32.totalorder %s21, 1
    %p128 = por %p126, %p127
    %p129 = scmp.ne.s32.totalorder %s120, %s121
    %p130 = scmp.eq.s32.totalorder %s21, 0
    %p131 = por %p129, %p130
    %p132 = scmp.ne.s32.totalorder %s120, %s121
    %p133 = scmp.eq.s32.totalorder %s22, 1
    %p134 = por %p132, %p133
    %p136 = scmp.ne.s32.totalorder %s121, %s135
    %p137 = scmp.eq.s32.totalorder %s22, 0
    %p138 = por %p136, %p137
    %s140 = sadd.s32 %s139, 1
    %p143 = scmp.eq.s32.totalorder %s16, 1
    %p144 = scmp.ne.s32.totalorder %s139, %s141
    %p145 = scmp.eq.s32.totalorder %s16, 0
    %p146 = por %p144, %p145
    %p147 = scmp.ne.s32.totalorder %s139, %s141
    %p148 = scmp.eq.s32.totalorder %s21, 1
    %p149 = por %p147, %p148
    %p150 = scmp.ne.s32.totalorder %s141, %s142
    %p151 = scmp.eq.s32.totalorder %s21, 0
    %p152 = por %p150, %p151
    %p153 = scmp.ne.s32.totalorder %s141, %s142
    %p154 = scmp.eq.s32.totalorder %s22, 1
    %p155 = por %p153, %p154
    %p157 = scmp.ne.s32.totalorder %s142, %s156
    %p158 = scmp.eq.s32.totalorder %s22, 0
    %p159 = por %p157, %p158
    %s161 = sadd.s32 %s160, 1
    %p164 = scmp.eq.s32.totalorder %s16, 1
    %p165 = scmp.ne.s32.totalorder %s160, %s162
    %p166 = scmp.eq.s32.totalorder %s16, 0
    %p167 = por %p165, %p166
    %p168 = scmp.ne.s32.totalorder %s160, %s162
    %p169 = scmp.eq.s32.totalorder %s21, 1
    %p170 = por %p168, %p169
    %p171 = scmp.ne.s32.totalorder %s162, %s163
    %p172 = scmp.eq.s32.totalorder %s21, 0
    %p173 = por %p171, %p172
    %p174 = scmp.ne.s32.totalorder %s162, %s163
    %p175 = scmp.eq.s32.totalorder %s22, 1
    %p176 = por %p174, %p175
    %p178 = scmp.ne.s32.totalorder %s163, %s177
    %p179 = scmp.eq.s32.totalorder %s22, 0
    %p180 = por %p178, %p179
    %s182 = sadd.s32 %s181, 1
    %p185 = scmp.eq.s32.totalorder %s16, 1
    %p186 = scmp.ne.s32.totalorder %s181, %s183
    %p187 = scmp.eq.s32.totalorder %s16, 0
    %p188 = por %p186, %p187
    %p189 = scmp.ne.s32.totalorder %s181, %s183
    %p190 = scmp.eq.s32.totalorder %s21, 1
    %p191 = por %p189, %p190
    %p192 = scmp.ne.s32.totalorder %s183, %s184
    %p193 = scmp.eq.s32.totalorder %s21, 0
    %p194 = por %p192, %p193
    %p195 = scmp.ne.s32.totalorder %s183, %s184
    %p196 = scmp.eq.s32.totalorder %s22, 1
    %p197 = por %p195, %p196
    %p199 = scmp.ne.s32.totalorder %s184, %s198
    %p200 = scmp.eq.s32.totalorder %s22, 0
    %p201 = por %p199, %p200
    %s202 = ssub.s32 %s16, %s23
    %p203 = scmp.eq.s32.totalorder %s202, 0
    %s205 = sadd.s32 %s204, 1
    %s206 = scalar_select %p203, %s204, %s205
    %p209 = pneg %p203
    %p210 = scmp.eq.s32.totalorder %s16, 1
    %p211 = por %p209, %p210
    %p212 = scmp.ne.s32.totalorder %s204, %s207
    %p213 = scmp.eq.s32.totalorder %s16, 0
    %p214 = por %p212, %p213
    %p215 = scmp.ne.s32.totalorder %s204, %s207
    %p216 = scmp.eq.s32.totalorder %s21, 1
    %p217 = por %p215, %p216
    %p218 = scmp.ne.s32.totalorder %s207, %s208
    %p219 = scmp.eq.s32.totalorder %s21, 0
    %p220 = por %p218, %p219
    %p221 = scmp.ne.s32.totalorder %s207, %s208
    %p222 = scmp.eq.s32.totalorder %s22, 1
    %p223 = por %p221, %p222
    %p225 = scmp.ne.s32.totalorder %s208, %s224
    %p226 = scmp.eq.s32.totalorder %s22, 0
    %p227 = por %p225, %p226
    %p228 = scmp.le.s32.totalorder 1, %s16
    %p229 = scmp.lt.s32.totalorder %s16, 3
    %p230 = pnand %p228, %p229
    %p231 = pneg %p230
    // Predicated region
    $region9: #{decoder_forward.7} parent=5 // pred_check
      _
    $region10: #{decoder_forward.7} parent=5 // pred_check_branch
      %233 = sbr.rel (%p230) target = $region12
    $region11: #{decoder_forward.7} parent=5 // pred_region
      %s234 = ssub.s32 %s16, 1
      // Predicated region
      $region13: #{decoder_forward.7} parent=11 // pred_check
        %p235 = pneg %p63
      $region14: #{decoder_forward.7} parent=11 // pred_check_branch
        %237 = sbr.rel (%p235) target = $region16
      $region15: #{decoder_forward.7} parent=11 // pred_region
        _
      $region16: #{decoder_forward.7} parent=11 // pred_fallthru
        _
      // Predicated region
      $region17: #{decoder_forward.7} parent=11 // pred_check
        %p238 = pneg %p110
      $region18: #{decoder_forward.7} parent=11 // pred_check_branch
        %240 = sbr.rel (%p238) target = $region20
      $region19: #{decoder_forward.7} parent=11 // pred_region
        _
      $region20: #{decoder_forward.7} parent=11 // pred_fallthru
        _
      // Predicated region
      $region21: #{decoder_forward.7} parent=11 // pred_check
        %p241 = pneg %p131
      $region22: #{decoder_forward.7} parent=11 // pred_check_branch
        %243 = sbr.rel (%p241) target = $region24
      $region23: #{decoder_forward.7} parent=11 // pred_region
        _
      $region24: #{decoder_forward.7} parent=11 // pred_fallthru
        _
      // Predicated region
      $region25: #{decoder_forward.7} parent=11 // pred_check
        %p244 = pneg %p152
      $region26: #{decoder_forward.7} parent=11 // pred_check_branch
        %246 = sbr.rel (%p244) target = $region28
      $region27: #{decoder_forward.7} parent=11 // pred_region
        _
      $region28: #{decoder_forward.7} parent=11 // pred_fallthru
        _
      // Predicated region
      $region29: #{decoder_forward.7} parent=11 // pred_check
        %p247 = pneg %p173
      $region30: #{decoder_forward.7} parent=11 // pred_check_branch
        %249 = sbr.rel (%p247) target = $region32
      $region31: #{decoder_forward.7} parent=11 // pred_region
        _
      $region32: #{decoder_forward.7} parent=11 // pred_fallthru
        _
      // Predicated region
      $region33: #{decoder_forward.7} parent=11 // pred_check
        %p250 = pneg %p194
      $region34: #{decoder_forward.7} parent=11 // pred_check_branch
        %252 = sbr.rel (%p250) target = $region36
      $region35: #{decoder_forward.7} parent=11 // pred_region
        _
      $region36: #{decoder_forward.7} parent=11 // pred_fallthru
        _
    $region12: #{decoder_forward.7} parent=5 // pred_fallthru
      _
    %p253 = scmp.lt.s32.totalorder %s16, 2
    // Predicated region
    $region37: #{decoder_forward.7} parent=5 // pred_check
      %p254 = pneg %p253
    $region38: #{decoder_forward.7} parent=5 // pred_check_branch
      %256 = sbr.rel (%p254) target = $region40
    $region39: #{decoder_forward.7} parent=5 // pred_region
      // Predicated region
      $region41: #{decoder_forward.7} parent=39 // pred_check
        %p257 = pneg %p36
      $region42: #{decoder_forward.7} parent=39 // pred_check_branch
        %259 = sbr.rel (%p257) target = $region44
      $region43: #{decoder_forward.7} parent=39 // pred_region
        %s260 = smul.u32 4, %s16
        %p261 = scmp.lt.s32.totalorder %s260, 7
        %s262 = scalar_select %p261, %s260, 7
        %s263 = smul.addr %s262, 4
        %s264 = scalar_lea.vmem %s0, %s263
        %s265 = smul.u32 4, %s16
      $region44: #{decoder_forward.7} parent=39 // pred_fallthru
        _
      // Predicated region
      $region45: #{decoder_forward.7} parent=39 // pred_check
        %p266 = pneg %p83
      $region46: #{decoder_forward.7} parent=39 // pred_check_branch
        %268 = sbr.rel (%p266) target = $region48
      $region47: #{decoder_forward.7} parent=39 // pred_region
        %s269 = smul.u32 4, %s16
        %p270 = scmp.lt.s32.totalorder %s269, 7
        %s271 = scalar_select %p270, %s269, 7
        %s272 = smul.addr %s271, 8
        %s273 = scalar_lea.vmem %s2, %s272
        %s274 = smul.u32 4, %s16
      $region48: #{decoder_forward.7} parent=39 // pred_fallthru
        _
    $region40: #{decoder_forward.7} parent=5 // pred_fallthru
      _
    %p275 = scmp.le.s32.totalorder 1, %s16
    %p276 = scmp.lt.s32.totalorder %s16, 3
    %p277 = pnand %p275, %p276
    %p278 = pneg %p277
    // Predicated region
    $region49: #{decoder_forward.7} parent=5 // pred_check
      _
    $region50: #{decoder_forward.7} parent=5 // pred_check_branch
      %280 = sbr.rel (%p277) target = $region52
    $region51: #{decoder_forward.7} parent=5 // pred_region
      %s281 = ssub.s32 %s16, 1
      %s282 = smul.u32 4, %s21
      %p283 = scmp.lt.s32.totalorder %s282, 7
      %s284 = scalar_select %p283, %s282, 7
      %s285 = smul.addr %s284, 4
      %s286 = scalar_lea.vmem %s0, %s285
      %p287 = pneg %p42
      %p288 = pneg %p39
      %p289 = pneg %p63
      %p290 = pneg %p60
      %s291 = smul.u32 4, %s21
      %p292 = scmp.lt.s32.totalorder %s291, 7
      %s293 = scalar_select %p292, %s291, 7
      %s294 = smul.addr %s293, 8
      %s295 = scalar_lea.vmem %s2, %s294
      %p296 = pneg %p89
      %p297 = pneg %p86
      %p298 = pneg %p110
      %p299 = pneg %p107
      %p300 = pneg %p131
      %p301 = pneg %p128
      %p302 = pneg %p152
      %p303 = pneg %p149
      %p304 = pneg %p173
      %p305 = pneg %p170
      %p306 = pneg %p194
      %p307 = pneg %p191
      %p308 = pneg %p220
      %p309 = pneg %p217
      %s310 = smul.u32 4, %s21
      %p311 = scmp.lt.s32.totalorder %s310, 7
      %s312 = scalar_select %p311, %s310, 7
      %s313 = smul.addr %s312, 3
      %s314 = smul.addr %s313, 4
      %s315 = scalar_lea.vmem %s8, %s314
      %s316 = smul.u32 4, %s21
      %p317 = scmp.lt.s32.totalorder %s316, 7
      %s318 = scalar_select %p317, %s316, 7
      %s319 = smul.addr %s318, 4
      %s320 = scalar_lea.vmem %s0, %s319
      %s321 = smul.u32 4, %s21
      %s322 = smul.u32 4, %s21
      %p323 = scmp.lt.s32.totalorder %s322, 7
      %s324 = scalar_select %p323, %s322, 7
      %s325 = smul.addr %s324, 8
      %s326 = scalar_lea.vmem %s2, %s325
      %s327 = smul.u32 4, %s21
      %s328 = smul.u32 4, %s21
      %p329 = scmp.lt.s32.totalorder %s328, 7
      %s330 = scalar_select %p329, %s328, 7
      %s331 = smul.addr %s330, 3
      %s332 = smul.addr %s331, 4
      %s333 = scalar_lea.vmem %s8, %s332
      %s334 = smul.u32 4, %s21
      %v335 = vld [vmem:[%s320] sm:$0xf]
      %v336 = vld [vmem:[%s320 + $0x4] sm:$0xf]
      %v337 = vld [vmem:[%s320 + $0x8] sm:$0xf]
      %v338 = vld [vmem:[%s320 + $0xc] sm:$0xf]
      %v339 = vunpack.c.l.bf16 %v335
      %v340 = vunpack.c.l.bf16 %v336
      %v341 = vunpack.c.l.bf16 %v337
      %v342 = vunpack.c.l.bf16 %v338
      %v343 = vld [vmem:[%s1] sm:$0x1]
      %v345 = vperm.slane %v343, 0
      %v347 = vadd.f32 %v339, %v345
      %v348 = vadd.f32 %v340, %v345
      %v349 = vadd.f32 %v341, %v345
      %v350 = vadd.f32 %v342, %v345
      %vm351 = vcmp.gt.f32.partialorder %v347, 0.0
      %vm352 = vcmp.gt.f32.partialorder %v348, 0.0
      %vm353 = vcmp.gt.f32.partialorder %v349, 0.0
      %vm354 = vcmp.gt.f32.partialorder %v350, 0.0
      %v355 = vmin.f32 %v347, 0.0
      %v356 = vmin.f32 %v348, 0.0
      %v357 = vmin.f32 %v349, 0.0
      %v358 = vmin.f32 %v350, 0.0
      %v359 = vmul.f32 %v355, 1.442695
      %v360 = vpow.pop %v359
      %v361 = vmul.f32 %v356, 1.442695
      %v362 = vpow.pop %v361
      %v363 = vmul.f32 %v357, 1.442695
      %v364 = vpow.pop %v363
      %v365 = vmul.f32 %v358, 1.442695
      %v366 = vpow.pop %v365
      %v367 = vsub.f32 %v360, 1.0
      %v368 = vsub.f32 %v362, 1.0
      %v369 = vsub.f32 %v364, 1.0
      %v370 = vsub.f32 %v366, 1.0
      %v371 = vsel %vm351, %v347, %v367
      %v372 = vsel %vm352, %v348, %v368
      %v373 = vsel %vm353, %v349, %v369
      %v374 = vsel %vm354, %v350, %v370
      %v375 = vpack.c.bf16 %v371, %v371
      %v376 = vpack.c.bf16 %v372, %v372
      %v377 = vpack.c.bf16 %v373, %v373
      %v378 = vpack.c.bf16 %v374, %v374
      %v379 = vld [vmem:[%s326] sm:$0xff]
      %v380 = vld [vmem:[%s326 + $0x8] sm:$0xff]
      %v381 = vld [vmem:[%s326 + $0x10] sm:$0xff]
      %v382 = vld [vmem:[%s326 + $0x18] sm:$0xff]
      %v383 = vpack.c.bf16 %v379, %v379
      %v384 = vpack.c.bf16 %v380, %v380
      %v385 = vpack.c.bf16 %v381, %v381
      %v386 = vpack.c.bf16 %v382, %v382
      %v391 = vunpack.c.l.b16 %v375
      %v392 = vunpack.c.l.b16 %v376
      %v393 = vunpack.c.l.b16 %v377
      %v394 = vunpack.c.l.b16 %v378
      %v395 = vpack.c.b16 %v392, %v391
      %v396 = vpack.c.b16 %v394, %v393
      %v401 = vunpack.c.l.b16 %v383
      %v402 = vunpack.c.l.b16 %v384
      %v403 = vunpack.c.l.b16 %v385
      %v404 = vunpack.c.l.b16 %v386
      %v405 = vpack.c.b16 %v402, %v401
      %v406 = vpack.c.b16 %v404, %v403
      %407 = vrot.lane.b32.xlu0 %v405, 64
      %v408 = vpop.permute.xlu0 %407
      %409 = vrot.lane.b32.xlu0 %v406, 64
      %v410 = vpop.permute.xlu0 %409
      %vm411 = vcmask 523264
      %v414 = vsel %vm411, %v395, %v408
      %v418 = vsel %vm411, %v396, %v410
      %v420 = vld [vmem:[%s3] sm:$0xf]
      %v421 = vld [vmem:[%s3 + $0x4] sm:$0xf]
      %v422 = vld [vmem:[%s3 + $0x8] sm:$0xf]
      %v423 = vld [vmem:[%s3 + $0xc] sm:$0xf]
      %v424 = vld [vmem:[%s3 + $0x10] sm:$0xf]
      %v425 = vld [vmem:[%s3 + $0x14] sm:$0xf]
      %v426 = vld [vmem:[%s3 + $0x18] sm:$0xf]
      %v427 = vld [vmem:[%s3 + $0x1c] sm:$0xf]
      %v428 = vld [vmem:[%s3 + $0x20] sm:$0xf]
      %v429 = vld [vmem:[%s3 + $0x24] sm:$0xf]
      %v430 = vld [vmem:[%s3 + $0x28] sm:$0xf]
      %v431 = vld [vmem:[%s3 + $0x2c] sm:$0xf]
      %v432 = vld [vmem:[%s3 + $0x30] sm:$0xf]
      %v433 = vld [vmem:[%s3 + $0x34] sm:$0xf]
      %v434 = vld [vmem:[%s3 + $0x38] sm:$0xf]
      %v435 = vld [vmem:[%s3 + $0x3c] sm:$0xf]
      %v436 = vld [vmem:[%s4] sm:$0x1]
      %v438 = vperm.slane %v436, 0
      %v456 = vunpack.c.l.b16 %v420
      %v457 = vunpack.c.l.b16 %v421
      %v458 = vunpack.c.l.b16 %v422
      %v459 = vunpack.c.l.b16 %v423
      %v460 = vunpack.c.l.b16 %v424
      %v461 = vunpack.c.l.b16 %v425
      %v462 = vunpack.c.l.b16 %v426
      %v463 = vunpack.c.l.b16 %v427
      %v464 = vunpack.c.l.b16 %v428
      %v465 = vunpack.c.l.b16 %v429
      %v466 = vunpack.c.l.b16 %v430
      %v467 = vunpack.c.l.b16 %v431
      %v468 = vunpack.c.l.b16 %v432
      %v469 = vunpack.c.l.b16 %v433
      %v470 = vunpack.c.l.b16 %v434
      %v471 = vunpack.c.l.b16 %v435
      %v472 = vpack.c.b16 %v457, %v456
      %v473 = vpack.c.b16 %v459, %v458
      %v474 = vpack.c.b16 %v461, %v460
      %v475 = vpack.c.b16 %v463, %v462
      %v476 = vpack.c.b16 %v465, %v464
      %v477 = vpack.c.b16 %v467, %v466
      %v478 = vpack.c.b16 %v469, %v468
      %v479 = vpack.c.b16 %v471, %v470
      %488 = vmatpush.bf16.msra.mxu0 %v479
      %489 = vmatpush.bf16.msra.mxu0 %v478
      %490 = vmatpush.bf16.msra.mxu0 %v477
      %491 = vmatpush.bf16.msra.mxu0 %v476
      %492 = vmatpush.bf16.msra.mxu0 %v475
      %493 = vmatpush.bf16.msra.mxu0 %v474
      %494 = vmatpush.bf16.msra.mxu0 %v473
      %495 = vmatpush.bf16.msra.mxu0 %v472
      %496 = vmatmul.bf16.gmra.mxu0 %v414
      %v497 = vpop.f32.mrf.mxu0
      %v498 = vadd.f32 %v438, %v497
      %v499 = vpop.f32.mrf.mxu0
      %v500 = vadd.f32 %v438, %v499
      %501 = vmatmul.bf16.gmra.mxu0 %v418
      %v502 = vpop.f32.mrf.mxu0
      %v503 = vadd.f32 %v438, %v502
      %v504 = vpop.f32.mrf.mxu0
      %v505 = vadd.f32 %v438, %v504
      %506 = vdwg.mxu0
      %v507 = vmax.f32 %v498, 0.0
      %v508 = vmax.f32 %v500, 0.0
      %v509 = vmax.f32 %v503, 0.0
      %v510 = vmax.f32 %v505, 0.0
      %v511 = vld [vmem:[%s5] sm:$0x1]
      %v513 = vperm.slane %v511, 0
      %v515 = vmul.f32 %v507, %v513
      %v516 = vmul.f32 %v508, %v513
      %v517 = vmul.f32 %v509, %v513
      %v518 = vmul.f32 %v510, %v513
      %v519 = vsel %vm411, %v515, 0.0
      %520 = vadd.xlane.f32.xlu0 %v519
      %v521 = vpop.xlane.xlu0 %520
      %v522 = vsel %vm411, %v516, 0.0
      %523 = vadd.xlane.f32.xlu0 %v522
      %v524 = vpop.xlane.xlu0 %523
      %v525 = vsel %vm411, %v517, 0.0
      %526 = vadd.xlane.f32.xlu0 %v525
      %v527 = vpop.xlane.xlu0 %526
      %v528 = vsel %vm411, %v518, 0.0
      %529 = vadd.xlane.f32.xlu0 %v528
      %v530 = vpop.xlane.xlu0 %529
      %v531 = vld [vmem:[#allocation2] sm:$0x1]
      %v533 = vperm.slane %v531, 0
      %v535 = vadd.f32 %v521, %v533
      %v536 = vadd.f32 %v524, %v533
      %v537 = vadd.f32 %v527, %v533
      %v538 = vadd.f32 %v530, %v533
      %v539 = vxor.u32 %v535, 2147483648
      %v540 = vxor.u32 %v536, 2147483648
      %v541 = vxor.u32 %v537, 2147483648
      %v542 = vxor.u32 %v538, 2147483648
      %v543 = vmul.f32 %v539, 1.442695
      %v544 = vpow.pop %v543
      %v545 = vmul.f32 %v540, 1.442695
      %v546 = vpow.pop %v545
      %v547 = vmul.f32 %v541, 1.442695
      %v548 = vpow.pop %v547
      %v549 = vmul.f32 %v542, 1.442695
      %v550 = vpow.pop %v549
      %v551 = vadd.f32 %v544, 1.0
      %v552 = vadd.f32 %v546, 1.0
      %v553 = vadd.f32 %v548, 1.0
      %v554 = vadd.f32 %v550, 1.0
      %v555 = vrcp.pop %v551
      %v556 = vmul.f32 %v551, %v555
      %v557 = vsub.f32 1.0, %v556
      %v558 = vmul.f32 %v555, %v557
      %v559 = vadd.f32 %v555, %v558
      %vm560 = vweird.f32 %v551
      %vm561 = vweird.f32 %v555
      %vm562 = vmor %vm560, %vm561
      %v563 = vsel %vm562, %v555, %v559
      %v564 = vand.u32 2147483647, %v551
      %vm565 = vcmp.eq.f32.partialorder %v564, 8.507059e+37
      %v566 = vand.u32 %v551, 2147483648
      %v567 = vor.u32 1.1754944e-38, %v566
      %v568 = vsel %vm565, %v567, %v563
      %v569 = vmul.f32 1.0, %v568
      %v570 = vrcp.pop %v552
      %v571 = vmul.f32 %v552, %v570
      %v572 = vsub.f32 1.0, %v571
      %v573 = vmul.f32 %v570, %v572
      %v574 = vadd.f32 %v570, %v573
      %vm575 = vweird.f32 %v552
      %vm576 = vweird.f32 %v570
      %vm577 = vmor %vm575, %vm576
      %v578 = vsel %vm577, %v570, %v574
      %v579 = vand.u32 2147483647, %v552
      %vm580 = vcmp.eq.f32.partialorder %v579, 8.507059e+37
      %v581 = vand.u32 %v552, 2147483648
      %v582 = vor.u32 1.1754944e-38, %v581
      %v583 = vsel %vm580, %v582, %v578
      %v584 = vmul.f32 1.0, %v583
      %v585 = vrcp.pop %v553
      %v586 = vmul.f32 %v553, %v585
      %v587 = vsub.f32 1.0, %v586
      %v588 = vmul.f32 %v585, %v587
      %v589 = vadd.f32 %v585, %v588
      %vm590 = vweird.f32 %v553
      %vm591 = vweird.f32 %v585
      %vm592 = vmor %vm590, %vm591
      %v593 = vsel %vm592, %v585, %v589
      %v594 = vand.u32 2147483647, %v553
      %vm595 = vcmp.eq.f32.partialorder %v594, 8.507059e+37
      %v596 = vand.u32 %v553, 2147483648
      %v597 = vor.u32 1.1754944e-38, %v596
      %v598 = vsel %vm595, %v597, %v593
      %v599 = vmul.f32 1.0, %v598
      %v600 = vrcp.pop %v554
      %v601 = vmul.f32 %v554, %v600
      %v602 = vsub.f32 1.0, %v601
      %v603 = vmul.f32 %v600, %v602
      %v604 = vadd.f32 %v600, %v603
      %vm605 = vweird.f32 %v554
      %vm606 = vweird.f32 %v600
      %vm607 = vmor %vm605, %vm606
      %v608 = vsel %vm607, %v600, %v604
      %v609 = vand.u32 2147483647, %v554
      %vm610 = vcmp.eq.f32.partialorder %v609, 8.507059e+37
      %v611 = vand.u32 %v554, 2147483648
      %v612 = vor.u32 1.1754944e-38, %v611
      %v613 = vsel %vm610, %v612, %v608
      %v614 = vmul.f32 1.0, %v613
      %616 = vset.pattern.permute.xlu0 0
      %617 = vperm.xlu0 %616, %v569
      %v618 = vpop.permute.xlu0 %617
      %621 = vset.pattern.permute.xlu0 0
      %622 = vperm.xlu0 %621, %v584
      %v623 = vpop.permute.xlu0 %622
      %626 = vset.pattern.permute.xlu0 0
      %627 = vperm.xlu0 %626, %v599
      %v628 = vpop.permute.xlu0 %627
      %631 = vset.pattern.permute.xlu0 0
      %632 = vperm.xlu0 %631, %v614
      %v633 = vpop.permute.xlu0 %632
      %v635 = vmul.f32 %v379, %v618
      %v636 = vmul.f32 %v380, %v623
      %v637 = vmul.f32 %v381, %v628
      %v638 = vmul.f32 %v382, %v633
      %v639 = vpack.c.bf16 %v635, %v635
      %v640 = vpack.c.bf16 %v636, %v636
      %v641 = vpack.c.bf16 %v637, %v637
      %v642 = vpack.c.bf16 %v638, %v638
      %v647 = vunpack.c.l.b16 %v639
      %v648 = vunpack.c.l.b16 %v640
      %v649 = vunpack.c.l.b16 %v641
      %v650 = vunpack.c.l.b16 %v642
      %v651 = vpack.c.b16 %v648, %v647
      %v652 = vpack.c.b16 %v650, %v649
      %653 = vrot.lane.b32.xlu0 %v651, 64
      %v654 = vpop.permute.xlu0 %653
      %655 = vrot.lane.b32.xlu0 %v652, 64
      %v656 = vpop.permute.xlu0 %655
      %v658 = vsel %vm411, %v395, %v654
      %v661 = vsel %vm411, %v396, %v656
      %v663 = vld [vmem:[%s7] sm:$0xff]
      %v664 = vld [vmem:[%s7 + $0x8] sm:$0xf]
      %v665 = vld [vmem:[%s7 + $0xc] sm:$0xff]
      %v666 = vld [vmem:[%s7 + $0x14] sm:$0xf]
      %v667 = vld [vmem:[%s7 + $0x18] sm:$0xff]
      %v668 = vld [vmem:[%s7 + $0x20] sm:$0xf]
      %v669 = vld [vmem:[%s7 + $0x24] sm:$0xff]
      %v670 = vld [vmem:[%s7 + $0x2c] sm:$0xf]
      %v671 = vld [vmem:[%s7 + $0x30] sm:$0xff]
      %v672 = vld [vmem:[%s7 + $0x38] sm:$0xf]
      %v673 = vld [vmem:[%s7 + $0x3c] sm:$0xff]
      %v674 = vld [vmem:[%s7 + $0x44] sm:$0xf]
      %v675 = vld [vmem:[%s7 + $0x48] sm:$0xff]
      %v676 = vld [vmem:[%s7 + $0x50] sm:$0xf]
      %v677 = vld [vmem:[%s7 + $0x54] sm:$0xff]
      %v678 = vld [vmem:[%s7 + $0x5c] sm:$0xf]
      %v679 = vld [vmem:[%s7 + $0x60] sm:$0xff]
      %v680 = vld [vmem:[%s7 + $0x68] sm:$0xf]
      %v681 = vld [vmem:[%s7 + $0x6c] sm:$0xff]
      %v682 = vld [vmem:[%s7 + $0x74] sm:$0xf]
      %v683 = vld [vmem:[%s7 + $0x78] sm:$0xff]
      %v684 = vld [vmem:[%s7 + $0x80] sm:$0xf]
      %v685 = vld [vmem:[%s7 + $0x84] sm:$0xff]
      %v686 = vld [vmem:[%s7 + $0x8c] sm:$0xf]
      %v687 = vld [vmem:[%s7 + $0x90] sm:$0xff]
      %v688 = vld [vmem:[%s7 + $0x98] sm:$0xf]
      %v689 = vld [vmem:[%s7 + $0x9c] sm:$0xff]
      %v690 = vld [vmem:[%s7 + $0xa4] sm:$0xf]
      %v691 = vld [vmem:[%s7 + $0xa8] sm:$0xff]
      %v692 = vld [vmem:[%s7 + $0xb0] sm:$0xf]
      %v693 = vld [vmem:[%s7 + $0xb4] sm:$0xff]
      %v694 = vld [vmem:[%s7 + $0xbc] sm:$0xf]
      %v727 = vunpack.c.l.b16 %v663
      %v728 = vunpack.c.h.b16 %v663
      %v729 = vunpack.c.l.b16 %v664
      %v730 = vunpack.c.l.b16 %v665
      %v731 = vunpack.c.h.b16 %v665
      %v732 = vunpack.c.l.b16 %v666
      %v733 = vunpack.c.l.b16 %v667
      %v734 = vunpack.c.h.b16 %v667
      %v735 = vunpack.c.l.b16 %v668
      %v736 = vunpack.c.l.b16 %v669
      %v737 = vunpack.c.h.b16 %v669
      %v738 = vunpack.c.l.b16 %v670
      %v739 = vunpack.c.l.b16 %v671
      %v740 = vunpack.c.h.b16 %v671
      %v741 = vunpack.c.l.b16 %v672
      %v742 = vunpack.c.l.b16 %v673
      %v743 = vunpack.c.h.b16 %v673
      %v744 = vunpack.c.l.b16 %v674
      %v745 = vunpack.c.l.b16 %v675
      %v746 = vunpack.c.h.b16 %v675
      %v747 = vunpack.c.l.b16 %v676
      %v748 = vunpack.c.l.b16 %v677
      %v749 = vunpack.c.h.b16 %v677
      %v750 = vunpack.c.l.b16 %v678
      %v751 = vunpack.c.l.b16 %v679
      %v752 = vunpack.c.h.b16 %v679
      %v753 = vunpack.c.l.b16 %v680
      %v754 = vunpack.c.l.b16 %v681
      %v755 = vunpack.c.h.b16 %v681
      %v756 = vunpack.c.l.b16 %v682
      %v757 = vunpack.c.l.b16 %v683
      %v758 = vunpack.c.h.b16 %v683
      %v759 = vunpack.c.l.b16 %v684
      %v760 = vunpack.c.l.b16 %v685
      %v761 = vunpack.c.h.b16 %v685
      %v762 = vunpack.c.l.b16 %v686
      %v763 = vunpack.c.l.b16 %v687
      %v764 = vunpack.c.h.b16 %v687
      %v765 = vunpack.c.l.b16 %v688
      %v766 = vunpack.c.l.b16 %v689
      %v767 = vunpack.c.h.b16 %v689
      %v768 = vunpack.c.l.b16 %v690
      %v769 = vunpack.c.l.b16 %v691
      %v770 = vunpack.c.h.b16 %v691
      %v771 = vunpack.c.l.b16 %v692
      %v772 = vunpack.c.l.b16 %v693
      %v773 = vunpack.c.h.b16 %v693
      %v774 = vunpack.c.l.b16 %v694
      %v775 = vpack.c.b16 %v730, %v727
      %v776 = vpack.c.b16 %v731, %v728
      %v777 = vpack.c.b16 %v732, %v729
      %v778 = vpack.c.b16 %v736, %v733
      %v779 = vpack.c.b16 %v737, %v734
      %v780 = vpack.c.b16 %v738, %v735
      %v781 = vpack.c.b16 %v742, %v739
      %v782 = vpack.c.b16 %v743, %v740
      %v783 = vpack.c.b16 %v744, %v741
      %v784 = vpack.c.b16 %v748, %v745
      %v785 = vpack.c.b16 %v749, %v746
      %v786 = vpack.c.b16 %v750, %v747
      %v787 = vpack.c.b16 %v754, %v751
      %v788 = vpack.c.b16 %v755, %v752
      %v789 = vpack.c.b16 %v756, %v753
      %v790 = vpack.c.b16 %v760, %v757
      %v791 = vpack.c.b16 %v761, %v758
      %v792 = vpack.c.b16 %v762, %v759
      %v793 = vpack.c.b16 %v766, %v763
      %v794 = vpack.c.b16 %v767, %v764
      %v795 = vpack.c.b16 %v768, %v765
      %v796 = vpack.c.b16 %v772, %v769
      %v797 = vpack.c.b16 %v773, %v770
      %v798 = vpack.c.b16 %v774, %v771
      %823 = vmatpush.bf16.msra.mxu0 %v796
      %824 = vmatpush.bf16.msra.mxu0 %v793
      %825 = vmatpush.bf16.msra.mxu0 %v790
      %826 = vmatpush.bf16.msra.mxu0 %v787
      %827 = vmatpush.bf16.msra.mxu0 %v784
      %828 = vmatpush.bf16.msra.mxu0 %v781
      %829 = vmatpush.bf16.msra.mxu0 %v778
      %830 = vmatpush.bf16.msra.mxu0 %v775
      %831 = vmatmul.bf16.gmra.mxu0 %v658
      %v832 = vpop.f32.mrf.mxu0
      %v833 = vadd.f32 0.0, %v832
      %v834 = vpop.f32.mrf.mxu0
      %v835 = vadd.f32 0.0, %v834
      %836 = vmatmul.bf16.gmra.mxu0 %v661
      %v837 = vpop.f32.mrf.mxu0
      %v838 = vadd.f32 0.0, %v837
      %v839 = vpop.f32.mrf.mxu0
      %v840 = vadd.f32 0.0, %v839
      %841 = vdwg.mxu0
      %842 = vmatpush.bf16.msra.mxu0 %v797
      %843 = vmatpush.bf16.msra.mxu0 %v794
      %844 = vmatpush.bf16.msra.mxu0 %v791
      %845 = vmatpush.bf16.msra.mxu0 %v788
      %846 = vmatpush.bf16.msra.mxu0 %v785
      %847 = vmatpush.bf16.msra.mxu0 %v782
      %848 = vmatpush.bf16.msra.mxu0 %v779
      %849 = vmatpush.bf16.msra.mxu0 %v776
      %850 = vmatmul.bf16.gmra.mxu0 %v658
      %v851 = vpop.f32.mrf.mxu0
      %v852 = vadd.f32 0.0, %v851
      %v853 = vpop.f32.mrf.mxu0
      %v854 = vadd.f32 0.0, %v853
      %855 = vmatmul.bf16.gmra.mxu0 %v661
      %v856 = vpop.f32.mrf.mxu0
      %v857 = vadd.f32 0.0, %v856
      %v858 = vpop.f32.mrf.mxu0
      %v859 = vadd.f32 0.0, %v858
      %860 = vdwg.mxu0
      %861 = vmatpush.bf16.msra.mxu0 %v798
      %862 = vmatpush.bf16.msra.mxu0 %v795
      %863 = vmatpush.bf16.msra.mxu0 %v792
      %864 = vmatpush.bf16.msra.mxu0 %v789
      %865 = vmatpush.bf16.msra.mxu0 %v786
      %866 = vmatpush.bf16.msra.mxu0 %v783
      %867 = vmatpush.bf16.msra.mxu0 %v780
      %868 = vmatpush.bf16.msra.mxu0 %v777
      %869 = vmatmul.bf16.gmra.mxu0 %v658
      %v870 = vpop.f32.mrf.mxu0
      %v871 = vadd.f32 0.0, %v870
      %v872 = vpop.f32.mrf.mxu0
      %v873 = vadd.f32 0.0, %v872
      %874 = vmatmul.bf16.gmra.mxu0 %v661
      %v875 = vpop.f32.mrf.mxu0
      %v876 = vadd.f32 0.0, %v875
      %v877 = vpop.f32.mrf.mxu0
      %v878 = vadd.f32 0.0, %v877
      %879 = vdwg.mxu0
      %v880 = vpack.c.bf16 %v852, %v833
      %v881 = vpack.c.bf16 %v871, %v871
      %v882 = vpack.c.bf16 %v854, %v835
      %v883 = vpack.c.bf16 %v873, %v873
      %v884 = vpack.c.bf16 %v857, %v838
      %v885 = vpack.c.bf16 %v876, %v876
      %v886 = vpack.c.bf16 %v859, %v840
      %v887 = vpack.c.bf16 %v878, %v878
      %888 = vst [vmem:[%s333] sm:$0xff] %v880
      %vm889 = vcmask 519168
      %890 = vst.msk [vmem:[%s333 + $0x8] sm:$0xf] %vm889, %v881
      %891 = vst [vmem:[%s333 + $0xc] sm:$0xff] %v882
      %892 = vst.msk [vmem:[%s333 + $0x14] sm:$0xf] %vm889, %v883
      %893 = vst [vmem:[%s333 + $0x18] sm:$0xff] %v884
      %894 = vst.msk [vmem:[%s333 + $0x20] sm:$0xf] %vm889, %v885
      %895 = vst [vmem:[%s333 + $0x24] sm:$0xff] %v886
      %896 = vst.msk [vmem:[%s333 + $0x2c] sm:$0xf] %vm889, %v887
      %s897 = smul.u32 4, %s21
      %p898 = scmp.lt.s32.totalorder %s897, 7
      %s899 = scalar_select %p898, %s897, 7
      %s900 = smul.addr %s899, 3
      %s901 = smul.addr %s900, 4
      %s902 = scalar_lea.vmem %s8, %s901
      // Predicated region
      $region53: #{decoder_forward.7} parent=51 // pred_check
        %p903 = pneg %p217
      $region54: #{decoder_forward.7} parent=51 // pred_check_branch
        %905 = sbr.rel (%p903) target = $region56
      $region55: #{decoder_forward.7} parent=51 // pred_region
        %s906 = smul.u32 4, %s21
      $region56: #{decoder_forward.7} parent=51 // pred_fallthru
        _
    $region52: #{decoder_forward.7} parent=5 // pred_fallthru
      _
    %p907 = scmp.le.s32.totalorder 2, %s16
    // Predicated region
    $region57: #{decoder_forward.7} parent=5 // pred_check
      %p908 = pneg %p907
    $region58: #{decoder_forward.7} parent=5 // pred_check_branch
      %910 = sbr.rel (%p908) target = $region60
    $region59: #{decoder_forward.7} parent=5 // pred_region
      %s911 = ssub.s32 %s16, 2
      // Predicated region
      $region61: #{decoder_forward.7} parent=59 // pred_check
        %p912 = pneg %p223
      $region62: #{decoder_forward.7} parent=59 // pred_check_branch
        %914 = sbr.rel (%p912) target = $region64
      $region63: #{decoder_forward.7} parent=59 // pred_region
        %s915 = smul.u32 4, %s22
        %p916 = scmp.lt.s32.totalorder %s915, 7
        %s917 = scalar_select %p916, %s915, 7
        %s918 = smul.addr %s917, 3
        %s919 = smul.addr %s918, 4
        %s920 = scalar_lea.vmem %s8, %s919
      $region64: #{decoder_forward.7} parent=59 // pred_fallthru
        _
    $region60: #{decoder_forward.7} parent=5 // pred_fallthru
      _
  $region6: #{decoder_forward.7} parent=0 // loop_footer
    %s20 = sadd.s32 1, %s16
  $region7: #{decoder_forward.7} parent=0 // loop_footer_branch
    %15 = sbr.rel target = $region3
  $region8: #{decoder_forward.7} parent=0 // loop_exit
    _

// kernel: decoder_forward.8
$region0: #{decoder_forward.8}
  #allocation0 [shape = 'u32[]', space=smem, size = 0x4, offset = 0x4, fixed_abs, tag = 'smem constant byte address 0x4 - core index']
  #allocation1 [shape = 'u32[72,128]{1,0:T(1,128)}', space=vmem, size = 0x9000, scoped, tag = 'internal scratch']
  #allocation2 [shape = 'f32[1,1]{1,0:T(1,128)S(1)}', space=vmem, size = 0x200, scoped, tag = 'scoped memory for decoder_forward.8']
  %s0 = inlined_call_operand.vmem [shape: bf16[128,32], index: 0, kind: input, shape index: {}]
  %s1 = inlined_call_operand.vmem [shape: f32[1,32], index: 1, kind: input, shape index: {}]
  %s2 = inlined_call_operand.vmem [shape: f32[128,32], index: 2, kind: input, shape index: {}]
  %s3 = inlined_call_operand.vmem [shape: bf16[64,32], index: 3, kind: input, shape index: {}]
  %s4 = inlined_call_operand.vmem [shape: f32[1,32], index: 4, kind: input, shape index: {}]
  %s5 = inlined_call_operand.vmem [shape: f32[1,32], index: 5, kind: input, shape index: {}]
  %s6 = inlined_call_operand.<no memory space> [shape: f32[1,1], index: 6, kind: input, shape index: {}]
  %s7 = inlined_call_operand.vmem [shape: bf16[64,320], index: 7, kind: input, shape index: {}]
  %s8 = inlined_call_operand.vmem [shape: bf16[128,320], index: 8, kind: output, shape index: {}]
  %s9 = sld [smem:[#allocation0]]
  $region65: #{decoder_forward.8} parent=0
    _
  %s11 = ssub.s32 1, %s9
  %s12 = scalar_select 0, %s11, %s9
  %v13 = vstv %s6
  %14 = vst [vmem:[#allocation2] sm:$0x1] %v13
  loop: start=0, step=1, limit=4
  $region2: #{decoder_forward.8} parent=0 // loop_pre_header
    _
  $region3: #{decoder_forward.8} parent=0 // loop_header
    %s16 = sphi 0, %s20
    %p17 = scmp.ge.s32.totalorder %s16, 4
    %s26 = sphi 0, %s28
    %s29 = sphi 0, %s26
    %s30 = sphi 0, %s29
    %s46 = sphi 0, %s30
    %s50 = sphi 0, %s50
    %s52 = sphi 0, %s50
    %s53 = sphi 0, %s52
    %s67 = sphi 0, %s53
    %s73 = sphi 0, %s75
    %s76 = sphi 0, %s73
    %s77 = sphi 0, %s76
    %s93 = sphi 0, %s77
    %s97 = sphi 0, %s97
    %s99 = sphi 0, %s97
    %s100 = sphi 0, %s99
    %s114 = sphi 0, %s100
    %s118 = sphi 0, %s118
    %s120 = sphi 0, %s118
    %s121 = sphi 0, %s120
    %s135 = sphi 0, %s121
    %s139 = sphi 0, %s139
    %s141 = sphi 0, %s139
    %s142 = sphi 0, %s141
    %s156 = sphi 0, %s142
    %s160 = sphi 0, %s160
    %s162 = sphi 0, %s160
    %s163 = sphi 0, %s162
    %s177 = sphi 0, %s163
    %s181 = sphi 0, %s181
    %s183 = sphi 0, %s181
    %s184 = sphi 0, %s183
    %s198 = sphi 0, %s184
    %s204 = sphi 0, %s206
    %s207 = sphi 0, %s204
    %s208 = sphi 0, %s207
    %s224 = sphi 0, %s208
  $region4: #{decoder_forward.8} parent=0 // loop_header_branch
    %19 = sbr.rel (%p17) target = $region8
  $region5: #{decoder_forward.8} parent=0 // loop_body
    %s21 = ssub.s32 %s16, 1
    %s22 = ssub.s32 %s16, 2
    %s23 = sadd.s32 %s16, 1
    %s24 = ssub.s32 %s16, %s23
    %p25 = scmp.eq.s32.totalorder %s24, 0
    %s27 = sadd.s32 %s26, 1
    %s28 = scalar_select %p25, %s26, %s27
    %p31 = pneg %p25
    %p32 = scmp.eq.s32.totalorder %s16, 1
    %p33 = por %p31, %p32
    %p34 = scmp.ne.s32.totalorder %s26, %s29
    %p35 = scmp.eq.s32.totalorder %s16, 0
    %p36 = por %p34, %p35
    %p37 = scmp.ne.s32.totalorder %s26, %s29
    %p38 = scmp.eq.s32.totalorder %s21, 1
    %p39 = por %p37, %p38
    %p40 = scmp.ne.s32.totalorder %s29, %s30
    %p41 = scmp.eq.s32.totalorder %s21, 0
    %p42 = por %p40, %p41
    %p43 = scmp.ne.s32.totalorder %s29, %s30
    %p44 = scmp.eq.s32.totalorder %s22, 1
    %p45 = por %p43, %p44
    %p47 = scmp.ne.s32.totalorder %s30, %s46
    %p48 = scmp.eq.s32.totalorder %s22, 0
    %p49 = por %p47, %p48
    %s51 = sadd.s32 %s50, 1
    %p54 = scmp.eq.s32.totalorder %s16, 1
    %p55 = scmp.ne.s32.totalorder %s50, %s52
    %p56 = scmp.eq.s32.totalorder %s16, 0
    %p57 = por %p55, %p56
    %p58 = scmp.ne.s32.totalorder %s50, %s52
    %p59 = scmp.eq.s32.totalorder %s21, 1
    %p60 = por %p58, %p59
    %p61 = scmp.ne.s32.totalorder %s52, %s53
    %p62 = scmp.eq.s32.totalorder %s21, 0
    %p63 = por %p61, %p62
    %p64 = scmp.ne.s32.totalorder %s52, %s53
    %p65 = scmp.eq.s32.totalorder %s22, 1
    %p66 = por %p64, %p65
    %p68 = scmp.ne.s32.totalorder %s53, %s67
    %p69 = scmp.eq.s32.totalorder %s22, 0
    %p70 = por %p68, %p69
    %s71 = ssub.s32 %s16, %s23
    %p72 = scmp.eq.s32.totalorder %s71, 0
    %s74 = sadd.s32 %s73, 1
    %s75 = scalar_select %p72, %s73, %s74
    %p78 = pneg %p72
    %p79 = scmp.eq.s32.totalorder %s16, 1
    %p80 = por %p78, %p79
    %p81 = scmp.ne.s32.totalorder %s73, %s76
    %p82 = scmp.eq.s32.totalorder %s16, 0
    %p83 = por %p81, %p82
    %p84 = scmp.ne.s32.totalorder %s73, %s76
    %p85 = scmp.eq.s32.totalorder %s21, 1
    %p86 = por %p84, %p85
    %p87 = scmp.ne.s32.totalorder %s76, %s77
    %p88 = scmp.eq.s32.totalorder %s21, 0
    %p89 = por %p87, %p88
    %p90 = scmp.ne.s32.totalorder %s76, %s77
    %p91 = scmp.eq.s32.totalorder %s22, 1
    %p92 = por %p90, %p91
    %p94 = scmp.ne.s32.totalorder %s77, %s93
    %p95 = scmp.eq.s32.totalorder %s22, 0
    %p96 = por %p94, %p95
    %s98 = sadd.s32 %s97, 1
    %p101 = scmp.eq.s32.totalorder %s16, 1
    %p102 = scmp.ne.s32.totalorder %s97, %s99
    %p103 = scmp.eq.s32.totalorder %s16, 0
    %p104 = por %p102, %p103
    %p105 = scmp.ne.s32.totalorder %s97, %s99
    %p106 = scmp.eq.s32.totalorder %s21, 1
    %p107 = por %p105, %p106
    %p108 = scmp.ne.s32.totalorder %s99, %s100
    %p109 = scmp.eq.s32.totalorder %s21, 0
    %p110 = por %p108, %p109
    %p111 = scmp.ne.s32.totalorder %s99, %s100
    %p112 = scmp.eq.s32.totalorder %s22, 1
    %p113 = por %p111, %p112
    %p115 = scmp.ne.s32.totalorder %s100, %s114
    %p116 = scmp.eq.s32.totalorder %s22, 0
    %p117 = por %p115, %p116
    %s119 = sadd.s32 %s118, 1
    %p122 = scmp.eq.s32.totalorder %s16, 1
    %p123 = scmp.ne.s32.totalorder %s118, %s120
    %p124 = scmp.eq.s32.totalorder %s16, 0
    %p125 = por %p123, %p124
    %p126 = scmp.ne.s32.totalorder %s118, %s120
    %p127 = scmp.eq.s32.totalorder %s21, 1
    %p128 = por %p126, %p127
    %p129 = scmp.ne.s32.totalorder %s120, %s121
    %p130 = scmp.eq.s32.totalorder %s21, 0
    %p131 = por %p129, %p130
    %p132 = scmp.ne.s32.totalorder %s120, %s121
    %p133 = scmp.eq.s32.totalorder %s22, 1
    %p134 = por %p132, %p133
    %p136 = scmp.ne.s32.totalorder %s121, %s135
    %p137 = scmp.eq.s32.totalorder %s22, 0
    %p138 = por %p136, %p137
    %s140 = sadd.s32 %s139, 1
    %p143 = scmp.eq.s32.totalorder %s16, 1
    %p144 = scmp.ne.s32.totalorder %s139, %s141
    %p145 = scmp.eq.s32.totalorder %s16, 0
    %p146 = por %p144, %p145
    %p147 = scmp.ne.s32.totalorder %s139, %s141
    %p148 = scmp.eq.s32.totalorder %s21, 1
    %p149 = por %p147, %p148
    %p150 = scmp.ne.s32.totalorder %s141, %s142
    %p151 = scmp.eq.s32.totalorder %s21, 0
    %p152 = por %p150, %p151
    %p153 = scmp.ne.s32.totalorder %s141, %s142
    %p154 = scmp.eq.s32.totalorder %s22, 1
    %p155 = por %p153, %p154
    %p157 = scmp.ne.s32.totalorder %s142, %s156
    %p158 = scmp.eq.s32.totalorder %s22, 0
    %p159 = por %p157, %p158
    %s161 = sadd.s32 %s160, 1
    %p164 = scmp.eq.s32.totalorder %s16, 1
    %p165 = scmp.ne.s32.totalorder %s160, %s162
    %p166 = scmp.eq.s32.totalorder %s16, 0
    %p167 = por %p165, %p166
    %p168 = scmp.ne.s32.totalorder %s160, %s162
    %p169 = scmp.eq.s32.totalorder %s21, 1
    %p170 = por %p168, %p169
    %p171 = scmp.ne.s32.totalorder %s162, %s163
    %p172 = scmp.eq.s32.totalorder %s21, 0
    %p173 = por %p171, %p172
    %p174 = scmp.ne.s32.totalorder %s162, %s163
    %p175 = scmp.eq.s32.totalorder %s22, 1
    %p176 = por %p174, %p175
    %p178 = scmp.ne.s32.totalorder %s163, %s177
    %p179 = scmp.eq.s32.totalorder %s22, 0
    %p180 = por %p178, %p179
    %s182 = sadd.s32 %s181, 1
    %p185 = scmp.eq.s32.totalorder %s16, 1
    %p186 = scmp.ne.s32.totalorder %s181, %s183
    %p187 = scmp.eq.s32.totalorder %s16, 0
    %p188 = por %p186, %p187
    %p189 = scmp.ne.s32.totalorder %s181, %s183
    %p190 = scmp.eq.s32.totalorder %s21, 1
    %p191 = por %p189, %p190
    %p192 = scmp.ne.s32.totalorder %s183, %s184
    %p193 = scmp.eq.s32.totalorder %s21, 0
    %p194 = por %p192, %p193
    %p195 = scmp.ne.s32.totalorder %s183, %s184
    %p196 = scmp.eq.s32.totalorder %s22, 1
    %p197 = por %p195, %p196
    %p199 = scmp.ne.s32.totalorder %s184, %s198
    %p200 = scmp.eq.s32.totalorder %s22, 0
    %p201 = por %p199, %p200
    %s202 = ssub.s32 %s16, %s23
    %p203 = scmp.eq.s32.totalorder %s202, 0
    %s205 = sadd.s32 %s204, 1
    %s206 = scalar_select %p203, %s204, %s205
    %p209 = pneg %p203
    %p210 = scmp.eq.s32.totalorder %s16, 1
    %p211 = por %p209, %p210
    %p212 = scmp.ne.s32.totalorder %s204, %s207
    %p213 = scmp.eq.s32.totalorder %s16, 0
    %p214 = por %p212, %p213
    %p215 = scmp.ne.s32.totalorder %s204, %s207
    %p216 = scmp.eq.s32.totalorder %s21, 1
    %p217 = por %p215, %p216
    %p218 = scmp.ne.s32.totalorder %s207, %s208
    %p219 = scmp.eq.s32.totalorder %s21, 0
    %p220 = por %p218, %p219
    %p221 = scmp.ne.s32.totalorder %s207, %s208
    %p222 = scmp.eq.s32.totalorder %s22, 1
    %p223 = por %p221, %p222
    %p225 = scmp.ne.s32.totalorder %s208, %s224
    %p226 = scmp.eq.s32.totalorder %s22, 0
    %p227 = por %p225, %p226
    %p228 = scmp.le.s32.totalorder 1, %s16
    %p229 = scmp.lt.s32.totalorder %s16, 3
    %p230 = pnand %p228, %p229
    %p231 = pneg %p230
    // Predicated region
    $region9: #{decoder_forward.8} parent=5 // pred_check
      _
    $region10: #{decoder_forward.8} parent=5 // pred_check_branch
      %233 = sbr.rel (%p230) target = $region12
    $region11: #{decoder_forward.8} parent=5 // pred_region
      %s234 = ssub.s32 %s16, 1
      // Predicated region
      $region13: #{decoder_forward.8} parent=11 // pred_check
        %p235 = pneg %p63
      $region14: #{decoder_forward.8} parent=11 // pred_check_branch
        %237 = sbr.rel (%p235) target = $region16
      $region15: #{decoder_forward.8} parent=11 // pred_region
        _
      $region16: #{decoder_forward.8} parent=11 // pred_fallthru
        _
      // Predicated region
      $region17: #{decoder_forward.8} parent=11 // pred_check
        %p238 = pneg %p110
      $region18: #{decoder_forward.8} parent=11 // pred_check_branch
        %240 = sbr.rel (%p238) target = $region20
      $region19: #{decoder_forward.8} parent=11 // pred_region
        _
      $region20: #{decoder_forward.8} parent=11 // pred_fallthru
        _
      // Predicated region
      $region21: #{decoder_forward.8} parent=11 // pred_check
        %p241 = pneg %p131
      $region22: #{decoder_forward.8} parent=11 // pred_check_branch
        %243 = sbr.rel (%p241) target = $region24
      $region23: #{decoder_forward.8} parent=11 // pred_region
        _
      $region24: #{decoder_forward.8} parent=11 // pred_fallthru
        _
      // Predicated region
      $region25: #{decoder_forward.8} parent=11 // pred_check
        %p244 = pneg %p152
      $region26: #{decoder_forward.8} parent=11 // pred_check_branch
        %246 = sbr.rel (%p244) target = $region28
      $region27: #{decoder_forward.8} parent=11 // pred_region
        _
      $region28: #{decoder_forward.8} parent=11 // pred_fallthru
        _
      // Predicated region
      $region29: #{decoder_forward.8} parent=11 // pred_check
        %p247 = pneg %p173
      $region30: #{decoder_forward.8} parent=11 // pred_check_branch
        %249 = sbr.rel (%p247) target = $region32
      $region31: #{decoder_forward.8} parent=11 // pred_region
        _
      $region32: #{decoder_forward.8} parent=11 // pred_fallthru
        _
      // Predicated region
      $region33: #{decoder_forward.8} parent=11 // pred_check
        %p250 = pneg %p194
      $region34: #{decoder_forward.8} parent=11 // pred_check_branch
        %252 = sbr.rel (%p250) target = $region36
      $region35: #{decoder_forward.8} parent=11 // pred_region
        _
      $region36: #{decoder_forward.8} parent=11 // pred_fallthru
        _
    $region12: #{decoder_forward.8} parent=5 // pred_fallthru
      _
    %p253 = scmp.lt.s32.totalorder %s16, 2
    // Predicated region
    $region37: #{decoder_forward.8} parent=5 // pred_check
      %p254 = pneg %p253
    $region38: #{decoder_forward.8} parent=5 // pred_check_branch
      %256 = sbr.rel (%p254) target = $region40
    $region39: #{decoder_forward.8} parent=5 // pred_region
      // Predicated region
      $region41: #{decoder_forward.8} parent=39 // pred_check
        %p257 = pneg %p36
      $region42: #{decoder_forward.8} parent=39 // pred_check_branch
        %259 = sbr.rel (%p257) target = $region44
      $region43: #{decoder_forward.8} parent=39 // pred_region
        %s260 = smul.u32 8, %s16
        %p261 = scmp.lt.s32.totalorder %s260, 15
        %s262 = scalar_select %p261, %s260, 15
        %s263 = smul.addr %s262, 4
        %s264 = scalar_lea.vmem %s0, %s263
        %s265 = smul.u32 8, %s16
      $region44: #{decoder_forward.8} parent=39 // pred_fallthru
        _
      // Predicated region
      $region45: #{decoder_forward.8} parent=39 // pred_check
        %p266 = pneg %p83
      $region46: #{decoder_forward.8} parent=39 // pred_check_branch
        %268 = sbr.rel (%p266) target = $region48
      $region47: #{decoder_forward.8} parent=39 // pred_region
        %s269 = smul.u32 8, %s16
        %p270 = scmp.lt.s32.totalorder %s269, 15
        %s271 = scalar_select %p270, %s269, 15
        %s272 = smul.addr %s271, 8
        %s273 = scalar_lea.vmem %s2, %s272
        %s274 = smul.u32 8, %s16
      $region48: #{decoder_forward.8} parent=39 // pred_fallthru
        _
    $region40: #{decoder_forward.8} parent=5 // pred_fallthru
      _
    %p275 = scmp.le.s32.totalorder 1, %s16
    %p276 = scmp.lt.s32.totalorder %s16, 3
    %p277 = pnand %p275, %p276
    %p278 = pneg %p277
    // Predicated region
    $region49: #{decoder_forward.8} parent=5 // pred_check
      _
    $region50: #{decoder_forward.8} parent=5 // pred_check_branch
      %280 = sbr.rel (%p277) target = $region52
    $region51: #{decoder_forward.8} parent=5 // pred_region
      %s281 = ssub.s32 %s16, 1
      %s282 = smul.u32 8, %s21
      %p283 = scmp.lt.s32.totalorder %s282, 15
      %s284 = scalar_select %p283, %s282, 15
      %s285 = smul.addr %s284, 4
      %s286 = scalar_lea.vmem %s0, %s285
      %p287 = pneg %p42
      %p288 = pneg %p39
      %p289 = pneg %p63
      %p290 = pneg %p60
      %s291 = smul.u32 8, %s21
      %p292 = scmp.lt.s32.totalorder %s291, 15
      %s293 = scalar_select %p292, %s291, 15
      %s294 = smul.addr %s293, 8
      %s295 = scalar_lea.vmem %s2, %s294
      %p296 = pneg %p89
      %p297 = pneg %p86
      %p298 = pneg %p110
      %p299 = pneg %p107
      %p300 = pneg %p131
      %p301 = pneg %p128
      %p302 = pneg %p152
      %p303 = pneg %p149
      %p304 = pneg %p173
      %p305 = pneg %p170
      %p306 = pneg %p194
      %p307 = pneg %p191
      %p308 = pneg %p220
      %p309 = pneg %p217
      %s310 = smul.u32 8, %s21
      %p311 = scmp.lt.s32.totalorder %s310, 15
      %s312 = scalar_select %p311, %s310, 15
      %s313 = smul.addr %s312, 3
      %s314 = smul.addr %s313, 4
      %s315 = scalar_lea.vmem %s8, %s314
      %s316 = smul.u32 8, %s21
      %p317 = scmp.lt.s32.totalorder %s316, 15
      %s318 = scalar_select %p317, %s316, 15
      %s319 = smul.addr %s318, 4
      %s320 = scalar_lea.vmem %s0, %s319
      %s321 = smul.u32 8, %s21
      %s322 = smul.u32 8, %s21
      %p323 = scmp.lt.s32.totalorder %s322, 15
      %s324 = scalar_select %p323, %s322, 15
      %s325 = smul.addr %s324, 8
      %s326 = scalar_lea.vmem %s2, %s325
      %s327 = smul.u32 8, %s21
      %s328 = smul.u32 8, %s21
      %p329 = scmp.lt.s32.totalorder %s328, 15
      %s330 = scalar_select %p329, %s328, 15
      %s331 = smul.addr %s330, 3
      %s332 = smul.addr %s331, 4
      %s333 = scalar_lea.vmem %s8, %s332
      %s334 = smul.u32 8, %s21
      %v336 = vld [vmem:[%s320] sm:$0xf]
      %v337 = vld [vmem:[%s320 + $0x4] sm:$0xf]
      %v338 = vld [vmem:[%s320 + $0x8] sm:$0xf]
      %v339 = vld [vmem:[%s320 + $0xc] sm:$0xf]
      %v340 = vld [vmem:[%s320 + $0x10] sm:$0xf]
      %v341 = vld [vmem:[%s320 + $0x14] sm:$0xf]
      %v342 = vld [vmem:[%s320 + $0x18] sm:$0xf]
      %v343 = vld [vmem:[%s320 + $0x1c] sm:$0xf]
      %v344 = vunpack.c.l.bf16 %v336
      %v345 = vunpack.c.l.bf16 %v337
      %v346 = vunpack.c.l.bf16 %v338
      %v347 = vunpack.c.l.bf16 %v339
      %v348 = vunpack.c.l.bf16 %v340
      %v349 = vunpack.c.l.bf16 %v341
      %v350 = vunpack.c.l.bf16 %v342
      %v351 = vunpack.c.l.bf16 %v343
      %v352 = vld [vmem:[%s1] sm:$0x1]
      %v354 = vperm.slane %v352, 0
      %v356 = vadd.f32 %v344, %v354
      %v357 = vadd.f32 %v345, %v354
      %v358 = vadd.f32 %v346, %v354
      %v359 = vadd.f32 %v347, %v354
      %v360 = vadd.f32 %v348, %v354
      %v361 = vadd.f32 %v349, %v354
      %v362 = vadd.f32 %v350, %v354
      %v363 = vadd.f32 %v351, %v354
      %vm364 = vcmp.gt.f32.partialorder %v356, 0.0
      %vm365 = vcmp.gt.f32.partialorder %v357, 0.0
      %vm366 = vcmp.gt.f32.partialorder %v358, 0.0
      %vm367 = vcmp.gt.f32.partialorder %v359, 0.0
      %vm368 = vcmp.gt.f32.partialorder %v360, 0.0
      %vm369 = vcmp.gt.f32.partialorder %v361, 0.0
      %vm370 = vcmp.gt.f32.partialorder %v362, 0.0
      %vm371 = vcmp.gt.f32.partialorder %v363, 0.0
      %v372 = vmin.f32 %v356, 0.0
      %v373 = vmin.f32 %v357, 0.0
      %v374 = vmin.f32 %v358, 0.0
      %v375 = vmin.f32 %v359, 0.0
      %v376 = vmin.f32 %v360, 0.0
      %v377 = vmin.f32 %v361, 0.0
      %v378 = vmin.f32 %v362, 0.0
      %v379 = vmin.f32 %v363, 0.0
      %v380 = vmul.f32 %v372, 1.442695
      %v381 = vpow.pop %v380
      %v382 = vmul.f32 %v373, 1.442695
      %v383 = vpow.pop %v382
      %v384 = vmul.f32 %v374, 1.442695
      %v385 = vpow.pop %v384
      %v386 = vmul.f32 %v375, 1.442695
      %v387 = vpow.pop %v386
      %v388 = vmul.f32 %v376, 1.442695
      %v389 = vpow.pop %v388
      %v390 = vmul.f32 %v377, 1.442695
      %v391 = vpow.pop %v390
      %v392 = vmul.f32 %v378, 1.442695
      %v393 = vpow.pop %v392
      %v394 = vmul.f32 %v379, 1.442695
      %v395 = vpow.pop %v394
      %v396 = vsub.f32 %v381, 1.0
      %v397 = vsub.f32 %v383, 1.0
      %v398 = vsub.f32 %v385, 1.0
      %v399 = vsub.f32 %v387, 1.0
      %v400 = vsub.f32 %v389, 1.0
      %v401 = vsub.f32 %v391, 1.0
      %v402 = vsub.f32 %v393, 1.0
      %v403 = vsub.f32 %v395, 1.0
      %v404 = vsel %vm364, %v356, %v396
      %v405 = vsel %vm365, %v357, %v397
      %v406 = vsel %vm366, %v358, %v398
      %v407 = vsel %vm367, %v359, %v399
      %v408 = vsel %vm368, %v360, %v400
      %v409 = vsel %vm369, %v361, %v401
      %v410 = vsel %vm370, %v362, %v402
      %v411 = vsel %vm371, %v363, %v403
      %v412 = vpack.c.bf16 %v404, %v404
      %v413 = vpack.c.bf16 %v405, %v405
      %v414 = vpack.c.bf16 %v406, %v406
      %v415 = vpack.c.bf16 %v407, %v407
      %v416 = vpack.c.bf16 %v408, %v408
      %v417 = vpack.c.bf16 %v409, %v409
      %v418 = vpack.c.bf16 %v410, %v410
      %v419 = vpack.c.bf16 %v411, %v411
      %v420 = vld [vmem:[%s326] sm:$0xff]
      %v421 = vld [vmem:[%s326 + $0x8] sm:$0xff]
      %v422 = vld [vmem:[%s326 + $0x10] sm:$0xff]
      %v423 = vld [vmem:[%s326 + $0x18] sm:$0xff]
      %v424 = vld [vmem:[%s326 + $0x20] sm:$0xff]
      %v425 = vld [vmem:[%s326 + $0x28] sm:$0xff]
      %v426 = vld [vmem:[%s326 + $0x30] sm:$0xff]
      %v427 = vld [vmem:[%s326 + $0x38] sm:$0xff]
      %v428 = vpack.c.bf16 %v420, %v420
      %v429 = vpack.c.bf16 %v421, %v421
      %v430 = vpack.c.bf16 %v422, %v422
      %v431 = vpack.c.bf16 %v423, %v423
      %v432 = vpack.c.bf16 %v424, %v424
      %v433 = vpack.c.bf16 %v425, %v425
      %v434 = vpack.c.bf16 %v426, %v426
      %v435 = vpack.c.bf16 %v427, %v427
      %v444 = vunpack.c.l.b16 %v412
      %v445 = vunpack.c.l.b16 %v413
      %v446 = vunpack.c.l.b16 %v414
      %v447 = vunpack.c.l.b16 %v415
      %v448 = vunpack.c.l.b16 %v416
      %v449 = vunpack.c.l.b16 %v417
      %v450 = vunpack.c.l.b16 %v418
      %v451 = vunpack.c.l.b16 %v419
      %v452 = vpack.c.b16 %v445, %v444
      %v453 = vpack.c.b16 %v447, %v446
      %v454 = vpack.c.b16 %v449, %v448
      %v455 = vpack.c.b16 %v451, %v450
      %v464 = vunpack.c.l.b16 %v428
      %v465 = vunpack.c.l.b16 %v429
      %v466 = vunpack.c.l.b16 %v430
      %v467 = vunpack.c.l.b16 %v431
      %v468 = vunpack.c.l.b16 %v432
      %v469 = vunpack.c.l.b16 %v433
      %v470 = vunpack.c.l.b16 %v434
      %v471 = vunpack.c.l.b16 %v435
      %v472 = vpack.c.b16 %v465, %v464
      %v473 = vpack.c.b16 %v467, %v466
      %v474 = vpack.c.b16 %v469, %v468
      %v475 = vpack.c.b16 %v471, %v470
      %476 = vrot.lane.b32.xlu0 %v472, 32
      %v477 = vpop.permute.xlu0 %476
      %478 = vrot.lane.b32.xlu0 %v473, 32
      %v479 = vpop.permute.xlu0 %478
      %480 = vrot.lane.b32.xlu0 %v474, 32
      %v481 = vpop.permute.xlu0 %480
      %482 = vrot.lane.b32.xlu0 %v475, 32
      %v483 = vpop.permute.xlu0 %482
      %vm484 = vcmask 261120
      %v487 = vsel %vm484, %v452, %v477
      %v490 = vsel %vm484, %v453, %v479
      %v493 = vsel %vm484, %v454, %v481
      %v496 = vsel %vm484, %v455, %v483
      %v497 = vld [vmem:[%s3] sm:$0xf]
      %v498 = vld [vmem:[%s3 + $0x4] sm:$0xf]
      %v499 = vld [vmem:[%s3 + $0x8] sm:$0xf]
      %v500 = vld [vmem:[%s3 + $0xc] sm:$0xf]
      %v501 = vld [vmem:[%s3 + $0x10] sm:$0xf]
      %v502 = vld [vmem:[%s3 + $0x14] sm:$0xf]
      %v503 = vld [vmem:[%s3 + $0x18] sm:$0xf]
      %v504 = vld [vmem:[%s3 + $0x1c] sm:$0xf]
      %v505 = vld [vmem:[%s4] sm:$0x1]
      %v507 = vperm.slane %v505, 0
      %v517 = vunpack.c.l.b16 %v497
      %v518 = vunpack.c.l.b16 %v498
      %v519 = vunpack.c.l.b16 %v499
      %v520 = vunpack.c.l.b16 %v500
      %v521 = vunpack.c.l.b16 %v501
      %v522 = vunpack.c.l.b16 %v502
      %v523 = vunpack.c.l.b16 %v503
      %v524 = vunpack.c.l.b16 %v504
      %v525 = vpack.c.b16 %v518, %v517
      %v526 = vpack.c.b16 %v520, %v519
      %v527 = vpack.c.b16 %v522, %v521
      %v528 = vpack.c.b16 %v524, %v523
      %vm533 = vcmask 523264
      %v534 = vsel %vm533, %v487, 0
      %v536 = vsel %vm533, %v490, 0
      %v538 = vsel %vm533, %v493, 0
      %v540 = vsel %vm533, %v496, 0
      %542 = vmatpush.bf16.msra.mxu0 0
      %543 = vmatpush.bf16.msra.mxu0 0
      %544 = vmatpush.bf16.msra.mxu0 0
      %545 = vmatpush.bf16.msra.mxu0 0
      %546 = vmatpush.bf16.msra.mxu0 %v528
      %547 = vmatpush.bf16.msra.mxu0 %v527
      %548 = vmatpush.bf16.msra.mxu0 %v526
      %549 = vmatpush.bf16.msra.mxu0 %v525
      %550 = vmatmul.bf16.gmra.mxu0 %v534
      %v551 = vpop.f32.mrf.mxu0
      %v552 = vadd.f32 %v507, %v551
      %v553 = vpop.f32.mrf.mxu0
      %v554 = vadd.f32 %v507, %v553
      %555 = vmatmul.bf16.gmra.mxu0 %v536
      %v556 = vpop.f32.mrf.mxu0
      %v557 = vadd.f32 %v507, %v556
      %v558 = vpop.f32.mrf.mxu0
      %v559 = vadd.f32 %v507, %v558
      %560 = vmatmul.bf16.gmra.mxu0 %v538
      %v561 = vpop.f32.mrf.mxu0
      %v562 = vadd.f32 %v507, %v561
      %v563 = vpop.f32.mrf.mxu0
      %v564 = vadd.f32 %v507, %v563
      %565 = vmatmul.bf16.gmra.mxu0 %v540
      %v566 = vpop.f32.mrf.mxu0
      %v567 = vadd.f32 %v507, %v566
      %v568 = vpop.f32.mrf.mxu0
      %v569 = vadd.f32 %v507, %v568
      %570 = vdwg.mxu0
      %v571 = vmax.f32 %v552, 0.0
      %v572 = vmax.f32 %v554, 0.0
      %v573 = vmax.f32 %v557, 0.0
      %v574 = vmax.f32 %v559, 0.0
      %v575 = vmax.f32 %v562, 0.0
      %v576 = vmax.f32 %v564, 0.0
      %v577 = vmax.f32 %v567, 0.0
      %v578 = vmax.f32 %v569, 0.0
      %v579 = vld [vmem:[%s5] sm:$0x1]
      %v581 = vperm.slane %v579, 0
      %v583 = vmul.f32 %v571, %v581
      %v584 = vmul.f32 %v572, %v581
      %v585 = vmul.f32 %v573, %v581
      %v586 = vmul.f32 %v574, %v581
      %v587 = vmul.f32 %v575, %v581
      %v588 = vmul.f32 %v576, %v581
      %v589 = vmul.f32 %v577, %v581
      %v590 = vmul.f32 %v578, %v581
      %v591 = vsel %vm484, %v583, 0.0
      %592 = vadd.xlane.f32.xlu0 %v591
      %v593 = vpop.xlane.xlu0 %592
      %v594 = vsel %vm484, %v584, 0.0
      %595 = vadd.xlane.f32.xlu0 %v594
      %v596 = vpop.xlane.xlu0 %595
      %v597 = vsel %vm484, %v585, 0.0
      %598 = vadd.xlane.f32.xlu0 %v597
      %v599 = vpop.xlane.xlu0 %598
      %v600 = vsel %vm484, %v586, 0.0
      %601 = vadd.xlane.f32.xlu0 %v600
      %v602 = vpop.xlane.xlu0 %601
      %v603 = vsel %vm484, %v587, 0.0
      %604 = vadd.xlane.f32.xlu0 %v603
      %v605 = vpop.xlane.xlu0 %604
      %v606 = vsel %vm484, %v588, 0.0
      %607 = vadd.xlane.f32.xlu0 %v606
      %v608 = vpop.xlane.xlu0 %607
      %v609 = vsel %vm484, %v589, 0.0
      %610 = vadd.xlane.f32.xlu0 %v609
      %v611 = vpop.xlane.xlu0 %610
      %v612 = vsel %vm484, %v590, 0.0
      %613 = vadd.xlane.f32.xlu0 %v612
      %v614 = vpop.xlane.xlu0 %613
      %v615 = vld [vmem:[#allocation2] sm:$0x1]
      %v617 = vperm.slane %v615, 0
      %v619 = vadd.f32 %v593, %v617
      %v620 = vadd.f32 %v596, %v617
      %v621 = vadd.f32 %v599, %v617
      %v622 = vadd.f32 %v602, %v617
      %v623 = vadd.f32 %v605, %v617
      %v624 = vadd.f32 %v608, %v617
      %v625 = vadd.f32 %v611, %v617
      %v626 = vadd.f32 %v614, %v617
      %v627 = vxor.u32 %v619, 2147483648
      %v628 = vxor.u32 %v620, 2147483648
      %v629 = vxor.u32 %v621, 2147483648
      %v630 = vxor.u32 %v622, 2147483648
      %v631 = vxor.u32 %v623, 2147483648
      %v632 = vxor.u32 %v624, 2147483648
      %v633 = vxor.u32 %v625, 2147483648
      %v634 = vxor.u32 %v626, 2147483648
      %v635 = vmul.f32 %v627, 1.442695
      %v636 = vpow.pop %v635
      %v637 = vmul.f32 %v628, 1.442695
      %v638 = vpow.pop %v637
      %v639 = vmul.f32 %v629, 1.442695
      %v640 = vpow.pop %v639
      %v641 = vmul.f32 %v630, 1.442695
      %v642 = vpow.pop %v641
      %v643 = vmul.f32 %v631, 1.442695
      %v644 = vpow.pop %v643
      %v645 = vmul.f32 %v632, 1.442695
      %v646 = vpow.pop %v645
      %v647 = vmul.f32 %v633, 1.442695
      %v648 = vpow.pop %v647
      %v649 = vmul.f32 %v634, 1.442695
      %v650 = vpow.pop %v649
      %v651 = vadd.f32 %v636, 1.0
      %v652 = vadd.f32 %v638, 1.0
      %v653 = vadd.f32 %v640, 1.0
      %v654 = vadd.f32 %v642, 1.0
      %v655 = vadd.f32 %v644, 1.0
      %v656 = vadd.f32 %v646, 1.0
      %v657 = vadd.f32 %v648, 1.0
      %v658 = vadd.f32 %v650, 1.0
      %v659 = vrcp.pop %v651
      %v660 = vmul.f32 %v651, %v659
      %v661 = vsub.f32 1.0, %v660
      %v662 = vmul.f32 %v659, %v661
      %v663 = vadd.f32 %v659, %v662
      %vm664 = vweird.f32 %v651
      %vm665 = vweird.f32 %v659
      %vm666 = vmor %vm664, %vm665
      %v667 = vsel %vm666, %v659, %v663
      %v668 = vand.u32 2147483647, %v651
      %vm669 = vcmp.eq.f32.partialorder %v668, 8.507059e+37
      %v670 = vand.u32 %v651, 2147483648
      %v671 = vor.u32 1.1754944e-38, %v670
      %v672 = vsel %vm669, %v671, %v667
      %v673 = vmul.f32 1.0, %v672
      %v674 = vrcp.pop %v652
      %v675 = vmul.f32 %v652, %v674
      %v676 = vsub.f32 1.0, %v675
      %v677 = vmul.f32 %v674, %v676
      %v678 = vadd.f32 %v674, %v677
      %vm679 = vweird.f32 %v652
      %vm680 = vweird.f32 %v674
      %vm681 = vmor %vm679, %vm680
      %v682 = vsel %vm681, %v674, %v678
      %v683 = vand.u32 2147483647, %v652
      %vm684 = vcmp.eq.f32.partialorder %v683, 8.507059e+37
      %v685 = vand.u32 %v652, 2147483648
      %v686 = vor.u32 1.1754944e-38, %v685
      %v687 = vsel %vm684, %v686, %v682
      %v688 = vmul.f32 1.0, %v687
      %v689 = vrcp.pop %v653
      %v690 = vmul.f32 %v653, %v689
      %v691 = vsub.f32 1.0, %v690
      %v692 = vmul.f32 %v689, %v691
      %v693 = vadd.f32 %v689, %v692
      %vm694 = vweird.f32 %v653
      %vm695 = vweird.f32 %v689
      %vm696 = vmor %vm694, %vm695
      %v697 = vsel %vm696, %v689, %v693
      %v698 = vand.u32 2147483647, %v653
      %vm699 = vcmp.eq.f32.partialorder %v698, 8.507059e+37
      %v700 = vand.u32 %v653, 2147483648
      %v701 = vor.u32 1.1754944e-38, %v700
      %v702 = vsel %vm699, %v701, %v697
      %v703 = vmul.f32 1.0, %v702
      %v704 = vrcp.pop %v654
      %v705 = vmul.f32 %v654, %v704
      %v706 = vsub.f32 1.0, %v705
      %v707 = vmul.f32 %v704, %v706
      %v708 = vadd.f32 %v704, %v707
      %vm709 = vweird.f32 %v654
      %vm710 = vweird.f32 %v704
      %vm711 = vmor %vm709, %vm710
      %v712 = vsel %vm711, %v704, %v708
      %v713 = vand.u32 2147483647, %v654
      %vm714 = vcmp.eq.f32.partialorder %v713, 8.507059e+37
      %v715 = vand.u32 %v654, 2147483648
      %v716 = vor.u32 1.1754944e-38, %v715
      %v717 = vsel %vm714, %v716, %v712
      %v718 = vmul.f32 1.0, %v717
      %v719 = vrcp.pop %v655
      %v720 = vmul.f32 %v655, %v719
      %v721 = vsub.f32 1.0, %v720
      %v722 = vmul.f32 %v719, %v721
      %v723 = vadd.f32 %v719, %v722
      %vm724 = vweird.f32 %v655
      %vm725 = vweird.f32 %v719
      %vm726 = vmor %vm724, %vm725
      %v727 = vsel %vm726, %v719, %v723
      %v728 = vand.u32 2147483647, %v655
      %vm729 = vcmp.eq.f32.partialorder %v728, 8.507059e+37
      %v730 = vand.u32 %v655, 2147483648
      %v731 = vor.u32 1.1754944e-38, %v730
      %v732 = vsel %vm729, %v731, %v727
      %v733 = vmul.f32 1.0, %v732
      %v734 = vrcp.pop %v656
      %v735 = vmul.f32 %v656, %v734
      %v736 = vsub.f32 1.0, %v735
      %v737 = vmul.f32 %v734, %v736
      %v738 = vadd.f32 %v734, %v737
      %vm739 = vweird.f32 %v656
      %vm740 = vweird.f32 %v734
      %vm741 = vmor %vm739, %vm740
      %v742 = vsel %vm741, %v734, %v738
      %v743 = vand.u32 2147483647, %v656
      %vm744 = vcmp.eq.f32.partialorder %v743, 8.507059e+37
      %v745 = vand.u32 %v656, 2147483648
      %v746 = vor.u32 1.1754944e-38, %v745
      %v747 = vsel %vm744, %v746, %v742
      %v748 = vmul.f32 1.0, %v747
      %v749 = vrcp.pop %v657
      %v750 = vmul.f32 %v657, %v749
      %v751 = vsub.f32 1.0, %v750
      %v752 = vmul.f32 %v749, %v751
      %v753 = vadd.f32 %v749, %v752
      %vm754 = vweird.f32 %v657
      %vm755 = vweird.f32 %v749
      %vm756 = vmor %vm754, %vm755
      %v757 = vsel %vm756, %v749, %v753
      %v758 = vand.u32 2147483647, %v657
      %vm759 = vcmp.eq.f32.partialorder %v758, 8.507059e+37
      %v760 = vand.u32 %v657, 2147483648
      %v761 = vor.u32 1.1754944e-38, %v760
      %v762 = vsel %vm759, %v761, %v757
      %v763 = vmul.f32 1.0, %v762
      %v764 = vrcp.pop %v658
      %v765 = vmul.f32 %v658, %v764
      %v766 = vsub.f32 1.0, %v765
      %v767 = vmul.f32 %v764, %v766
      %v768 = vadd.f32 %v764, %v767
      %vm769 = vweird.f32 %v658
      %vm770 = vweird.f32 %v764
      %vm771 = vmor %vm769, %vm770
      %v772 = vsel %vm771, %v764, %v768
      %v773 = vand.u32 2147483647, %v658
      %vm774 = vcmp.eq.f32.partialorder %v773, 8.507059e+37
      %v775 = vand.u32 %v658, 2147483648
      %v776 = vor.u32 1.1754944e-38, %v775
      %v777 = vsel %vm774, %v776, %v772
      %v778 = vmul.f32 1.0, %v777
      %780 = vset.pattern.permute.xlu0 0
      %781 = vperm.xlu0 %780, %v673
      %v782 = vpop.permute.xlu0 %781
      %785 = vset.pattern.permute.xlu0 0
      %786 = vperm.xlu0 %785, %v688
      %v787 = vpop.permute.xlu0 %786
      %790 = vset.pattern.permute.xlu0 0
      %791 = vperm.xlu0 %790, %v703
      %v792 = vpop.permute.xlu0 %791
      %795 = vset.pattern.permute.xlu0 0
      %796 = vperm.xlu0 %795, %v718
      %v797 = vpop.permute.xlu0 %796
      %800 = vset.pattern.permute.xlu0 0
      %801 = vperm.xlu0 %800, %v733
      %v802 = vpop.permute.xlu0 %801
      %805 = vset.pattern.permute.xlu0 0
      %806 = vperm.xlu0 %805, %v748
      %v807 = vpop.permute.xlu0 %806
      %810 = vset.pattern.permute.xlu0 0
      %811 = vperm.xlu0 %810, %v763
      %v812 = vpop.permute.xlu0 %811
      %815 = vset.pattern.permute.xlu0 0
      %816 = vperm.xlu0 %815, %v778
      %v817 = vpop.permute.xlu0 %816
      %v819 = vmul.f32 %v420, %v782
      %v820 = vmul.f32 %v421, %v787
      %v821 = vmul.f32 %v422, %v792
      %v822 = vmul.f32 %v423, %v797
      %v823 = vmul.f32 %v424, %v802
      %v824 = vmul.f32 %v425, %v807
      %v825 = vmul.f32 %v426, %v812
      %v826 = vmul.f32 %v427, %v817
      %v827 = vpack.c.bf16 %v819, %v819
      %v828 = vpack.c.bf16 %v820, %v820
      %v829 = vpack.c.bf16 %v821, %v821
      %v830 = vpack.c.bf16 %v822, %v822
      %v831 = vpack.c.bf16 %v823, %v823
      %v832 = vpack.c.bf16 %v824, %v824
      %v833 = vpack.c.bf16 %v825, %v825
      %v834 = vpack.c.bf16 %v826, %v826
      %v843 = vunpack.c.l.b16 %v827
      %v844 = vunpack.c.l.b16 %v828
      %v845 = vunpack.c.l.b16 %v829
      %v846 = vunpack.c.l.b16 %v830
      %v847 = vunpack.c.l.b16 %v831
      %v848 = vunpack.c.l.b16 %v832
      %v849 = vunpack.c.l.b16 %v833
      %v850 = vunpack.c.l.b16 %v834
      %v851 = vpack.c.b16 %v844, %v843
      %v852 = vpack.c.b16 %v846, %v845
      %v853 = vpack.c.b16 %v848, %v847
      %v854 = vpack.c.b16 %v850, %v849
      %855 = vrot.lane.b32.xlu0 %v851, 32
      %v856 = vpop.permute.xlu0 %855
      %857 = vrot.lane.b32.xlu0 %v852, 32
      %v858 = vpop.permute.xlu0 %857
      %859 = vrot.lane.b32.xlu0 %v853, 32
      %v860 = vpop.permute.xlu0 %859
      %861 = vrot.lane.b32.xlu0 %v854, 32
      %v862 = vpop.permute.xlu0 %861
      %v864 = vsel %vm484, %v452, %v856
      %v866 = vsel %vm484, %v453, %v858
      %v868 = vsel %vm484, %v454, %v860
      %v870 = vsel %vm484, %v455, %v862
      %v871 = vld [vmem:[%s7] sm:$0xff]
      %v872 = vld [vmem:[%s7 + $0x8] sm:$0xf]
      %v873 = vld [vmem:[%s7 + $0xc] sm:$0xff]
      %v874 = vld [vmem:[%s7 + $0x14] sm:$0xf]
      %v875 = vld [vmem:[%s7 + $0x18] sm:$0xff]
      %v876 = vld [vmem:[%s7 + $0x20] sm:$0xf]
      %v877 = vld [vmem:[%s7 + $0x24] sm:$0xff]
      %v878 = vld [vmem:[%s7 + $0x2c] sm:$0xf]
      %v879 = vld [vmem:[%s7 + $0x30] sm:$0xff]
      %v880 = vld [vmem:[%s7 + $0x38] sm:$0xf]
      %v881 = vld [vmem:[%s7 + $0x3c] sm:$0xff]
      %v882 = vld [vmem:[%s7 + $0x44] sm:$0xf]
      %v883 = vld [vmem:[%s7 + $0x48] sm:$0xff]
      %v884 = vld [vmem:[%s7 + $0x50] sm:$0xf]
      %v885 = vld [vmem:[%s7 + $0x54] sm:$0xff]
      %v886 = vld [vmem:[%s7 + $0x5c] sm:$0xf]
      %v903 = vunpack.c.l.b16 %v871
      %v904 = vunpack.c.h.b16 %v871
      %v905 = vunpack.c.l.b16 %v872
      %v906 = vunpack.c.l.b16 %v873
      %v907 = vunpack.c.h.b16 %v873
      %v908 = vunpack.c.l.b16 %v874
      %v909 = vunpack.c.l.b16 %v875
      %v910 = vunpack.c.h.b16 %v875
      %v911 = vunpack.c.l.b16 %v876
      %v912 = vunpack.c.l.b16 %v877
      %v913 = vunpack.c.h.b16 %v877
      %v914 = vunpack.c.l.b16 %v878
      %v915 = vunpack.c.l.b16 %v879
      %v916 = vunpack.c.h.b16 %v879
      %v917 = vunpack.c.l.b16 %v880
      %v918 = vunpack.c.l.b16 %v881
      %v919 = vunpack.c.h.b16 %v881
      %v920 = vunpack.c.l.b16 %v882
      %v921 = vunpack.c.l.b16 %v883
      %v922 = vunpack.c.h.b16 %v883
      %v923 = vunpack.c.l.b16 %v884
      %v924 = vunpack.c.l.b16 %v885
      %v925 = vunpack.c.h.b16 %v885
      %v926 = vunpack.c.l.b16 %v886
      %v927 = vpack.c.b16 %v906, %v903
      %v928 = vpack.c.b16 %v907, %v904
      %v929 = vpack.c.b16 %v908, %v905
      %v930 = vpack.c.b16 %v912, %v909
      %v931 = vpack.c.b16 %v913, %v910
      %v932 = vpack.c.b16 %v914, %v911
      %v933 = vpack.c.b16 %v918, %v915
      %v934 = vpack.c.b16 %v919, %v916
      %v935 = vpack.c.b16 %v920, %v917
      %v936 = vpack.c.b16 %v924, %v921
      %v937 = vpack.c.b16 %v925, %v922
      %v938 = vpack.c.b16 %v926, %v923
      %v951 = vsel %vm533, %v864, 0
      %v953 = vsel %vm533, %v866, 0
      %v955 = vsel %vm533, %v868, 0
      %v957 = vsel %vm533, %v870, 0
      %959 = vmatpush.bf16.msra.mxu0 0
      %960 = vmatpush.bf16.msra.mxu0 0
      %961 = vmatpush.bf16.msra.mxu0 0
      %962 = vmatpush.bf16.msra.mxu0 0
      %963 = vmatpush.bf16.msra.mxu0 %v936
      %964 = vmatpush.bf16.msra.mxu0 %v933
      %965 = vmatpush.bf16.msra.mxu0 %v930
      %966 = vmatpush.bf16.msra.mxu0 %v927
      %967 = vmatmul.bf16.gmra.mxu0 %v951
      %v968 = vpop.f32.mrf.mxu0
      %v969 = vadd.f32 0.0, %v968
      %v970 = vpop.f32.mrf.mxu0
      %v971 = vadd.f32 0.0, %v970
      %972 = vmatmul.bf16.gmra.mxu0 %v953
      %v973 = vpop.f32.mrf.mxu0
      %v974 = vadd.f32 0.0, %v973
      %v975 = vpop.f32.mrf.mxu0
      %v976 = vadd.f32 0.0, %v975
      %977 = vmatmul.bf16.gmra.mxu0 %v955
      %v978 = vpop.f32.mrf.mxu0
      %v979 = vadd.f32 0.0, %v978
      %v980 = vpop.f32.mrf.mxu0
      %v981 = vadd.f32 0.0, %v980
      %982 = vmatmul.bf16.gmra.mxu0 %v957
      %v983 = vpop.f32.mrf.mxu0
      %v984 = vadd.f32 0.0, %v983
      %v985 = vpop.f32.mrf.mxu0
      %v986 = vadd.f32 0.0, %v985
      %987 = vdwg.mxu0
      %988 = vmatpush.bf16.msra.mxu0 0
      %989 = vmatpush.bf16.msra.mxu0 0
      %990 = vmatpush.bf16.msra.mxu0 0
      %991 = vmatpush.bf16.msra.mxu0 0
      %992 = vmatpush.bf16.msra.mxu0 %v937
      %993 = vmatpush.bf16.msra.mxu0 %v934
      %994 = vmatpush.bf16.msra.mxu0 %v931
      %995 = vmatpush.bf16.msra.mxu0 %v928
      %996 = vmatmul.bf16.gmra.mxu0 %v951
      %v997 = vpop.f32.mrf.mxu0
      %v998 = vadd.f32 0.0, %v997
      %v999 = vpop.f32.mrf.mxu0
      %v1000 = vadd.f32 0.0, %v999
      %1001 = vmatmul.bf16.gmra.mxu0 %v953
      %v1002 = vpop.f32.mrf.mxu0
      %v1003 = vadd.f32 0.0, %v1002
      %v1004 = vpop.f32.mrf.mxu0
      %v1005 = vadd.f32 0.0, %v1004
      %1006 = vmatmul.bf16.gmra.mxu0 %v955
      %v1007 = vpop.f32.mrf.mxu0
      %v1008 = vadd.f32 0.0, %v1007
      %v1009 = vpop.f32.mrf.mxu0
      %v1010 = vadd.f32 0.0, %v1009
      %1011 = vmatmul.bf16.gmra.mxu0 %v957
      %v1012 = vpop.f32.mrf.mxu0
      %v1013 = vadd.f32 0.0, %v1012
      %v1014 = vpop.f32.mrf.mxu0
      %v1015 = vadd.f32 0.0, %v1014
      %1016 = vdwg.mxu0
      %1017 = vmatpush.bf16.msra.mxu0 0
      %1018 = vmatpush.bf16.msra.mxu0 0
      %1019 = vmatpush.bf16.msra.mxu0 0
      %1020 = vmatpush.bf16.msra.mxu0 0
      %1021 = vmatpush.bf16.msra.mxu0 %v938
      %1022 = vmatpush.bf16.msra.mxu0 %v935
      %1023 = vmatpush.bf16.msra.mxu0 %v932
      %1024 = vmatpush.bf16.msra.mxu0 %v929
      %1025 = vmatmul.bf16.gmra.mxu0 %v951
      %v1026 = vpop.f32.mrf.mxu0
      %v1027 = vadd.f32 0.0, %v1026
      %v1028 = vpop.f32.mrf.mxu0
      %v1029 = vadd.f32 0.0, %v1028
      %1030 = vmatmul.bf16.gmra.mxu0 %v953
      %v1031 = vpop.f32.mrf.mxu0
      %v1032 = vadd.f32 0.0, %v1031
      %v1033 = vpop.f32.mrf.mxu0
      %v1034 = vadd.f32 0.0, %v1033
      %1035 = vmatmul.bf16.gmra.mxu0 %v955
      %v1036 = vpop.f32.mrf.mxu0
      %v1037 = vadd.f32 0.0, %v1036
      %v1038 = vpop.f32.mrf.mxu0
      %v1039 = vadd.f32 0.0, %v1038
      %1040 = vmatmul.bf16.gmra.mxu0 %v957
      %v1041 = vpop.f32.mrf.mxu0
      %v1042 = vadd.f32 0.0, %v1041
      %v1043 = vpop.f32.mrf.mxu0
      %v1044 = vadd.f32 0.0, %v1043
      %1045 = vdwg.mxu0
      %v1046 = vpack.c.bf16 %v998, %v969
      %v1047 = vpack.c.bf16 %v1027, %v1027
      %v1048 = vpack.c.bf16 %v1000, %v971
      %v1049 = vpack.c.bf16 %v1029, %v1029
      %v1050 = vpack.c.bf16 %v1003, %v974
      %v1051 = vpack.c.bf16 %v1032, %v1032
      %v1052 = vpack.c.bf16 %v1005, %v976
      %v1053 = vpack.c.bf16 %v1034, %v1034
      %v1054 = vpack.c.bf16 %v1008, %v979
      %v1055 = vpack.c.bf16 %v1037, %v1037
      %v1056 = vpack.c.bf16 %v1010, %v981
      %v1057 = vpack.c.bf16 %v1039, %v1039
      %v1058 = vpack.c.bf16 %v1013, %v984
      %v1059 = vpack.c.bf16 %v1042, %v1042
      %v1060 = vpack.c.bf16 %v1015, %v986
      %v1061 = vpack.c.bf16 %v1044, %v1044
      %1062 = vst [vmem:[%s333] sm:$0xff] %v1046
      %vm1063 = vcmask 519168
      %1064 = vst.msk [vmem:[%s333 + $0x8] sm:$0xf] %vm1063, %v1047
      %1065 = vst [vmem:[%s333 + $0xc] sm:$0xff] %v1048
      %1066 = vst.msk [vmem:[%s333 + $0x14] sm:$0xf] %vm1063, %v1049
      %1067 = vst [vmem:[%s333 + $0x18] sm:$0xff] %v1050
      %1068 = vst.msk [vmem:[%s333 + $0x20] sm:$0xf] %vm1063, %v1051
      %1069 = vst [vmem:[%s333 + $0x24] sm:$0xff] %v1052
      %1070 = vst.msk [vmem:[%s333 + $0x2c] sm:$0xf] %vm1063, %v1053
      %1071 = vst [vmem:[%s333 + $0x30] sm:$0xff] %v1054
      %1072 = vst.msk [vmem:[%s333 + $0x38] sm:$0xf] %vm1063, %v1055
      %1073 = vst [vmem:[%s333 + $0x3c] sm:$0xff] %v1056
      %1074 = vst.msk [vmem:[%s333 + $0x44] sm:$0xf] %vm1063, %v1057
      %1075 = vst [vmem:[%s333 + $0x48] sm:$0xff] %v1058
      %1076 = vst.msk [vmem:[%s333 + $0x50] sm:$0xf] %vm1063, %v1059
      %1077 = vst [vmem:[%s333 + $0x54] sm:$0xff] %v1060
      %1078 = vst.msk [vmem:[%s333 + $0x5c] sm:$0xf] %vm1063, %v1061
      %s1079 = smul.u32 8, %s21
      %p1080 = scmp.lt.s32.totalorder %s1079, 15
      %s1081 = scalar_select %p1080, %s1079, 15
      %s1082 = smul.addr %s1081, 3
      %s1083 = smul.addr %s1082, 4
      %s1084 = scalar_lea.vmem %s8, %s1083
      // Predicated region
      $region53: #{decoder_forward.8} parent=51 // pred_check
        %p1085 = pneg %p217
      $region54: #{decoder_forward.8} parent=51 // pred_check_branch
        %1087 = sbr.rel (%p1085) target = $region56
      $region55: #{decoder_forward.8} parent=51 // pred_region
        %s1088 = smul.u32 8, %s21
      $region56: #{decoder_forward.8} parent=51 // pred_fallthru
        _
    $region52: #{decoder_forward.8} parent=5 // pred_fallthru
      _
    %p1089 = scmp.le.s32.totalorder 2, %s16
    // Predicated region
    $region57: #{decoder_forward.8} parent=5 // pred_check
      %p1090 = pneg %p1089
    $region58: #{decoder_forward.8} parent=5 // pred_check_branch
      %1092 = sbr.rel (%p1090) target = $region60
    $region59: #{decoder_forward.8} parent=5 // pred_region
      %s1093 = ssub.s32 %s16, 2
      // Predicated region
      $region61: #{decoder_forward.8} parent=59 // pred_check
        %p1094 = pneg %p223
      $region62: #{decoder_forward.8} parent=59 // pred_check_branch
        %1096 = sbr.rel (%p1094) target = $region64
      $region63: #{decoder_forward.8} parent=59 // pred_region
        %s1097 = smul.u32 8, %s22
        %p1098 = scmp.lt.s32.totalorder %s1097, 15
        %s1099 = scalar_select %p1098, %s1097, 15
        %s1100 = smul.addr %s1099, 3
        %s1101 = smul.addr %s1100, 4
        %s1102 = scalar_lea.vmem %s8, %s1101
      $region64: #{decoder_forward.8} parent=59 // pred_fallthru
        _
    $region60: #{decoder_forward.8} parent=5 // pred_fallthru
      _
  $region6: #{decoder_forward.8} parent=0 // loop_footer
    %s20 = sadd.s32 1, %s16
  $region7: #{decoder_forward.8} parent=0 // loop_footer_branch
    %15 = sbr.rel target = $region3
  $region8: #{decoder_forward.8} parent=0 // loop_exit
    _

// kernel: decoder_forward.9
$region0: #{decoder_forward.9}
  #allocation0 [shape = 'u32[]', space=smem, size = 0x4, offset = 0x4, fixed_abs, tag = 'smem constant byte address 0x4 - core index']
  #allocation1 [shape = 'u32[72,128]{1,0:T(1,128)}', space=vmem, size = 0x9000, scoped, tag = 'internal scratch']
  #allocation2 [shape = 'f32[1,1]{1,0:T(1,128)S(1)}', space=vmem, size = 0x200, scoped, tag = 'scoped memory for decoder_forward.9']
  %s0 = inlined_call_operand.vmem [shape: bf16[256,32], index: 0, kind: input, shape index: {}]
  %s1 = inlined_call_operand.vmem [shape: f32[1,32], index: 1, kind: input, shape index: {}]
  %s2 = inlined_call_operand.vmem [shape: f32[256,32], index: 2, kind: input, shape index: {}]
  %s3 = inlined_call_operand.vmem [shape: bf16[64,32], index: 3, kind: input, shape index: {}]
  %s4 = inlined_call_operand.vmem [shape: f32[1,32], index: 4, kind: input, shape index: {}]
  %s5 = inlined_call_operand.vmem [shape: f32[1,32], index: 5, kind: input, shape index: {}]
  %s6 = inlined_call_operand.<no memory space> [shape: f32[1,1], index: 6, kind: input, shape index: {}]
  %s7 = inlined_call_operand.vmem [shape: bf16[64,160], index: 7, kind: input, shape index: {}]
  %s8 = inlined_call_operand.vmem [shape: bf16[256,160], index: 8, kind: output, shape index: {}]
  %s9 = sld [smem:[#allocation0]]
  $region65: #{decoder_forward.9} parent=0
    _
  %s11 = ssub.s32 1, %s9
  %s12 = scalar_select 0, %s11, %s9
  %v13 = vstv %s6
  %14 = vst [vmem:[#allocation2] sm:$0x1] %v13
  loop: start=0, step=1, limit=4
  $region2: #{decoder_forward.9} parent=0 // loop_pre_header
    _
  $region3: #{decoder_forward.9} parent=0 // loop_header
    %s16 = sphi 0, %s20
    %p17 = scmp.ge.s32.totalorder %s16, 4
    %s26 = sphi 0, %s28
    %s29 = sphi 0, %s26
    %s30 = sphi 0, %s29
    %s46 = sphi 0, %s30
    %s50 = sphi 0, %s50
    %s52 = sphi 0, %s50
    %s53 = sphi 0, %s52
    %s67 = sphi 0, %s53
    %s73 = sphi 0, %s75
    %s76 = sphi 0, %s73
    %s77 = sphi 0, %s76
    %s93 = sphi 0, %s77
    %s97 = sphi 0, %s97
    %s99 = sphi 0, %s97
    %s100 = sphi 0, %s99
    %s114 = sphi 0, %s100
    %s118 = sphi 0, %s118
    %s120 = sphi 0, %s118
    %s121 = sphi 0, %s120
    %s135 = sphi 0, %s121
    %s139 = sphi 0, %s139
    %s141 = sphi 0, %s139
    %s142 = sphi 0, %s141
    %s156 = sphi 0, %s142
    %s160 = sphi 0, %s160
    %s162 = sphi 0, %s160
    %s163 = sphi 0, %s162
    %s177 = sphi 0, %s163
    %s181 = sphi 0, %s181
    %s183 = sphi 0, %s181
    %s184 = sphi 0, %s183
    %s198 = sphi 0, %s184
    %s204 = sphi 0, %s206
    %s207 = sphi 0, %s204
    %s208 = sphi 0, %s207
    %s224 = sphi 0, %s208
  $region4: #{decoder_forward.9} parent=0 // loop_header_branch
    %19 = sbr.rel (%p17) target = $region8
  $region5: #{decoder_forward.9} parent=0 // loop_body
    %s21 = ssub.s32 %s16, 1
    %s22 = ssub.s32 %s16, 2
    %s23 = sadd.s32 %s16, 1
    %s24 = ssub.s32 %s16, %s23
    %p25 = scmp.eq.s32.totalorder %s24, 0
    %s27 = sadd.s32 %s26, 1
    %s28 = scalar_select %p25, %s26, %s27
    %p31 = pneg %p25
    %p32 = scmp.eq.s32.totalorder %s16, 1
    %p33 = por %p31, %p32
    %p34 = scmp.ne.s32.totalorder %s26, %s29
    %p35 = scmp.eq.s32.totalorder %s16, 0
    %p36 = por %p34, %p35
    %p37 = scmp.ne.s32.totalorder %s26, %s29
    %p38 = scmp.eq.s32.totalorder %s21, 1
    %p39 = por %p37, %p38
    %p40 = scmp.ne.s32.totalorder %s29, %s30
    %p41 = scmp.eq.s32.totalorder %s21, 0
    %p42 = por %p40, %p41
    %p43 = scmp.ne.s32.totalorder %s29, %s30
    %p44 = scmp.eq.s32.totalorder %s22, 1
    %p45 = por %p43, %p44
    %p47 = scmp.ne.s32.totalorder %s30, %s46
    %p48 = scmp.eq.s32.totalorder %s22, 0
    %p49 = por %p47, %p48
    %s51 = sadd.s32 %s50, 1
    %p54 = scmp.eq.s32.totalorder %s16, 1
    %p55 = scmp.ne.s32.totalorder %s50, %s52
    %p56 = scmp.eq.s32.totalorder %s16, 0
    %p57 = por %p55, %p56
    %p58 = scmp.ne.s32.totalorder %s50, %s52
    %p59 = scmp.eq.s32.totalorder %s21, 1
    %p60 = por %p58, %p59
    %p61 = scmp.ne.s32.totalorder %s52, %s53
    %p62 = scmp.eq.s32.totalorder %s21, 0
    %p63 = por %p61, %p62
    %p64 = scmp.ne.s32.totalorder %s52, %s53
    %p65 = scmp.eq.s32.totalorder %s22, 1
    %p66 = por %p64, %p65
    %p68 = scmp.ne.s32.totalorder %s53, %s67
    %p69 = scmp.eq.s32.totalorder %s22, 0
    %p70 = por %p68, %p69
    %s71 = ssub.s32 %s16, %s23
    %p72 = scmp.eq.s32.totalorder %s71, 0
    %s74 = sadd.s32 %s73, 1
    %s75 = scalar_select %p72, %s73, %s74
    %p78 = pneg %p72
    %p79 = scmp.eq.s32.totalorder %s16, 1
    %p80 = por %p78, %p79
    %p81 = scmp.ne.s32.totalorder %s73, %s76
    %p82 = scmp.eq.s32.totalorder %s16, 0
    %p83 = por %p81, %p82
    %p84 = scmp.ne.s32.totalorder %s73, %s76
    %p85 = scmp.eq.s32.totalorder %s21, 1
    %p86 = por %p84, %p85
    %p87 = scmp.ne.s32.totalorder %s76, %s77
    %p88 = scmp.eq.s32.totalorder %s21, 0
    %p89 = por %p87, %p88
    %p90 = scmp.ne.s32.totalorder %s76, %s77
    %p91 = scmp.eq.s32.totalorder %s22, 1
    %p92 = por %p90, %p91
    %p94 = scmp.ne.s32.totalorder %s77, %s93
    %p95 = scmp.eq.s32.totalorder %s22, 0
    %p96 = por %p94, %p95
    %s98 = sadd.s32 %s97, 1
    %p101 = scmp.eq.s32.totalorder %s16, 1
    %p102 = scmp.ne.s32.totalorder %s97, %s99
    %p103 = scmp.eq.s32.totalorder %s16, 0
    %p104 = por %p102, %p103
    %p105 = scmp.ne.s32.totalorder %s97, %s99
    %p106 = scmp.eq.s32.totalorder %s21, 1
    %p107 = por %p105, %p106
    %p108 = scmp.ne.s32.totalorder %s99, %s100
    %p109 = scmp.eq.s32.totalorder %s21, 0
    %p110 = por %p108, %p109
    %p111 = scmp.ne.s32.totalorder %s99, %s100
    %p112 = scmp.eq.s32.totalorder %s22, 1
    %p113 = por %p111, %p112
    %p115 = scmp.ne.s32.totalorder %s100, %s114
    %p116 = scmp.eq.s32.totalorder %s22, 0
    %p117 = por %p115, %p116
    %s119 = sadd.s32 %s118, 1
    %p122 = scmp.eq.s32.totalorder %s16, 1
    %p123 = scmp.ne.s32.totalorder %s118, %s120
    %p124 = scmp.eq.s32.totalorder %s16, 0
    %p125 = por %p123, %p124
    %p126 = scmp.ne.s32.totalorder %s118, %s120
    %p127 = scmp.eq.s32.totalorder %s21, 1
    %p128 = por %p126, %p127
    %p129 = scmp.ne.s32.totalorder %s120, %s121
    %p130 = scmp.eq.s32.totalorder %s21, 0
    %p131 = por %p129, %p130
    %p132 = scmp.ne.s32.totalorder %s120, %s121
    %p133 = scmp.eq.s32.totalorder %s22, 1
    %p134 = por %p132, %p133
    %p136 = scmp.ne.s32.totalorder %s121, %s135
    %p137 = scmp.eq.s32.totalorder %s22, 0
    %p138 = por %p136, %p137
    %s140 = sadd.s32 %s139, 1
    %p143 = scmp.eq.s32.totalorder %s16, 1
    %p144 = scmp.ne.s32.totalorder %s139, %s141
    %p145 = scmp.eq.s32.totalorder %s16, 0
    %p146 = por %p144, %p145
    %p147 = scmp.ne.s32.totalorder %s139, %s141
    %p148 = scmp.eq.s32.totalorder %s21, 1
    %p149 = por %p147, %p148
    %p150 = scmp.ne.s32.totalorder %s141, %s142
    %p151 = scmp.eq.s32.totalorder %s21, 0
    %p152 = por %p150, %p151
    %p153 = scmp.ne.s32.totalorder %s141, %s142
    %p154 = scmp.eq.s32.totalorder %s22, 1
    %p155 = por %p153, %p154
    %p157 = scmp.ne.s32.totalorder %s142, %s156
    %p158 = scmp.eq.s32.totalorder %s22, 0
    %p159 = por %p157, %p158
    %s161 = sadd.s32 %s160, 1
    %p164 = scmp.eq.s32.totalorder %s16, 1
    %p165 = scmp.ne.s32.totalorder %s160, %s162
    %p166 = scmp.eq.s32.totalorder %s16, 0
    %p167 = por %p165, %p166
    %p168 = scmp.ne.s32.totalorder %s160, %s162
    %p169 = scmp.eq.s32.totalorder %s21, 1
    %p170 = por %p168, %p169
    %p171 = scmp.ne.s32.totalorder %s162, %s163
    %p172 = scmp.eq.s32.totalorder %s21, 0
    %p173 = por %p171, %p172
    %p174 = scmp.ne.s32.totalorder %s162, %s163
    %p175 = scmp.eq.s32.totalorder %s22, 1
    %p176 = por %p174, %p175
    %p178 = scmp.ne.s32.totalorder %s163, %s177
    %p179 = scmp.eq.s32.totalorder %s22, 0
    %p180 = por %p178, %p179
    %s182 = sadd.s32 %s181, 1
    %p185 = scmp.eq.s32.totalorder %s16, 1
    %p186 = scmp.ne.s32.totalorder %s181, %s183
    %p187 = scmp.eq.s32.totalorder %s16, 0
    %p188 = por %p186, %p187
    %p189 = scmp.ne.s32.totalorder %s181, %s183
    %p190 = scmp.eq.s32.totalorder %s21, 1
    %p191 = por %p189, %p190
    %p192 = scmp.ne.s32.totalorder %s183, %s184
    %p193 = scmp.eq.s32.totalorder %s21, 0
    %p194 = por %p192, %p193
    %p195 = scmp.ne.s32.totalorder %s183, %s184
    %p196 = scmp.eq.s32.totalorder %s22, 1
    %p197 = por %p195, %p196
    %p199 = scmp.ne.s32.totalorder %s184, %s198
    %p200 = scmp.eq.s32.totalorder %s22, 0
    %p201 = por %p199, %p200
    %s202 = ssub.s32 %s16, %s23
    %p203 = scmp.eq.s32.totalorder %s202, 0
    %s205 = sadd.s32 %s204, 1
    %s206 = scalar_select %p203, %s204, %s205
    %p209 = pneg %p203
    %p210 = scmp.eq.s32.totalorder %s16, 1
    %p211 = por %p209, %p210
    %p212 = scmp.ne.s32.totalorder %s204, %s207
    %p213 = scmp.eq.s32.totalorder %s16, 0
    %p214 = por %p212, %p213
    %p215 = scmp.ne.s32.totalorder %s204, %s207
    %p216 = scmp.eq.s32.totalorder %s21, 1
    %p217 = por %p215, %p216
    %p218 = scmp.ne.s32.totalorder %s207, %s208
    %p219 = scmp.eq.s32.totalorder %s21, 0
    %p220 = por %p218, %p219
    %p221 = scmp.ne.s32.totalorder %s207, %s208
    %p222 = scmp.eq.s32.totalorder %s22, 1
    %p223 = por %p221, %p222
    %p225 = scmp.ne.s32.totalorder %s208, %s224
    %p226 = scmp.eq.s32.totalorder %s22, 0
    %p227 = por %p225, %p226
    %p228 = scmp.le.s32.totalorder 1, %s16
    %p229 = scmp.lt.s32.totalorder %s16, 3
    %p230 = pnand %p228, %p229
    %p231 = pneg %p230
    // Predicated region
    $region9: #{decoder_forward.9} parent=5 // pred_check
      _
    $region10: #{decoder_forward.9} parent=5 // pred_check_branch
      %233 = sbr.rel (%p230) target = $region12
    $region11: #{decoder_forward.9} parent=5 // pred_region
      %s234 = ssub.s32 %s16, 1
      // Predicated region
      $region13: #{decoder_forward.9} parent=11 // pred_check
        %p235 = pneg %p63
      $region14: #{decoder_forward.9} parent=11 // pred_check_branch
        %237 = sbr.rel (%p235) target = $region16
      $region15: #{decoder_forward.9} parent=11 // pred_region
        _
      $region16: #{decoder_forward.9} parent=11 // pred_fallthru
        _
      // Predicated region
      $region17: #{decoder_forward.9} parent=11 // pred_check
        %p238 = pneg %p110
      $region18: #{decoder_forward.9} parent=11 // pred_check_branch
        %240 = sbr.rel (%p238) target = $region20
      $region19: #{decoder_forward.9} parent=11 // pred_region
        _
      $region20: #{decoder_forward.9} parent=11 // pred_fallthru
        _
      // Predicated region
      $region21: #{decoder_forward.9} parent=11 // pred_check
        %p241 = pneg %p131
      $region22: #{decoder_forward.9} parent=11 // pred_check_branch
        %243 = sbr.rel (%p241) target = $region24
      $region23: #{decoder_forward.9} parent=11 // pred_region
        _
      $region24: #{decoder_forward.9} parent=11 // pred_fallthru
        _
      // Predicated region
      $region25: #{decoder_forward.9} parent=11 // pred_check
        %p244 = pneg %p152
      $region26: #{decoder_forward.9} parent=11 // pred_check_branch
        %246 = sbr.rel (%p244) target = $region28
      $region27: #{decoder_forward.9} parent=11 // pred_region
        _
      $region28: #{decoder_forward.9} parent=11 // pred_fallthru
        _
      // Predicated region
      $region29: #{decoder_forward.9} parent=11 // pred_check
        %p247 = pneg %p173
      $region30: #{decoder_forward.9} parent=11 // pred_check_branch
        %249 = sbr.rel (%p247) target = $region32
      $region31: #{decoder_forward.9} parent=11 // pred_region
        _
      $region32: #{decoder_forward.9} parent=11 // pred_fallthru
        _
      // Predicated region
      $region33: #{decoder_forward.9} parent=11 // pred_check
        %p250 = pneg %p194
      $region34: #{decoder_forward.9} parent=11 // pred_check_branch
        %252 = sbr.rel (%p250) target = $region36
      $region35: #{decoder_forward.9} parent=11 // pred_region
        _
      $region36: #{decoder_forward.9} parent=11 // pred_fallthru
        _
    $region12: #{decoder_forward.9} parent=5 // pred_fallthru
      _
    %p253 = scmp.lt.s32.totalorder %s16, 2
    // Predicated region
    $region37: #{decoder_forward.9} parent=5 // pred_check
      %p254 = pneg %p253
    $region38: #{decoder_forward.9} parent=5 // pred_check_branch
      %256 = sbr.rel (%p254) target = $region40
    $region39: #{decoder_forward.9} parent=5 // pred_region
      // Predicated region
      $region41: #{decoder_forward.9} parent=39 // pred_check
        %p257 = pneg %p36
      $region42: #{decoder_forward.9} parent=39 // pred_check_branch
        %259 = sbr.rel (%p257) target = $region44
      $region43: #{decoder_forward.9} parent=39 // pred_region
        %s260 = smul.u32 16, %s16
        %p261 = scmp.lt.s32.totalorder %s260, 31
        %s262 = scalar_select %p261, %s260, 31
        %s263 = smul.addr %s262, 4
        %s264 = scalar_lea.vmem %s0, %s263
        %s265 = smul.u32 16, %s16
      $region44: #{decoder_forward.9} parent=39 // pred_fallthru
        _
      // Predicated region
      $region45: #{decoder_forward.9} parent=39 // pred_check
        %p266 = pneg %p83
      $region46: #{decoder_forward.9} parent=39 // pred_check_branch
        %268 = sbr.rel (%p266) target = $region48
      $region47: #{decoder_forward.9} parent=39 // pred_region
        %s269 = smul.u32 16, %s16
        %p270 = scmp.lt.s32.totalorder %s269, 31
        %s271 = scalar_select %p270, %s269, 31
        %s272 = smul.addr %s271, 8
        %s273 = scalar_lea.vmem %s2, %s272
        %s274 = smul.u32 16, %s16
      $region48: #{decoder_forward.9} parent=39 // pred_fallthru
        _
    $region40: #{decoder_forward.9} parent=5 // pred_fallthru
      _
    %p275 = scmp.le.s32.totalorder 1, %s16
    %p276 = scmp.lt.s32.totalorder %s16, 3
    %p277 = pnand %p275, %p276
    %p278 = pneg %p277
    // Predicated region
    $region49: #{decoder_forward.9} parent=5 // pred_check
      _
    $region50: #{decoder_forward.9} parent=5 // pred_check_branch
      %280 = sbr.rel (%p277) target = $region52
    $region51: #{decoder_forward.9} parent=5 // pred_region
      %s281 = ssub.s32 %s16, 1
      %s282 = smul.u32 16, %s21
      %p283 = scmp.lt.s32.totalorder %s282, 31
      %s284 = scalar_select %p283, %s282, 31
      %s285 = smul.addr %s284, 4
      %s286 = scalar_lea.vmem %s0, %s285
      %p287 = pneg %p42
      %p288 = pneg %p39
      %p289 = pneg %p63
      %p290 = pneg %p60
      %s291 = smul.u32 16, %s21
      %p292 = scmp.lt.s32.totalorder %s291, 31
      %s293 = scalar_select %p292, %s291, 31
      %s294 = smul.addr %s293, 8
      %s295 = scalar_lea.vmem %s2, %s294
      %p296 = pneg %p89
      %p297 = pneg %p86
      %p298 = pneg %p110
      %p299 = pneg %p107
      %p300 = pneg %p131
      %p301 = pneg %p128
      %p302 = pneg %p152
      %p303 = pneg %p149
      %p304 = pneg %p173
      %p305 = pneg %p170
      %p306 = pneg %p194
      %p307 = pneg %p191
      %p308 = pneg %p220
      %p309 = pneg %p217
      %s310 = smul.u32 16, %s21
      %p311 = scmp.lt.s32.totalorder %s310, 31
      %s312 = scalar_select %p311, %s310, 31
      %s313 = smul.addr %s312, 2
      %s314 = smul.addr %s313, 4
      %s315 = scalar_lea.vmem %s8, %s314
      %s316 = smul.u32 16, %s21
      %p317 = scmp.lt.s32.totalorder %s316, 31
      %s318 = scalar_select %p317, %s316, 31
      %s319 = smul.addr %s318, 4
      %s320 = scalar_lea.vmem %s0, %s319
      %s321 = smul.u32 16, %s21
      %s322 = smul.u32 16, %s21
      %p323 = scmp.lt.s32.totalorder %s322, 31
      %s324 = scalar_select %p323, %s322, 31
      %s325 = smul.addr %s324, 8
      %s326 = scalar_lea.vmem %s2, %s325
      %s327 = smul.u32 16, %s21
      %s328 = smul.u32 16, %s21
      %p329 = scmp.lt.s32.totalorder %s328, 31
      %s330 = scalar_select %p329, %s328, 31
      %s331 = smul.addr %s330, 2
      %s332 = smul.addr %s331, 4
      %s333 = scalar_lea.vmem %s8, %s332
      %s334 = smul.u32 16, %s21
      %v336 = vld [vmem:[%s320] sm:$0xf]
      %v337 = vld [vmem:[%s320 + $0x4] sm:$0xf]
      %v338 = vld [vmem:[%s320 + $0x8] sm:$0xf]
      %v339 = vld [vmem:[%s320 + $0xc] sm:$0xf]
      %v340 = vld [vmem:[%s320 + $0x10] sm:$0xf]
      %v341 = vld [vmem:[%s320 + $0x14] sm:$0xf]
      %v342 = vld [vmem:[%s320 + $0x18] sm:$0xf]
      %v343 = vld [vmem:[%s320 + $0x1c] sm:$0xf]
      %v344 = vld [vmem:[%s320 + $0x20] sm:$0xf]
      %v345 = vld [vmem:[%s320 + $0x24] sm:$0xf]
      %v346 = vld [vmem:[%s320 + $0x28] sm:$0xf]
      %v347 = vld [vmem:[%s320 + $0x2c] sm:$0xf]
      %v348 = vld [vmem:[%s320 + $0x30] sm:$0xf]
      %v349 = vld [vmem:[%s320 + $0x34] sm:$0xf]
      %v350 = vld [vmem:[%s320 + $0x38] sm:$0xf]
      %v351 = vld [vmem:[%s320 + $0x3c] sm:$0xf]
      %v352 = vunpack.c.l.bf16 %v336
      %v353 = vunpack.c.l.bf16 %v337
      %v354 = vunpack.c.l.bf16 %v338
      %v355 = vunpack.c.l.bf16 %v339
      %v356 = vunpack.c.l.bf16 %v340
      %v357 = vunpack.c.l.bf16 %v341
      %v358 = vunpack.c.l.bf16 %v342
      %v359 = vunpack.c.l.bf16 %v343
      %v360 = vunpack.c.l.bf16 %v344
      %v361 = vunpack.c.l.bf16 %v345
      %v362 = vunpack.c.l.bf16 %v346
      %v363 = vunpack.c.l.bf16 %v347
      %v364 = vunpack.c.l.bf16 %v348
      %v365 = vunpack.c.l.bf16 %v349
      %v366 = vunpack.c.l.bf16 %v350
      %v367 = vunpack.c.l.bf16 %v351
      %v368 = vld [vmem:[%s1] sm:$0x1]
      %v370 = vperm.slane %v368, 0
      %v372 = vadd.f32 %v352, %v370
      %v373 = vadd.f32 %v353, %v370
      %v374 = vadd.f32 %v354, %v370
      %v375 = vadd.f32 %v355, %v370
      %v376 = vadd.f32 %v356, %v370
      %v377 = vadd.f32 %v357, %v370
      %v378 = vadd.f32 %v358, %v370
      %v379 = vadd.f32 %v359, %v370
      %v380 = vadd.f32 %v360, %v370
      %v381 = vadd.f32 %v361, %v370
      %v382 = vadd.f32 %v362, %v370
      %v383 = vadd.f32 %v363, %v370
      %v384 = vadd.f32 %v364, %v370
      %v385 = vadd.f32 %v365, %v370
      %v386 = vadd.f32 %v366, %v370
      %v387 = vadd.f32 %v367, %v370
      %vm388 = vcmp.gt.f32.partialorder %v372, 0.0
      %vm389 = vcmp.gt.f32.partialorder %v373, 0.0
      %vm390 = vcmp.gt.f32.partialorder %v374, 0.0
      %vm391 = vcmp.gt.f32.partialorder %v375, 0.0
      %vm392 = vcmp.gt.f32.partialorder %v376, 0.0
      %vm393 = vcmp.gt.f32.partialorder %v377, 0.0
      %vm394 = vcmp.gt.f32.partialorder %v378, 0.0
      %vm395 = vcmp.gt.f32.partialorder %v379, 0.0
      %vm396 = vcmp.gt.f32.partialorder %v380, 0.0
      %vm397 = vcmp.gt.f32.partialorder %v381, 0.0
      %vm398 = vcmp.gt.f32.partialorder %v382, 0.0
      %vm399 = vcmp.gt.f32.partialorder %v383, 0.0
      %vm400 = vcmp.gt.f32.partialorder %v384, 0.0
      %vm401 = vcmp.gt.f32.partialorder %v385, 0.0
      %vm402 = vcmp.gt.f32.partialorder %v386, 0.0
      %vm403 = vcmp.gt.f32.partialorder %v387, 0.0
      %v404 = vmin.f32 %v372, 0.0
      %v405 = vmin.f32 %v373, 0.0
      %v406 = vmin.f32 %v374, 0.0
      %v407 = vmin.f32 %v375, 0.0
      %v408 = vmin.f32 %v376, 0.0
      %v409 = vmin.f32 %v377, 0.0
      %v410 = vmin.f32 %v378, 0.0
      %v411 = vmin.f32 %v379, 0.0
      %v412 = vmin.f32 %v380, 0.0
      %v413 = vmin.f32 %v381, 0.0
      %v414 = vmin.f32 %v382, 0.0
      %v415 = vmin.f32 %v383, 0.0
      %v416 = vmin.f32 %v384, 0.0
      %v417 = vmin.f32 %v385, 0.0
      %v418 = vmin.f32 %v386, 0.0
      %v419 = vmin.f32 %v387, 0.0
      %v420 = vmul.f32 %v404, 1.442695
      %v421 = vpow.pop %v420
      %v422 = vmul.f32 %v405, 1.442695
      %v423 = vpow.pop %v422
      %v424 = vmul.f32 %v406, 1.442695
      %v425 = vpow.pop %v424
      %v426 = vmul.f32 %v407, 1.442695
      %v427 = vpow.pop %v426
      %v428 = vmul.f32 %v408, 1.442695
      %v429 = vpow.pop %v428
      %v430 = vmul.f32 %v409, 1.442695
      %v431 = vpow.pop %v430
      %v432 = vmul.f32 %v410, 1.442695
      %v433 = vpow.pop %v432
      %v434 = vmul.f32 %v411, 1.442695
      %v435 = vpow.pop %v434
      %v436 = vmul.f32 %v412, 1.442695
      %v437 = vpow.pop %v436
      %v438 = vmul.f32 %v413, 1.442695
      %v439 = vpow.pop %v438
      %v440 = vmul.f32 %v414, 1.442695
      %v441 = vpow.pop %v440
      %v442 = vmul.f32 %v415, 1.442695
      %v443 = vpow.pop %v442
      %v444 = vmul.f32 %v416, 1.442695
      %v445 = vpow.pop %v444
      %v446 = vmul.f32 %v417, 1.442695
      %v447 = vpow.pop %v446
      %v448 = vmul.f32 %v418, 1.442695
      %v449 = vpow.pop %v448
      %v450 = vmul.f32 %v419, 1.442695
      %v451 = vpow.pop %v450
      %v452 = vsub.f32 %v421, 1.0
      %v453 = vsub.f32 %v423, 1.0
      %v454 = vsub.f32 %v425, 1.0
      %v455 = vsub.f32 %v427, 1.0
      %v456 = vsub.f32 %v429, 1.0
      %v457 = vsub.f32 %v431, 1.0
      %v458 = vsub.f32 %v433, 1.0
      %v459 = vsub.f32 %v435, 1.0
      %v460 = vsub.f32 %v437, 1.0
      %v461 = vsub.f32 %v439, 1.0
      %v462 = vsub.f32 %v441, 1.0
      %v463 = vsub.f32 %v443, 1.0
      %v464 = vsub.f32 %v445, 1.0
      %v465 = vsub.f32 %v447, 1.0
      %v466 = vsub.f32 %v449, 1.0
      %v467 = vsub.f32 %v451, 1.0
      %v468 = vsel %vm388, %v372, %v452
      %v469 = vsel %vm389, %v373, %v453
      %v470 = vsel %vm390, %v374, %v454
      %v471 = vsel %vm391, %v375, %v455
      %v472 = vsel %vm392, %v376, %v456
      %v473 = vsel %vm393, %v377, %v457
      %v474 = vsel %vm394, %v378, %v458
      %v475 = vsel %vm395, %v379, %v459
      %v476 = vsel %vm396, %v380, %v460
      %v477 = vsel %vm397, %v381, %v461
      %v478 = vsel %vm398, %v382, %v462
      %v479 = vsel %vm399, %v383, %v463
      %v480 = vsel %vm400, %v384, %v464
      %v481 = vsel %vm401, %v385, %v465
      %v482 = vsel %vm402, %v386, %v466
      %v483 = vsel %vm403, %v387, %v467
      %v484 = vpack.c.bf16 %v468, %v468
      %v485 = vpack.c.bf16 %v469, %v469
      %v486 = vpack.c.bf16 %v470, %v470
      %v487 = vpack.c.bf16 %v471, %v471
      %v488 = vpack.c.bf16 %v472, %v472
      %v489 = vpack.c.bf16 %v473, %v473
      %v490 = vpack.c.bf16 %v474, %v474
      %v491 = vpack.c.bf16 %v475, %v475
      %v492 = vpack.c.bf16 %v476, %v476
      %v493 = vpack.c.bf16 %v477, %v477
      %v494 = vpack.c.bf16 %v478, %v478
      %v495 = vpack.c.bf16 %v479, %v479
      %v496 = vpack.c.bf16 %v480, %v480
      %v497 = vpack.c.bf16 %v481, %v481
      %v498 = vpack.c.bf16 %v482, %v482
      %v499 = vpack.c.bf16 %v483, %v483
      %v500 = vld [vmem:[%s326] sm:$0xff]
      %v501 = vld [vmem:[%s326 + $0x8] sm:$0xff]
      %v502 = vld [vmem:[%s326 + $0x10] sm:$0xff]
      %v503 = vld [vmem:[%s326 + $0x18] sm:$0xff]
      %v504 = vld [vmem:[%s326 + $0x20] sm:$0xff]
      %v505 = vld [vmem:[%s326 + $0x28] sm:$0xff]
      %v506 = vld [vmem:[%s326 + $0x30] sm:$0xff]
      %v507 = vld [vmem:[%s326 + $0x38] sm:$0xff]
      %v508 = vld [vmem:[%s326 + $0x40] sm:$0xff]
      %v509 = vld [vmem:[%s326 + $0x48] sm:$0xff]
      %v510 = vld [vmem:[%s326 + $0x50] sm:$0xff]
      %v511 = vld [vmem:[%s326 + $0x58] sm:$0xff]
      %v512 = vld [vmem:[%s326 + $0x60] sm:$0xff]
      %v513 = vld [vmem:[%s326 + $0x68] sm:$0xff]
      %v514 = vld [vmem:[%s326 + $0x70] sm:$0xff]
      %v515 = vld [vmem:[%s326 + $0x78] sm:$0xff]
      %v516 = vpack.c.bf16 %v500, %v500
      %v517 = vpack.c.bf16 %v501, %v501
      %v518 = vpack.c.bf16 %v502, %v502
      %v519 = vpack.c.bf16 %v503, %v503
      %v520 = vpack.c.bf16 %v504, %v504
      %v521 = vpack.c.bf16 %v505, %v505
      %v522 = vpack.c.bf16 %v506, %v506
      %v523 = vpack.c.bf16 %v507, %v507
      %v524 = vpack.c.bf16 %v508, %v508
      %v525 = vpack.c.bf16 %v509, %v509
      %v526 = vpack.c.bf16 %v510, %v510
      %v527 = vpack.c.bf16 %v511, %v511
      %v528 = vpack.c.bf16 %v512, %v512
      %v529 = vpack.c.bf16 %v513, %v513
      %v530 = vpack.c.bf16 %v514, %v514
      %v531 = vpack.c.bf16 %v515, %v515
      %v548 = vunpack.c.l.b16 %v484
      %v549 = vunpack.c.l.b16 %v485
      %v550 = vunpack.c.l.b16 %v486
      %v551 = vunpack.c.l.b16 %v487
      %v552 = vunpack.c.l.b16 %v488
      %v553 = vunpack.c.l.b16 %v489
      %v554 = vunpack.c.l.b16 %v490
      %v555 = vunpack.c.l.b16 %v491
      %v556 = vunpack.c.l.b16 %v492
      %v557 = vunpack.c.l.b16 %v493
      %v558 = vunpack.c.l.b16 %v494
      %v559 = vunpack.c.l.b16 %v495
      %v560 = vunpack.c.l.b16 %v496
      %v561 = vunpack.c.l.b16 %v497
      %v562 = vunpack.c.l.b16 %v498
      %v563 = vunpack.c.l.b16 %v499
      %v564 = vpack.c.b16 %v549, %v548
      %v565 = vpack.c.b16 %v551, %v550
      %v566 = vpack.c.b16 %v553, %v552
      %v567 = vpack.c.b16 %v555, %v554
      %v568 = vpack.c.b16 %v557, %v556
      %v569 = vpack.c.b16 %v559, %v558
      %v570 = vpack.c.b16 %v561, %v560
      %v571 = vpack.c.b16 %v563, %v562
      %v588 = vunpack.c.l.b16 %v516
      %v589 = vunpack.c.l.b16 %v517
      %v590 = vunpack.c.l.b16 %v518
      %v591 = vunpack.c.l.b16 %v519
      %v592 = vunpack.c.l.b16 %v520
      %v593 = vunpack.c.l.b16 %v521
      %v594 = vunpack.c.l.b16 %v522
      %v595 = vunpack.c.l.b16 %v523
      %v596 = vunpack.c.l.b16 %v524
      %v597 = vunpack.c.l.b16 %v525
      %v598 = vunpack.c.l.b16 %v526
      %v599 = vunpack.c.l.b16 %v527
      %v600 = vunpack.c.l.b16 %v528
      %v601 = vunpack.c.l.b16 %v529
      %v602 = vunpack.c.l.b16 %v530
      %v603 = vunpack.c.l.b16 %v531
      %v604 = vpack.c.b16 %v589, %v588
      %v605 = vpack.c.b16 %v591, %v590
      %v606 = vpack.c.b16 %v593, %v592
      %v607 = vpack.c.b16 %v595, %v594
      %v608 = vpack.c.b16 %v597, %v596
      %v609 = vpack.c.b16 %v599, %v598
      %v610 = vpack.c.b16 %v601, %v600
      %v611 = vpack.c.b16 %v603, %v602
      %612 = vrot.lane.b32.xlu0 %v604, 32
      %v613 = vpop.permute.xlu0 %612
      %614 = vrot.lane.b32.xlu0 %v605, 32
      %v615 = vpop.permute.xlu0 %614
      %616 = vrot.lane.b32.xlu0 %v606, 32
      %v617 = vpop.permute.xlu0 %616
      %618 = vrot.lane.b32.xlu0 %v607, 32
      %v619 = vpop.permute.xlu0 %618
      %620 = vrot.lane.b32.xlu0 %v608, 32
      %v621 = vpop.permute.xlu0 %620
      %622 = vrot.lane.b32.xlu0 %v609, 32
      %v623 = vpop.permute.xlu0 %622
      %624 = vrot.lane.b32.xlu0 %v610, 32
      %v625 = vpop.permute.xlu0 %624
      %626 = vrot.lane.b32.xlu0 %v611, 32
      %v627 = vpop.permute.xlu0 %626
      %vm628 = vcmask 261120
      %v631 = vsel %vm628, %v564, %v613
      %v634 = vsel %vm628, %v565, %v615
      %v637 = vsel %vm628, %v566, %v617
      %v640 = vsel %vm628, %v567, %v619
      %v643 = vsel %vm628, %v568, %v621
      %v646 = vsel %vm628, %v569, %v623
      %v649 = vsel %vm628, %v570, %v625
      %v652 = vsel %vm628, %v571, %v627
      %v653 = vld [vmem:[%s3] sm:$0xf]
      %v654 = vld [vmem:[%s3 + $0x4] sm:$0xf]
      %v655 = vld [vmem:[%s3 + $0x8] sm:$0xf]
      %v656 = vld [vmem:[%s3 + $0xc] sm:$0xf]
      %v657 = vld [vmem:[%s3 + $0x10] sm:$0xf]
      %v658 = vld [vmem:[%s3 + $0x14] sm:$0xf]
      %v659 = vld [vmem:[%s3 + $0x18] sm:$0xf]
      %v660 = vld [vmem:[%s3 + $0x1c] sm:$0xf]
      %v661 = vld [vmem:[%s4] sm:$0x1]
      %v663 = vperm.slane %v661, 0
      %v673 = vunpack.c.l.b16 %v653
      %v674 = vunpack.c.l.b16 %v654
      %v675 = vunpack.c.l.b16 %v655
      %v676 = vunpack.c.l.b16 %v656
      %v677 = vunpack.c.l.b16 %v657
      %v678 = vunpack.c.l.b16 %v658
      %v679 = vunpack.c.l.b16 %v659
      %v680 = vunpack.c.l.b16 %v660
      %v681 = vpack.c.b16 %v674, %v673
      %v682 = vpack.c.b16 %v676, %v675
      %v683 = vpack.c.b16 %v678, %v677
      %v684 = vpack.c.b16 %v680, %v679
      %vm689 = vcmask 523264
      %v690 = vsel %vm689, %v631, 0
      %v692 = vsel %vm689, %v634, 0
      %v694 = vsel %vm689, %v637, 0
      %v696 = vsel %vm689, %v640, 0
      %v698 = vsel %vm689, %v643, 0
      %v700 = vsel %vm689, %v646, 0
      %v702 = vsel %vm689, %v649, 0
      %v704 = vsel %vm689, %v652, 0
      %706 = vmatpush.bf16.msra.mxu0 0
      %707 = vmatpush.bf16.msra.mxu0 0
      %708 = vmatpush.bf16.msra.mxu0 0
      %709 = vmatpush.bf16.msra.mxu0 0
      %710 = vmatpush.bf16.msra.mxu0 %v684
      %711 = vmatpush.bf16.msra.mxu0 %v683
      %712 = vmatpush.bf16.msra.mxu0 %v682
      %713 = vmatpush.bf16.msra.mxu0 %v681
      %714 = vmatmul.bf16.gmra.mxu0 %v690
      %v715 = vpop.f32.mrf.mxu0
      %v716 = vadd.f32 %v663, %v715
      %v717 = vpop.f32.mrf.mxu0
      %v718 = vadd.f32 %v663, %v717
      %719 = vmatmul.bf16.gmra.mxu0 %v692
      %v720 = vpop.f32.mrf.mxu0
      %v721 = vadd.f32 %v663, %v720
      %v722 = vpop.f32.mrf.mxu0
      %v723 = vadd.f32 %v663, %v722
      %724 = vmatmul.bf16.gmra.mxu0 %v694
      %v725 = vpop.f32.mrf.mxu0
      %v726 = vadd.f32 %v663, %v725
      %v727 = vpop.f32.mrf.mxu0
      %v728 = vadd.f32 %v663, %v727
      %729 = vmatmul.bf16.gmra.mxu0 %v696
      %v730 = vpop.f32.mrf.mxu0
      %v731 = vadd.f32 %v663, %v730
      %v732 = vpop.f32.mrf.mxu0
      %v733 = vadd.f32 %v663, %v732
      %734 = vmatmul.bf16.gmra.mxu0 %v698
      %v735 = vpop.f32.mrf.mxu0
      %v736 = vadd.f32 %v663, %v735
      %v737 = vpop.f32.mrf.mxu0
      %v738 = vadd.f32 %v663, %v737
      %739 = vmatmul.bf16.gmra.mxu0 %v700
      %v740 = vpop.f32.mrf.mxu0
      %v741 = vadd.f32 %v663, %v740
      %v742 = vpop.f32.mrf.mxu0
      %v743 = vadd.f32 %v663, %v742
      %744 = vmatmul.bf16.gmra.mxu0 %v702
      %v745 = vpop.f32.mrf.mxu0
      %v746 = vadd.f32 %v663, %v745
      %v747 = vpop.f32.mrf.mxu0
      %v748 = vadd.f32 %v663, %v747
      %749 = vmatmul.bf16.gmra.mxu0 %v704
      %v750 = vpop.f32.mrf.mxu0
      %v751 = vadd.f32 %v663, %v750
      %v752 = vpop.f32.mrf.mxu0
      %v753 = vadd.f32 %v663, %v752
      %754 = vdwg.mxu0
      %v755 = vmax.f32 %v716, 0.0
      %v756 = vmax.f32 %v718, 0.0
      %v757 = vmax.f32 %v721, 0.0
      %v758 = vmax.f32 %v723, 0.0
      %v759 = vmax.f32 %v726, 0.0
      %v760 = vmax.f32 %v728, 0.0
      %v761 = vmax.f32 %v731, 0.0
      %v762 = vmax.f32 %v733, 0.0
      %v763 = vmax.f32 %v736, 0.0
      %v764 = vmax.f32 %v738, 0.0
      %v765 = vmax.f32 %v741, 0.0
      %v766 = vmax.f32 %v743, 0.0
      %v767 = vmax.f32 %v746, 0.0
      %v768 = vmax.f32 %v748, 0.0
      %v769 = vmax.f32 %v751, 0.0
      %v770 = vmax.f32 %v753, 0.0
      %v771 = vld [vmem:[%s5] sm:$0x1]
      %v773 = vperm.slane %v771, 0
      %v775 = vmul.f32 %v755, %v773
      %v776 = vmul.f32 %v756, %v773
      %v777 = vmul.f32 %v757, %v773
      %v778 = vmul.f32 %v758, %v773
      %v779 = vmul.f32 %v759, %v773
      %v780 = vmul.f32 %v760, %v773
      %v781 = vmul.f32 %v761, %v773
      %v782 = vmul.f32 %v762, %v773
      %v783 = vmul.f32 %v763, %v773
      %v784 = vmul.f32 %v764, %v773
      %v785 = vmul.f32 %v765, %v773
      %v786 = vmul.f32 %v766, %v773
      %v787 = vmul.f32 %v767, %v773
      %v788 = vmul.f32 %v768, %v773
      %v789 = vmul.f32 %v769, %v773
      %v790 = vmul.f32 %v770, %v773
      %v791 = vsel %vm628, %v775, 0.0
      %792 = vadd.xlane.f32.xlu0 %v791
      %v793 = vpop.xlane.xlu0 %792
      %v794 = vsel %vm628, %v776, 0.0
      %795 = vadd.xlane.f32.xlu0 %v794
      %v796 = vpop.xlane.xlu0 %795
      %v797 = vsel %vm628, %v777, 0.0
      %798 = vadd.xlane.f32.xlu0 %v797
      %v799 = vpop.xlane.xlu0 %798
      %v800 = vsel %vm628, %v778, 0.0
      %801 = vadd.xlane.f32.xlu0 %v800
      %v802 = vpop.xlane.xlu0 %801
      %v803 = vsel %vm628, %v779, 0.0
      %804 = vadd.xlane.f32.xlu0 %v803
      %v805 = vpop.xlane.xlu0 %804
      %v806 = vsel %vm628, %v780, 0.0
      %807 = vadd.xlane.f32.xlu0 %v806
      %v808 = vpop.xlane.xlu0 %807
      %v809 = vsel %vm628, %v781, 0.0
      %810 = vadd.xlane.f32.xlu0 %v809
      %v811 = vpop.xlane.xlu0 %810
      %v812 = vsel %vm628, %v782, 0.0
      %813 = vadd.xlane.f32.xlu0 %v812
      %v814 = vpop.xlane.xlu0 %813
      %v815 = vsel %vm628, %v783, 0.0
      %816 = vadd.xlane.f32.xlu0 %v815
      %v817 = vpop.xlane.xlu0 %816
      %v818 = vsel %vm628, %v784, 0.0
      %819 = vadd.xlane.f32.xlu0 %v818
      %v820 = vpop.xlane.xlu0 %819
      %v821 = vsel %vm628, %v785, 0.0
      %822 = vadd.xlane.f32.xlu0 %v821
      %v823 = vpop.xlane.xlu0 %822
      %v824 = vsel %vm628, %v786, 0.0
      %825 = vadd.xlane.f32.xlu0 %v824
      %v826 = vpop.xlane.xlu0 %825
      %v827 = vsel %vm628, %v787, 0.0
      %828 = vadd.xlane.f32.xlu0 %v827
      %v829 = vpop.xlane.xlu0 %828
      %v830 = vsel %vm628, %v788, 0.0
      %831 = vadd.xlane.f32.xlu0 %v830
      %v832 = vpop.xlane.xlu0 %831
      %v833 = vsel %vm628, %v789, 0.0
      %834 = vadd.xlane.f32.xlu0 %v833
      %v835 = vpop.xlane.xlu0 %834
      %v836 = vsel %vm628, %v790, 0.0
      %837 = vadd.xlane.f32.xlu0 %v836
      %v838 = vpop.xlane.xlu0 %837
      %v839 = vld [vmem:[#allocation2] sm:$0x1]
      %v841 = vperm.slane %v839, 0
      %v843 = vadd.f32 %v793, %v841
      %v844 = vadd.f32 %v796, %v841
      %v845 = vadd.f32 %v799, %v841
      %v846 = vadd.f32 %v802, %v841
      %v847 = vadd.f32 %v805, %v841
      %v848 = vadd.f32 %v808, %v841
      %v849 = vadd.f32 %v811, %v841
      %v850 = vadd.f32 %v814, %v841
      %v851 = vadd.f32 %v817, %v841
      %v852 = vadd.f32 %v820, %v841
      %v853 = vadd.f32 %v823, %v841
      %v854 = vadd.f32 %v826, %v841
      %v855 = vadd.f32 %v829, %v841
      %v856 = vadd.f32 %v832, %v841
      %v857 = vadd.f32 %v835, %v841
      %v858 = vadd.f32 %v838, %v841
      %v859 = vxor.u32 %v843, 2147483648
      %v860 = vxor.u32 %v844, 2147483648
      %v861 = vxor.u32 %v845, 2147483648
      %v862 = vxor.u32 %v846, 2147483648
      %v863 = vxor.u32 %v847, 2147483648
      %v864 = vxor.u32 %v848, 2147483648
      %v865 = vxor.u32 %v849, 2147483648
      %v866 = vxor.u32 %v850, 2147483648
      %v867 = vxor.u32 %v851, 2147483648
      %v868 = vxor.u32 %v852, 2147483648
      %v869 = vxor.u32 %v853, 2147483648
      %v870 = vxor.u32 %v854, 2147483648
      %v871 = vxor.u32 %v855, 2147483648
      %v872 = vxor.u32 %v856, 2147483648
      %v873 = vxor.u32 %v857, 2147483648
      %v874 = vxor.u32 %v858, 2147483648
      %v875 = vmul.f32 %v859, 1.442695
      %v876 = vpow.pop %v875
      %v877 = vmul.f32 %v860, 1.442695
      %v878 = vpow.pop %v877
      %v879 = vmul.f32 %v861, 1.442695
      %v880 = vpow.pop %v879
      %v881 = vmul.f32 %v862, 1.442695
      %v882 = vpow.pop %v881
      %v883 = vmul.f32 %v863, 1.442695
      %v884 = vpow.pop %v883
      %v885 = vmul.f32 %v864, 1.442695
      %v886 = vpow.pop %v885
      %v887 = vmul.f32 %v865, 1.442695
      %v888 = vpow.pop %v887
      %v889 = vmul.f32 %v866, 1.442695
      %v890 = vpow.pop %v889
      %v891 = vmul.f32 %v867, 1.442695
      %v892 = vpow.pop %v891
      %v893 = vmul.f32 %v868, 1.442695
      %v894 = vpow.pop %v893
      %v895 = vmul.f32 %v869, 1.442695
      %v896 = vpow.pop %v895
      %v897 = vmul.f32 %v870, 1.442695
      %v898 = vpow.pop %v897
      %v899 = vmul.f32 %v871, 1.442695
      %v900 = vpow.pop %v899
      %v901 = vmul.f32 %v872, 1.442695
      %v902 = vpow.pop %v901
      %v903 = vmul.f32 %v873, 1.442695
      %v904 = vpow.pop %v903
      %v905 = vmul.f32 %v874, 1.442695
      %v906 = vpow.pop %v905
      %v907 = vadd.f32 %v876, 1.0
      %v908 = vadd.f32 %v878, 1.0
      %v909 = vadd.f32 %v880, 1.0
      %v910 = vadd.f32 %v882, 1.0
      %v911 = vadd.f32 %v884, 1.0
      %v912 = vadd.f32 %v886, 1.0
      %v913 = vadd.f32 %v888, 1.0
      %v914 = vadd.f32 %v890, 1.0
      %v915 = vadd.f32 %v892, 1.0
      %v916 = vadd.f32 %v894, 1.0
      %v917 = vadd.f32 %v896, 1.0
      %v918 = vadd.f32 %v898, 1.0
      %v919 = vadd.f32 %v900, 1.0
      %v920 = vadd.f32 %v902, 1.0
      %v921 = vadd.f32 %v904, 1.0
      %v922 = vadd.f32 %v906, 1.0
      %v923 = vrcp.pop %v907
      %v924 = vmul.f32 %v907, %v923
      %v925 = vsub.f32 1.0, %v924
      %v926 = vmul.f32 %v923, %v925
      %v927 = vadd.f32 %v923, %v926
      %vm928 = vweird.f32 %v907
      %vm929 = vweird.f32 %v923
      %vm930 = vmor %vm928, %vm929
      %v931 = vsel %vm930, %v923, %v927
      %v932 = vand.u32 2147483647, %v907
      %vm933 = vcmp.eq.f32.partialorder %v932, 8.507059e+37
      %v934 = vand.u32 %v907, 2147483648
      %v935 = vor.u32 1.1754944e-38, %v934
      %v936 = vsel %vm933, %v935, %v931
      %v937 = vmul.f32 1.0, %v936
      %v938 = vrcp.pop %v908
      %v939 = vmul.f32 %v908, %v938
      %v940 = vsub.f32 1.0, %v939
      %v941 = vmul.f32 %v938, %v940
      %v942 = vadd.f32 %v938, %v941
      %vm943 = vweird.f32 %v908
      %vm944 = vweird.f32 %v938
      %vm945 = vmor %vm943, %vm944
      %v946 = vsel %vm945, %v938, %v942
      %v947 = vand.u32 2147483647, %v908
      %vm948 = vcmp.eq.f32.partialorder %v947, 8.507059e+37
      %v949 = vand.u32 %v908, 2147483648
      %v950 = vor.u32 1.1754944e-38, %v949
      %v951 = vsel %vm948, %v950, %v946
      %v952 = vmul.f32 1.0, %v951
      %v953 = vrcp.pop %v909
      %v954 = vmul.f32 %v909, %v953
      %v955 = vsub.f32 1.0, %v954
      %v956 = vmul.f32 %v953, %v955
      %v957 = vadd.f32 %v953, %v956
      %vm958 = vweird.f32 %v909
      %vm959 = vweird.f32 %v953
      %vm960 = vmor %vm958, %vm959
      %v961 = vsel %vm960, %v953, %v957
      %v962 = vand.u32 2147483647, %v909
      %vm963 = vcmp.eq.f32.partialorder %v962, 8.507059e+37
      %v964 = vand.u32 %v909, 2147483648
      %v965 = vor.u32 1.1754944e-38, %v964
      %v966 = vsel %vm963, %v965, %v961
      %v967 = vmul.f32 1.0, %v966
      %v968 = vrcp.pop %v910
      %v969 = vmul.f32 %v910, %v968
      %v970 = vsub.f32 1.0, %v969
      %v971 = vmul.f32 %v968, %v970
      %v972 = vadd.f32 %v968, %v971
      %vm973 = vweird.f32 %v910
      %vm974 = vweird.f32 %v968
      %vm975 = vmor %vm973, %vm974
      %v976 = vsel %vm975, %v968, %v972
      %v977 = vand.u32 2147483647, %v910
      %vm978 = vcmp.eq.f32.partialorder %v977, 8.507059e+37
      %v979 = vand.u32 %v910, 2147483648
      %v980 = vor.u32 1.1754944e-38, %v979
      %v981 = vsel %vm978, %v980, %v976
      %v982 = vmul.f32 1.0, %v981
      %v983 = vrcp.pop %v911
      %v984 = vmul.f32 %v911, %v983
      %v985 = vsub.f32 1.0, %v984
      %v986 = vmul.f32 %v983, %v985
      %v987 = vadd.f32 %v983, %v986
      %vm988 = vweird.f32 %v911
      %vm989 = vweird.f32 %v983
      %vm990 = vmor %vm988, %vm989
      %v991 = vsel %vm990, %v983, %v987
      %v992 = vand.u32 2147483647, %v911
      %vm993 = vcmp.eq.f32.partialorder %v992, 8.507059e+37
      %v994 = vand.u32 %v911, 2147483648
      %v995 = vor.u32 1.1754944e-38, %v994
      %v996 = vsel %vm993, %v995, %v991
      %v997 = vmul.f32 1.0, %v996
      %v998 = vrcp.pop %v912
      %v999 = vmul.f32 %v912, %v998
      %v1000 = vsub.f32 1.0, %v999
      %v1001 = vmul.f32 %v998, %v1000
      %v1002 = vadd.f32 %v998, %v1001
      %vm1003 = vweird.f32 %v912
      %vm1004 = vweird.f32 %v998
      %vm1005 = vmor %vm1003, %vm1004
      %v1006 = vsel %vm1005, %v998, %v1002
      %v1007 = vand.u32 2147483647, %v912
      %vm1008 = vcmp.eq.f32.partialorder %v1007, 8.507059e+37
      %v1009 = vand.u32 %v912, 2147483648
      %v1010 = vor.u32 1.1754944e-38, %v1009
      %v1011 = vsel %vm1008, %v1010, %v1006
      %v1012 = vmul.f32 1.0, %v1011
      %v1013 = vrcp.pop %v913
      %v1014 = vmul.f32 %v913, %v1013
      %v1015 = vsub.f32 1.0, %v1014
      %v1016 = vmul.f32 %v1013, %v1015
      %v1017 = vadd.f32 %v1013, %v1016
      %vm1018 = vweird.f32 %v913
      %vm1019 = vweird.f32 %v1013
      %vm1020 = vmor %vm1018, %vm1019
      %v1021 = vsel %vm1020, %v1013, %v1017
      %v1022 = vand.u32 2147483647, %v913
      %vm1023 = vcmp.eq.f32.partialorder %v1022, 8.507059e+37
      %v1024 = vand.u32 %v913, 2147483648
      %v1025 = vor.u32 1.1754944e-38, %v1024
      %v1026 = vsel %vm1023, %v1025, %v1021
      %v1027 = vmul.f32 1.0, %v1026
      %v1028 = vrcp.pop %v914
      %v1029 = vmul.f32 %v914, %v1028
      %v1030 = vsub.f32 1.0, %v1029
      %v1031 = vmul.f32 %v1028, %v1030
      %v1032 = vadd.f32 %v1028, %v1031
      %vm1033 = vweird.f32 %v914
      %vm1034 = vweird.f32 %v1028
      %vm1035 = vmor %vm1033, %vm1034
      %v1036 = vsel %vm1035, %v1028, %v1032
      %v1037 = vand.u32 2147483647, %v914
      %vm1038 = vcmp.eq.f32.partialorder %v1037, 8.507059e+37
      %v1039 = vand.u32 %v914, 2147483648
      %v1040 = vor.u32 1.1754944e-38, %v1039
      %v1041 = vsel %vm1038, %v1040, %v1036
      %v1042 = vmul.f32 1.0, %v1041
      %v1043 = vrcp.pop %v915
      %v1044 = vmul.f32 %v915, %v1043
      %v1045 = vsub.f32 1.0, %v1044
      %v1046 = vmul.f32 %v1043, %v1045
      %v1047 = vadd.f32 %v1043, %v1046
      %vm1048 = vweird.f32 %v915
      %vm1049 = vweird.f32 %v1043
      %vm1050 = vmor %vm1048, %vm1049
      %v1051 = vsel %vm1050, %v1043, %v1047
      %v1052 = vand.u32 2147483647, %v915
      %vm1053 = vcmp.eq.f32.partialorder %v1052, 8.507059e+37
      %v1054 = vand.u32 %v915, 2147483648
      %v1055 = vor.u32 1.1754944e-38, %v1054
      %v1056 = vsel %vm1053, %v1055, %v1051
      %v1057 = vmul.f32 1.0, %v1056
      %v1058 = vrcp.pop %v916
      %v1059 = vmul.f32 %v916, %v1058
      %v1060 = vsub.f32 1.0, %v1059
      %v1061 = vmul.f32 %v1058, %v1060
      %v1062 = vadd.f32 %v1058, %v1061
      %vm1063 = vweird.f32 %v916
      %vm1064 = vweird.f32 %v1058
      %vm1065 = vmor %vm1063, %vm1064
      %v1066 = vsel %vm1065, %v1058, %v1062
      %v1067 = vand.u32 2147483647, %v916
      %vm1068 = vcmp.eq.f32.partialorder %v1067, 8.507059e+37
      %v1069 = vand.u32 %v916, 2147483648
      %v1070 = vor.u32 1.1754944e-38, %v1069
      %v1071 = vsel %vm1068, %v1070, %v1066
      %v1072 = vmul.f32 1.0, %v1071
      %v1073 = vrcp.pop %v917
      %v1074 = vmul.f32 %v917, %v1073
      %v1075 = vsub.f32 1.0, %v1074
      %v1076 = vmul.f32 %v1073, %v1075
      %v1077 = vadd.f32 %v1073, %v1076
      %vm1078 = vweird.f32 %v917
      %vm1079 = vweird.f32 %v1073
      %vm1080 = vmor %vm1078, %vm1079
      %v1081 = vsel %vm1080, %v1073, %v1077
      %v1082 = vand.u32 2147483647, %v917
      %vm1083 = vcmp.eq.f32.partialorder %v1082, 8.507059e+37
      %v1084 = vand.u32 %v917, 2147483648
      %v1085 = vor.u32 1.1754944e-38, %v1084
      %v1086 = vsel %vm1083, %v1085, %v1081
      %v1087 = vmul.f32 1.0, %v1086
      %v1088 = vrcp.pop %v918
      %v1089 = vmul.f32 %v918, %v1088
      %v1090 = vsub.f32 1.0, %v1089
      %v1091 = vmul.f32 %v1088, %v1090
      %v1092 = vadd.f32 %v1088, %v1091
      %vm1093 = vweird.f32 %v918
      %vm1094 = vweird.f32 %v1088
      %vm1095 = vmor %vm1093, %vm1094
      %v1096 = vsel %vm1095, %v1088, %v1092
      %v1097 = vand.u32 2147483647, %v918
      %vm1098 = vcmp.eq.f32.partialorder %v1097, 8.507059e+37
      %v1099 = vand.u32 %v918, 2147483648
      %v1100 = vor.u32 1.1754944e-38, %v1099
      %v1101 = vsel %vm1098, %v1100, %v1096
      %v1102 = vmul.f32 1.0, %v1101
      %v1103 = vrcp.pop %v919
      %v1104 = vmul.f32 %v919, %v1103
      %v1105 = vsub.f32 1.0, %v1104
      %v1106 = vmul.f32 %v1103, %v1105
      %v1107 = vadd.f32 %v1103, %v1106
      %vm1108 = vweird.f32 %v919
      %vm1109 = vweird.f32 %v1103
      %vm1110 = vmor %vm1108, %vm1109
      %v1111 = vsel %vm1110, %v1103, %v1107
      %v1112 = vand.u32 2147483647, %v919
      %vm1113 = vcmp.eq.f32.partialorder %v1112, 8.507059e+37
      %v1114 = vand.u32 %v919, 2147483648
      %v1115 = vor.u32 1.1754944e-38, %v1114
      %v1116 = vsel %vm1113, %v1115, %v1111
      %v1117 = vmul.f32 1.0, %v1116
      %v1118 = vrcp.pop %v920
      %v1119 = vmul.f32 %v920, %v1118
      %v1120 = vsub.f32 1.0, %v1119
      %v1121 = vmul.f32 %v1118, %v1120
      %v1122 = vadd.f32 %v1118, %v1121
      %vm1123 = vweird.f32 %v920
      %vm1124 = vweird.f32 %v1118
      %vm1125 = vmor %vm1123, %vm1124
      %v1126 = vsel %vm1125, %v1118, %v1122
      %v1127 = vand.u32 2147483647, %v920
      %vm1128 = vcmp.eq.f32.partialorder %v1127, 8.507059e+37
      %v1129 = vand.u32 %v920, 2147483648
      %v1130 = vor.u32 1.1754944e-38, %v1129
      %v1131 = vsel %vm1128, %v1130, %v1126
      %v1132 = vmul.f32 1.0, %v1131
      %v1133 = vrcp.pop %v921
      %v1134 = vmul.f32 %v921, %v1133
      %v1135 = vsub.f32 1.0, %v1134
      %v1136 = vmul.f32 %v1133, %v1135
      %v1137 = vadd.f32 %v1133, %v1136
      %vm1138 = vweird.f32 %v921
      %vm1139 = vweird.f32 %v1133
      %vm1140 = vmor %vm1138, %vm1139
      %v1141 = vsel %vm1140, %v1133, %v1137
      %v1142 = vand.u32 2147483647, %v921
      %vm1143 = vcmp.eq.f32.partialorder %v1142, 8.507059e+37
      %v1144 = vand.u32 %v921, 2147483648
      %v1145 = vor.u32 1.1754944e-38, %v1144
      %v1146 = vsel %vm1143, %v1145, %v1141
      %v1147 = vmul.f32 1.0, %v1146
      %v1148 = vrcp.pop %v922
      %v1149 = vmul.f32 %v922, %v1148
      %v1150 = vsub.f32 1.0, %v1149
      %v1151 = vmul.f32 %v1148, %v1150
      %v1152 = vadd.f32 %v1148, %v1151
      %vm1153 = vweird.f32 %v922
      %vm1154 = vweird.f32 %v1148
      %vm1155 = vmor %vm1153, %vm1154
      %v1156 = vsel %vm1155, %v1148, %v1152
      %v1157 = vand.u32 2147483647, %v922
      %vm1158 = vcmp.eq.f32.partialorder %v1157, 8.507059e+37
      %v1159 = vand.u32 %v922, 2147483648
      %v1160 = vor.u32 1.1754944e-38, %v1159
      %v1161 = vsel %vm1158, %v1160, %v1156
      %v1162 = vmul.f32 1.0, %v1161
      %1164 = vset.pattern.permute.xlu0 0
      %1165 = vperm.xlu0 %1164, %v937
      %v1166 = vpop.permute.xlu0 %1165
      %1169 = vset.pattern.permute.xlu0 0
      %1170 = vperm.xlu0 %1169, %v952
      %v1171 = vpop.permute.xlu0 %1170
      %1174 = vset.pattern.permute.xlu0 0
      %1175 = vperm.xlu0 %1174, %v967
      %v1176 = vpop.permute.xlu0 %1175
      %1179 = vset.pattern.permute.xlu0 0
      %1180 = vperm.xlu0 %1179, %v982
      %v1181 = vpop.permute.xlu0 %1180
      %1184 = vset.pattern.permute.xlu0 0
      %1185 = vperm.xlu0 %1184, %v997
      %v1186 = vpop.permute.xlu0 %1185
      %1189 = vset.pattern.permute.xlu0 0
      %1190 = vperm.xlu0 %1189, %v1012
      %v1191 = vpop.permute.xlu0 %1190
      %1194 = vset.pattern.permute.xlu0 0
      %1195 = vperm.xlu0 %1194, %v1027
      %v1196 = vpop.permute.xlu0 %1195
      %1199 = vset.pattern.permute.xlu0 0
      %1200 = vperm.xlu0 %1199, %v1042
      %v1201 = vpop.permute.xlu0 %1200
      %1204 = vset.pattern.permute.xlu0 0
      %1205 = vperm.xlu0 %1204, %v1057
      %v1206 = vpop.permute.xlu0 %1205
      %1209 = vset.pattern.permute.xlu0 0
      %1210 = vperm.xlu0 %1209, %v1072
      %v1211 = vpop.permute.xlu0 %1210
      %1214 = vset.pattern.permute.xlu0 0
      %1215 = vperm.xlu0 %1214, %v1087
      %v1216 = vpop.permute.xlu0 %1215
      %1219 = vset.pattern.permute.xlu0 0
      %1220 = vperm.xlu0 %1219, %v1102
      %v1221 = vpop.permute.xlu0 %1220
      %1224 = vset.pattern.permute.xlu0 0
      %1225 = vperm.xlu0 %1224, %v1117
      %v1226 = vpop.permute.xlu0 %1225
      %1229 = vset.pattern.permute.xlu0 0
      %1230 = vperm.xlu0 %1229, %v1132
      %v1231 = vpop.permute.xlu0 %1230
      %1234 = vset.pattern.permute.xlu0 0
      %1235 = vperm.xlu0 %1234, %v1147
      %v1236 = vpop.permute.xlu0 %1235
      %1239 = vset.pattern.permute.xlu0 0
      %1240 = vperm.xlu0 %1239, %v1162
      %v1241 = vpop.permute.xlu0 %1240
      %v1243 = vmul.f32 %v500, %v1166
      %v1244 = vmul.f32 %v501, %v1171
      %v1245 = vmul.f32 %v502, %v1176
      %v1246 = vmul.f32 %v503, %v1181
      %v1247 = vmul.f32 %v504, %v1186
      %v1248 = vmul.f32 %v505, %v1191
      %v1249 = vmul.f32 %v506, %v1196
      %v1250 = vmul.f32 %v507, %v1201
      %v1251 = vmul.f32 %v508, %v1206
      %v1252 = vmul.f32 %v509, %v1211
      %v1253 = vmul.f32 %v510, %v1216
      %v1254 = vmul.f32 %v511, %v1221
      %v1255 = vmul.f32 %v512, %v1226
      %v1256 = vmul.f32 %v513, %v1231
      %v1257 = vmul.f32 %v514, %v1236
      %v1258 = vmul.f32 %v515, %v1241
      %v1259 = vpack.c.bf16 %v1243, %v1243
      %v1260 = vpack.c.bf16 %v1244, %v1244
      %v1261 = vpack.c.bf16 %v1245, %v1245
      %v1262 = vpack.c.bf16 %v1246, %v1246
      %v1263 = vpack.c.bf16 %v1247, %v1247
      %v1264 = vpack.c.bf16 %v1248, %v1248
      %v1265 = vpack.c.bf16 %v1249, %v1249
      %v1266 = vpack.c.bf16 %v1250, %v1250
      %v1267 = vpack.c.bf16 %v1251, %v1251
      %v1268 = vpack.c.bf16 %v1252, %v1252
      %v1269 = vpack.c.bf16 %v1253, %v1253
      %v1270 = vpack.c.bf16 %v1254, %v1254
      %v1271 = vpack.c.bf16 %v1255, %v1255
      %v1272 = vpack.c.bf16 %v1256, %v1256
      %v1273 = vpack.c.bf16 %v1257, %v1257
      %v1274 = vpack.c.bf16 %v1258, %v1258
      %v1291 = vunpack.c.l.b16 %v1259
      %v1292 = vunpack.c.l.b16 %v1260
      %v1293 = vunpack.c.l.b16 %v1261
      %v1294 = vunpack.c.l.b16 %v1262
      %v1295 = vunpack.c.l.b16 %v1263
      %v1296 = vunpack.c.l.b16 %v1264
      %v1297 = vunpack.c.l.b16 %v1265
      %v1298 = vunpack.c.l.b16 %v1266
      %v1299 = vunpack.c.l.b16 %v1267
      %v1300 = vunpack.c.l.b16 %v1268
      %v1301 = vunpack.c.l.b16 %v1269
      %v1302 = vunpack.c.l.b16 %v1270
      %v1303 = vunpack.c.l.b16 %v1271
      %v1304 = vunpack.c.l.b16 %v1272
      %v1305 = vunpack.c.l.b16 %v1273
      %v1306 = vunpack.c.l.b16 %v1274
      %v1307 = vpack.c.b16 %v1292, %v1291
      %v1308 = vpack.c.b16 %v1294, %v1293
      %v1309 = vpack.c.b16 %v1296, %v1295
      %v1310 = vpack.c.b16 %v1298, %v1297
      %v1311 = vpack.c.b16 %v1300, %v1299
      %v1312 = vpack.c.b16 %v1302, %v1301
      %v1313 = vpack.c.b16 %v1304, %v1303
      %v1314 = vpack.c.b16 %v1306, %v1305
      %1315 = vrot.lane.b32.xlu0 %v1307, 32
      %v1316 = vpop.permute.xlu0 %1315
      %1317 = vrot.lane.b32.xlu0 %v1308, 32
      %v1318 = vpop.permute.xlu0 %1317
      %1319 = vrot.lane.b32.xlu0 %v1309, 32
      %v1320 = vpop.permute.xlu0 %1319
      %1321 = vrot.lane.b32.xlu0 %v1310, 32
      %v1322 = vpop.permute.xlu0 %1321
      %1323 = vrot.lane.b32.xlu0 %v1311, 32
      %v1324 = vpop.permute.xlu0 %1323
      %1325 = vrot.lane.b32.xlu0 %v1312, 32
      %v1326 = vpop.permute.xlu0 %1325
      %1327 = vrot.lane.b32.xlu0 %v1313, 32
      %v1328 = vpop.permute.xlu0 %1327
      %1329 = vrot.lane.b32.xlu0 %v1314, 32
      %v1330 = vpop.permute.xlu0 %1329
      %v1332 = vsel %vm628, %v564, %v1316
      %v1334 = vsel %vm628, %v565, %v1318
      %v1336 = vsel %vm628, %v566, %v1320
      %v1338 = vsel %vm628, %v567, %v1322
      %v1340 = vsel %vm628, %v568, %v1324
      %v1342 = vsel %vm628, %v569, %v1326
      %v1344 = vsel %vm628, %v570, %v1328
      %v1346 = vsel %vm628, %v571, %v1330
      %v1347 = vld [vmem:[%s7] sm:$0xff]
      %v1348 = vld [vmem:[%s7 + $0x8] sm:$0xff]
      %v1349 = vld [vmem:[%s7 + $0x10] sm:$0xff]
      %v1350 = vld [vmem:[%s7 + $0x18] sm:$0xff]
      %v1351 = vld [vmem:[%s7 + $0x20] sm:$0xff]
      %v1352 = vld [vmem:[%s7 + $0x28] sm:$0xff]
      %v1353 = vld [vmem:[%s7 + $0x30] sm:$0xff]
      %v1354 = vld [vmem:[%s7 + $0x38] sm:$0xff]
      %v1363 = vunpack.c.l.b16 %v1347
      %v1364 = vunpack.c.h.b16 %v1347
      %v1365 = vunpack.c.l.b16 %v1348
      %v1366 = vunpack.c.h.b16 %v1348
      %v1367 = vunpack.c.l.b16 %v1349
      %v1368 = vunpack.c.h.b16 %v1349
      %v1369 = vunpack.c.l.b16 %v1350
      %v1370 = vunpack.c.h.b16 %v1350
      %v1371 = vunpack.c.l.b16 %v1351
      %v1372 = vunpack.c.h.b16 %v1351
      %v1373 = vunpack.c.l.b16 %v1352
      %v1374 = vunpack.c.h.b16 %v1352
      %v1375 = vunpack.c.l.b16 %v1353
      %v1376 = vunpack.c.h.b16 %v1353
      %v1377 = vunpack.c.l.b16 %v1354
      %v1378 = vunpack.c.h.b16 %v1354
      %v1379 = vpack.c.b16 %v1365, %v1363
      %v1380 = vpack.c.b16 %v1366, %v1364
      %v1381 = vpack.c.b16 %v1369, %v1367
      %v1382 = vpack.c.b16 %v1370, %v1368
      %v1383 = vpack.c.b16 %v1373, %v1371
      %v1384 = vpack.c.b16 %v1374, %v1372
      %v1385 = vpack.c.b16 %v1377, %v1375
      %v1386 = vpack.c.b16 %v1378, %v1376
      %v1395 = vsel %vm689, %v1332, 0
      %v1397 = vsel %vm689, %v1334, 0
      %v1399 = vsel %vm689, %v1336, 0
      %v1401 = vsel %vm689, %v1338, 0
      %v1403 = vsel %vm689, %v1340, 0
      %v1405 = vsel %vm689, %v1342, 0
      %v1407 = vsel %vm689, %v1344, 0
      %v1409 = vsel %vm689, %v1346, 0
      %1411 = vmatpush.bf16.msra.mxu0 0
      %1412 = vmatpush.bf16.msra.mxu0 0
      %1413 = vmatpush.bf16.msra.mxu0 0
      %1414 = vmatpush.bf16.msra.mxu0 0
      %1415 = vmatpush.bf16.msra.mxu0 %v1385
      %1416 = vmatpush.bf16.msra.mxu0 %v1383
      %1417 = vmatpush.bf16.msra.mxu0 %v1381
      %1418 = vmatpush.bf16.msra.mxu0 %v1379
      %1419 = vmatmul.bf16.gmra.mxu0 %v1395
      %v1420 = vpop.f32.mrf.mxu0
      %v1421 = vadd.f32 0.0, %v1420
      %v1422 = vpop.f32.mrf.mxu0
      %v1423 = vadd.f32 0.0, %v1422
      %1424 = vmatmul.bf16.gmra.mxu0 %v1397
      %v1425 = vpop.f32.mrf.mxu0
      %v1426 = vadd.f32 0.0, %v1425
      %v1427 = vpop.f32.mrf.mxu0
      %v1428 = vadd.f32 0.0, %v1427
      %1429 = vmatmul.bf16.gmra.mxu0 %v1399
      %v1430 = vpop.f32.mrf.mxu0
      %v1431 = vadd.f32 0.0, %v1430
      %v1432 = vpop.f32.mrf.mxu0
      %v1433 = vadd.f32 0.0, %v1432
      %1434 = vmatmul.bf16.gmra.mxu0 %v1401
      %v1435 = vpop.f32.mrf.mxu0
      %v1436 = vadd.f32 0.0, %v1435
      %v1437 = vpop.f32.mrf.mxu0
      %v1438 = vadd.f32 0.0, %v1437
      %1439 = vmatmul.bf16.gmra.mxu0 %v1403
      %v1440 = vpop.f32.mrf.mxu0
      %v1441 = vadd.f32 0.0, %v1440
      %v1442 = vpop.f32.mrf.mxu0
      %v1443 = vadd.f32 0.0, %v1442
      %1444 = vmatmul.bf16.gmra.mxu0 %v1405
      %v1445 = vpop.f32.mrf.mxu0
      %v1446 = vadd.f32 0.0, %v1445
      %v1447 = vpop.f32.mrf.mxu0
      %v1448 = vadd.f32 0.0, %v1447
      %1449 = vmatmul.bf16.gmra.mxu0 %v1407
      %v1450 = vpop.f32.mrf.mxu0
      %v1451 = vadd.f32 0.0, %v1450
      %v1452 = vpop.f32.mrf.mxu0
      %v1453 = vadd.f32 0.0, %v1452
      %1454 = vmatmul.bf16.gmra.mxu0 %v1409
      %v1455 = vpop.f32.mrf.mxu0
      %v1456 = vadd.f32 0.0, %v1455
      %v1457 = vpop.f32.mrf.mxu0
      %v1458 = vadd.f32 0.0, %v1457
      %1459 = vdwg.mxu0
      %1460 = vmatpush.bf16.msra.mxu0 0
      %1461 = vmatpush.bf16.msra.mxu0 0
      %1462 = vmatpush.bf16.msra.mxu0 0
      %1463 = vmatpush.bf16.msra.mxu0 0
      %1464 = vmatpush.bf16.msra.mxu0 %v1386
      %1465 = vmatpush.bf16.msra.mxu0 %v1384
      %1466 = vmatpush.bf16.msra.mxu0 %v1382
      %1467 = vmatpush.bf16.msra.mxu0 %v1380
      %1468 = vmatmul.bf16.gmra.mxu0 %v1395
      %v1469 = vpop.f32.mrf.mxu0
      %v1470 = vadd.f32 0.0, %v1469
      %v1471 = vpop.f32.mrf.mxu0
      %v1472 = vadd.f32 0.0, %v1471
      %1473 = vmatmul.bf16.gmra.mxu0 %v1397
      %v1474 = vpop.f32.mrf.mxu0
      %v1475 = vadd.f32 0.0, %v1474
      %v1476 = vpop.f32.mrf.mxu0
      %v1477 = vadd.f32 0.0, %v1476
      %1478 = vmatmul.bf16.gmra.mxu0 %v1399
      %v1479 = vpop.f32.mrf.mxu0
      %v1480 = vadd.f32 0.0, %v1479
      %v1481 = vpop.f32.mrf.mxu0
      %v1482 = vadd.f32 0.0, %v1481
      %1483 = vmatmul.bf16.gmra.mxu0 %v1401
      %v1484 = vpop.f32.mrf.mxu0
      %v1485 = vadd.f32 0.0, %v1484
      %v1486 = vpop.f32.mrf.mxu0
      %v1487 = vadd.f32 0.0, %v1486
      %1488 = vmatmul.bf16.gmra.mxu0 %v1403
      %v1489 = vpop.f32.mrf.mxu0
      %v1490 = vadd.f32 0.0, %v1489
      %v1491 = vpop.f32.mrf.mxu0
      %v1492 = vadd.f32 0.0, %v1491
      %1493 = vmatmul.bf16.gmra.mxu0 %v1405
      %v1494 = vpop.f32.mrf.mxu0
      %v1495 = vadd.f32 0.0, %v1494
      %v1496 = vpop.f32.mrf.mxu0
      %v1497 = vadd.f32 0.0, %v1496
      %1498 = vmatmul.bf16.gmra.mxu0 %v1407
      %v1499 = vpop.f32.mrf.mxu0
      %v1500 = vadd.f32 0.0, %v1499
      %v1501 = vpop.f32.mrf.mxu0
      %v1502 = vadd.f32 0.0, %v1501
      %1503 = vmatmul.bf16.gmra.mxu0 %v1409
      %v1504 = vpop.f32.mrf.mxu0
      %v1505 = vadd.f32 0.0, %v1504
      %v1506 = vpop.f32.mrf.mxu0
      %v1507 = vadd.f32 0.0, %v1506
      %1508 = vdwg.mxu0
      %v1509 = vpack.c.bf16 %v1470, %v1421
      %v1510 = vpack.c.bf16 %v1472, %v1423
      %v1511 = vpack.c.bf16 %v1475, %v1426
      %v1512 = vpack.c.bf16 %v1477, %v1428
      %v1513 = vpack.c.bf16 %v1480, %v1431
      %v1514 = vpack.c.bf16 %v1482, %v1433
      %v1515 = vpack.c.bf16 %v1485, %v1436
      %v1516 = vpack.c.bf16 %v1487, %v1438
      %v1517 = vpack.c.bf16 %v1490, %v1441
      %v1518 = vpack.c.bf16 %v1492, %v1443
      %v1519 = vpack.c.bf16 %v1495, %v1446
      %v1520 = vpack.c.bf16 %v1497, %v1448
      %v1521 = vpack.c.bf16 %v1500, %v1451
      %v1522 = vpack.c.bf16 %v1502, %v1453
      %v1523 = vpack.c.bf16 %v1505, %v1456
      %v1524 = vpack.c.bf16 %v1507, %v1458
      %vm1525 = vcmask 1043456
      %vm1526 = vcmask 261124
      %vm1527 = vmor %vm1526, %vm1525
      %1528 = vst.msk [vmem:[%s333] sm:$0xff] %vm1527, %v1509
      %1529 = vst.msk [vmem:[%s333 + $0x8] sm:$0xff] %vm1527, %v1510
      %1530 = vst.msk [vmem:[%s333 + $0x10] sm:$0xff] %vm1527, %v1511
      %1531 = vst.msk [vmem:[%s333 + $0x18] sm:$0xff] %vm1527, %v1512
      %1532 = vst.msk [vmem:[%s333 + $0x20] sm:$0xff] %vm1527, %v1513
      %1533 = vst.msk [vmem:[%s333 + $0x28] sm:$0xff] %vm1527, %v1514
      %1534 = vst.msk [vmem:[%s333 + $0x30] sm:$0xff] %vm1527, %v1515
      %1535 = vst.msk [vmem:[%s333 + $0x38] sm:$0xff] %vm1527, %v1516
      %1536 = vst.msk [vmem:[%s333 + $0x40] sm:$0xff] %vm1527, %v1517
      %1537 = vst.msk [vmem:[%s333 + $0x48] sm:$0xff] %vm1527, %v1518
      %1538 = vst.msk [vmem:[%s333 + $0x50] sm:$0xff] %vm1527, %v1519
      %1539 = vst.msk [vmem:[%s333 + $0x58] sm:$0xff] %vm1527, %v1520
      %1540 = vst.msk [vmem:[%s333 + $0x60] sm:$0xff] %vm1527, %v1521
      %1541 = vst.msk [vmem:[%s333 + $0x68] sm:$0xff] %vm1527, %v1522
      %1542 = vst.msk [vmem:[%s333 + $0x70] sm:$0xff] %vm1527, %v1523
      %1543 = vst.msk [vmem:[%s333 + $0x78] sm:$0xff] %vm1527, %v1524
      %s1544 = smul.u32 16, %s21
      %p1545 = scmp.lt.s32.totalorder %s1544, 31
      %s1546 = scalar_select %p1545, %s1544, 31
      %s1547 = smul.addr %s1546, 2
      %s1548 = smul.addr %s1547, 4
      %s1549 = scalar_lea.vmem %s8, %s1548
      // Predicated region
      $region53: #{decoder_forward.9} parent=51 // pred_check
        %p1550 = pneg %p217
      $region54: #{decoder_forward.9} parent=51 // pred_check_branch
        %1552 = sbr.rel (%p1550) target = $region56
      $region55: #{decoder_forward.9} parent=51 // pred_region
        %s1553 = smul.u32 16, %s21
      $region56: #{decoder_forward.9} parent=51 // pred_fallthru
        _
    $region52: #{decoder_forward.9} parent=5 // pred_fallthru
      _
    %p1554 = scmp.le.s32.totalorder 2, %s16
    // Predicated region
    $region57: #{decoder_forward.9} parent=5 // pred_check
      %p1555 = pneg %p1554
    $region58: #{decoder_forward.9} parent=5 // pred_check_branch
      %1557 = sbr.rel (%p1555) target = $region60
    $region59: #{decoder_forward.9} parent=5 // pred_region
      %s1558 = ssub.s32 %s16, 2
      // Predicated region
      $region61: #{decoder_forward.9} parent=59 // pred_check
        %p1559 = pneg %p223
      $region62: #{decoder_forward.9} parent=59 // pred_check_branch
        %1561 = sbr.rel (%p1559) target = $region64
      $region63: #{decoder_forward.9} parent=59 // pred_region
        %s1562 = smul.u32 16, %s22
        %p1563 = scmp.lt.s32.totalorder %s1562, 31
        %s1564 = scalar_select %p1563, %s1562, 31
        %s1565 = smul.addr %s1564, 2
        %s1566 = smul.addr %s1565, 4
        %s1567 = scalar_lea.vmem %s8, %s1566
      $region64: #{decoder_forward.9} parent=59 // pred_fallthru
        _
    $region60: #{decoder_forward.9} parent=5 // pred_fallthru
      _
  $region6: #{decoder_forward.9} parent=0 // loop_footer
    %s20 = sadd.s32 1, %s16
  $region7: #{decoder_forward.9} parent=0 // loop_footer_branch
    %15 = sbr.rel target = $region3
  $region8: #{decoder_forward.9} parent=0 // loop_exit
    _

// kernel: decoder_forward.10
$region0: #{decoder_forward.10}
  #allocation0 [shape = 'u32[]', space=smem, size = 0x4, offset = 0x4, fixed_abs, tag = 'smem constant byte address 0x4 - core index']
  #allocation1 [shape = 'u32[72,128]{1,0:T(1,128)}', space=vmem, size = 0x9000, scoped, tag = 'internal scratch']
  #allocation2 [shape = 'f32[1,1]{1,0:T(1,128)S(1)}', space=vmem, size = 0x200, scoped, tag = 'scoped memory for decoder_forward.10']
  %s0 = inlined_call_operand.vmem [shape: bf16[512,16], index: 0, kind: input, shape index: {}]
  %s1 = inlined_call_operand.vmem [shape: f32[1,16], index: 1, kind: input, shape index: {}]
  %s2 = inlined_call_operand.vmem [shape: f32[512,16], index: 2, kind: input, shape index: {}]
  %s3 = inlined_call_operand.vmem [shape: bf16[32,16], index: 3, kind: input, shape index: {}]
  %s4 = inlined_call_operand.vmem [shape: f32[1,16], index: 4, kind: input, shape index: {}]
  %s5 = inlined_call_operand.vmem [shape: f32[1,16], index: 5, kind: input, shape index: {}]
  %s6 = inlined_call_operand.<no memory space> [shape: f32[1,1], index: 6, kind: input, shape index: {}]
  %s7 = inlined_call_operand.vmem [shape: bf16[32,160], index: 7, kind: input, shape index: {}]
  %s8 = inlined_call_operand.vmem [shape: bf16[512,160], index: 8, kind: output, shape index: {}]
  %s9 = sld [smem:[#allocation0]]
  $region65: #{decoder_forward.10} parent=0
    _
  %s11 = ssub.s32 1, %s9
  %s12 = scalar_select 0, %s11, %s9
  %v13 = vstv %s6
  %14 = vst [vmem:[#allocation2] sm:$0x1] %v13
  loop: start=0, step=1, limit=4
  $region2: #{decoder_forward.10} parent=0 // loop_pre_header
    _
  $region3: #{decoder_forward.10} parent=0 // loop_header
    %s16 = sphi 0, %s20
    %p17 = scmp.ge.s32.totalorder %s16, 4
    %s26 = sphi 0, %s28
    %s29 = sphi 0, %s26
    %s30 = sphi 0, %s29
    %s46 = sphi 0, %s30
    %s50 = sphi 0, %s50
    %s52 = sphi 0, %s50
    %s53 = sphi 0, %s52
    %s67 = sphi 0, %s53
    %s73 = sphi 0, %s75
    %s76 = sphi 0, %s73
    %s77 = sphi 0, %s76
    %s93 = sphi 0, %s77
    %s97 = sphi 0, %s97
    %s99 = sphi 0, %s97
    %s100 = sphi 0, %s99
    %s114 = sphi 0, %s100
    %s118 = sphi 0, %s118
    %s120 = sphi 0, %s118
    %s121 = sphi 0, %s120
    %s135 = sphi 0, %s121
    %s139 = sphi 0, %s139
    %s141 = sphi 0, %s139
    %s142 = sphi 0, %s141
    %s156 = sphi 0, %s142
    %s160 = sphi 0, %s160
    %s162 = sphi 0, %s160
    %s163 = sphi 0, %s162
    %s177 = sphi 0, %s163
    %s181 = sphi 0, %s181
    %s183 = sphi 0, %s181
    %s184 = sphi 0, %s183
    %s198 = sphi 0, %s184
    %s204 = sphi 0, %s206
    %s207 = sphi 0, %s204
    %s208 = sphi 0, %s207
    %s224 = sphi 0, %s208
  $region4: #{decoder_forward.10} parent=0 // loop_header_branch
    %19 = sbr.rel (%p17) target = $region8
  $region5: #{decoder_forward.10} parent=0 // loop_body
    %s21 = ssub.s32 %s16, 1
    %s22 = ssub.s32 %s16, 2
    %s23 = sadd.s32 %s16, 1
    %s24 = ssub.s32 %s16, %s23
    %p25 = scmp.eq.s32.totalorder %s24, 0
    %s27 = sadd.s32 %s26, 1
    %s28 = scalar_select %p25, %s26, %s27
    %p31 = pneg %p25
    %p32 = scmp.eq.s32.totalorder %s16, 1
    %p33 = por %p31, %p32
    %p34 = scmp.ne.s32.totalorder %s26, %s29
    %p35 = scmp.eq.s32.totalorder %s16, 0
    %p36 = por %p34, %p35
    %p37 = scmp.ne.s32.totalorder %s26, %s29
    %p38 = scmp.eq.s32.totalorder %s21, 1
    %p39 = por %p37, %p38
    %p40 = scmp.ne.s32.totalorder %s29, %s30
    %p41 = scmp.eq.s32.totalorder %s21, 0
    %p42 = por %p40, %p41
    %p43 = scmp.ne.s32.totalorder %s29, %s30
    %p44 = scmp.eq.s32.totalorder %s22, 1
    %p45 = por %p43, %p44
    %p47 = scmp.ne.s32.totalorder %s30, %s46
    %p48 = scmp.eq.s32.totalorder %s22, 0
    %p49 = por %p47, %p48
    %s51 = sadd.s32 %s50, 1
    %p54 = scmp.eq.s32.totalorder %s16, 1
    %p55 = scmp.ne.s32.totalorder %s50, %s52
    %p56 = scmp.eq.s32.totalorder %s16, 0
    %p57 = por %p55, %p56
    %p58 = scmp.ne.s32.totalorder %s50, %s52
    %p59 = scmp.eq.s32.totalorder %s21, 1
    %p60 = por %p58, %p59
    %p61 = scmp.ne.s32.totalorder %s52, %s53
    %p62 = scmp.eq.s32.totalorder %s21, 0
    %p63 = por %p61, %p62
    %p64 = scmp.ne.s32.totalorder %s52, %s53
    %p65 = scmp.eq.s32.totalorder %s22, 1
    %p66 = por %p64, %p65
    %p68 = scmp.ne.s32.totalorder %s53, %s67
    %p69 = scmp.eq.s32.totalorder %s22, 0
    %p70 = por %p68, %p69
    %s71 = ssub.s32 %s16, %s23
    %p72 = scmp.eq.s32.totalorder %s71, 0
    %s74 = sadd.s32 %s73, 1
    %s75 = scalar_select %p72, %s73, %s74
    %p78 = pneg %p72
    %p79 = scmp.eq.s32.totalorder %s16, 1
    %p80 = por %p78, %p79
    %p81 = scmp.ne.s32.totalorder %s73, %s76
    %p82 = scmp.eq.s32.totalorder %s16, 0
    %p83 = por %p81, %p82
    %p84 = scmp.ne.s32.totalorder %s73, %s76
    %p85 = scmp.eq.s32.totalorder %s21, 1
    %p86 = por %p84, %p85
    %p87 = scmp.ne.s32.totalorder %s76, %s77
    %p88 = scmp.eq.s32.totalorder %s21, 0
    %p89 = por %p87, %p88
    %p90 = scmp.ne.s32.totalorder %s76, %s77
    %p91 = scmp.eq.s32.totalorder %s22, 1
    %p92 = por %p90, %p91
    %p94 = scmp.ne.s32.totalorder %s77, %s93
    %p95 = scmp.eq.s32.totalorder %s22, 0
    %p96 = por %p94, %p95
    %s98 = sadd.s32 %s97, 1
    %p101 = scmp.eq.s32.totalorder %s16, 1
    %p102 = scmp.ne.s32.totalorder %s97, %s99
    %p103 = scmp.eq.s32.totalorder %s16, 0
    %p104 = por %p102, %p103
    %p105 = scmp.ne.s32.totalorder %s97, %s99
    %p106 = scmp.eq.s32.totalorder %s21, 1
    %p107 = por %p105, %p106
    %p108 = scmp.ne.s32.totalorder %s99, %s100
    %p109 = scmp.eq.s32.totalorder %s21, 0
    %p110 = por %p108, %p109
    %p111 = scmp.ne.s32.totalorder %s99, %s100
    %p112 = scmp.eq.s32.totalorder %s22, 1
    %p113 = por %p111, %p112
    %p115 = scmp.ne.s32.totalorder %s100, %s114
    %p116 = scmp.eq.s32.totalorder %s22, 0
    %p117 = por %p115, %p116
    %s119 = sadd.s32 %s118, 1
    %p122 = scmp.eq.s32.totalorder %s16, 1
    %p123 = scmp.ne.s32.totalorder %s118, %s120
    %p124 = scmp.eq.s32.totalorder %s16, 0
    %p125 = por %p123, %p124
    %p126 = scmp.ne.s32.totalorder %s118, %s120
    %p127 = scmp.eq.s32.totalorder %s21, 1
    %p128 = por %p126, %p127
    %p129 = scmp.ne.s32.totalorder %s120, %s121
    %p130 = scmp.eq.s32.totalorder %s21, 0
    %p131 = por %p129, %p130
    %p132 = scmp.ne.s32.totalorder %s120, %s121
    %p133 = scmp.eq.s32.totalorder %s22, 1
    %p134 = por %p132, %p133
    %p136 = scmp.ne.s32.totalorder %s121, %s135
    %p137 = scmp.eq.s32.totalorder %s22, 0
    %p138 = por %p136, %p137
    %s140 = sadd.s32 %s139, 1
    %p143 = scmp.eq.s32.totalorder %s16, 1
    %p144 = scmp.ne.s32.totalorder %s139, %s141
    %p145 = scmp.eq.s32.totalorder %s16, 0
    %p146 = por %p144, %p145
    %p147 = scmp.ne.s32.totalorder %s139, %s141
    %p148 = scmp.eq.s32.totalorder %s21, 1
    %p149 = por %p147, %p148
    %p150 = scmp.ne.s32.totalorder %s141, %s142
    %p151 = scmp.eq.s32.totalorder %s21, 0
    %p152 = por %p150, %p151
    %p153 = scmp.ne.s32.totalorder %s141, %s142
    %p154 = scmp.eq.s32.totalorder %s22, 1
    %p155 = por %p153, %p154
    %p157 = scmp.ne.s32.totalorder %s142, %s156
    %p158 = scmp.eq.s32.totalorder %s22, 0
    %p159 = por %p157, %p158
    %s161 = sadd.s32 %s160, 1
    %p164 = scmp.eq.s32.totalorder %s16, 1
    %p165 = scmp.ne.s32.totalorder %s160, %s162
    %p166 = scmp.eq.s32.totalorder %s16, 0
    %p167 = por %p165, %p166
    %p168 = scmp.ne.s32.totalorder %s160, %s162
    %p169 = scmp.eq.s32.totalorder %s21, 1
    %p170 = por %p168, %p169
    %p171 = scmp.ne.s32.totalorder %s162, %s163
    %p172 = scmp.eq.s32.totalorder %s21, 0
    %p173 = por %p171, %p172
    %p174 = scmp.ne.s32.totalorder %s162, %s163
    %p175 = scmp.eq.s32.totalorder %s22, 1
    %p176 = por %p174, %p175
    %p178 = scmp.ne.s32.totalorder %s163, %s177
    %p179 = scmp.eq.s32.totalorder %s22, 0
    %p180 = por %p178, %p179
    %s182 = sadd.s32 %s181, 1
    %p185 = scmp.eq.s32.totalorder %s16, 1
    %p186 = scmp.ne.s32.totalorder %s181, %s183
    %p187 = scmp.eq.s32.totalorder %s16, 0
    %p188 = por %p186, %p187
    %p189 = scmp.ne.s32.totalorder %s181, %s183
    %p190 = scmp.eq.s32.totalorder %s21, 1
    %p191 = por %p189, %p190
    %p192 = scmp.ne.s32.totalorder %s183, %s184
    %p193 = scmp.eq.s32.totalorder %s21, 0
    %p194 = por %p192, %p193
    %p195 = scmp.ne.s32.totalorder %s183, %s184
    %p196 = scmp.eq.s32.totalorder %s22, 1
    %p197 = por %p195, %p196
    %p199 = scmp.ne.s32.totalorder %s184, %s198
    %p200 = scmp.eq.s32.totalorder %s22, 0
    %p201 = por %p199, %p200
    %s202 = ssub.s32 %s16, %s23
    %p203 = scmp.eq.s32.totalorder %s202, 0
    %s205 = sadd.s32 %s204, 1
    %s206 = scalar_select %p203, %s204, %s205
    %p209 = pneg %p203
    %p210 = scmp.eq.s32.totalorder %s16, 1
    %p211 = por %p209, %p210
    %p212 = scmp.ne.s32.totalorder %s204, %s207
    %p213 = scmp.eq.s32.totalorder %s16, 0
    %p214 = por %p212, %p213
    %p215 = scmp.ne.s32.totalorder %s204, %s207
    %p216 = scmp.eq.s32.totalorder %s21, 1
    %p217 = por %p215, %p216
    %p218 = scmp.ne.s32.totalorder %s207, %s208
    %p219 = scmp.eq.s32.totalorder %s21, 0
    %p220 = por %p218, %p219
    %p221 = scmp.ne.s32.totalorder %s207, %s208
    %p222 = scmp.eq.s32.totalorder %s22, 1
    %p223 = por %p221, %p222
    %p225 = scmp.ne.s32.totalorder %s208, %s224
    %p226 = scmp.eq.s32.totalorder %s22, 0
    %p227 = por %p225, %p226
    %p228 = scmp.le.s32.totalorder 1, %s16
    %p229 = scmp.lt.s32.totalorder %s16, 3
    %p230 = pnand %p228, %p229
    %p231 = pneg %p230
    // Predicated region
    $region9: #{decoder_forward.10} parent=5 // pred_check
      _
    $region10: #{decoder_forward.10} parent=5 // pred_check_branch
      %233 = sbr.rel (%p230) target = $region12
    $region11: #{decoder_forward.10} parent=5 // pred_region
      %s234 = ssub.s32 %s16, 1
      // Predicated region
      $region13: #{decoder_forward.10} parent=11 // pred_check
        %p235 = pneg %p63
      $region14: #{decoder_forward.10} parent=11 // pred_check_branch
        %237 = sbr.rel (%p235) target = $region16
      $region15: #{decoder_forward.10} parent=11 // pred_region
        _
      $region16: #{decoder_forward.10} parent=11 // pred_fallthru
        _
      // Predicated region
      $region17: #{decoder_forward.10} parent=11 // pred_check
        %p238 = pneg %p110
      $region18: #{decoder_forward.10} parent=11 // pred_check_branch
        %240 = sbr.rel (%p238) target = $region20
      $region19: #{decoder_forward.10} parent=11 // pred_region
        _
      $region20: #{decoder_forward.10} parent=11 // pred_fallthru
        _
      // Predicated region
      $region21: #{decoder_forward.10} parent=11 // pred_check
        %p241 = pneg %p131
      $region22: #{decoder_forward.10} parent=11 // pred_check_branch
        %243 = sbr.rel (%p241) target = $region24
      $region23: #{decoder_forward.10} parent=11 // pred_region
        _
      $region24: #{decoder_forward.10} parent=11 // pred_fallthru
        _
      // Predicated region
      $region25: #{decoder_forward.10} parent=11 // pred_check
        %p244 = pneg %p152
      $region26: #{decoder_forward.10} parent=11 // pred_check_branch
        %246 = sbr.rel (%p244) target = $region28
      $region27: #{decoder_forward.10} parent=11 // pred_region
        _
      $region28: #{decoder_forward.10} parent=11 // pred_fallthru
        _
      // Predicated region
      $region29: #{decoder_forward.10} parent=11 // pred_check
        %p247 = pneg %p173
      $region30: #{decoder_forward.10} parent=11 // pred_check_branch
        %249 = sbr.rel (%p247) target = $region32
      $region31: #{decoder_forward.10} parent=11 // pred_region
        _
      $region32: #{decoder_forward.10} parent=11 // pred_fallthru
        _
      // Predicated region
      $region33: #{decoder_forward.10} parent=11 // pred_check
        %p250 = pneg %p194
      $region34: #{decoder_forward.10} parent=11 // pred_check_branch
        %252 = sbr.rel (%p250) target = $region36
      $region35: #{decoder_forward.10} parent=11 // pred_region
        _
      $region36: #{decoder_forward.10} parent=11 // pred_fallthru
        _
    $region12: #{decoder_forward.10} parent=5 // pred_fallthru
      _
    %p253 = scmp.lt.s32.totalorder %s16, 2
    // Predicated region
    $region37: #{decoder_forward.10} parent=5 // pred_check
      %p254 = pneg %p253
    $region38: #{decoder_forward.10} parent=5 // pred_check_branch
      %256 = sbr.rel (%p254) target = $region40
    $region39: #{decoder_forward.10} parent=5 // pred_region
      // Predicated region
      $region41: #{decoder_forward.10} parent=39 // pred_check
        %p257 = pneg %p36
      $region42: #{decoder_forward.10} parent=39 // pred_check_branch
        %259 = sbr.rel (%p257) target = $region44
      $region43: #{decoder_forward.10} parent=39 // pred_region
        %s260 = smul.u32 32, %s16
        %p261 = scmp.lt.s32.totalorder %s260, 63
        %s262 = scalar_select %p261, %s260, 63
        %s263 = smul.addr %s262, 4
        %s264 = scalar_lea.vmem %s0, %s263
        %s265 = smul.u32 32, %s16
      $region44: #{decoder_forward.10} parent=39 // pred_fallthru
        _
      // Predicated region
      $region45: #{decoder_forward.10} parent=39 // pred_check
        %p266 = pneg %p83
      $region46: #{decoder_forward.10} parent=39 // pred_check_branch
        %268 = sbr.rel (%p266) target = $region48
      $region47: #{decoder_forward.10} parent=39 // pred_region
        %s269 = smul.u32 32, %s16
        %p270 = scmp.lt.s32.totalorder %s269, 63
        %s271 = scalar_select %p270, %s269, 63
        %s272 = smul.addr %s271, 8
        %s273 = scalar_lea.vmem %s2, %s272
        %s274 = smul.u32 32, %s16
      $region48: #{decoder_forward.10} parent=39 // pred_fallthru
        _
    $region40: #{decoder_forward.10} parent=5 // pred_fallthru
      _
    %p275 = scmp.le.s32.totalorder 1, %s16
    %p276 = scmp.lt.s32.totalorder %s16, 3
    %p277 = pnand %p275, %p276
    %p278 = pneg %p277
    // Predicated region
    $region49: #{decoder_forward.10} parent=5 // pred_check
      _
    $region50: #{decoder_forward.10} parent=5 // pred_check_branch
      %280 = sbr.rel (%p277) target = $region52
    $region51: #{decoder_forward.10} parent=5 // pred_region
      %s281 = ssub.s32 %s16, 1
      %s282 = smul.u32 32, %s21
      %p283 = scmp.lt.s32.totalorder %s282, 63
      %s284 = scalar_select %p283, %s282, 63
      %s285 = smul.addr %s284, 4
      %s286 = scalar_lea.vmem %s0, %s285
      %p287 = pneg %p42
      %p288 = pneg %p39
      %p289 = pneg %p63
      %p290 = pneg %p60
      %s291 = smul.u32 32, %s21
      %p292 = scmp.lt.s32.totalorder %s291, 63
      %s293 = scalar_select %p292, %s291, 63
      %s294 = smul.addr %s293, 8
      %s295 = scalar_lea.vmem %s2, %s294
      %p296 = pneg %p89
      %p297 = pneg %p86
      %p298 = pneg %p110
      %p299 = pneg %p107
      %p300 = pneg %p131
      %p301 = pneg %p128
      %p302 = pneg %p152
      %p303 = pneg %p149
      %p304 = pneg %p173
      %p305 = pneg %p170
      %p306 = pneg %p194
      %p307 = pneg %p191
      %p308 = pneg %p220
      %p309 = pneg %p217
      %s310 = smul.u32 32, %s21
      %p311 = scmp.lt.s32.totalorder %s310, 63
      %s312 = scalar_select %p311, %s310, 63
      %s313 = smul.addr %s312, 2
      %s314 = smul.addr %s313, 4
      %s315 = scalar_lea.vmem %s8, %s314
      %s316 = smul.u32 32, %s21
      %p317 = scmp.lt.s32.totalorder %s316, 63
      %s318 = scalar_select %p317, %s316, 63
      %s319 = smul.addr %s318, 4
      %s320 = scalar_lea.vmem %s0, %s319
      %s321 = smul.u32 32, %s21
      %s322 = smul.u32 32, %s21
      %p323 = scmp.lt.s32.totalorder %s322, 63
      %s324 = scalar_select %p323, %s322, 63
      %s325 = smul.addr %s324, 8
      %s326 = scalar_lea.vmem %s2, %s325
      %s327 = smul.u32 32, %s21
      %s328 = smul.u32 32, %s21
      %p329 = scmp.lt.s32.totalorder %s328, 63
      %s330 = scalar_select %p329, %s328, 63
      %s331 = smul.addr %s330, 2
      %s332 = smul.addr %s331, 4
      %s333 = scalar_lea.vmem %s8, %s332
      %s334 = smul.u32 32, %s21
      %v336 = vld [vmem:[%s320] sm:$0xf]
      %v337 = vld [vmem:[%s320 + $0x4] sm:$0xf]
      %v338 = vld [vmem:[%s320 + $0x8] sm:$0xf]
      %v339 = vld [vmem:[%s320 + $0xc] sm:$0xf]
      %v340 = vld [vmem:[%s320 + $0x10] sm:$0xf]
      %v341 = vld [vmem:[%s320 + $0x14] sm:$0xf]
      %v342 = vld [vmem:[%s320 + $0x18] sm:$0xf]
      %v343 = vld [vmem:[%s320 + $0x1c] sm:$0xf]
      %v344 = vld [vmem:[%s320 + $0x20] sm:$0xf]
      %v345 = vld [vmem:[%s320 + $0x24] sm:$0xf]
      %v346 = vld [vmem:[%s320 + $0x28] sm:$0xf]
      %v347 = vld [vmem:[%s320 + $0x2c] sm:$0xf]
      %v348 = vld [vmem:[%s320 + $0x30] sm:$0xf]
      %v349 = vld [vmem:[%s320 + $0x34] sm:$0xf]
      %v350 = vld [vmem:[%s320 + $0x38] sm:$0xf]
      %v351 = vld [vmem:[%s320 + $0x3c] sm:$0xf]
      %v352 = vld [vmem:[%s320 + $0x40] sm:$0xf]
      %v353 = vld [vmem:[%s320 + $0x44] sm:$0xf]
      %v354 = vld [vmem:[%s320 + $0x48] sm:$0xf]
      %v355 = vld [vmem:[%s320 + $0x4c] sm:$0xf]
      %v356 = vld [vmem:[%s320 + $0x50] sm:$0xf]
      %v357 = vld [vmem:[%s320 + $0x54] sm:$0xf]
      %v358 = vld [vmem:[%s320 + $0x58] sm:$0xf]
      %v359 = vld [vmem:[%s320 + $0x5c] sm:$0xf]
      %v360 = vld [vmem:[%s320 + $0x60] sm:$0xf]
      %v361 = vld [vmem:[%s320 + $0x64] sm:$0xf]
      %v362 = vld [vmem:[%s320 + $0x68] sm:$0xf]
      %v363 = vld [vmem:[%s320 + $0x6c] sm:$0xf]
      %v364 = vld [vmem:[%s320 + $0x70] sm:$0xf]
      %v365 = vld [vmem:[%s320 + $0x74] sm:$0xf]
      %v366 = vld [vmem:[%s320 + $0x78] sm:$0xf]
      %v367 = vld [vmem:[%s320 + $0x7c] sm:$0xf]
      %v368 = vunpack.c.l.bf16 %v336
      %v369 = vunpack.c.l.bf16 %v337
      %v370 = vunpack.c.l.bf16 %v338
      %v371 = vunpack.c.l.bf16 %v339
      %v372 = vunpack.c.l.bf16 %v340
      %v373 = vunpack.c.l.bf16 %v341
      %v374 = vunpack.c.l.bf16 %v342
      %v375 = vunpack.c.l.bf16 %v343
      %v376 = vunpack.c.l.bf16 %v344
      %v377 = vunpack.c.l.bf16 %v345
      %v378 = vunpack.c.l.bf16 %v346
      %v379 = vunpack.c.l.bf16 %v347
      %v380 = vunpack.c.l.bf16 %v348
      %v381 = vunpack.c.l.bf16 %v349
      %v382 = vunpack.c.l.bf16 %v350
      %v383 = vunpack.c.l.bf16 %v351
      %v384 = vunpack.c.l.bf16 %v352
      %v385 = vunpack.c.l.bf16 %v353
      %v386 = vunpack.c.l.bf16 %v354
      %v387 = vunpack.c.l.bf16 %v355
      %v388 = vunpack.c.l.bf16 %v356
      %v389 = vunpack.c.l.bf16 %v357
      %v390 = vunpack.c.l.bf16 %v358
      %v391 = vunpack.c.l.bf16 %v359
      %v392 = vunpack.c.l.bf16 %v360
      %v393 = vunpack.c.l.bf16 %v361
      %v394 = vunpack.c.l.bf16 %v362
      %v395 = vunpack.c.l.bf16 %v363
      %v396 = vunpack.c.l.bf16 %v364
      %v397 = vunpack.c.l.bf16 %v365
      %v398 = vunpack.c.l.bf16 %v366
      %v399 = vunpack.c.l.bf16 %v367
      %v400 = vld [vmem:[%s1] sm:$0x1]
      %v402 = vperm.slane %v400, 0
      %v404 = vadd.f32 %v368, %v402
      %v405 = vadd.f32 %v369, %v402
      %v406 = vadd.f32 %v370, %v402
      %v407 = vadd.f32 %v371, %v402
      %v408 = vadd.f32 %v372, %v402
      %v409 = vadd.f32 %v373, %v402
      %v410 = vadd.f32 %v374, %v402
      %v411 = vadd.f32 %v375, %v402
      %v412 = vadd.f32 %v376, %v402
      %v413 = vadd.f32 %v377, %v402
      %v414 = vadd.f32 %v378, %v402
      %v415 = vadd.f32 %v379, %v402
      %v416 = vadd.f32 %v380, %v402
      %v417 = vadd.f32 %v381, %v402
      %v418 = vadd.f32 %v382, %v402
      %v419 = vadd.f32 %v383, %v402
      %v420 = vadd.f32 %v384, %v402
      %v421 = vadd.f32 %v385, %v402
      %v422 = vadd.f32 %v386, %v402
      %v423 = vadd.f32 %v387, %v402
      %v424 = vadd.f32 %v388, %v402
      %v425 = vadd.f32 %v389, %v402
      %v426 = vadd.f32 %v390, %v402
      %v427 = vadd.f32 %v391, %v402
      %v428 = vadd.f32 %v392, %v402
      %v429 = vadd.f32 %v393, %v402
      %v430 = vadd.f32 %v394, %v402
      %v431 = vadd.f32 %v395, %v402
      %v432 = vadd.f32 %v396, %v402
      %v433 = vadd.f32 %v397, %v402
      %v434 = vadd.f32 %v398, %v402
      %v435 = vadd.f32 %v399, %v402
      %vm436 = vcmp.gt.f32.partialorder %v404, 0.0
      %vm437 = vcmp.gt.f32.partialorder %v405, 0.0
      %vm438 = vcmp.gt.f32.partialorder %v406, 0.0
      %vm439 = vcmp.gt.f32.partialorder %v407, 0.0
      %vm440 = vcmp.gt.f32.partialorder %v408, 0.0
      %vm441 = vcmp.gt.f32.partialorder %v409, 0.0
      %vm442 = vcmp.gt.f32.partialorder %v410, 0.0
      %vm443 = vcmp.gt.f32.partialorder %v411, 0.0
      %vm444 = vcmp.gt.f32.partialorder %v412, 0.0
      %vm445 = vcmp.gt.f32.partialorder %v413, 0.0
      %vm446 = vcmp.gt.f32.partialorder %v414, 0.0
      %vm447 = vcmp.gt.f32.partialorder %v415, 0.0
      %vm448 = vcmp.gt.f32.partialorder %v416, 0.0
      %vm449 = vcmp.gt.f32.partialorder %v417, 0.0
      %vm450 = vcmp.gt.f32.partialorder %v418, 0.0
      %vm451 = vcmp.gt.f32.partialorder %v419, 0.0
      %vm452 = vcmp.gt.f32.partialorder %v420, 0.0
      %vm453 = vcmp.gt.f32.partialorder %v421, 0.0
      %vm454 = vcmp.gt.f32.partialorder %v422, 0.0
      %vm455 = vcmp.gt.f32.partialorder %v423, 0.0
      %vm456 = vcmp.gt.f32.partialorder %v424, 0.0
      %vm457 = vcmp.gt.f32.partialorder %v425, 0.0
      %vm458 = vcmp.gt.f32.partialorder %v426, 0.0
      %vm459 = vcmp.gt.f32.partialorder %v427, 0.0
      %vm460 = vcmp.gt.f32.partialorder %v428, 0.0
      %vm461 = vcmp.gt.f32.partialorder %v429, 0.0
      %vm462 = vcmp.gt.f32.partialorder %v430, 0.0
      %vm463 = vcmp.gt.f32.partialorder %v431, 0.0
      %vm464 = vcmp.gt.f32.partialorder %v432, 0.0
      %vm465 = vcmp.gt.f32.partialorder %v433, 0.0
      %vm466 = vcmp.gt.f32.partialorder %v434, 0.0
      %vm467 = vcmp.gt.f32.partialorder %v435, 0.0
      %v468 = vmin.f32 %v404, 0.0
      %v469 = vmin.f32 %v405, 0.0
      %v470 = vmin.f32 %v406, 0.0
      %v471 = vmin.f32 %v407, 0.0
      %v472 = vmin.f32 %v408, 0.0
      %v473 = vmin.f32 %v409, 0.0
      %v474 = vmin.f32 %v410, 0.0
      %v475 = vmin.f32 %v411, 0.0
      %v476 = vmin.f32 %v412, 0.0
      %v477 = vmin.f32 %v413, 0.0
      %v478 = vmin.f32 %v414, 0.0
      %v479 = vmin.f32 %v415, 0.0
      %v480 = vmin.f32 %v416, 0.0
      %v481 = vmin.f32 %v417, 0.0
      %v482 = vmin.f32 %v418, 0.0
      %v483 = vmin.f32 %v419, 0.0
      %v484 = vmin.f32 %v420, 0.0
      %v485 = vmin.f32 %v421, 0.0
      %v486 = vmin.f32 %v422, 0.0
      %v487 = vmin.f32 %v423, 0.0
      %v488 = vmin.f32 %v424, 0.0
      %v489 = vmin.f32 %v425, 0.0
      %v490 = vmin.f32 %v426, 0.0
      %v491 = vmin.f32 %v427, 0.0
      %v492 = vmin.f32 %v428, 0.0
      %v493 = vmin.f32 %v429, 0.0
      %v494 = vmin.f32 %v430, 0.0
      %v495 = vmin.f32 %v431, 0.0
      %v496 = vmin.f32 %v432, 0.0
      %v497 = vmin.f32 %v433, 0.0
      %v498 = vmin.f32 %v434, 0.0
      %v499 = vmin.f32 %v435, 0.0
      %v500 = vmul.f32 %v468, 1.442695
      %v501 = vpow.pop %v500
      %v502 = vmul.f32 %v469, 1.442695
      %v503 = vpow.pop %v502
      %v504 = vmul.f32 %v470, 1.442695
      %v505 = vpow.pop %v504
      %v506 = vmul.f32 %v471, 1.442695
      %v507 = vpow.pop %v506
      %v508 = vmul.f32 %v472, 1.442695
      %v509 = vpow.pop %v508
      %v510 = vmul.f32 %v473, 1.442695
      %v511 = vpow.pop %v510
      %v512 = vmul.f32 %v474, 1.442695
      %v513 = vpow.pop %v512
      %v514 = vmul.f32 %v475, 1.442695
      %v515 = vpow.pop %v514
      %v516 = vmul.f32 %v476, 1.442695
      %v517 = vpow.pop %v516
      %v518 = vmul.f32 %v477, 1.442695
      %v519 = vpow.pop %v518
      %v520 = vmul.f32 %v478, 1.442695
      %v521 = vpow.pop %v520
      %v522 = vmul.f32 %v479, 1.442695
      %v523 = vpow.pop %v522
      %v524 = vmul.f32 %v480, 1.442695
      %v525 = vpow.pop %v524
      %v526 = vmul.f32 %v481, 1.442695
      %v527 = vpow.pop %v526
      %v528 = vmul.f32 %v482, 1.442695
      %v529 = vpow.pop %v528
      %v530 = vmul.f32 %v483, 1.442695
      %v531 = vpow.pop %v530
      %v532 = vmul.f32 %v484, 1.442695
      %v533 = vpow.pop %v532
      %v534 = vmul.f32 %v485, 1.442695
      %v535 = vpow.pop %v534
      %v536 = vmul.f32 %v486, 1.442695
      %v537 = vpow.pop %v536
      %v538 = vmul.f32 %v487, 1.442695
      %v539 = vpow.pop %v538
      %v540 = vmul.f32 %v488, 1.442695
      %v541 = vpow.pop %v540
      %v542 = vmul.f32 %v489, 1.442695
      %v543 = vpow.pop %v542
      %v544 = vmul.f32 %v490, 1.442695
      %v545 = vpow.pop %v544
      %v546 = vmul.f32 %v491, 1.442695
      %v547 = vpow.pop %v546
      %v548 = vmul.f32 %v492, 1.442695
      %v549 = vpow.pop %v548
      %v550 = vmul.f32 %v493, 1.442695
      %v551 = vpow.pop %v550
      %v552 = vmul.f32 %v494, 1.442695
      %v553 = vpow.pop %v552
      %v554 = vmul.f32 %v495, 1.442695
      %v555 = vpow.pop %v554
      %v556 = vmul.f32 %v496, 1.442695
      %v557 = vpow.pop %v556
      %v558 = vmul.f32 %v497, 1.442695
      %v559 = vpow.pop %v558
      %v560 = vmul.f32 %v498, 1.442695
      %v561 = vpow.pop %v560
      %v562 = vmul.f32 %v499, 1.442695
      %v563 = vpow.pop %v562
      %v564 = vsub.f32 %v501, 1.0
      %v565 = vsub.f32 %v503, 1.0
      %v566 = vsub.f32 %v505, 1.0
      %v567 = vsub.f32 %v507, 1.0
      %v568 = vsub.f32 %v509, 1.0
      %v569 = vsub.f32 %v511, 1.0
      %v570 = vsub.f32 %v513, 1.0
      %v571 = vsub.f32 %v515, 1.0
      %v572 = vsub.f32 %v517, 1.0
      %v573 = vsub.f32 %v519, 1.0
      %v574 = vsub.f32 %v521, 1.0
      %v575 = vsub.f32 %v523, 1.0
      %v576 = vsub.f32 %v525, 1.0
      %v577 = vsub.f32 %v527, 1.0
      %v578 = vsub.f32 %v529, 1.0
      %v579 = vsub.f32 %v531, 1.0
      %v580 = vsub.f32 %v533, 1.0
      %v581 = vsub.f32 %v535, 1.0
      %v582 = vsub.f32 %v537, 1.0
      %v583 = vsub.f32 %v539, 1.0
      %v584 = vsub.f32 %v541, 1.0
      %v585 = vsub.f32 %v543, 1.0
      %v586 = vsub.f32 %v545, 1.0
      %v587 = vsub.f32 %v547, 1.0
      %v588 = vsub.f32 %v549, 1.0
      %v589 = vsub.f32 %v551, 1.0
      %v590 = vsub.f32 %v553, 1.0
      %v591 = vsub.f32 %v555, 1.0
      %v592 = vsub.f32 %v557, 1.0
      %v593 = vsub.f32 %v559, 1.0
      %v594 = vsub.f32 %v561, 1.0
      %v595 = vsub.f32 %v563, 1.0
      %v596 = vsel %vm436, %v404, %v564
      %v597 = vsel %vm437, %v405, %v565
      %v598 = vsel %vm438, %v406, %v566
      %v599 = vsel %vm439, %v407, %v567
      %v600 = vsel %vm440, %v408, %v568
      %v601 = vsel %vm441, %v409, %v569
      %v602 = vsel %vm442, %v410, %v570
      %v603 = vsel %vm443, %v411, %v571
      %v604 = vsel %vm444, %v412, %v572
      %v605 = vsel %vm445, %v413, %v573
      %v606 = vsel %vm446, %v414, %v574
      %v607 = vsel %vm447, %v415, %v575
      %v608 = vsel %vm448, %v416, %v576
      %v609 = vsel %vm449, %v417, %v577
      %v610 = vsel %vm450, %v418, %v578
      %v611 = vsel %vm451, %v419, %v579
      %v612 = vsel %vm452, %v420, %v580
      %v613 = vsel %vm453, %v421, %v581
      %v614 = vsel %vm454, %v422, %v582
      %v615 = vsel %vm455, %v423, %v583
      %v616 = vsel %vm456, %v424, %v584
      %v617 = vsel %vm457, %v425, %v585
      %v618 = vsel %vm458, %v426, %v586
      %v619 = vsel %vm459, %v427, %v587
      %v620 = vsel %vm460, %v428, %v588
      %v621 = vsel %vm461, %v429, %v589
      %v622 = vsel %vm462, %v430, %v590
      %v623 = vsel %vm463, %v431, %v591
      %v624 = vsel %vm464, %v432, %v592
      %v625 = vsel %vm465, %v433, %v593
      %v626 = vsel %vm466, %v434, %v594
      %v627 = vsel %vm467, %v435, %v595
      %v628 = vpack.c.bf16 %v596, %v596
      %v629 = vpack.c.bf16 %v597, %v597
      %v630 = vpack.c.bf16 %v598, %v598
      %v631 = vpack.c.bf16 %v599, %v599
      %v632 = vpack.c.bf16 %v600, %v600
      %v633 = vpack.c.bf16 %v601, %v601
      %v634 = vpack.c.bf16 %v602, %v602
      %v635 = vpack.c.bf16 %v603, %v603
      %v636 = vpack.c.bf16 %v604, %v604
      %v637 = vpack.c.bf16 %v605, %v605
      %v638 = vpack.c.bf16 %v606, %v606
      %v639 = vpack.c.bf16 %v607, %v607
      %v640 = vpack.c.bf16 %v608, %v608
      %v641 = vpack.c.bf16 %v609, %v609
      %v642 = vpack.c.bf16 %v610, %v610
      %v643 = vpack.c.bf16 %v611, %v611
      %v644 = vpack.c.bf16 %v612, %v612
      %v645 = vpack.c.bf16 %v613, %v613
      %v646 = vpack.c.bf16 %v614, %v614
      %v647 = vpack.c.bf16 %v615, %v615
      %v648 = vpack.c.bf16 %v616, %v616
      %v649 = vpack.c.bf16 %v617, %v617
      %v650 = vpack.c.bf16 %v618, %v618
      %v651 = vpack.c.bf16 %v619, %v619
      %v652 = vpack.c.bf16 %v620, %v620
      %v653 = vpack.c.bf16 %v621, %v621
      %v654 = vpack.c.bf16 %v622, %v622
      %v655 = vpack.c.bf16 %v623, %v623
      %v656 = vpack.c.bf16 %v624, %v624
      %v657 = vpack.c.bf16 %v625, %v625
      %v658 = vpack.c.bf16 %v626, %v626
      %v659 = vpack.c.bf16 %v627, %v627
      %v660 = vld [vmem:[%s326] sm:$0xff]
      %v661 = vld [vmem:[%s326 + $0x8] sm:$0xff]
      %v662 = vld [vmem:[%s326 + $0x10] sm:$0xff]
      %v663 = vld [vmem:[%s326 + $0x18] sm:$0xff]
      %v664 = vld [vmem:[%s326 + $0x20] sm:$0xff]
      %v665 = vld [vmem:[%s326 + $0x28] sm:$0xff]
      %v666 = vld [vmem:[%s326 + $0x30] sm:$0xff]
      %v667 = vld [vmem:[%s326 + $0x38] sm:$0xff]
      %v668 = vld [vmem:[%s326 + $0x40] sm:$0xff]
      %v669 = vld [vmem:[%s326 + $0x48] sm:$0xff]
      %v670 = vld [vmem:[%s326 + $0x50] sm:$0xff]
      %v671 = vld [vmem:[%s326 + $0x58] sm:$0xff]
      %v672 = vld [vmem:[%s326 + $0x60] sm:$0xff]
      %v673 = vld [vmem:[%s326 + $0x68] sm:$0xff]
      %v674 = vld [vmem:[%s326 + $0x70] sm:$0xff]
      %v675 = vld [vmem:[%s326 + $0x78] sm:$0xff]
      %v676 = vld [vmem:[%s326 + $0x80] sm:$0xff]
      %v677 = vld [vmem:[%s326 + $0x88] sm:$0xff]
      %v678 = vld [vmem:[%s326 + $0x90] sm:$0xff]
      %v679 = vld [vmem:[%s326 + $0x98] sm:$0xff]
      %v680 = vld [vmem:[%s326 + $0xa0] sm:$0xff]
      %v681 = vld [vmem:[%s326 + $0xa8] sm:$0xff]
      %v682 = vld [vmem:[%s326 + $0xb0] sm:$0xff]
      %v683 = vld [vmem:[%s326 + $0xb8] sm:$0xff]
      %v684 = vld [vmem:[%s326 + $0xc0] sm:$0xff]
      %v685 = vld [vmem:[%s326 + $0xc8] sm:$0xff]
      %v686 = vld [vmem:[%s326 + $0xd0] sm:$0xff]
      %v687 = vld [vmem:[%s326 + $0xd8] sm:$0xff]
      %v688 = vld [vmem:[%s326 + $0xe0] sm:$0xff]
      %v689 = vld [vmem:[%s326 + $0xe8] sm:$0xff]
      %v690 = vld [vmem:[%s326 + $0xf0] sm:$0xff]
      %v691 = vld [vmem:[%s326 + $0xf8] sm:$0xff]
      %v692 = vpack.c.bf16 %v660, %v660
      %v693 = vpack.c.bf16 %v661, %v661
      %v694 = vpack.c.bf16 %v662, %v662
      %v695 = vpack.c.bf16 %v663, %v663
      %v696 = vpack.c.bf16 %v664, %v664
      %v697 = vpack.c.bf16 %v665, %v665
      %v698 = vpack.c.bf16 %v666, %v666
      %v699 = vpack.c.bf16 %v667, %v667
      %v700 = vpack.c.bf16 %v668, %v668
      %v701 = vpack.c.bf16 %v669, %v669
      %v702 = vpack.c.bf16 %v670, %v670
      %v703 = vpack.c.bf16 %v671, %v671
      %v704 = vpack.c.bf16 %v672, %v672
      %v705 = vpack.c.bf16 %v673, %v673
      %v706 = vpack.c.bf16 %v674, %v674
      %v707 = vpack.c.bf16 %v675, %v675
      %v708 = vpack.c.bf16 %v676, %v676
      %v709 = vpack.c.bf16 %v677, %v677
      %v710 = vpack.c.bf16 %v678, %v678
      %v711 = vpack.c.bf16 %v679, %v679
      %v712 = vpack.c.bf16 %v680, %v680
      %v713 = vpack.c.bf16 %v681, %v681
      %v714 = vpack.c.bf16 %v682, %v682
      %v715 = vpack.c.bf16 %v683, %v683
      %v716 = vpack.c.bf16 %v684, %v684
      %v717 = vpack.c.bf16 %v685, %v685
      %v718 = vpack.c.bf16 %v686, %v686
      %v719 = vpack.c.bf16 %v687, %v687
      %v720 = vpack.c.bf16 %v688, %v688
      %v721 = vpack.c.bf16 %v689, %v689
      %v722 = vpack.c.bf16 %v690, %v690
      %v723 = vpack.c.bf16 %v691, %v691
      %v756 = vunpack.c.l.b16 %v628
      %v757 = vunpack.c.l.b16 %v629
      %v758 = vunpack.c.l.b16 %v630
      %v759 = vunpack.c.l.b16 %v631
      %v760 = vunpack.c.l.b16 %v632
      %v761 = vunpack.c.l.b16 %v633
      %v762 = vunpack.c.l.b16 %v634
      %v763 = vunpack.c.l.b16 %v635
      %v764 = vunpack.c.l.b16 %v636
      %v765 = vunpack.c.l.b16 %v637
      %v766 = vunpack.c.l.b16 %v638
      %v767 = vunpack.c.l.b16 %v639
      %v768 = vunpack.c.l.b16 %v640
      %v769 = vunpack.c.l.b16 %v641
      %v770 = vunpack.c.l.b16 %v642
      %v771 = vunpack.c.l.b16 %v643
      %v772 = vunpack.c.l.b16 %v644
      %v773 = vunpack.c.l.b16 %v645
      %v774 = vunpack.c.l.b16 %v646
      %v775 = vunpack.c.l.b16 %v647
      %v776 = vunpack.c.l.b16 %v648
      %v777 = vunpack.c.l.b16 %v649
      %v778 = vunpack.c.l.b16 %v650
      %v779 = vunpack.c.l.b16 %v651
      %v780 = vunpack.c.l.b16 %v652
      %v781 = vunpack.c.l.b16 %v653
      %v782 = vunpack.c.l.b16 %v654
      %v783 = vunpack.c.l.b16 %v655
      %v784 = vunpack.c.l.b16 %v656
      %v785 = vunpack.c.l.b16 %v657
      %v786 = vunpack.c.l.b16 %v658
      %v787 = vunpack.c.l.b16 %v659
      %v788 = vpack.c.b16 %v757, %v756
      %v789 = vpack.c.b16 %v759, %v758
      %v790 = vpack.c.b16 %v761, %v760
      %v791 = vpack.c.b16 %v763, %v762
      %v792 = vpack.c.b16 %v765, %v764
      %v793 = vpack.c.b16 %v767, %v766
      %v794 = vpack.c.b16 %v769, %v768
      %v795 = vpack.c.b16 %v771, %v770
      %v796 = vpack.c.b16 %v773, %v772
      %v797 = vpack.c.b16 %v775, %v774
      %v798 = vpack.c.b16 %v777, %v776
      %v799 = vpack.c.b16 %v779, %v778
      %v800 = vpack.c.b16 %v781, %v780
      %v801 = vpack.c.b16 %v783, %v782
      %v802 = vpack.c.b16 %v785, %v784
      %v803 = vpack.c.b16 %v787, %v786
      %v836 = vunpack.c.l.b16 %v692
      %v837 = vunpack.c.l.b16 %v693
      %v838 = vunpack.c.l.b16 %v694
      %v839 = vunpack.c.l.b16 %v695
      %v840 = vunpack.c.l.b16 %v696
      %v841 = vunpack.c.l.b16 %v697
      %v842 = vunpack.c.l.b16 %v698
      %v843 = vunpack.c.l.b16 %v699
      %v844 = vunpack.c.l.b16 %v700
      %v845 = vunpack.c.l.b16 %v701
      %v846 = vunpack.c.l.b16 %v702
      %v847 = vunpack.c.l.b16 %v703
      %v848 = vunpack.c.l.b16 %v704
      %v849 = vunpack.c.l.b16 %v705
      %v850 = vunpack.c.l.b16 %v706
      %v851 = vunpack.c.l.b16 %v707
      %v852 = vunpack.c.l.b16 %v708
      %v853 = vunpack.c.l.b16 %v709
      %v854 = vunpack.c.l.b16 %v710
      %v855 = vunpack.c.l.b16 %v711
      %v856 = vunpack.c.l.b16 %v712
      %v857 = vunpack.c.l.b16 %v713
      %v858 = vunpack.c.l.b16 %v714
      %v859 = vunpack.c.l.b16 %v715
      %v860 = vunpack.c.l.b16 %v716
      %v861 = vunpack.c.l.b16 %v717
      %v862 = vunpack.c.l.b16 %v718
      %v863 = vunpack.c.l.b16 %v719
      %v864 = vunpack.c.l.b16 %v720
      %v865 = vunpack.c.l.b16 %v721
      %v866 = vunpack.c.l.b16 %v722
      %v867 = vunpack.c.l.b16 %v723
      %v868 = vpack.c.b16 %v837, %v836
      %v869 = vpack.c.b16 %v839, %v838
      %v870 = vpack.c.b16 %v841, %v840
      %v871 = vpack.c.b16 %v843, %v842
      %v872 = vpack.c.b16 %v845, %v844
      %v873 = vpack.c.b16 %v847, %v846
      %v874 = vpack.c.b16 %v849, %v848
      %v875 = vpack.c.b16 %v851, %v850
      %v876 = vpack.c.b16 %v853, %v852
      %v877 = vpack.c.b16 %v855, %v854
      %v878 = vpack.c.b16 %v857, %v856
      %v879 = vpack.c.b16 %v859, %v858
      %v880 = vpack.c.b16 %v861, %v860
      %v881 = vpack.c.b16 %v863, %v862
      %v882 = vpack.c.b16 %v865, %v864
      %v883 = vpack.c.b16 %v867, %v866
      %884 = vrot.lane.b32.xlu0 %v868, 16
      %v885 = vpop.permute.xlu0 %884
      %886 = vrot.lane.b32.xlu0 %v869, 16
      %v887 = vpop.permute.xlu0 %886
      %888 = vrot.lane.b32.xlu0 %v870, 16
      %v889 = vpop.permute.xlu0 %888
      %890 = vrot.lane.b32.xlu0 %v871, 16
      %v891 = vpop.permute.xlu0 %890
      %892 = vrot.lane.b32.xlu0 %v872, 16
      %v893 = vpop.permute.xlu0 %892
      %894 = vrot.lane.b32.xlu0 %v873, 16
      %v895 = vpop.permute.xlu0 %894
      %896 = vrot.lane.b32.xlu0 %v874, 16
      %v897 = vpop.permute.xlu0 %896
      %898 = vrot.lane.b32.xlu0 %v875, 16
      %v899 = vpop.permute.xlu0 %898
      %900 = vrot.lane.b32.xlu0 %v876, 16
      %v901 = vpop.permute.xlu0 %900
      %902 = vrot.lane.b32.xlu0 %v877, 16
      %v903 = vpop.permute.xlu0 %902
      %904 = vrot.lane.b32.xlu0 %v878, 16
      %v905 = vpop.permute.xlu0 %904
      %906 = vrot.lane.b32.xlu0 %v879, 16
      %v907 = vpop.permute.xlu0 %906
      %908 = vrot.lane.b32.xlu0 %v880, 16
      %v909 = vpop.permute.xlu0 %908
      %910 = vrot.lane.b32.xlu0 %v881, 16
      %v911 = vpop.permute.xlu0 %910
      %912 = vrot.lane.b32.xlu0 %v882, 16
      %v913 = vpop.permute.xlu0 %912
      %914 = vrot.lane.b32.xlu0 %v883, 16
      %v915 = vpop.permute.xlu0 %914
      %vm916 = vcmask 130048
      %v919 = vsel %vm916, %v788, %v885
      %v922 = vsel %vm916, %v789, %v887
      %v925 = vsel %vm916, %v790, %v889
      %v928 = vsel %vm916, %v791, %v891
      %v931 = vsel %vm916, %v792, %v893
      %v934 = vsel %vm916, %v793, %v895
      %v937 = vsel %vm916, %v794, %v897
      %v940 = vsel %vm916, %v795, %v899
      %v943 = vsel %vm916, %v796, %v901
      %v946 = vsel %vm916, %v797, %v903
      %v949 = vsel %vm916, %v798, %v905
      %v952 = vsel %vm916, %v799, %v907
      %v955 = vsel %vm916, %v800, %v909
      %v958 = vsel %vm916, %v801, %v911
      %v961 = vsel %vm916, %v802, %v913
      %v964 = vsel %vm916, %v803, %v915
      %v965 = vld [vmem:[%s3] sm:$0xf]
      %v966 = vld [vmem:[%s3 + $0x4] sm:$0xf]
      %v967 = vld [vmem:[%s3 + $0x8] sm:$0xf]
      %v968 = vld [vmem:[%s3 + $0xc] sm:$0xf]
      %v969 = vld [vmem:[%s4] sm:$0x1]
      %v971 = vperm.slane %v969, 0
      %v977 = vunpack.c.l.b16 %v965
      %v978 = vunpack.c.l.b16 %v966
      %v979 = vunpack.c.l.b16 %v967
      %v980 = vunpack.c.l.b16 %v968
      %v981 = vpack.c.b16 %v978, %v977
      %v982 = vpack.c.b16 %v980, %v979
      %vm985 = vcmask 261120
      %v986 = vsel %vm985, %v919, 0
      %v988 = vsel %vm985, %v922, 0
      %v990 = vsel %vm985, %v925, 0
      %v992 = vsel %vm985, %v928, 0
      %v994 = vsel %vm985, %v931, 0
      %v996 = vsel %vm985, %v934, 0
      %v998 = vsel %vm985, %v937, 0
      %v1000 = vsel %vm985, %v940, 0
      %v1002 = vsel %vm985, %v943, 0
      %v1004 = vsel %vm985, %v946, 0
      %v1006 = vsel %vm985, %v949, 0
      %v1008 = vsel %vm985, %v952, 0
      %v1010 = vsel %vm985, %v955, 0
      %v1012 = vsel %vm985, %v958, 0
      %v1014 = vsel %vm985, %v961, 0
      %v1016 = vsel %vm985, %v964, 0
      %1018 = vmatpush.bf16.msra.mxu0 0
      %1019 = vmatpush.bf16.msra.mxu0 0
      %1020 = vmatpush.bf16.msra.mxu0 0
      %1021 = vmatpush.bf16.msra.mxu0 0
      %1022 = vmatpush.bf16.msra.mxu0 0
      %1023 = vmatpush.bf16.msra.mxu0 0
      %1024 = vmatpush.bf16.msra.mxu0 %v982
      %1025 = vmatpush.bf16.msra.mxu0 %v981
      %1026 = vmatmul.bf16.gmra.mxu0 %v986
      %v1027 = vpop.f32.mrf.mxu0
      %v1028 = vadd.f32 %v971, %v1027
      %v1029 = vpop.f32.mrf.mxu0
      %v1030 = vadd.f32 %v971, %v1029
      %1031 = vmatmul.bf16.gmra.mxu0 %v988
      %v1032 = vpop.f32.mrf.mxu0
      %v1033 = vadd.f32 %v971, %v1032
      %v1034 = vpop.f32.mrf.mxu0
      %v1035 = vadd.f32 %v971, %v1034
      %1036 = vmatmul.bf16.gmra.mxu0 %v990
      %v1037 = vpop.f32.mrf.mxu0
      %v1038 = vadd.f32 %v971, %v1037
      %v1039 = vpop.f32.mrf.mxu0
      %v1040 = vadd.f32 %v971, %v1039
      %1041 = vmatmul.bf16.gmra.mxu0 %v992
      %v1042 = vpop.f32.mrf.mxu0
      %v1043 = vadd.f32 %v971, %v1042
      %v1044 = vpop.f32.mrf.mxu0
      %v1045 = vadd.f32 %v971, %v1044
      %1046 = vmatmul.bf16.gmra.mxu0 %v994
      %v1047 = vpop.f32.mrf.mxu0
      %v1048 = vadd.f32 %v971, %v1047
      %v1049 = vpop.f32.mrf.mxu0
      %v1050 = vadd.f32 %v971, %v1049
      %1051 = vmatmul.bf16.gmra.mxu0 %v996
      %v1052 = vpop.f32.mrf.mxu0
      %v1053 = vadd.f32 %v971, %v1052
      %v1054 = vpop.f32.mrf.mxu0
      %v1055 = vadd.f32 %v971, %v1054
      %1056 = vmatmul.bf16.gmra.mxu0 %v998
      %v1057 = vpop.f32.mrf.mxu0
      %v1058 = vadd.f32 %v971, %v1057
      %v1059 = vpop.f32.mrf.mxu0
      %v1060 = vadd.f32 %v971, %v1059
      %1061 = vmatmul.bf16.gmra.mxu0 %v1000
      %v1062 = vpop.f32.mrf.mxu0
      %v1063 = vadd.f32 %v971, %v1062
      %v1064 = vpop.f32.mrf.mxu0
      %v1065 = vadd.f32 %v971, %v1064
      %1066 = vmatmul.bf16.gmra.mxu0 %v1002
      %v1067 = vpop.f32.mrf.mxu0
      %v1068 = vadd.f32 %v971, %v1067
      %v1069 = vpop.f32.mrf.mxu0
      %v1070 = vadd.f32 %v971, %v1069
      %1071 = vmatmul.bf16.gmra.mxu0 %v1004
      %v1072 = vpop.f32.mrf.mxu0
      %v1073 = vadd.f32 %v971, %v1072
      %v1074 = vpop.f32.mrf.mxu0
      %v1075 = vadd.f32 %v971, %v1074
      %1076 = vmatmul.bf16.gmra.mxu0 %v1006
      %v1077 = vpop.f32.mrf.mxu0
      %v1078 = vadd.f32 %v971, %v1077
      %v1079 = vpop.f32.mrf.mxu0
      %v1080 = vadd.f32 %v971, %v1079
      %1081 = vmatmul.bf16.gmra.mxu0 %v1008
      %v1082 = vpop.f32.mrf.mxu0
      %v1083 = vadd.f32 %v971, %v1082
      %v1084 = vpop.f32.mrf.mxu0
      %v1085 = vadd.f32 %v971, %v1084
      %1086 = vmatmul.bf16.gmra.mxu0 %v1010
      %v1087 = vpop.f32.mrf.mxu0
      %v1088 = vadd.f32 %v971, %v1087
      %v1089 = vpop.f32.mrf.mxu0
      %v1090 = vadd.f32 %v971, %v1089
      %1091 = vmatmul.bf16.gmra.mxu0 %v1012
      %v1092 = vpop.f32.mrf.mxu0
      %v1093 = vadd.f32 %v971, %v1092
      %v1094 = vpop.f32.mrf.mxu0
      %v1095 = vadd.f32 %v971, %v1094
      %1096 = vmatmul.bf16.gmra.mxu0 %v1014
      %v1097 = vpop.f32.mrf.mxu0
      %v1098 = vadd.f32 %v971, %v1097
      %v1099 = vpop.f32.mrf.mxu0
      %v1100 = vadd.f32 %v971, %v1099
      %1101 = vmatmul.bf16.gmra.mxu0 %v1016
      %v1102 = vpop.f32.mrf.mxu0
      %v1103 = vadd.f32 %v971, %v1102
      %v1104 = vpop.f32.mrf.mxu0
      %v1105 = vadd.f32 %v971, %v1104
      %1106 = vdwg.mxu0
      %v1107 = vmax.f32 %v1028, 0.0
      %v1108 = vmax.f32 %v1030, 0.0
      %v1109 = vmax.f32 %v1033, 0.0
      %v1110 = vmax.f32 %v1035, 0.0
      %v1111 = vmax.f32 %v1038, 0.0
      %v1112 = vmax.f32 %v1040, 0.0
      %v1113 = vmax.f32 %v1043, 0.0
      %v1114 = vmax.f32 %v1045, 0.0
      %v1115 = vmax.f32 %v1048, 0.0
      %v1116 = vmax.f32 %v1050, 0.0
      %v1117 = vmax.f32 %v1053, 0.0
      %v1118 = vmax.f32 %v1055, 0.0
      %v1119 = vmax.f32 %v1058, 0.0
      %v1120 = vmax.f32 %v1060, 0.0
      %v1121 = vmax.f32 %v1063, 0.0
      %v1122 = vmax.f32 %v1065, 0.0
      %v1123 = vmax.f32 %v1068, 0.0
      %v1124 = vmax.f32 %v1070, 0.0
      %v1125 = vmax.f32 %v1073, 0.0
      %v1126 = vmax.f32 %v1075, 0.0
      %v1127 = vmax.f32 %v1078, 0.0
      %v1128 = vmax.f32 %v1080, 0.0
      %v1129 = vmax.f32 %v1083, 0.0
      %v1130 = vmax.f32 %v1085, 0.0
      %v1131 = vmax.f32 %v1088, 0.0
      %v1132 = vmax.f32 %v1090, 0.0
      %v1133 = vmax.f32 %v1093, 0.0
      %v1134 = vmax.f32 %v1095, 0.0
      %v1135 = vmax.f32 %v1098, 0.0
      %v1136 = vmax.f32 %v1100, 0.0
      %v1137 = vmax.f32 %v1103, 0.0
      %v1138 = vmax.f32 %v1105, 0.0
      %v1139 = vld [vmem:[%s5] sm:$0x1]
      %v1141 = vperm.slane %v1139, 0
      %v1143 = vmul.f32 %v1107, %v1141
      %v1144 = vmul.f32 %v1108, %v1141
      %v1145 = vmul.f32 %v1109, %v1141
      %v1146 = vmul.f32 %v1110, %v1141
      %v1147 = vmul.f32 %v1111, %v1141
      %v1148 = vmul.f32 %v1112, %v1141
      %v1149 = vmul.f32 %v1113, %v1141
      %v1150 = vmul.f32 %v1114, %v1141
      %v1151 = vmul.f32 %v1115, %v1141
      %v1152 = vmul.f32 %v1116, %v1141
      %v1153 = vmul.f32 %v1117, %v1141
      %v1154 = vmul.f32 %v1118, %v1141
      %v1155 = vmul.f32 %v1119, %v1141
      %v1156 = vmul.f32 %v1120, %v1141
      %v1157 = vmul.f32 %v1121, %v1141
      %v1158 = vmul.f32 %v1122, %v1141
      %v1159 = vmul.f32 %v1123, %v1141
      %v1160 = vmul.f32 %v1124, %v1141
      %v1161 = vmul.f32 %v1125, %v1141
      %v1162 = vmul.f32 %v1126, %v1141
      %v1163 = vmul.f32 %v1127, %v1141
      %v1164 = vmul.f32 %v1128, %v1141
      %v1165 = vmul.f32 %v1129, %v1141
      %v1166 = vmul.f32 %v1130, %v1141
      %v1167 = vmul.f32 %v1131, %v1141
      %v1168 = vmul.f32 %v1132, %v1141
      %v1169 = vmul.f32 %v1133, %v1141
      %v1170 = vmul.f32 %v1134, %v1141
      %v1171 = vmul.f32 %v1135, %v1141
      %v1172 = vmul.f32 %v1136, %v1141
      %v1173 = vmul.f32 %v1137, %v1141
      %v1174 = vmul.f32 %v1138, %v1141
      %v1175 = vsel %vm916, %v1143, 0.0
      %1176 = vadd.xlane.f32.xlu0 %v1175
      %v1177 = vpop.xlane.xlu0 %1176
      %v1178 = vsel %vm916, %v1144, 0.0
      %1179 = vadd.xlane.f32.xlu0 %v1178
      %v1180 = vpop.xlane.xlu0 %1179
      %v1181 = vsel %vm916, %v1145, 0.0
      %1182 = vadd.xlane.f32.xlu0 %v1181
      %v1183 = vpop.xlane.xlu0 %1182
      %v1184 = vsel %vm916, %v1146, 0.0
      %1185 = vadd.xlane.f32.xlu0 %v1184
      %v1186 = vpop.xlane.xlu0 %1185
      %v1187 = vsel %vm916, %v1147, 0.0
      %1188 = vadd.xlane.f32.xlu0 %v1187
      %v1189 = vpop.xlane.xlu0 %1188
      %v1190 = vsel %vm916, %v1148, 0.0
      %1191 = vadd.xlane.f32.xlu0 %v1190
      %v1192 = vpop.xlane.xlu0 %1191
      %v1193 = vsel %vm916, %v1149, 0.0
      %1194 = vadd.xlane.f32.xlu0 %v1193
      %v1195 = vpop.xlane.xlu0 %1194
      %v1196 = vsel %vm916, %v1150, 0.0
      %1197 = vadd.xlane.f32.xlu0 %v1196
      %v1198 = vpop.xlane.xlu0 %1197
      %v1199 = vsel %vm916, %v1151, 0.0
      %1200 = vadd.xlane.f32.xlu0 %v1199
      %v1201 = vpop.xlane.xlu0 %1200
      %v1202 = vsel %vm916, %v1152, 0.0
      %1203 = vadd.xlane.f32.xlu0 %v1202
      %v1204 = vpop.xlane.xlu0 %1203
      %v1205 = vsel %vm916, %v1153, 0.0
      %1206 = vadd.xlane.f32.xlu0 %v1205
      %v1207 = vpop.xlane.xlu0 %1206
      %v1208 = vsel %vm916, %v1154, 0.0
      %1209 = vadd.xlane.f32.xlu0 %v1208
      %v1210 = vpop.xlane.xlu0 %1209
      %v1211 = vsel %vm916, %v1155, 0.0
      %1212 = vadd.xlane.f32.xlu0 %v1211
      %v1213 = vpop.xlane.xlu0 %1212
      %v1214 = vsel %vm916, %v1156, 0.0
      %1215 = vadd.xlane.f32.xlu0 %v1214
      %v1216 = vpop.xlane.xlu0 %1215
      %v1217 = vsel %vm916, %v1157, 0.0
      %1218 = vadd.xlane.f32.xlu0 %v1217
      %v1219 = vpop.xlane.xlu0 %1218
      %v1220 = vsel %vm916, %v1158, 0.0
      %1221 = vadd.xlane.f32.xlu0 %v1220
      %v1222 = vpop.xlane.xlu0 %1221
      %v1223 = vsel %vm916, %v1159, 0.0
      %1224 = vadd.xlane.f32.xlu0 %v1223
      %v1225 = vpop.xlane.xlu0 %1224
      %v1226 = vsel %vm916, %v1160, 0.0
      %1227 = vadd.xlane.f32.xlu0 %v1226
      %v1228 = vpop.xlane.xlu0 %1227
      %v1229 = vsel %vm916, %v1161, 0.0
      %1230 = vadd.xlane.f32.xlu0 %v1229
      %v1231 = vpop.xlane.xlu0 %1230
      %v1232 = vsel %vm916, %v1162, 0.0
      %1233 = vadd.xlane.f32.xlu0 %v1232
      %v1234 = vpop.xlane.xlu0 %1233
      %v1235 = vsel %vm916, %v1163, 0.0
      %1236 = vadd.xlane.f32.xlu0 %v1235
      %v1237 = vpop.xlane.xlu0 %1236
      %v1238 = vsel %vm916, %v1164, 0.0
      %1239 = vadd.xlane.f32.xlu0 %v1238
      %v1240 = vpop.xlane.xlu0 %1239
      %v1241 = vsel %vm916, %v1165, 0.0
      %1242 = vadd.xlane.f32.xlu0 %v1241
      %v1243 = vpop.xlane.xlu0 %1242
      %v1244 = vsel %vm916, %v1166, 0.0
      %1245 = vadd.xlane.f32.xlu0 %v1244
      %v1246 = vpop.xlane.xlu0 %1245
      %v1247 = vsel %vm916, %v1167, 0.0
      %1248 = vadd.xlane.f32.xlu0 %v1247
      %v1249 = vpop.xlane.xlu0 %1248
      %v1250 = vsel %vm916, %v1168, 0.0
      %1251 = vadd.xlane.f32.xlu0 %v1250
      %v1252 = vpop.xlane.xlu0 %1251
      %v1253 = vsel %vm916, %v1169, 0.0
      %1254 = vadd.xlane.f32.xlu0 %v1253
      %v1255 = vpop.xlane.xlu0 %1254
      %v1256 = vsel %vm916, %v1170, 0.0
      %1257 = vadd.xlane.f32.xlu0 %v1256
      %v1258 = vpop.xlane.xlu0 %1257
      %v1259 = vsel %vm916, %v1171, 0.0
      %1260 = vadd.xlane.f32.xlu0 %v1259
      %v1261 = vpop.xlane.xlu0 %1260
      %v1262 = vsel %vm916, %v1172, 0.0
      %1263 = vadd.xlane.f32.xlu0 %v1262
      %v1264 = vpop.xlane.xlu0 %1263
      %v1265 = vsel %vm916, %v1173, 0.0
      %1266 = vadd.xlane.f32.xlu0 %v1265
      %v1267 = vpop.xlane.xlu0 %1266
      %v1268 = vsel %vm916, %v1174, 0.0
      %1269 = vadd.xlane.f32.xlu0 %v1268
      %v1270 = vpop.xlane.xlu0 %1269
      %v1271 = vld [vmem:[#allocation2] sm:$0x1]
      %v1273 = vperm.slane %v1271, 0
      %v1275 = vadd.f32 %v1177, %v1273
      %v1276 = vadd.f32 %v1180, %v1273
      %v1277 = vadd.f32 %v1183, %v1273
      %v1278 = vadd.f32 %v1186, %v1273
      %v1279 = vadd.f32 %v1189, %v1273
      %v1280 = vadd.f32 %v1192, %v1273
      %v1281 = vadd.f32 %v1195, %v1273
      %v1282 = vadd.f32 %v1198, %v1273
      %v1283 = vadd.f32 %v1201, %v1273
      %v1284 = vadd.f32 %v1204, %v1273
      %v1285 = vadd.f32 %v1207, %v1273
      %v1286 = vadd.f32 %v1210, %v1273
      %v1287 = vadd.f32 %v1213, %v1273
      %v1288 = vadd.f32 %v1216, %v1273
      %v1289 = vadd.f32 %v1219, %v1273
      %v1290 = vadd.f32 %v1222, %v1273
      %v1291 = vadd.f32 %v1225, %v1273
      %v1292 = vadd.f32 %v1228, %v1273
      %v1293 = vadd.f32 %v1231, %v1273
      %v1294 = vadd.f32 %v1234, %v1273
      %v1295 = vadd.f32 %v1237, %v1273
      %v1296 = vadd.f32 %v1240, %v1273
      %v1297 = vadd.f32 %v1243, %v1273
      %v1298 = vadd.f32 %v1246, %v1273
      %v1299 = vadd.f32 %v1249, %v1273
      %v1300 = vadd.f32 %v1252, %v1273
      %v1301 = vadd.f32 %v1255, %v1273
      %v1302 = vadd.f32 %v1258, %v1273
      %v1303 = vadd.f32 %v1261, %v1273
      %v1304 = vadd.f32 %v1264, %v1273
      %v1305 = vadd.f32 %v1267, %v1273
      %v1306 = vadd.f32 %v1270, %v1273
      %v1307 = vxor.u32 %v1275, 2147483648
      %v1308 = vxor.u32 %v1276, 2147483648
      %v1309 = vxor.u32 %v1277, 2147483648
      %v1310 = vxor.u32 %v1278, 2147483648
      %v1311 = vxor.u32 %v1279, 2147483648
      %v1312 = vxor.u32 %v1280, 2147483648
      %v1313 = vxor.u32 %v1281, 2147483648
      %v1314 = vxor.u32 %v1282, 2147483648
      %v1315 = vxor.u32 %v1283, 2147483648
      %v1316 = vxor.u32 %v1284, 2147483648
      %v1317 = vxor.u32 %v1285, 2147483648
      %v1318 = vxor.u32 %v1286, 2147483648
      %v1319 = vxor.u32 %v1287, 2147483648
      %v1320 = vxor.u32 %v1288, 2147483648
      %v1321 = vxor.u32 %v1289, 2147483648
      %v1322 = vxor.u32 %v1290, 2147483648
      %v1323 = vxor.u32 %v1291, 2147483648
      %v1324 = vxor.u32 %v1292, 2147483648
      %v1325 = vxor.u32 %v1293, 2147483648
      %v1326 = vxor.u32 %v1294, 2147483648
      %v1327 = vxor.u32 %v1295, 2147483648
      %v1328 = vxor.u32 %v1296, 2147483648
      %v1329 = vxor.u32 %v1297, 2147483648
      %v1330 = vxor.u32 %v1298, 2147483648
      %v1331 = vxor.u32 %v1299, 2147483648
      %v1332 = vxor.u32 %v1300, 2147483648
      %v1333 = vxor.u32 %v1301, 2147483648
      %v1334 = vxor.u32 %v1302, 2147483648
      %v1335 = vxor.u32 %v1303, 2147483648
      %v1336 = vxor.u32 %v1304, 2147483648
      %v1337 = vxor.u32 %v1305, 2147483648
      %v1338 = vxor.u32 %v1306, 2147483648
      %v1339 = vmul.f32 %v1307, 1.442695
      %v1340 = vpow.pop %v1339
      %v1341 = vmul.f32 %v1308, 1.442695
      %v1342 = vpow.pop %v1341
      %v1343 = vmul.f32 %v1309, 1.442695
      %v1344 = vpow.pop %v1343
      %v1345 = vmul.f32 %v1310, 1.442695
      %v1346 = vpow.pop %v1345
      %v1347 = vmul.f32 %v1311, 1.442695
      %v1348 = vpow.pop %v1347
      %v1349 = vmul.f32 %v1312, 1.442695
      %v1350 = vpow.pop %v1349
      %v1351 = vmul.f32 %v1313, 1.442695
      %v1352 = vpow.pop %v1351
      %v1353 = vmul.f32 %v1314, 1.442695
      %v1354 = vpow.pop %v1353
      %v1355 = vmul.f32 %v1315, 1.442695
      %v1356 = vpow.pop %v1355
      %v1357 = vmul.f32 %v1316, 1.442695
      %v1358 = vpow.pop %v1357
      %v1359 = vmul.f32 %v1317, 1.442695
      %v1360 = vpow.pop %v1359
      %v1361 = vmul.f32 %v1318, 1.442695
      %v1362 = vpow.pop %v1361
      %v1363 = vmul.f32 %v1319, 1.442695
      %v1364 = vpow.pop %v1363
      %v1365 = vmul.f32 %v1320, 1.442695
      %v1366 = vpow.pop %v1365
      %v1367 = vmul.f32 %v1321, 1.442695
      %v1368 = vpow.pop %v1367
      %v1369 = vmul.f32 %v1322, 1.442695
      %v1370 = vpow.pop %v1369
      %v1371 = vmul.f32 %v1323, 1.442695
      %v1372 = vpow.pop %v1371
      %v1373 = vmul.f32 %v1324, 1.442695
      %v1374 = vpow.pop %v1373
      %v1375 = vmul.f32 %v1325, 1.442695
      %v1376 = vpow.pop %v1375
      %v1377 = vmul.f32 %v1326, 1.442695
      %v1378 = vpow.pop %v1377
      %v1379 = vmul.f32 %v1327, 1.442695
      %v1380 = vpow.pop %v1379
      %v1381 = vmul.f32 %v1328, 1.442695
      %v1382 = vpow.pop %v1381
      %v1383 = vmul.f32 %v1329, 1.442695
      %v1384 = vpow.pop %v1383
      %v1385 = vmul.f32 %v1330, 1.442695
      %v1386 = vpow.pop %v1385
      %v1387 = vmul.f32 %v1331, 1.442695
      %v1388 = vpow.pop %v1387
      %v1389 = vmul.f32 %v1332, 1.442695
      %v1390 = vpow.pop %v1389
      %v1391 = vmul.f32 %v1333, 1.442695
      %v1392 = vpow.pop %v1391
      %v1393 = vmul.f32 %v1334, 1.442695
      %v1394 = vpow.pop %v1393
      %v1395 = vmul.f32 %v1335, 1.442695
      %v1396 = vpow.pop %v1395
      %v1397 = vmul.f32 %v1336, 1.442695
      %v1398 = vpow.pop %v1397
      %v1399 = vmul.f32 %v1337, 1.442695
      %v1400 = vpow.pop %v1399
      %v1401 = vmul.f32 %v1338, 1.442695
      %v1402 = vpow.pop %v1401
      %v1403 = vadd.f32 %v1340, 1.0
      %v1404 = vadd.f32 %v1342, 1.0
      %v1405 = vadd.f32 %v1344, 1.0
      %v1406 = vadd.f32 %v1346, 1.0
      %v1407 = vadd.f32 %v1348, 1.0
      %v1408 = vadd.f32 %v1350, 1.0
      %v1409 = vadd.f32 %v1352, 1.0
      %v1410 = vadd.f32 %v1354, 1.0
      %v1411 = vadd.f32 %v1356, 1.0
      %v1412 = vadd.f32 %v1358, 1.0
      %v1413 = vadd.f32 %v1360, 1.0
      %v1414 = vadd.f32 %v1362, 1.0
      %v1415 = vadd.f32 %v1364, 1.0
      %v1416 = vadd.f32 %v1366, 1.0
      %v1417 = vadd.f32 %v1368, 1.0
      %v1418 = vadd.f32 %v1370, 1.0
      %v1419 = vadd.f32 %v1372, 1.0
      %v1420 = vadd.f32 %v1374, 1.0
      %v1421 = vadd.f32 %v1376, 1.0
      %v1422 = vadd.f32 %v1378, 1.0
      %v1423 = vadd.f32 %v1380, 1.0
      %v1424 = vadd.f32 %v1382, 1.0
      %v1425 = vadd.f32 %v1384, 1.0
      %v1426 = vadd.f32 %v1386, 1.0
      %v1427 = vadd.f32 %v1388, 1.0
      %v1428 = vadd.f32 %v1390, 1.0
      %v1429 = vadd.f32 %v1392, 1.0
      %v1430 = vadd.f32 %v1394, 1.0
      %v1431 = vadd.f32 %v1396, 1.0
      %v1432 = vadd.f32 %v1398, 1.0
      %v1433 = vadd.f32 %v1400, 1.0
      %v1434 = vadd.f32 %v1402, 1.0
      %v1435 = vrcp.pop %v1403
      %v1436 = vmul.f32 %v1403, %v1435
      %v1437 = vsub.f32 1.0, %v1436
      %v1438 = vmul.f32 %v1435, %v1437
      %v1439 = vadd.f32 %v1435, %v1438
      %vm1440 = vweird.f32 %v1403
      %vm1441 = vweird.f32 %v1435
      %vm1442 = vmor %vm1440, %vm1441
      %v1443 = vsel %vm1442, %v1435, %v1439
      %v1444 = vand.u32 2147483647, %v1403
      %vm1445 = vcmp.eq.f32.partialorder %v1444, 8.507059e+37
      %v1446 = vand.u32 %v1403, 2147483648
      %v1447 = vor.u32 1.1754944e-38, %v1446
      %v1448 = vsel %vm1445, %v1447, %v1443
      %v1449 = vmul.f32 1.0, %v1448
      %v1450 = vrcp.pop %v1404
      %v1451 = vmul.f32 %v1404, %v1450
      %v1452 = vsub.f32 1.0, %v1451
      %v1453 = vmul.f32 %v1450, %v1452
      %v1454 = vadd.f32 %v1450, %v1453
      %vm1455 = vweird.f32 %v1404
      %vm1456 = vweird.f32 %v1450
      %vm1457 = vmor %vm1455, %vm1456
      %v1458 = vsel %vm1457, %v1450, %v1454
      %v1459 = vand.u32 2147483647, %v1404
      %vm1460 = vcmp.eq.f32.partialorder %v1459, 8.507059e+37
      %v1461 = vand.u32 %v1404, 2147483648
      %v1462 = vor.u32 1.1754944e-38, %v1461
      %v1463 = vsel %vm1460, %v1462, %v1458
      %v1464 = vmul.f32 1.0, %v1463
      %v1465 = vrcp.pop %v1405
      %v1466 = vmul.f32 %v1405, %v1465
      %v1467 = vsub.f32 1.0, %v1466
      %v1468 = vmul.f32 %v1465, %v1467
      %v1469 = vadd.f32 %v1465, %v1468
      %vm1470 = vweird.f32 %v1405
      %vm1471 = vweird.f32 %v1465
      %vm1472 = vmor %vm1470, %vm1471
      %v1473 = vsel %vm1472, %v1465, %v1469
      %v1474 = vand.u32 2147483647, %v1405
      %vm1475 = vcmp.eq.f32.partialorder %v1474, 8.507059e+37
      %v1476 = vand.u32 %v1405, 2147483648
      %v1477 = vor.u32 1.1754944e-38, %v1476
      %v1478 = vsel %vm1475, %v1477, %v1473
      %v1479 = vmul.f32 1.0, %v1478
      %v1480 = vrcp.pop %v1406
      %v1481 = vmul.f32 %v1406, %v1480
      %v1482 = vsub.f32 1.0, %v1481
      %v1483 = vmul.f32 %v1480, %v1482
      %v1484 = vadd.f32 %v1480, %v1483
      %vm1485 = vweird.f32 %v1406
      %vm1486 = vweird.f32 %v1480
      %vm1487 = vmor %vm1485, %vm1486
      %v1488 = vsel %vm1487, %v1480, %v1484
      %v1489 = vand.u32 2147483647, %v1406
      %vm1490 = vcmp.eq.f32.partialorder %v1489, 8.507059e+37
      %v1491 = vand.u32 %v1406, 2147483648
      %v1492 = vor.u32 1.1754944e-38, %v1491
      %v1493 = vsel %vm1490, %v1492, %v1488
      %v1494 = vmul.f32 1.0, %v1493
      %v1495 = vrcp.pop %v1407
      %v1496 = vmul.f32 %v1407, %v1495
      %v1497 = vsub.f32 1.0, %v1496
      %v1498 = vmul.f32 %v1495, %v1497
      %v1499 = vadd.f32 %v1495, %v1498
      %vm1500 = vweird.f32 %v1407
      %vm1501 = vweird.f32 %v1495
      %vm1502 = vmor %vm1500, %vm1501
      %v1503 = vsel %vm1502, %v1495, %v1499
      %v1504 = vand.u32 2147483647, %v1407
      %vm1505 = vcmp.eq.f32.partialorder %v1504, 8.507059e+37
      %v1506 = vand.u32 %v1407, 2147483648
      %v1507 = vor.u32 1.1754944e-38, %v1506
      %v1508 = vsel %vm1505, %v1507, %v1503
      %v1509 = vmul.f32 1.0, %v1508
      %v1510 = vrcp.pop %v1408
      %v1511 = vmul.f32 %v1408, %v1510
      %v1512 = vsub.f32 1.0, %v1511
      %v1513 = vmul.f32 %v1510, %v1512
      %v1514 = vadd.f32 %v1510, %v1513
      %vm1515 = vweird.f32 %v1408
      %vm1516 = vweird.f32 %v1510
      %vm1517 = vmor %vm1515, %vm1516
      %v1518 = vsel %vm1517, %v1510, %v1514
      %v1519 = vand.u32 2147483647, %v1408
      %vm1520 = vcmp.eq.f32.partialorder %v1519, 8.507059e+37
      %v1521 = vand.u32 %v1408, 2147483648
      %v1522 = vor.u32 1.1754944e-38, %v1521
      %v1523 = vsel %vm1520, %v1522, %v1518
      %v1524 = vmul.f32 1.0, %v1523
      %v1525 = vrcp.pop %v1409
      %v1526 = vmul.f32 %v1409, %v1525
      %v1527 = vsub.f32 1.0, %v1526
      %v1528 = vmul.f32 %v1525, %v1527
      %v1529 = vadd.f32 %v1525, %v1528
      %vm1530 = vweird.f32 %v1409
      %vm1531 = vweird.f32 %v1525
      %vm1532 = vmor %vm1530, %vm1531
      %v1533 = vsel %vm1532, %v1525, %v1529
      %v1534 = vand.u32 2147483647, %v1409
      %vm1535 = vcmp.eq.f32.partialorder %v1534, 8.507059e+37
      %v1536 = vand.u32 %v1409, 2147483648
      %v1537 = vor.u32 1.1754944e-38, %v1536
      %v1538 = vsel %vm1535, %v1537, %v1533
      %v1539 = vmul.f32 1.0, %v1538
      %v1540 = vrcp.pop %v1410
      %v1541 = vmul.f32 %v1410, %v1540
      %v1542 = vsub.f32 1.0, %v1541
      %v1543 = vmul.f32 %v1540, %v1542
      %v1544 = vadd.f32 %v1540, %v1543
      %vm1545 = vweird.f32 %v1410
      %vm1546 = vweird.f32 %v1540
      %vm1547 = vmor %vm1545, %vm1546
      %v1548 = vsel %vm1547, %v1540, %v1544
      %v1549 = vand.u32 2147483647, %v1410
      %vm1550 = vcmp.eq.f32.partialorder %v1549, 8.507059e+37
      %v1551 = vand.u32 %v1410, 2147483648
      %v1552 = vor.u32 1.1754944e-38, %v1551
      %v1553 = vsel %vm1550, %v1552, %v1548
      %v1554 = vmul.f32 1.0, %v1553
      %v1555 = vrcp.pop %v1411
      %v1556 = vmul.f32 %v1411, %v1555
      %v1557 = vsub.f32 1.0, %v1556
      %v1558 = vmul.f32 %v1555, %v1557
      %v1559 = vadd.f32 %v1555, %v1558
      %vm1560 = vweird.f32 %v1411
      %vm1561 = vweird.f32 %v1555
      %vm1562 = vmor %vm1560, %vm1561
      %v1563 = vsel %vm1562, %v1555, %v1559
      %v1564 = vand.u32 2147483647, %v1411
      %vm1565 = vcmp.eq.f32.partialorder %v1564, 8.507059e+37
      %v1566 = vand.u32 %v1411, 2147483648
      %v1567 = vor.u32 1.1754944e-38, %v1566
      %v1568 = vsel %vm1565, %v1567, %v1563
      %v1569 = vmul.f32 1.0, %v1568
      %v1570 = vrcp.pop %v1412
      %v1571 = vmul.f32 %v1412, %v1570
      %v1572 = vsub.f32 1.0, %v1571
      %v1573 = vmul.f32 %v1570, %v1572
      %v1574 = vadd.f32 %v1570, %v1573
      %vm1575 = vweird.f32 %v1412
      %vm1576 = vweird.f32 %v1570
      %vm1577 = vmor %vm1575, %vm1576
      %v1578 = vsel %vm1577, %v1570, %v1574
      %v1579 = vand.u32 2147483647, %v1412
      %vm1580 = vcmp.eq.f32.partialorder %v1579, 8.507059e+37
      %v1581 = vand.u32 %v1412, 2147483648
      %v1582 = vor.u32 1.1754944e-38, %v1581
      %v1583 = vsel %vm1580, %v1582, %v1578
      %v1584 = vmul.f32 1.0, %v1583
      %v1585 = vrcp.pop %v1413
      %v1586 = vmul.f32 %v1413, %v1585
      %v1587 = vsub.f32 1.0, %v1586
      %v1588 = vmul.f32 %v1585, %v1587
      %v1589 = vadd.f32 %v1585, %v1588
      %vm1590 = vweird.f32 %v1413
      %vm1591 = vweird.f32 %v1585
      %vm1592 = vmor %vm1590, %vm1591
      %v1593 = vsel %vm1592, %v1585, %v1589
      %v1594 = vand.u32 2147483647, %v1413
      %vm1595 = vcmp.eq.f32.partialorder %v1594, 8.507059e+37
      %v1596 = vand.u32 %v1413, 2147483648
      %v1597 = vor.u32 1.1754944e-38, %v1596
      %v1598 = vsel %vm1595, %v1597, %v1593
      %v1599 = vmul.f32 1.0, %v1598
      %v1600 = vrcp.pop %v1414
      %v1601 = vmul.f32 %v1414, %v1600
      %v1602 = vsub.f32 1.0, %v1601
      %v1603 = vmul.f32 %v1600, %v1602
      %v1604 = vadd.f32 %v1600, %v1603
      %vm1605 = vweird.f32 %v1414
      %vm1606 = vweird.f32 %v1600
      %vm1607 = vmor %vm1605, %vm1606
      %v1608 = vsel %vm1607, %v1600, %v1604
      %v1609 = vand.u32 2147483647, %v1414
      %vm1610 = vcmp.eq.f32.partialorder %v1609, 8.507059e+37
      %v1611 = vand.u32 %v1414, 2147483648
      %v1612 = vor.u32 1.1754944e-38, %v1611
      %v1613 = vsel %vm1610, %v1612, %v1608
      %v1614 = vmul.f32 1.0, %v1613
      %v1615 = vrcp.pop %v1415
      %v1616 = vmul.f32 %v1415, %v1615
      %v1617 = vsub.f32 1.0, %v1616
      %v1618 = vmul.f32 %v1615, %v1617
      %v1619 = vadd.f32 %v1615, %v1618
      %vm1620 = vweird.f32 %v1415
      %vm1621 = vweird.f32 %v1615
      %vm1622 = vmor %vm1620, %vm1621
      %v1623 = vsel %vm1622, %v1615, %v1619
      %v1624 = vand.u32 2147483647, %v1415
      %vm1625 = vcmp.eq.f32.partialorder %v1624, 8.507059e+37
      %v1626 = vand.u32 %v1415, 2147483648
      %v1627 = vor.u32 1.1754944e-38, %v1626
      %v1628 = vsel %vm1625, %v1627, %v1623
      %v1629 = vmul.f32 1.0, %v1628
      %v1630 = vrcp.pop %v1416
      %v1631 = vmul.f32 %v1416, %v1630
      %v1632 = vsub.f32 1.0, %v1631
      %v1633 = vmul.f32 %v1630, %v1632
      %v1634 = vadd.f32 %v1630, %v1633
      %vm1635 = vweird.f32 %v1416
      %vm1636 = vweird.f32 %v1630
      %vm1637 = vmor %vm1635, %vm1636
      %v1638 = vsel %vm1637, %v1630, %v1634
      %v1639 = vand.u32 2147483647, %v1416
      %vm1640 = vcmp.eq.f32.partialorder %v1639, 8.507059e+37
      %v1641 = vand.u32 %v1416, 2147483648
      %v1642 = vor.u32 1.1754944e-38, %v1641
      %v1643 = vsel %vm1640, %v1642, %v1638
      %v1644 = vmul.f32 1.0, %v1643
      %v1645 = vrcp.pop %v1417
      %v1646 = vmul.f32 %v1417, %v1645
      %v1647 = vsub.f32 1.0, %v1646
      %v1648 = vmul.f32 %v1645, %v1647
      %v1649 = vadd.f32 %v1645, %v1648
      %vm1650 = vweird.f32 %v1417
      %vm1651 = vweird.f32 %v1645
      %vm1652 = vmor %vm1650, %vm1651
      %v1653 = vsel %vm1652, %v1645, %v1649
      %v1654 = vand.u32 2147483647, %v1417
      %vm1655 = vcmp.eq.f32.partialorder %v1654, 8.507059e+37
      %v1656 = vand.u32 %v1417, 2147483648
      %v1657 = vor.u32 1.1754944e-38, %v1656
      %v1658 = vsel %vm1655, %v1657, %v1653
      %v1659 = vmul.f32 1.0, %v1658
      %v1660 = vrcp.pop %v1418
      %v1661 = vmul.f32 %v1418, %v1660
      %v1662 = vsub.f32 1.0, %v1661
      %v1663 = vmul.f32 %v1660, %v1662
      %v1664 = vadd.f32 %v1660, %v1663
      %vm1665 = vweird.f32 %v1418
      %vm1666 = vweird.f32 %v1660
      %vm1667 = vmor %vm1665, %vm1666
      %v1668 = vsel %vm1667, %v1660, %v1664
      %v1669 = vand.u32 2147483647, %v1418
      %vm1670 = vcmp.eq.f32.partialorder %v1669, 8.507059e+37
      %v1671 = vand.u32 %v1418, 2147483648
      %v1672 = vor.u32 1.1754944e-38, %v1671
      %v1673 = vsel %vm1670, %v1672, %v1668
      %v1674 = vmul.f32 1.0, %v1673
      %v1675 = vrcp.pop %v1419
      %v1676 = vmul.f32 %v1419, %v1675
      %v1677 = vsub.f32 1.0, %v1676
      %v1678 = vmul.f32 %v1675, %v1677
      %v1679 = vadd.f32 %v1675, %v1678
      %vm1680 = vweird.f32 %v1419
      %vm1681 = vweird.f32 %v1675
      %vm1682 = vmor %vm1680, %vm1681
      %v1683 = vsel %vm1682, %v1675, %v1679
      %v1684 = vand.u32 2147483647, %v1419
      %vm1685 = vcmp.eq.f32.partialorder %v1684, 8.507059e+37
      %v1686 = vand.u32 %v1419, 2147483648
      %v1687 = vor.u32 1.1754944e-38, %v1686
      %v1688 = vsel %vm1685, %v1687, %v1683
      %v1689 = vmul.f32 1.0, %v1688
      %v1690 = vrcp.pop %v1420
      %v1691 = vmul.f32 %v1420, %v1690
      %v1692 = vsub.f32 1.0, %v1691
      %v1693 = vmul.f32 %v1690, %v1692
      %v1694 = vadd.f32 %v1690, %v1693
      %vm1695 = vweird.f32 %v1420
      %vm1696 = vweird.f32 %v1690
      %vm1697 = vmor %vm1695, %vm1696
      %v1698 = vsel %vm1697, %v1690, %v1694
      %v1699 = vand.u32 2147483647, %v1420
      %vm1700 = vcmp.eq.f32.partialorder %v1699, 8.507059e+37
      %v1701 = vand.u32 %v1420, 2147483648
      %v1702 = vor.u32 1.1754944e-38, %v1701
      %v1703 = vsel %vm1700, %v1702, %v1698
      %v1704 = vmul.f32 1.0, %v1703
      %v1705 = vrcp.pop %v1421
      %v1706 = vmul.f32 %v1421, %v1705
      %v1707 = vsub.f32 1.0, %v1706
      %v1708 = vmul.f32 %v1705, %v1707
      %v1709 = vadd.f32 %v1705, %v1708
      %vm1710 = vweird.f32 %v1421
      %vm1711 = vweird.f32 %v1705
      %vm1712 = vmor %vm1710, %vm1711
      %v1713 = vsel %vm1712, %v1705, %v1709
      %v1714 = vand.u32 2147483647, %v1421
      %vm1715 = vcmp.eq.f32.partialorder %v1714, 8.507059e+37
      %v1716 = vand.u32 %v1421, 2147483648
      %v1717 = vor.u32 1.1754944e-38, %v1716
      %v1718 = vsel %vm1715, %v1717, %v1713
      %v1719 = vmul.f32 1.0, %v1718
      %v1720 = vrcp.pop %v1422
      %v1721 = vmul.f32 %v1422, %v1720
      %v1722 = vsub.f32 1.0, %v1721
      %v1723 = vmul.f32 %v1720, %v1722
      %v1724 = vadd.f32 %v1720, %v1723
      %vm1725 = vweird.f32 %v1422
      %vm1726 = vweird.f32 %v1720
      %vm1727 = vmor %vm1725, %vm1726
      %v1728 = vsel %vm1727, %v1720, %v1724
      %v1729 = vand.u32 2147483647, %v1422
      %vm1730 = vcmp.eq.f32.partialorder %v1729, 8.507059e+37
      %v1731 = vand.u32 %v1422, 2147483648
      %v1732 = vor.u32 1.1754944e-38, %v1731
      %v1733 = vsel %vm1730, %v1732, %v1728
      %v1734 = vmul.f32 1.0, %v1733
      %v1735 = vrcp.pop %v1423
      %v1736 = vmul.f32 %v1423, %v1735
      %v1737 = vsub.f32 1.0, %v1736
      %v1738 = vmul.f32 %v1735, %v1737
      %v1739 = vadd.f32 %v1735, %v1738
      %vm1740 = vweird.f32 %v1423
      %vm1741 = vweird.f32 %v1735
      %vm1742 = vmor %vm1740, %vm1741
      %v1743 = vsel %vm1742, %v1735, %v1739
      %v1744 = vand.u32 2147483647, %v1423
      %vm1745 = vcmp.eq.f32.partialorder %v1744, 8.507059e+37
      %v1746 = vand.u32 %v1423, 2147483648
      %v1747 = vor.u32 1.1754944e-38, %v1746
      %v1748 = vsel %vm1745, %v1747, %v1743
      %v1749 = vmul.f32 1.0, %v1748
      %v1750 = vrcp.pop %v1424
      %v1751 = vmul.f32 %v1424, %v1750
      %v1752 = vsub.f32 1.0, %v1751
      %v1753 = vmul.f32 %v1750, %v1752
      %v1754 = vadd.f32 %v1750, %v1753
      %vm1755 = vweird.f32 %v1424
      %vm1756 = vweird.f32 %v1750
      %vm1757 = vmor %vm1755, %vm1756
      %v1758 = vsel %vm1757, %v1750, %v1754
      %v1759 = vand.u32 2147483647, %v1424
      %vm1760 = vcmp.eq.f32.partialorder %v1759, 8.507059e+37
      %v1761 = vand.u32 %v1424, 2147483648
      %v1762 = vor.u32 1.1754944e-38, %v1761
      %v1763 = vsel %vm1760, %v1762, %v1758
      %v1764 = vmul.f32 1.0, %v1763
      %v1765 = vrcp.pop %v1425
      %v1766 = vmul.f32 %v1425, %v1765
      %v1767 = vsub.f32 1.0, %v1766
      %v1768 = vmul.f32 %v1765, %v1767
      %v1769 = vadd.f32 %v1765, %v1768
      %vm1770 = vweird.f32 %v1425
      %vm1771 = vweird.f32 %v1765
      %vm1772 = vmor %vm1770, %vm1771
      %v1773 = vsel %vm1772, %v1765, %v1769
      %v1774 = vand.u32 2147483647, %v1425
      %vm1775 = vcmp.eq.f32.partialorder %v1774, 8.507059e+37
      %v1776 = vand.u32 %v1425, 2147483648
      %v1777 = vor.u32 1.1754944e-38, %v1776
      %v1778 = vsel %vm1775, %v1777, %v1773
      %v1779 = vmul.f32 1.0, %v1778
      %v1780 = vrcp.pop %v1426
      %v1781 = vmul.f32 %v1426, %v1780
      %v1782 = vsub.f32 1.0, %v1781
      %v1783 = vmul.f32 %v1780, %v1782
      %v1784 = vadd.f32 %v1780, %v1783
      %vm1785 = vweird.f32 %v1426
      %vm1786 = vweird.f32 %v1780
      %vm1787 = vmor %vm1785, %vm1786
      %v1788 = vsel %vm1787, %v1780, %v1784
      %v1789 = vand.u32 2147483647, %v1426
      %vm1790 = vcmp.eq.f32.partialorder %v1789, 8.507059e+37
      %v1791 = vand.u32 %v1426, 2147483648
      %v1792 = vor.u32 1.1754944e-38, %v1791
      %v1793 = vsel %vm1790, %v1792, %v1788
      %v1794 = vmul.f32 1.0, %v1793
      %v1795 = vrcp.pop %v1427
      %v1796 = vmul.f32 %v1427, %v1795
      %v1797 = vsub.f32 1.0, %v1796
      %v1798 = vmul.f32 %v1795, %v1797
      %v1799 = vadd.f32 %v1795, %v1798
      %vm1800 = vweird.f32 %v1427
      %vm1801 = vweird.f32 %v1795
      %vm1802 = vmor %vm1800, %vm1801
      %v1803 = vsel %vm1802, %v1795, %v1799
      %v1804 = vand.u32 2147483647, %v1427
      %vm1805 = vcmp.eq.f32.partialorder %v1804, 8.507059e+37
      %v1806 = vand.u32 %v1427, 2147483648
      %v1807 = vor.u32 1.1754944e-38, %v1806
      %v1808 = vsel %vm1805, %v1807, %v1803
      %v1809 = vmul.f32 1.0, %v1808
      %v1810 = vrcp.pop %v1428
      %v1811 = vmul.f32 %v1428, %v1810
      %v1812 = vsub.f32 1.0, %v1811
      %v1813 = vmul.f32 %v1810, %v1812
      %v1814 = vadd.f32 %v1810, %v1813
      %vm1815 = vweird.f32 %v1428
      %vm1816 = vweird.f32 %v1810
      %vm1817 = vmor %vm1815, %vm1816
      %v1818 = vsel %vm1817, %v1810, %v1814
      %v1819 = vand.u32 2147483647, %v1428
      %vm1820 = vcmp.eq.f32.partialorder %v1819, 8.507059e+37
      %v1821 = vand.u32 %v1428, 2147483648
      %v1822 = vor.u32 1.1754944e-38, %v1821
      %v1823 = vsel %vm1820, %v1822, %v1818
      %v1824 = vmul.f32 1.0, %v1823
      %v1825 = vrcp.pop %v1429
      %v1826 = vmul.f32 %v1429, %v1825
      %v1827 = vsub.f32 1.0, %v1826
      %v1828 = vmul.f32 %v1825, %v1827
      %v1829 = vadd.f32 %v1825, %v1828
      %vm1830 = vweird.f32 %v1429
      %vm1831 = vweird.f32 %v1825
      %vm1832 = vmor %vm1830, %vm1831
      %v1833 = vsel %vm1832, %v1825, %v1829
      %v1834 = vand.u32 2147483647, %v1429
      %vm1835 = vcmp.eq.f32.partialorder %v1834, 8.507059e+37
      %v1836 = vand.u32 %v1429, 2147483648
      %v1837 = vor.u32 1.1754944e-38, %v1836
      %v1838 = vsel %vm1835, %v1837, %v1833
      %v1839 = vmul.f32 1.0, %v1838
      %v1840 = vrcp.pop %v1430
      %v1841 = vmul.f32 %v1430, %v1840
      %v1842 = vsub.f32 1.0, %v1841
      %v1843 = vmul.f32 %v1840, %v1842
      %v1844 = vadd.f32 %v1840, %v1843
      %vm1845 = vweird.f32 %v1430
      %vm1846 = vweird.f32 %v1840
      %vm1847 = vmor %vm1845, %vm1846
      %v1848 = vsel %vm1847, %v1840, %v1844
      %v1849 = vand.u32 2147483647, %v1430
      %vm1850 = vcmp.eq.f32.partialorder %v1849, 8.507059e+37
      %v1851 = vand.u32 %v1430, 2147483648
      %v1852 = vor.u32 1.1754944e-38, %v1851
      %v1853 = vsel %vm1850, %v1852, %v1848
      %v1854 = vmul.f32 1.0, %v1853
      %v1855 = vrcp.pop %v1431
      %v1856 = vmul.f32 %v1431, %v1855
      %v1857 = vsub.f32 1.0, %v1856
      %v1858 = vmul.f32 %v1855, %v1857
      %v1859 = vadd.f32 %v1855, %v1858
      %vm1860 = vweird.f32 %v1431
      %vm1861 = vweird.f32 %v1855
      %vm1862 = vmor %vm1860, %vm1861
      %v1863 = vsel %vm1862, %v1855, %v1859
      %v1864 = vand.u32 2147483647, %v1431
      %vm1865 = vcmp.eq.f32.partialorder %v1864, 8.507059e+37
      %v1866 = vand.u32 %v1431, 2147483648
      %v1867 = vor.u32 1.1754944e-38, %v1866
      %v1868 = vsel %vm1865, %v1867, %v1863
      %v1869 = vmul.f32 1.0, %v1868
      %v1870 = vrcp.pop %v1432
      %v1871 = vmul.f32 %v1432, %v1870
      %v1872 = vsub.f32 1.0, %v1871
      %v1873 = vmul.f32 %v1870, %v1872
      %v1874 = vadd.f32 %v1870, %v1873
      %vm1875 = vweird.f32 %v1432
      %vm1876 = vweird.f32 %v1870
      %vm1877 = vmor %vm1875, %vm1876
      %v1878 = vsel %vm1877, %v1870, %v1874
      %v1879 = vand.u32 2147483647, %v1432
      %vm1880 = vcmp.eq.f32.partialorder %v1879, 8.507059e+37
      %v1881 = vand.u32 %v1432, 2147483648
      %v1882 = vor.u32 1.1754944e-38, %v1881
      %v1883 = vsel %vm1880, %v1882, %v1878
      %v1884 = vmul.f32 1.0, %v1883
      %v1885 = vrcp.pop %v1433
      %v1886 = vmul.f32 %v1433, %v1885
      %v1887 = vsub.f32 1.0, %v1886
      %v1888 = vmul.f32 %v1885, %v1887
      %v1889 = vadd.f32 %v1885, %v1888
      %vm1890 = vweird.f32 %v1433
      %vm1891 = vweird.f32 %v1885
      %vm1892 = vmor %vm1890, %vm1891
      %v1893 = vsel %vm1892, %v1885, %v1889
      %v1894 = vand.u32 2147483647, %v1433
      %vm1895 = vcmp.eq.f32.partialorder %v1894, 8.507059e+37
      %v1896 = vand.u32 %v1433, 2147483648
      %v1897 = vor.u32 1.1754944e-38, %v1896
      %v1898 = vsel %vm1895, %v1897, %v1893
      %v1899 = vmul.f32 1.0, %v1898
      %v1900 = vrcp.pop %v1434
      %v1901 = vmul.f32 %v1434, %v1900
      %v1902 = vsub.f32 1.0, %v1901
      %v1903 = vmul.f32 %v1900, %v1902
      %v1904 = vadd.f32 %v1900, %v1903
      %vm1905 = vweird.f32 %v1434
      %vm1906 = vweird.f32 %v1900
      %vm1907 = vmor %vm1905, %vm1906
      %v1908 = vsel %vm1907, %v1900, %v1904
      %v1909 = vand.u32 2147483647, %v1434
      %vm1910 = vcmp.eq.f32.partialorder %v1909, 8.507059e+37
      %v1911 = vand.u32 %v1434, 2147483648
      %v1912 = vor.u32 1.1754944e-38, %v1911
      %v1913 = vsel %vm1910, %v1912, %v1908
      %v1914 = vmul.f32 1.0, %v1913
      %1916 = vset.pattern.permute.xlu0 0
      %1917 = vperm.xlu0 %1916, %v1449
      %v1918 = vpop.permute.xlu0 %1917
      %1921 = vset.pattern.permute.xlu0 0
      %1922 = vperm.xlu0 %1921, %v1464
      %v1923 = vpop.permute.xlu0 %1922
      %1926 = vset.pattern.permute.xlu0 0
      %1927 = vperm.xlu0 %1926, %v1479
      %v1928 = vpop.permute.xlu0 %1927
      %1931 = vset.pattern.permute.xlu0 0
      %1932 = vperm.xlu0 %1931, %v1494
      %v1933 = vpop.permute.xlu0 %1932
      %1936 = vset.pattern.permute.xlu0 0
      %1937 = vperm.xlu0 %1936, %v1509
      %v1938 = vpop.permute.xlu0 %1937
      %1941 = vset.pattern.permute.xlu0 0
      %1942 = vperm.xlu0 %1941, %v1524
      %v1943 = vpop.permute.xlu0 %1942
      %1946 = vset.pattern.permute.xlu0 0
      %1947 = vperm.xlu0 %1946, %v1539
      %v1948 = vpop.permute.xlu0 %1947
      %1951 = vset.pattern.permute.xlu0 0
      %1952 = vperm.xlu0 %1951, %v1554
      %v1953 = vpop.permute.xlu0 %1952
      %1956 = vset.pattern.permute.xlu0 0
      %1957 = vperm.xlu0 %1956, %v1569
      %v1958 = vpop.permute.xlu0 %1957
      %1961 = vset.pattern.permute.xlu0 0
      %1962 = vperm.xlu0 %1961, %v1584
      %v1963 = vpop.permute.xlu0 %1962
      %1966 = vset.pattern.permute.xlu0 0
      %1967 = vperm.xlu0 %1966, %v1599
      %v1968 = vpop.permute.xlu0 %1967
      %1971 = vset.pattern.permute.xlu0 0
      %1972 = vperm.xlu0 %1971, %v1614
      %v1973 = vpop.permute.xlu0 %1972
      %1976 = vset.pattern.permute.xlu0 0
      %1977 = vperm.xlu0 %1976, %v1629
      %v1978 = vpop.permute.xlu0 %1977
      %1981 = vset.pattern.permute.xlu0 0
      %1982 = vperm.xlu0 %1981, %v1644
      %v1983 = vpop.permute.xlu0 %1982
      %1986 = vset.pattern.permute.xlu0 0
      %1987 = vperm.xlu0 %1986, %v1659
      %v1988 = vpop.permute.xlu0 %1987
      %1991 = vset.pattern.permute.xlu0 0
      %1992 = vperm.xlu0 %1991, %v1674
      %v1993 = vpop.permute.xlu0 %1992
      %1996 = vset.pattern.permute.xlu0 0
      %1997 = vperm.xlu0 %1996, %v1689
      %v1998 = vpop.permute.xlu0 %1997
      %2001 = vset.pattern.permute.xlu0 0
      %2002 = vperm.xlu0 %2001, %v1704
      %v2003 = vpop.permute.xlu0 %2002
      %2006 = vset.pattern.permute.xlu0 0
      %2007 = vperm.xlu0 %2006, %v1719
      %v2008 = vpop.permute.xlu0 %2007
      %2011 = vset.pattern.permute.xlu0 0
      %2012 = vperm.xlu0 %2011, %v1734
      %v2013 = vpop.permute.xlu0 %2012
      %2016 = vset.pattern.permute.xlu0 0
      %2017 = vperm.xlu0 %2016, %v1749
      %v2018 = vpop.permute.xlu0 %2017
      %2021 = vset.pattern.permute.xlu0 0
      %2022 = vperm.xlu0 %2021, %v1764
      %v2023 = vpop.permute.xlu0 %2022
      %2026 = vset.pattern.permute.xlu0 0
      %2027 = vperm.xlu0 %2026, %v1779
      %v2028 = vpop.permute.xlu0 %2027
      %2031 = vset.pattern.permute.xlu0 0
      %2032 = vperm.xlu0 %2031, %v1794
      %v2033 = vpop.permute.xlu0 %2032
      %2036 = vset.pattern.permute.xlu0 0
      %2037 = vperm.xlu0 %2036, %v1809
      %v2038 = vpop.permute.xlu0 %2037
      %2041 = vset.pattern.permute.xlu0 0
      %2042 = vperm.xlu0 %2041, %v1824
      %v2043 = vpop.permute.xlu0 %2042
      %2046 = vset.pattern.permute.xlu0 0
      %2047 = vperm.xlu0 %2046, %v1839
      %v2048 = vpop.permute.xlu0 %2047
      %2051 = vset.pattern.permute.xlu0 0
      %2052 = vperm.xlu0 %2051, %v1854
      %v2053 = vpop.permute.xlu0 %2052
      %2056 = vset.pattern.permute.xlu0 0
      %2057 = vperm.xlu0 %2056, %v1869
      %v2058 = vpop.permute.xlu0 %2057
      %2061 = vset.pattern.permute.xlu0 0
      %2062 = vperm.xlu0 %2061, %v1884
      %v2063 = vpop.permute.xlu0 %2062
      %2066 = vset.pattern.permute.xlu0 0
      %2067 = vperm.xlu0 %2066, %v1899
      %v2068 = vpop.permute.xlu0 %2067
      %2071 = vset.pattern.permute.xlu0 0
      %2072 = vperm.xlu0 %2071, %v1914
      %v2073 = vpop.permute.xlu0 %2072
      %v2075 = vmul.f32 %v660, %v1918
      %v2076 = vmul.f32 %v661, %v1923
      %v2077 = vmul.f32 %v662, %v1928
      %v2078 = vmul.f32 %v663, %v1933
      %v2079 = vmul.f32 %v664, %v1938
      %v2080 = vmul.f32 %v665, %v1943
      %v2081 = vmul.f32 %v666, %v1948
      %v2082 = vmul.f32 %v667, %v1953
      %v2083 = vmul.f32 %v668, %v1958
      %v2084 = vmul.f32 %v669, %v1963
      %v2085 = vmul.f32 %v670, %v1968
      %v2086 = vmul.f32 %v671, %v1973
      %v2087 = vmul.f32 %v672, %v1978
      %v2088 = vmul.f32 %v673, %v1983
      %v2089 = vmul.f32 %v674, %v1988
      %v2090 = vmul.f32 %v675, %v1993
      %v2091 = vmul.f32 %v676, %v1998
      %v2092 = vmul.f32 %v677, %v2003
      %v2093 = vmul.f32 %v678, %v2008
      %v2094 = vmul.f32 %v679, %v2013
      %v2095 = vmul.f32 %v680, %v2018
      %v2096 = vmul.f32 %v681, %v2023
      %v2097 = vmul.f32 %v682, %v2028
      %v2098 = vmul.f32 %v683, %v2033
      %v2099 = vmul.f32 %v684, %v2038
      %v2100 = vmul.f32 %v685, %v2043
      %v2101 = vmul.f32 %v686, %v2048
      %v2102 = vmul.f32 %v687, %v2053
      %v2103 = vmul.f32 %v688, %v2058
      %v2104 = vmul.f32 %v689, %v2063
      %v2105 = vmul.f32 %v690, %v2068
      %v2106 = vmul.f32 %v691, %v2073
      %v2107 = vpack.c.bf16 %v2075, %v2075
      %v2108 = vpack.c.bf16 %v2076, %v2076
      %v2109 = vpack.c.bf16 %v2077, %v2077
      %v2110 = vpack.c.bf16 %v2078, %v2078
      %v2111 = vpack.c.bf16 %v2079, %v2079
      %v2112 = vpack.c.bf16 %v2080, %v2080
      %v2113 = vpack.c.bf16 %v2081, %v2081
      %v2114 = vpack.c.bf16 %v2082, %v2082
      %v2115 = vpack.c.bf16 %v2083, %v2083
      %v2116 = vpack.c.bf16 %v2084, %v2084
      %v2117 = vpack.c.bf16 %v2085, %v2085
      %v2118 = vpack.c.bf16 %v2086, %v2086
      %v2119 = vpack.c.bf16 %v2087, %v2087
      %v2120 = vpack.c.bf16 %v2088, %v2088
      %v2121 = vpack.c.bf16 %v2089, %v2089
      %v2122 = vpack.c.bf16 %v2090, %v2090
      %v2123 = vpack.c.bf16 %v2091, %v2091
      %v2124 = vpack.c.bf16 %v2092, %v2092
      %v2125 = vpack.c.bf16 %v2093, %v2093
      %v2126 = vpack.c.bf16 %v2094, %v2094
      %v2127 = vpack.c.bf16 %v2095, %v2095
      %v2128 = vpack.c.bf16 %v2096, %v2096
      %v2129 = vpack.c.bf16 %v2097, %v2097
      %v2130 = vpack.c.bf16 %v2098, %v2098
      %v2131 = vpack.c.bf16 %v2099, %v2099
      %v2132 = vpack.c.bf16 %v2100, %v2100
      %v2133 = vpack.c.bf16 %v2101, %v2101
      %v2134 = vpack.c.bf16 %v2102, %v2102
      %v2135 = vpack.c.bf16 %v2103, %v2103
      %v2136 = vpack.c.bf16 %v2104, %v2104
      %v2137 = vpack.c.bf16 %v2105, %v2105
      %v2138 = vpack.c.bf16 %v2106, %v2106
      %v2171 = vunpack.c.l.b16 %v2107
      %v2172 = vunpack.c.l.b16 %v2108
      %v2173 = vunpack.c.l.b16 %v2109
      %v2174 = vunpack.c.l.b16 %v2110
      %v2175 = vunpack.c.l.b16 %v2111
      %v2176 = vunpack.c.l.b16 %v2112
      %v2177 = vunpack.c.l.b16 %v2113
      %v2178 = vunpack.c.l.b16 %v2114
      %v2179 = vunpack.c.l.b16 %v2115
      %v2180 = vunpack.c.l.b16 %v2116
      %v2181 = vunpack.c.l.b16 %v2117
      %v2182 = vunpack.c.l.b16 %v2118
      %v2183 = vunpack.c.l.b16 %v2119
      %v2184 = vunpack.c.l.b16 %v2120
      %v2185 = vunpack.c.l.b16 %v2121
      %v2186 = vunpack.c.l.b16 %v2122
      %v2187 = vunpack.c.l.b16 %v2123
      %v2188 = vunpack.c.l.b16 %v2124
      %v2189 = vunpack.c.l.b16 %v2125
      %v2190 = vunpack.c.l.b16 %v2126
      %v2191 = vunpack.c.l.b16 %v2127
      %v2192 = vunpack.c.l.b16 %v2128
      %v2193 = vunpack.c.l.b16 %v2129
      %v2194 = vunpack.c.l.b16 %v2130
      %v2195 = vunpack.c.l.b16 %v2131
      %v2196 = vunpack.c.l.b16 %v2132
      %v2197 = vunpack.c.l.b16 %v2133
      %v2198 = vunpack.c.l.b16 %v2134
      %v2199 = vunpack.c.l.b16 %v2135
      %v2200 = vunpack.c.l.b16 %v2136
      %v2201 = vunpack.c.l.b16 %v2137
      %v2202 = vunpack.c.l.b16 %v2138
      %v2203 = vpack.c.b16 %v2172, %v2171
      %v2204 = vpack.c.b16 %v2174, %v2173
      %v2205 = vpack.c.b16 %v2176, %v2175
      %v2206 = vpack.c.b16 %v2178, %v2177
      %v2207 = vpack.c.b16 %v2180, %v2179
      %v2208 = vpack.c.b16 %v2182, %v2181
      %v2209 = vpack.c.b16 %v2184, %v2183
      %v2210 = vpack.c.b16 %v2186, %v2185
      %v2211 = vpack.c.b16 %v2188, %v2187
      %v2212 = vpack.c.b16 %v2190, %v2189
      %v2213 = vpack.c.b16 %v2192, %v2191
      %v2214 = vpack.c.b16 %v2194, %v2193
      %v2215 = vpack.c.b16 %v2196, %v2195
      %v2216 = vpack.c.b16 %v2198, %v2197
      %v2217 = vpack.c.b16 %v2200, %v2199
      %v2218 = vpack.c.b16 %v2202, %v2201
      %2219 = vrot.lane.b32.xlu0 %v2203, 16
      %v2220 = vpop.permute.xlu0 %2219
      %2221 = vrot.lane.b32.xlu0 %v2204, 16
      %v2222 = vpop.permute.xlu0 %2221
      %2223 = vrot.lane.b32.xlu0 %v2205, 16
      %v2224 = vpop.permute.xlu0 %2223
      %2225 = vrot.lane.b32.xlu0 %v2206, 16
      %v2226 = vpop.permute.xlu0 %2225
      %2227 = vrot.lane.b32.xlu0 %v2207, 16
      %v2228 = vpop.permute.xlu0 %2227
      %2229 = vrot.lane.b32.xlu0 %v2208, 16
      %v2230 = vpop.permute.xlu0 %2229
      %2231 = vrot.lane.b32.xlu0 %v2209, 16
      %v2232 = vpop.permute.xlu0 %2231
      %2233 = vrot.lane.b32.xlu0 %v2210, 16
      %v2234 = vpop.permute.xlu0 %2233
      %2235 = vrot.lane.b32.xlu0 %v2211, 16
      %v2236 = vpop.permute.xlu0 %2235
      %2237 = vrot.lane.b32.xlu0 %v2212, 16
      %v2238 = vpop.permute.xlu0 %2237
      %2239 = vrot.lane.b32.xlu0 %v2213, 16
      %v2240 = vpop.permute.xlu0 %2239
      %2241 = vrot.lane.b32.xlu0 %v2214, 16
      %v2242 = vpop.permute.xlu0 %2241
      %2243 = vrot.lane.b32.xlu0 %v2215, 16
      %v2244 = vpop.permute.xlu0 %2243
      %2245 = vrot.lane.b32.xlu0 %v2216, 16
      %v2246 = vpop.permute.xlu0 %2245
      %2247 = vrot.lane.b32.xlu0 %v2217, 16
      %v2248 = vpop.permute.xlu0 %2247
      %2249 = vrot.lane.b32.xlu0 %v2218, 16
      %v2250 = vpop.permute.xlu0 %2249
      %v2252 = vsel %vm916, %v788, %v2220
      %v2254 = vsel %vm916, %v789, %v2222
      %v2256 = vsel %vm916, %v790, %v2224
      %v2258 = vsel %vm916, %v791, %v2226
      %v2260 = vsel %vm916, %v792, %v2228
      %v2262 = vsel %vm916, %v793, %v2230
      %v2264 = vsel %vm916, %v794, %v2232
      %v2266 = vsel %vm916, %v795, %v2234
      %v2268 = vsel %vm916, %v796, %v2236
      %v2270 = vsel %vm916, %v797, %v2238
      %v2272 = vsel %vm916, %v798, %v2240
      %v2274 = vsel %vm916, %v799, %v2242
      %v2276 = vsel %vm916, %v800, %v2244
      %v2278 = vsel %vm916, %v801, %v2246
      %v2280 = vsel %vm916, %v802, %v2248
      %v2282 = vsel %vm916, %v803, %v2250
      %v2283 = vld [vmem:[%s7] sm:$0xff]
      %v2284 = vld [vmem:[%s7 + $0x8] sm:$0xff]
      %v2285 = vld [vmem:[%s7 + $0x10] sm:$0xff]
      %v2286 = vld [vmem:[%s7 + $0x18] sm:$0xff]
      %v2291 = vunpack.c.l.b16 %v2283
      %v2292 = vunpack.c.h.b16 %v2283
      %v2293 = vunpack.c.l.b16 %v2284
      %v2294 = vunpack.c.h.b16 %v2284
      %v2295 = vunpack.c.l.b16 %v2285
      %v2296 = vunpack.c.h.b16 %v2285
      %v2297 = vunpack.c.l.b16 %v2286
      %v2298 = vunpack.c.h.b16 %v2286
      %v2299 = vpack.c.b16 %v2293, %v2291
      %v2300 = vpack.c.b16 %v2294, %v2292
      %v2301 = vpack.c.b16 %v2297, %v2295
      %v2302 = vpack.c.b16 %v2298, %v2296
      %v2307 = vsel %vm985, %v2252, 0
      %v2309 = vsel %vm985, %v2254, 0
      %v2311 = vsel %vm985, %v2256, 0
      %v2313 = vsel %vm985, %v2258, 0
      %v2315 = vsel %vm985, %v2260, 0
      %v2317 = vsel %vm985, %v2262, 0
      %v2319 = vsel %vm985, %v2264, 0
      %v2321 = vsel %vm985, %v2266, 0
      %v2323 = vsel %vm985, %v2268, 0
      %v2325 = vsel %vm985, %v2270, 0
      %v2327 = vsel %vm985, %v2272, 0
      %v2329 = vsel %vm985, %v2274, 0
      %v2331 = vsel %vm985, %v2276, 0
      %v2333 = vsel %vm985, %v2278, 0
      %v2335 = vsel %vm985, %v2280, 0
      %v2337 = vsel %vm985, %v2282, 0
      %2339 = vmatpush.bf16.msra.mxu0 0
      %2340 = vmatpush.bf16.msra.mxu0 0
      %2341 = vmatpush.bf16.msra.mxu0 0
      %2342 = vmatpush.bf16.msra.mxu0 0
      %2343 = vmatpush.bf16.msra.mxu0 0
      %2344 = vmatpush.bf16.msra.mxu0 0
      %2345 = vmatpush.bf16.msra.mxu0 %v2301
      %2346 = vmatpush.bf16.msra.mxu0 %v2299
      %2347 = vmatmul.bf16.gmra.mxu0 %v2307
      %v2348 = vpop.f32.mrf.mxu0
      %v2349 = vadd.f32 0.0, %v2348
      %v2350 = vpop.f32.mrf.mxu0
      %v2351 = vadd.f32 0.0, %v2350
      %2352 = vmatmul.bf16.gmra.mxu0 %v2309
      %v2353 = vpop.f32.mrf.mxu0
      %v2354 = vadd.f32 0.0, %v2353
      %v2355 = vpop.f32.mrf.mxu0
      %v2356 = vadd.f32 0.0, %v2355
      %2357 = vmatmul.bf16.gmra.mxu0 %v2311
      %v2358 = vpop.f32.mrf.mxu0
      %v2359 = vadd.f32 0.0, %v2358
      %v2360 = vpop.f32.mrf.mxu0
      %v2361 = vadd.f32 0.0, %v2360
      %2362 = vmatmul.bf16.gmra.mxu0 %v2313
      %v2363 = vpop.f32.mrf.mxu0
      %v2364 = vadd.f32 0.0, %v2363
      %v2365 = vpop.f32.mrf.mxu0
      %v2366 = vadd.f32 0.0, %v2365
      %2367 = vmatmul.bf16.gmra.mxu0 %v2315
      %v2368 = vpop.f32.mrf.mxu0
      %v2369 = vadd.f32 0.0, %v2368
      %v2370 = vpop.f32.mrf.mxu0
      %v2371 = vadd.f32 0.0, %v2370
      %2372 = vmatmul.bf16.gmra.mxu0 %v2317
      %v2373 = vpop.f32.mrf.mxu0
      %v2374 = vadd.f32 0.0, %v2373
      %v2375 = vpop.f32.mrf.mxu0
      %v2376 = vadd.f32 0.0, %v2375
      %2377 = vmatmul.bf16.gmra.mxu0 %v2319
      %v2378 = vpop.f32.mrf.mxu0
      %v2379 = vadd.f32 0.0, %v2378
      %v2380 = vpop.f32.mrf.mxu0
      %v2381 = vadd.f32 0.0, %v2380
      %2382 = vmatmul.bf16.gmra.mxu0 %v2321
      %v2383 = vpop.f32.mrf.mxu0
      %v2384 = vadd.f32 0.0, %v2383
      %v2385 = vpop.f32.mrf.mxu0
      %v2386 = vadd.f32 0.0, %v2385
      %2387 = vmatmul.bf16.gmra.mxu0 %v2323
      %v2388 = vpop.f32.mrf.mxu0
      %v2389 = vadd.f32 0.0, %v2388
      %v2390 = vpop.f32.mrf.mxu0
      %v2391 = vadd.f32 0.0, %v2390
      %2392 = vmatmul.bf16.gmra.mxu0 %v2325
      %v2393 = vpop.f32.mrf.mxu0
      %v2394 = vadd.f32 0.0, %v2393
      %v2395 = vpop.f32.mrf.mxu0
      %v2396 = vadd.f32 0.0, %v2395
      %2397 = vmatmul.bf16.gmra.mxu0 %v2327
      %v2398 = vpop.f32.mrf.mxu0
      %v2399 = vadd.f32 0.0, %v2398
      %v2400 = vpop.f32.mrf.mxu0
      %v2401 = vadd.f32 0.0, %v2400
      %2402 = vmatmul.bf16.gmra.mxu0 %v2329
      %v2403 = vpop.f32.mrf.mxu0
      %v2404 = vadd.f32 0.0, %v2403
      %v2405 = vpop.f32.mrf.mxu0
      %v2406 = vadd.f32 0.0, %v2405
      %2407 = vmatmul.bf16.gmra.mxu0 %v2331
      %v2408 = vpop.f32.mrf.mxu0
      %v2409 = vadd.f32 0.0, %v2408
      %v2410 = vpop.f32.mrf.mxu0
      %v2411 = vadd.f32 0.0, %v2410
      %2412 = vmatmul.bf16.gmra.mxu0 %v2333
      %v2413 = vpop.f32.mrf.mxu0
      %v2414 = vadd.f32 0.0, %v2413
      %v2415 = vpop.f32.mrf.mxu0
      %v2416 = vadd.f32 0.0, %v2415
      %2417 = vmatmul.bf16.gmra.mxu0 %v2335
      %v2418 = vpop.f32.mrf.mxu0
      %v2419 = vadd.f32 0.0, %v2418
      %v2420 = vpop.f32.mrf.mxu0
      %v2421 = vadd.f32 0.0, %v2420
      %2422 = vmatmul.bf16.gmra.mxu0 %v2337
      %v2423 = vpop.f32.mrf.mxu0
      %v2424 = vadd.f32 0.0, %v2423
      %v2425 = vpop.f32.mrf.mxu0
      %v2426 = vadd.f32 0.0, %v2425
      %2427 = vdwg.mxu0
      %2428 = vmatpush.bf16.msra.mxu0 0
      %2429 = vmatpush.bf16.msra.mxu0 0
      %2430 = vmatpush.bf16.msra.mxu0 0
      %2431 = vmatpush.bf16.msra.mxu0 0
      %2432 = vmatpush.bf16.msra.mxu0 0
      %2433 = vmatpush.bf16.msra.mxu0 0
      %2434 = vmatpush.bf16.msra.mxu0 %v2302
      %2435 = vmatpush.bf16.msra.mxu0 %v2300
      %2436 = vmatmul.bf16.gmra.mxu0 %v2307
      %v2437 = vpop.f32.mrf.mxu0
      %v2438 = vadd.f32 0.0, %v2437
      %v2439 = vpop.f32.mrf.mxu0
      %v2440 = vadd.f32 0.0, %v2439
      %2441 = vmatmul.bf16.gmra.mxu0 %v2309
      %v2442 = vpop.f32.mrf.mxu0
      %v2443 = vadd.f32 0.0, %v2442
      %v2444 = vpop.f32.mrf.mxu0
      %v2445 = vadd.f32 0.0, %v2444
      %2446 = vmatmul.bf16.gmra.mxu0 %v2311
      %v2447 = vpop.f32.mrf.mxu0
      %v2448 = vadd.f32 0.0, %v2447
      %v2449 = vpop.f32.mrf.mxu0
      %v2450 = vadd.f32 0.0, %v2449
      %2451 = vmatmul.bf16.gmra.mxu0 %v2313
      %v2452 = vpop.f32.mrf.mxu0
      %v2453 = vadd.f32 0.0, %v2452
      %v2454 = vpop.f32.mrf.mxu0
      %v2455 = vadd.f32 0.0, %v2454
      %2456 = vmatmul.bf16.gmra.mxu0 %v2315
      %v2457 = vpop.f32.mrf.mxu0
      %v2458 = vadd.f32 0.0, %v2457
      %v2459 = vpop.f32.mrf.mxu0
      %v2460 = vadd.f32 0.0, %v2459
      %2461 = vmatmul.bf16.gmra.mxu0 %v2317
      %v2462 = vpop.f32.mrf.mxu0
      %v2463 = vadd.f32 0.0, %v2462
      %v2464 = vpop.f32.mrf.mxu0
      %v2465 = vadd.f32 0.0, %v2464
      %2466 = vmatmul.bf16.gmra.mxu0 %v2319
      %v2467 = vpop.f32.mrf.mxu0
      %v2468 = vadd.f32 0.0, %v2467
      %v2469 = vpop.f32.mrf.mxu0
      %v2470 = vadd.f32 0.0, %v2469
      %2471 = vmatmul.bf16.gmra.mxu0 %v2321
      %v2472 = vpop.f32.mrf.mxu0
      %v2473 = vadd.f32 0.0, %v2472
      %v2474 = vpop.f32.mrf.mxu0
      %v2475 = vadd.f32 0.0, %v2474
      %2476 = vmatmul.bf16.gmra.mxu0 %v2323
      %v2477 = vpop.f32.mrf.mxu0
      %v2478 = vadd.f32 0.0, %v2477
      %v2479 = vpop.f32.mrf.mxu0
      %v2480 = vadd.f32 0.0, %v2479
      %2481 = vmatmul.bf16.gmra.mxu0 %v2325
      %v2482 = vpop.f32.mrf.mxu0
      %v2483 = vadd.f32 0.0, %v2482
      %v2484 = vpop.f32.mrf.mxu0
      %v2485 = vadd.f32 0.0, %v2484
      %2486 = vmatmul.bf16.gmra.mxu0 %v2327
      %v2487 = vpop.f32.mrf.mxu0
      %v2488 = vadd.f32 0.0, %v2487
      %v2489 = vpop.f32.mrf.mxu0
      %v2490 = vadd.f32 0.0, %v2489
      %2491 = vmatmul.bf16.gmra.mxu0 %v2329
      %v2492 = vpop.f32.mrf.mxu0
      %v2493 = vadd.f32 0.0, %v2492
      %v2494 = vpop.f32.mrf.mxu0
      %v2495 = vadd.f32 0.0, %v2494
      %2496 = vmatmul.bf16.gmra.mxu0 %v2331
      %v2497 = vpop.f32.mrf.mxu0
      %v2498 = vadd.f32 0.0, %v2497
      %v2499 = vpop.f32.mrf.mxu0
      %v2500 = vadd.f32 0.0, %v2499
      %2501 = vmatmul.bf16.gmra.mxu0 %v2333
      %v2502 = vpop.f32.mrf.mxu0
      %v2503 = vadd.f32 0.0, %v2502
      %v2504 = vpop.f32.mrf.mxu0
      %v2505 = vadd.f32 0.0, %v2504
      %2506 = vmatmul.bf16.gmra.mxu0 %v2335
      %v2507 = vpop.f32.mrf.mxu0
      %v2508 = vadd.f32 0.0, %v2507
      %v2509 = vpop.f32.mrf.mxu0
      %v2510 = vadd.f32 0.0, %v2509
      %2511 = vmatmul.bf16.gmra.mxu0 %v2337
      %v2512 = vpop.f32.mrf.mxu0
      %v2513 = vadd.f32 0.0, %v2512
      %v2514 = vpop.f32.mrf.mxu0
      %v2515 = vadd.f32 0.0, %v2514
      %2516 = vdwg.mxu0
      %v2517 = vpack.c.bf16 %v2438, %v2349
      %v2518 = vpack.c.bf16 %v2440, %v2351
      %v2519 = vpack.c.bf16 %v2443, %v2354
      %v2520 = vpack.c.bf16 %v2445, %v2356
      %v2521 = vpack.c.bf16 %v2448, %v2359
      %v2522 = vpack.c.bf16 %v2450, %v2361
      %v2523 = vpack.c.bf16 %v2453, %v2364
      %v2524 = vpack.c.bf16 %v2455, %v2366
      %v2525 = vpack.c.bf16 %v2458, %v2369
      %v2526 = vpack.c.bf16 %v2460, %v2371
      %v2527 = vpack.c.bf16 %v2463, %v2374
      %v2528 = vpack.c.bf16 %v2465, %v2376
      %v2529 = vpack.c.bf16 %v2468, %v2379
      %v2530 = vpack.c.bf16 %v2470, %v2381
      %v2531 = vpack.c.bf16 %v2473, %v2384
      %v2532 = vpack.c.bf16 %v2475, %v2386
      %v2533 = vpack.c.bf16 %v2478, %v2389
      %v2534 = vpack.c.bf16 %v2480, %v2391
      %v2535 = vpack.c.bf16 %v2483, %v2394
      %v2536 = vpack.c.bf16 %v2485, %v2396
      %v2537 = vpack.c.bf16 %v2488, %v2399
      %v2538 = vpack.c.bf16 %v2490, %v2401
      %v2539 = vpack.c.bf16 %v2493, %v2404
      %v2540 = vpack.c.bf16 %v2495, %v2406
      %v2541 = vpack.c.bf16 %v2498, %v2409
      %v2542 = vpack.c.bf16 %v2500, %v2411
      %v2543 = vpack.c.bf16 %v2503, %v2414
      %v2544 = vpack.c.bf16 %v2505, %v2416
      %v2545 = vpack.c.bf16 %v2508, %v2419
      %v2546 = vpack.c.bf16 %v2510, %v2421
      %v2547 = vpack.c.bf16 %v2513, %v2424
      %v2548 = vpack.c.bf16 %v2515, %v2426
      %vm2549 = vcmask 1043456
      %vm2550 = vcmask 261124
      %vm2551 = vmor %vm2550, %vm2549
      %2552 = vst.msk [vmem:[%s333] sm:$0xff] %vm2551, %v2517
      %2553 = vst.msk [vmem:[%s333 + $0x8] sm:$0xff] %vm2551, %v2518
      %2554 = vst.msk [vmem:[%s333 + $0x10] sm:$0xff] %vm2551, %v2519
      %2555 = vst.msk [vmem:[%s333 + $0x18] sm:$0xff] %vm2551, %v2520
      %2556 = vst.msk [vmem:[%s333 + $0x20] sm:$0xff] %vm2551, %v2521
      %2557 = vst.msk [vmem:[%s333 + $0x28] sm:$0xff] %vm2551, %v2522
      %2558 = vst.msk [vmem:[%s333 + $0x30] sm:$0xff] %vm2551, %v2523
      %2559 = vst.msk [vmem:[%s333 + $0x38] sm:$0xff] %vm2551, %v2524
      %2560 = vst.msk [vmem:[%s333 + $0x40] sm:$0xff] %vm2551, %v2525
      %2561 = vst.msk [vmem:[%s333 + $0x48] sm:$0xff] %vm2551, %v2526
      %2562 = vst.msk [vmem:[%s333 + $0x50] sm:$0xff] %vm2551, %v2527
      %2563 = vst.msk [vmem:[%s333 + $0x58] sm:$0xff] %vm2551, %v2528
      %2564 = vst.msk [vmem:[%s333 + $0x60] sm:$0xff] %vm2551, %v2529
      %2565 = vst.msk [vmem:[%s333 + $0x68] sm:$0xff] %vm2551, %v2530
      %2566 = vst.msk [vmem:[%s333 + $0x70] sm:$0xff] %vm2551, %v2531
      %2567 = vst.msk [vmem:[%s333 + $0x78] sm:$0xff] %vm2551, %v2532
      %2568 = vst.msk [vmem:[%s333 + $0x80] sm:$0xff] %vm2551, %v2533
      %2569 = vst.msk [vmem:[%s333 + $0x88] sm:$0xff] %vm2551, %v2534
      %2570 = vst.msk [vmem:[%s333 + $0x90] sm:$0xff] %vm2551, %v2535
      %2571 = vst.msk [vmem:[%s333 + $0x98] sm:$0xff] %vm2551, %v2536
      %2572 = vst.msk [vmem:[%s333 + $0xa0] sm:$0xff] %vm2551, %v2537
      %2573 = vst.msk [vmem:[%s333 + $0xa8] sm:$0xff] %vm2551, %v2538
      %2574 = vst.msk [vmem:[%s333 + $0xb0] sm:$0xff] %vm2551, %v2539
      %2575 = vst.msk [vmem:[%s333 + $0xb8] sm:$0xff] %vm2551, %v2540
      %2576 = vst.msk [vmem:[%s333 + $0xc0] sm:$0xff] %vm2551, %v2541
      %2577 = vst.msk [vmem:[%s333 + $0xc8] sm:$0xff] %vm2551, %v2542
      %2578 = vst.msk [vmem:[%s333 + $0xd0] sm:$0xff] %vm2551, %v2543
      %2579 = vst.msk [vmem:[%s333 + $0xd8] sm:$0xff] %vm2551, %v2544
      %2580 = vst.msk [vmem:[%s333 + $0xe0] sm:$0xff] %vm2551, %v2545
      %2581 = vst.msk [vmem:[%s333 + $0xe8] sm:$0xff] %vm2551, %v2546
      %2582 = vst.msk [vmem:[%s333 + $0xf0] sm:$0xff] %vm2551, %v2547
      %2583 = vst.msk [vmem:[%s333 + $0xf8] sm:$0xff] %vm2551, %v2548
      %s2584 = smul.u32 32, %s21
      %p2585 = scmp.lt.s32.totalorder %s2584, 63
      %s2586 = scalar_select %p2585, %s2584, 63
      %s2587 = smul.addr %s2586, 2
      %s2588 = smul.addr %s2587, 4
      %s2589 = scalar_lea.vmem %s8, %s2588
      // Predicated region
      $region53: #{decoder_forward.10} parent=51 // pred_check
        %p2590 = pneg %p217
      $region54: #{decoder_forward.10} parent=51 // pred_check_branch
        %2592 = sbr.rel (%p2590) target = $region56
      $region55: #{decoder_forward.10} parent=51 // pred_region
        %s2593 = smul.u32 32, %s21
      $region56: #{decoder_forward.10} parent=51 // pred_fallthru
        _
    $region52: #{decoder_forward.10} parent=5 // pred_fallthru
      _
    %p2594 = scmp.le.s32.totalorder 2, %s16
    // Predicated region
    $region57: #{decoder_forward.10} parent=5 // pred_check
      %p2595 = pneg %p2594
    $region58: #{decoder_forward.10} parent=5 // pred_check_branch
      %2597 = sbr.rel (%p2595) target = $region60
    $region59: #{decoder_forward.10} parent=5 // pred_region
      %s2598 = ssub.s32 %s16, 2
      // Predicated region
      $region61: #{decoder_forward.10} parent=59 // pred_check
        %p2599 = pneg %p223
      $region62: #{decoder_forward.10} parent=59 // pred_check_branch
        %2601 = sbr.rel (%p2599) target = $region64
      $region63: #{decoder_forward.10} parent=59 // pred_region
        %s2602 = smul.u32 32, %s22
        %p2603 = scmp.lt.s32.totalorder %s2602, 63
        %s2604 = scalar_select %p2603, %s2602, 63
        %s2605 = smul.addr %s2604, 2
        %s2606 = smul.addr %s2605, 4
        %s2607 = scalar_lea.vmem %s8, %s2606
      $region64: #{decoder_forward.10} parent=59 // pred_fallthru
        _
    $region60: #{decoder_forward.10} parent=5 // pred_fallthru
      _
  $region6: #{decoder_forward.10} parent=0 // loop_footer
    %s20 = sadd.s32 1, %s16
  $region7: #{decoder_forward.10} parent=0 // loop_footer_branch
    %15 = sbr.rel target = $region3
  $region8: #{decoder_forward.10} parent=0 // loop_exit
    _

// kernel: decoder_forward.11
$region0: #{decoder_forward.11}
  #allocation0 [shape = 'u32[]', space=smem, size = 0x4, offset = 0x4, fixed_abs, tag = 'smem constant byte address 0x4 - core index']
  #allocation1 [shape = 'u32[72,128]{1,0:T(1,128)}', space=vmem, size = 0x9000, scoped, tag = 'internal scratch']
  #allocation2 [shape = 'f32[1,1]{1,0:T(1,128)S(1)}', space=vmem, size = 0x200, scoped, tag = 'scoped memory for decoder_forward.11']
  %s0 = inlined_call_operand.vmem [shape: bf16[8,16,129], index: 0, kind: input, shape index: {}]
  %s1 = inlined_call_operand.vmem [shape: f32[1,16,1], index: 1, kind: input, shape index: {}]
  %s2 = inlined_call_operand.vmem [shape: f32[1,16,1], index: 2, kind: input, shape index: {}]
  %s3 = inlined_call_operand.<no memory space> [shape: f32[1,1], index: 3, kind: input, shape index: {}]
  %s4 = inlined_call_operand.vmem [shape: f32[8,129], index: 4, kind: output, shape index: {}]
  %s5 = sld [smem:[#allocation0]]
  $region26: #{decoder_forward.11} parent=0
    _
  %s7 = ssub.s32 1, %s5
  %s8 = scalar_select 0, %s7, %s5
  %v9 = vstv %s3
  %10 = vst [vmem:[#allocation2] sm:$0x1] %v9
  // Predicated region
  $region2: #{decoder_forward.11} parent=0 // pred_check
    _
  $region3: #{decoder_forward.11} parent=0 // pred_check_branch
    %12 = sbr.rel (0) target = $region5
  $region4: #{decoder_forward.11} parent=0 // pred_region
    _
  $region5: #{decoder_forward.11} parent=0 // pred_fallthru
    _
  // Predicated region
  $region6: #{decoder_forward.11} parent=0 // pred_check
    _
  $region7: #{decoder_forward.11} parent=0 // pred_check_branch
    %14 = sbr.rel (0) target = $region9
  $region8: #{decoder_forward.11} parent=0 // pred_region
    _
  $region9: #{decoder_forward.11} parent=0 // pred_fallthru
    _
  // Predicated region
  $region10: #{decoder_forward.11} parent=0 // pred_check
    _
  $region11: #{decoder_forward.11} parent=0 // pred_check_branch
    %16 = sbr.rel (0) target = $region13
  $region12: #{decoder_forward.11} parent=0 // pred_region
    _
  $region13: #{decoder_forward.11} parent=0 // pred_fallthru
    _
  // Predicated region
  $region14: #{decoder_forward.11} parent=0 // pred_check
    _
  $region15: #{decoder_forward.11} parent=0 // pred_check_branch
    %18 = sbr.rel (0) target = $region17
  $region16: #{decoder_forward.11} parent=0 // pred_region
    _
  $region17: #{decoder_forward.11} parent=0 // pred_fallthru
    _
  %v19 = vld [vmem:[%s0] sm:$0xff]
  %v20 = vld [vmem:[%s0 + $0x8] sm:$0xff]
  %v21 = vld [vmem:[%s0 + $0x10] sm:$0xff]
  %v22 = vld [vmem:[%s0 + $0x18] sm:$0xff]
  %v23 = vld [vmem:[%s0 + $0x20] sm:$0xff]
  %v24 = vld [vmem:[%s0 + $0x28] sm:$0xff]
  %v25 = vld [vmem:[%s0 + $0x30] sm:$0xff]
  %v26 = vld [vmem:[%s0 + $0x38] sm:$0xff]
  %v27 = vld [vmem:[%s0 + $0x40] sm:$0xff]
  %v28 = vld [vmem:[%s0 + $0x48] sm:$0xff]
  %v29 = vld [vmem:[%s0 + $0x50] sm:$0xff]
  %v30 = vld [vmem:[%s0 + $0x58] sm:$0xff]
  %v31 = vld [vmem:[%s0 + $0x60] sm:$0xff]
  %v32 = vld [vmem:[%s0 + $0x68] sm:$0xff]
  %v33 = vld [vmem:[%s0 + $0x70] sm:$0xff]
  %v34 = vld [vmem:[%s0 + $0x78] sm:$0xff]
  %v35 = vunpack.c.l.bf16 %v19
  %v36 = vunpack.c.h.bf16 %v19
  %v37 = vunpack.c.l.bf16 %v20
  %v38 = vunpack.c.h.bf16 %v20
  %v39 = vunpack.c.l.bf16 %v21
  %v40 = vunpack.c.h.bf16 %v21
  %v41 = vunpack.c.l.bf16 %v22
  %v42 = vunpack.c.h.bf16 %v22
  %v43 = vunpack.c.l.bf16 %v23
  %v44 = vunpack.c.h.bf16 %v23
  %v45 = vunpack.c.l.bf16 %v24
  %v46 = vunpack.c.h.bf16 %v24
  %v47 = vunpack.c.l.bf16 %v25
  %v48 = vunpack.c.h.bf16 %v25
  %v49 = vunpack.c.l.bf16 %v26
  %v50 = vunpack.c.h.bf16 %v26
  %v51 = vunpack.c.l.bf16 %v27
  %v52 = vunpack.c.h.bf16 %v27
  %v53 = vunpack.c.l.bf16 %v28
  %v54 = vunpack.c.h.bf16 %v28
  %v55 = vunpack.c.l.bf16 %v29
  %v56 = vunpack.c.h.bf16 %v29
  %v57 = vunpack.c.l.bf16 %v30
  %v58 = vunpack.c.h.bf16 %v30
  %v59 = vunpack.c.l.bf16 %v31
  %v60 = vunpack.c.h.bf16 %v31
  %v61 = vunpack.c.l.bf16 %v32
  %v62 = vunpack.c.h.bf16 %v32
  %v63 = vunpack.c.l.bf16 %v33
  %v64 = vunpack.c.h.bf16 %v33
  %v65 = vunpack.c.l.bf16 %v34
  %v66 = vunpack.c.h.bf16 %v34
  %v67 = vld [vmem:[%s1] sm:$0xff]
  %v68 = vld [vmem:[%s1 + $0x8] sm:$0xff]
  %70 = vset.pattern.permute.xlu0 0
  %71 = vperm.xlu0 %70, %v67
  %v72 = vpop.permute.xlu0 %71
  %75 = vset.pattern.permute.xlu0 0
  %76 = vperm.xlu0 %75, %v68
  %v77 = vpop.permute.xlu0 %76
  %v79 = vadd.f32 %v35, %v72
  %v80 = vadd.f32 %v36, %v72
  %v81 = vadd.f32 %v37, %v77
  %v82 = vadd.f32 %v38, %v77
  %v83 = vadd.f32 %v39, %v72
  %v84 = vadd.f32 %v40, %v72
  %v85 = vadd.f32 %v41, %v77
  %v86 = vadd.f32 %v42, %v77
  %v87 = vadd.f32 %v43, %v72
  %v88 = vadd.f32 %v44, %v72
  %v89 = vadd.f32 %v45, %v77
  %v90 = vadd.f32 %v46, %v77
  %v91 = vadd.f32 %v47, %v72
  %v92 = vadd.f32 %v48, %v72
  %v93 = vadd.f32 %v49, %v77
  %v94 = vadd.f32 %v50, %v77
  %v95 = vadd.f32 %v51, %v72
  %v96 = vadd.f32 %v52, %v72
  %v97 = vadd.f32 %v53, %v77
  %v98 = vadd.f32 %v54, %v77
  %v99 = vadd.f32 %v55, %v72
  %v100 = vadd.f32 %v56, %v72
  %v101 = vadd.f32 %v57, %v77
  %v102 = vadd.f32 %v58, %v77
  %v103 = vadd.f32 %v59, %v72
  %v104 = vadd.f32 %v60, %v72
  %v105 = vadd.f32 %v61, %v77
  %v106 = vadd.f32 %v62, %v77
  %v107 = vadd.f32 %v63, %v72
  %v108 = vadd.f32 %v64, %v72
  %v109 = vadd.f32 %v65, %v77
  %v110 = vadd.f32 %v66, %v77
  %vm111 = vcmp.gt.f32.partialorder %v79, 0.0
  %vm112 = vcmp.gt.f32.partialorder %v80, 0.0
  %vm113 = vcmp.gt.f32.partialorder %v81, 0.0
  %vm114 = vcmp.gt.f32.partialorder %v82, 0.0
  %vm115 = vcmp.gt.f32.partialorder %v83, 0.0
  %vm116 = vcmp.gt.f32.partialorder %v84, 0.0
  %vm117 = vcmp.gt.f32.partialorder %v85, 0.0
  %vm118 = vcmp.gt.f32.partialorder %v86, 0.0
  %vm119 = vcmp.gt.f32.partialorder %v87, 0.0
  %vm120 = vcmp.gt.f32.partialorder %v88, 0.0
  %vm121 = vcmp.gt.f32.partialorder %v89, 0.0
  %vm122 = vcmp.gt.f32.partialorder %v90, 0.0
  %vm123 = vcmp.gt.f32.partialorder %v91, 0.0
  %vm124 = vcmp.gt.f32.partialorder %v92, 0.0
  %vm125 = vcmp.gt.f32.partialorder %v93, 0.0
  %vm126 = vcmp.gt.f32.partialorder %v94, 0.0
  %vm127 = vcmp.gt.f32.partialorder %v95, 0.0
  %vm128 = vcmp.gt.f32.partialorder %v96, 0.0
  %vm129 = vcmp.gt.f32.partialorder %v97, 0.0
  %vm130 = vcmp.gt.f32.partialorder %v98, 0.0
  %vm131 = vcmp.gt.f32.partialorder %v99, 0.0
  %vm132 = vcmp.gt.f32.partialorder %v100, 0.0
  %vm133 = vcmp.gt.f32.partialorder %v101, 0.0
  %vm134 = vcmp.gt.f32.partialorder %v102, 0.0
  %vm135 = vcmp.gt.f32.partialorder %v103, 0.0
  %vm136 = vcmp.gt.f32.partialorder %v104, 0.0
  %vm137 = vcmp.gt.f32.partialorder %v105, 0.0
  %vm138 = vcmp.gt.f32.partialorder %v106, 0.0
  %vm139 = vcmp.gt.f32.partialorder %v107, 0.0
  %vm140 = vcmp.gt.f32.partialorder %v108, 0.0
  %vm141 = vcmp.gt.f32.partialorder %v109, 0.0
  %vm142 = vcmp.gt.f32.partialorder %v110, 0.0
  %v143 = vmin.f32 %v79, 0.0
  %v144 = vmin.f32 %v80, 0.0
  %v145 = vmin.f32 %v81, 0.0
  %v146 = vmin.f32 %v82, 0.0
  %v147 = vmin.f32 %v83, 0.0
  %v148 = vmin.f32 %v84, 0.0
  %v149 = vmin.f32 %v85, 0.0
  %v150 = vmin.f32 %v86, 0.0
  %v151 = vmin.f32 %v87, 0.0
  %v152 = vmin.f32 %v88, 0.0
  %v153 = vmin.f32 %v89, 0.0
  %v154 = vmin.f32 %v90, 0.0
  %v155 = vmin.f32 %v91, 0.0
  %v156 = vmin.f32 %v92, 0.0
  %v157 = vmin.f32 %v93, 0.0
  %v158 = vmin.f32 %v94, 0.0
  %v159 = vmin.f32 %v95, 0.0
  %v160 = vmin.f32 %v96, 0.0
  %v161 = vmin.f32 %v97, 0.0
  %v162 = vmin.f32 %v98, 0.0
  %v163 = vmin.f32 %v99, 0.0
  %v164 = vmin.f32 %v100, 0.0
  %v165 = vmin.f32 %v101, 0.0
  %v166 = vmin.f32 %v102, 0.0
  %v167 = vmin.f32 %v103, 0.0
  %v168 = vmin.f32 %v104, 0.0
  %v169 = vmin.f32 %v105, 0.0
  %v170 = vmin.f32 %v106, 0.0
  %v171 = vmin.f32 %v107, 0.0
  %v172 = vmin.f32 %v108, 0.0
  %v173 = vmin.f32 %v109, 0.0
  %v174 = vmin.f32 %v110, 0.0
  %v175 = vmul.f32 %v143, 1.442695
  %v176 = vpow.pop %v175
  %v177 = vmul.f32 %v144, 1.442695
  %v178 = vpow.pop %v177
  %v179 = vmul.f32 %v145, 1.442695
  %v180 = vpow.pop %v179
  %v181 = vmul.f32 %v146, 1.442695
  %v182 = vpow.pop %v181
  %v183 = vmul.f32 %v147, 1.442695
  %v184 = vpow.pop %v183
  %v185 = vmul.f32 %v148, 1.442695
  %v186 = vpow.pop %v185
  %v187 = vmul.f32 %v149, 1.442695
  %v188 = vpow.pop %v187
  %v189 = vmul.f32 %v150, 1.442695
  %v190 = vpow.pop %v189
  %v191 = vmul.f32 %v151, 1.442695
  %v192 = vpow.pop %v191
  %v193 = vmul.f32 %v152, 1.442695
  %v194 = vpow.pop %v193
  %v195 = vmul.f32 %v153, 1.442695
  %v196 = vpow.pop %v195
  %v197 = vmul.f32 %v154, 1.442695
  %v198 = vpow.pop %v197
  %v199 = vmul.f32 %v155, 1.442695
  %v200 = vpow.pop %v199
  %v201 = vmul.f32 %v156, 1.442695
  %v202 = vpow.pop %v201
  %v203 = vmul.f32 %v157, 1.442695
  %v204 = vpow.pop %v203
  %v205 = vmul.f32 %v158, 1.442695
  %v206 = vpow.pop %v205
  %v207 = vmul.f32 %v159, 1.442695
  %v208 = vpow.pop %v207
  %v209 = vmul.f32 %v160, 1.442695
  %v210 = vpow.pop %v209
  %v211 = vmul.f32 %v161, 1.442695
  %v212 = vpow.pop %v211
  %v213 = vmul.f32 %v162, 1.442695
  %v214 = vpow.pop %v213
  %v215 = vmul.f32 %v163, 1.442695
  %v216 = vpow.pop %v215
  %v217 = vmul.f32 %v164, 1.442695
  %v218 = vpow.pop %v217
  %v219 = vmul.f32 %v165, 1.442695
  %v220 = vpow.pop %v219
  %v221 = vmul.f32 %v166, 1.442695
  %v222 = vpow.pop %v221
  %v223 = vmul.f32 %v167, 1.442695
  %v224 = vpow.pop %v223
  %v225 = vmul.f32 %v168, 1.442695
  %v226 = vpow.pop %v225
  %v227 = vmul.f32 %v169, 1.442695
  %v228 = vpow.pop %v227
  %v229 = vmul.f32 %v170, 1.442695
  %v230 = vpow.pop %v229
  %v231 = vmul.f32 %v171, 1.442695
  %v232 = vpow.pop %v231
  %v233 = vmul.f32 %v172, 1.442695
  %v234 = vpow.pop %v233
  %v235 = vmul.f32 %v173, 1.442695
  %v236 = vpow.pop %v235
  %v237 = vmul.f32 %v174, 1.442695
  %v238 = vpow.pop %v237
  %v239 = vsub.f32 %v176, 1.0
  %v240 = vsub.f32 %v178, 1.0
  %v241 = vsub.f32 %v180, 1.0
  %v242 = vsub.f32 %v182, 1.0
  %v243 = vsub.f32 %v184, 1.0
  %v244 = vsub.f32 %v186, 1.0
  %v245 = vsub.f32 %v188, 1.0
  %v246 = vsub.f32 %v190, 1.0
  %v247 = vsub.f32 %v192, 1.0
  %v248 = vsub.f32 %v194, 1.0
  %v249 = vsub.f32 %v196, 1.0
  %v250 = vsub.f32 %v198, 1.0
  %v251 = vsub.f32 %v200, 1.0
  %v252 = vsub.f32 %v202, 1.0
  %v253 = vsub.f32 %v204, 1.0
  %v254 = vsub.f32 %v206, 1.0
  %v255 = vsub.f32 %v208, 1.0
  %v256 = vsub.f32 %v210, 1.0
  %v257 = vsub.f32 %v212, 1.0
  %v258 = vsub.f32 %v214, 1.0
  %v259 = vsub.f32 %v216, 1.0
  %v260 = vsub.f32 %v218, 1.0
  %v261 = vsub.f32 %v220, 1.0
  %v262 = vsub.f32 %v222, 1.0
  %v263 = vsub.f32 %v224, 1.0
  %v264 = vsub.f32 %v226, 1.0
  %v265 = vsub.f32 %v228, 1.0
  %v266 = vsub.f32 %v230, 1.0
  %v267 = vsub.f32 %v232, 1.0
  %v268 = vsub.f32 %v234, 1.0
  %v269 = vsub.f32 %v236, 1.0
  %v270 = vsub.f32 %v238, 1.0
  %v271 = vsel %vm111, %v79, %v239
  %v272 = vsel %vm112, %v80, %v240
  %v273 = vsel %vm113, %v81, %v241
  %v274 = vsel %vm114, %v82, %v242
  %v275 = vsel %vm115, %v83, %v243
  %v276 = vsel %vm116, %v84, %v244
  %v277 = vsel %vm117, %v85, %v245
  %v278 = vsel %vm118, %v86, %v246
  %v279 = vsel %vm119, %v87, %v247
  %v280 = vsel %vm120, %v88, %v248
  %v281 = vsel %vm121, %v89, %v249
  %v282 = vsel %vm122, %v90, %v250
  %v283 = vsel %vm123, %v91, %v251
  %v284 = vsel %vm124, %v92, %v252
  %v285 = vsel %vm125, %v93, %v253
  %v286 = vsel %vm126, %v94, %v254
  %v287 = vsel %vm127, %v95, %v255
  %v288 = vsel %vm128, %v96, %v256
  %v289 = vsel %vm129, %v97, %v257
  %v290 = vsel %vm130, %v98, %v258
  %v291 = vsel %vm131, %v99, %v259
  %v292 = vsel %vm132, %v100, %v260
  %v293 = vsel %vm133, %v101, %v261
  %v294 = vsel %vm134, %v102, %v262
  %v295 = vsel %vm135, %v103, %v263
  %v296 = vsel %vm136, %v104, %v264
  %v297 = vsel %vm137, %v105, %v265
  %v298 = vsel %vm138, %v106, %v266
  %v299 = vsel %vm139, %v107, %v267
  %v300 = vsel %vm140, %v108, %v268
  %v301 = vsel %vm141, %v109, %v269
  %v302 = vsel %vm142, %v110, %v270
  %v303 = vld [vmem:[%s2] sm:$0xff]
  %v304 = vld [vmem:[%s2 + $0x8] sm:$0xff]
  %306 = vset.pattern.permute.xlu0 0
  %307 = vperm.xlu0 %306, %v303
  %v308 = vpop.permute.xlu0 %307
  %311 = vset.pattern.permute.xlu0 0
  %312 = vperm.xlu0 %311, %v304
  %v313 = vpop.permute.xlu0 %312
  %v315 = vmul.f32 %v271, %v308
  %v316 = vmul.f32 %v272, %v308
  %v317 = vmul.f32 %v273, %v313
  %v318 = vmul.f32 %v274, %v313
  %v319 = vmul.f32 %v275, %v308
  %v320 = vmul.f32 %v276, %v308
  %v321 = vmul.f32 %v277, %v313
  %v322 = vmul.f32 %v278, %v313
  %v323 = vmul.f32 %v279, %v308
  %v324 = vmul.f32 %v280, %v308
  %v325 = vmul.f32 %v281, %v313
  %v326 = vmul.f32 %v282, %v313
  %v327 = vmul.f32 %v283, %v308
  %v328 = vmul.f32 %v284, %v308
  %v329 = vmul.f32 %v285, %v313
  %v330 = vmul.f32 %v286, %v313
  %v331 = vmul.f32 %v287, %v308
  %v332 = vmul.f32 %v288, %v308
  %v333 = vmul.f32 %v289, %v313
  %v334 = vmul.f32 %v290, %v313
  %v335 = vmul.f32 %v291, %v308
  %v336 = vmul.f32 %v292, %v308
  %v337 = vmul.f32 %v293, %v313
  %v338 = vmul.f32 %v294, %v313
  %v339 = vmul.f32 %v295, %v308
  %v340 = vmul.f32 %v296, %v308
  %v341 = vmul.f32 %v297, %v313
  %v342 = vmul.f32 %v298, %v313
  %v343 = vmul.f32 %v299, %v308
  %v344 = vmul.f32 %v300, %v308
  %v345 = vmul.f32 %v301, %v313
  %v346 = vmul.f32 %v302, %v313
  %v347 = vadd.f32 %v315, %v317
  %v348 = vrot.slane %v347, 4
  %v349 = vadd.f32 %v347, %v348
  %v350 = vrot.slane %v349, 2
  %v351 = vadd.f32 %v349, %v350
  %v352 = vrot.slane %v351, 1
  %v353 = vadd.f32 %v351, %v352
  %vm354 = vcmask 7168
  %v355 = vsel %vm354, %v316, 0.0
  %v356 = vsel %vm354, %v318, 0.0
  %v357 = vadd.f32 %v355, %v356
  %v358 = vrot.slane %v357, 4
  %v359 = vadd.f32 %v357, %v358
  %v360 = vrot.slane %v359, 2
  %v361 = vadd.f32 %v359, %v360
  %v362 = vrot.slane %v361, 1
  %v363 = vadd.f32 %v361, %v362
  %v364 = vadd.f32 %v319, %v321
  %v365 = vrot.slane %v364, 4
  %v366 = vadd.f32 %v364, %v365
  %v367 = vrot.slane %v366, 2
  %v368 = vadd.f32 %v366, %v367
  %v369 = vrot.slane %v368, 1
  %v370 = vadd.f32 %v368, %v369
  %v371 = vsel %vm354, %v320, 0.0
  %v372 = vsel %vm354, %v322, 0.0
  %v373 = vadd.f32 %v371, %v372
  %v374 = vrot.slane %v373, 4
  %v375 = vadd.f32 %v373, %v374
  %v376 = vrot.slane %v375, 2
  %v377 = vadd.f32 %v375, %v376
  %v378 = vrot.slane %v377, 1
  %v379 = vadd.f32 %v377, %v378
  %v380 = vadd.f32 %v323, %v325
  %v381 = vrot.slane %v380, 4
  %v382 = vadd.f32 %v380, %v381
  %v383 = vrot.slane %v382, 2
  %v384 = vadd.f32 %v382, %v383
  %v385 = vrot.slane %v384, 1
  %v386 = vadd.f32 %v384, %v385
  %v387 = vsel %vm354, %v324, 0.0
  %v388 = vsel %vm354, %v326, 0.0
  %v389 = vadd.f32 %v387, %v388
  %v390 = vrot.slane %v389, 4
  %v391 = vadd.f32 %v389, %v390
  %v392 = vrot.slane %v391, 2
  %v393 = vadd.f32 %v391, %v392
  %v394 = vrot.slane %v393, 1
  %v395 = vadd.f32 %v393, %v394
  %v396 = vadd.f32 %v327, %v329
  %v397 = vrot.slane %v396, 4
  %v398 = vadd.f32 %v396, %v397
  %v399 = vrot.slane %v398, 2
  %v400 = vadd.f32 %v398, %v399
  %v401 = vrot.slane %v400, 1
  %v402 = vadd.f32 %v400, %v401
  %v403 = vsel %vm354, %v328, 0.0
  %v404 = vsel %vm354, %v330, 0.0
  %v405 = vadd.f32 %v403, %v404
  %v406 = vrot.slane %v405, 4
  %v407 = vadd.f32 %v405, %v406
  %v408 = vrot.slane %v407, 2
  %v409 = vadd.f32 %v407, %v408
  %v410 = vrot.slane %v409, 1
  %v411 = vadd.f32 %v409, %v410
  %v412 = vadd.f32 %v331, %v333
  %v413 = vrot.slane %v412, 4
  %v414 = vadd.f32 %v412, %v413
  %v415 = vrot.slane %v414, 2
  %v416 = vadd.f32 %v414, %v415
  %v417 = vrot.slane %v416, 1
  %v418 = vadd.f32 %v416, %v417
  %v419 = vsel %vm354, %v332, 0.0
  %v420 = vsel %vm354, %v334, 0.0
  %v421 = vadd.f32 %v419, %v420
  %v422 = vrot.slane %v421, 4
  %v423 = vadd.f32 %v421, %v422
  %v424 = vrot.slane %v423, 2
  %v425 = vadd.f32 %v423, %v424
  %v426 = vrot.slane %v425, 1
  %v427 = vadd.f32 %v425, %v426
  %v428 = vadd.f32 %v335, %v337
  %v429 = vrot.slane %v428, 4
  %v430 = vadd.f32 %v428, %v429
  %v431 = vrot.slane %v430, 2
  %v432 = vadd.f32 %v430, %v431
  %v433 = vrot.slane %v432, 1
  %v434 = vadd.f32 %v432, %v433
  %v435 = vsel %vm354, %v336, 0.0
  %v436 = vsel %vm354, %v338, 0.0
  %v437 = vadd.f32 %v435, %v436
  %v438 = vrot.slane %v437, 4
  %v439 = vadd.f32 %v437, %v438
  %v440 = vrot.slane %v439, 2
  %v441 = vadd.f32 %v439, %v440
  %v442 = vrot.slane %v441, 1
  %v443 = vadd.f32 %v441, %v442
  %v444 = vadd.f32 %v339, %v341
  %v445 = vrot.slane %v444, 4
  %v446 = vadd.f32 %v444, %v445
  %v447 = vrot.slane %v446, 2
  %v448 = vadd.f32 %v446, %v447
  %v449 = vrot.slane %v448, 1
  %v450 = vadd.f32 %v448, %v449
  %v451 = vsel %vm354, %v340, 0.0
  %v452 = vsel %vm354, %v342, 0.0
  %v453 = vadd.f32 %v451, %v452
  %v454 = vrot.slane %v453, 4
  %v455 = vadd.f32 %v453, %v454
  %v456 = vrot.slane %v455, 2
  %v457 = vadd.f32 %v455, %v456
  %v458 = vrot.slane %v457, 1
  %v459 = vadd.f32 %v457, %v458
  %v460 = vadd.f32 %v343, %v345
  %v461 = vrot.slane %v460, 4
  %v462 = vadd.f32 %v460, %v461
  %v463 = vrot.slane %v462, 2
  %v464 = vadd.f32 %v462, %v463
  %v465 = vrot.slane %v464, 1
  %v466 = vadd.f32 %v464, %v465
  %v467 = vsel %vm354, %v344, 0.0
  %v468 = vsel %vm354, %v346, 0.0
  %v469 = vadd.f32 %v467, %v468
  %v470 = vrot.slane %v469, 4
  %v471 = vadd.f32 %v469, %v470
  %v472 = vrot.slane %v471, 2
  %v473 = vadd.f32 %v471, %v472
  %v474 = vrot.slane %v473, 1
  %v475 = vadd.f32 %v473, %v474
  %v476 = vld [vmem:[#allocation2] sm:$0x1]
  %v478 = vperm.slane %v476, 0
  %479 = vset.pattern.permute.xlu0 0
  %480 = vperm.xlu0 %479, %v478
  %v481 = vpop.permute.xlu0 %480
  %v483 = vadd.f32 %v353, %v481
  %v484 = vadd.f32 %v363, %v481
  %v485 = vadd.f32 %v370, %v481
  %v486 = vadd.f32 %v379, %v481
  %v487 = vadd.f32 %v386, %v481
  %v488 = vadd.f32 %v395, %v481
  %v489 = vadd.f32 %v402, %v481
  %v490 = vadd.f32 %v411, %v481
  %v491 = vadd.f32 %v418, %v481
  %v492 = vadd.f32 %v427, %v481
  %v493 = vadd.f32 %v434, %v481
  %v494 = vadd.f32 %v443, %v481
  %v495 = vadd.f32 %v450, %v481
  %v496 = vadd.f32 %v459, %v481
  %v497 = vadd.f32 %v466, %v481
  %v498 = vadd.f32 %v475, %v481
  %vm499 = vcmp.gt.f32.partialorder %v483, 20.0
  %vm500 = vcmp.gt.f32.partialorder %v484, 20.0
  %vm501 = vcmp.gt.f32.partialorder %v485, 20.0
  %vm502 = vcmp.gt.f32.partialorder %v486, 20.0
  %vm503 = vcmp.gt.f32.partialorder %v487, 20.0
  %vm504 = vcmp.gt.f32.partialorder %v488, 20.0
  %vm505 = vcmp.gt.f32.partialorder %v489, 20.0
  %vm506 = vcmp.gt.f32.partialorder %v490, 20.0
  %vm507 = vcmp.gt.f32.partialorder %v491, 20.0
  %vm508 = vcmp.gt.f32.partialorder %v492, 20.0
  %vm509 = vcmp.gt.f32.partialorder %v493, 20.0
  %vm510 = vcmp.gt.f32.partialorder %v494, 20.0
  %vm511 = vcmp.gt.f32.partialorder %v495, 20.0
  %vm512 = vcmp.gt.f32.partialorder %v496, 20.0
  %vm513 = vcmp.gt.f32.partialorder %v497, 20.0
  %vm514 = vcmp.gt.f32.partialorder %v498, 20.0
  %v515 = vmin.f32 %v483, 20.0
  %v516 = vmin.f32 %v484, 20.0
  %v517 = vmin.f32 %v485, 20.0
  %v518 = vmin.f32 %v486, 20.0
  %v519 = vmin.f32 %v487, 20.0
  %v520 = vmin.f32 %v488, 20.0
  %v521 = vmin.f32 %v489, 20.0
  %v522 = vmin.f32 %v490, 20.0
  %v523 = vmin.f32 %v491, 20.0
  %v524 = vmin.f32 %v492, 20.0
  %v525 = vmin.f32 %v493, 20.0
  %v526 = vmin.f32 %v494, 20.0
  %v527 = vmin.f32 %v495, 20.0
  %v528 = vmin.f32 %v496, 20.0
  %v529 = vmin.f32 %v497, 20.0
  %v530 = vmin.f32 %v498, 20.0
  %v531 = vmul.f32 %v515, 1.442695
  %v532 = vpow.pop %v531
  %v533 = vmul.f32 %v516, 1.442695
  %v534 = vpow.pop %v533
  %v535 = vmul.f32 %v517, 1.442695
  %v536 = vpow.pop %v535
  %v537 = vmul.f32 %v518, 1.442695
  %v538 = vpow.pop %v537
  %v539 = vmul.f32 %v519, 1.442695
  %v540 = vpow.pop %v539
  %v541 = vmul.f32 %v520, 1.442695
  %v542 = vpow.pop %v541
  %v543 = vmul.f32 %v521, 1.442695
  %v544 = vpow.pop %v543
  %v545 = vmul.f32 %v522, 1.442695
  %v546 = vpow.pop %v545
  %v547 = vmul.f32 %v523, 1.442695
  %v548 = vpow.pop %v547
  %v549 = vmul.f32 %v524, 1.442695
  %v550 = vpow.pop %v549
  %v551 = vmul.f32 %v525, 1.442695
  %v552 = vpow.pop %v551
  %v553 = vmul.f32 %v526, 1.442695
  %v554 = vpow.pop %v553
  %v555 = vmul.f32 %v527, 1.442695
  %v556 = vpow.pop %v555
  %v557 = vmul.f32 %v528, 1.442695
  %v558 = vpow.pop %v557
  %v559 = vmul.f32 %v529, 1.442695
  %v560 = vpow.pop %v559
  %v561 = vmul.f32 %v530, 1.442695
  %v562 = vpow.pop %v561
  %v563 = vadd.f32 %v532, 1.0
  %v564 = vadd.f32 %v534, 1.0
  %v565 = vadd.f32 %v536, 1.0
  %v566 = vadd.f32 %v538, 1.0
  %v567 = vadd.f32 %v540, 1.0
  %v568 = vadd.f32 %v542, 1.0
  %v569 = vadd.f32 %v544, 1.0
  %v570 = vadd.f32 %v546, 1.0
  %v571 = vadd.f32 %v548, 1.0
  %v572 = vadd.f32 %v550, 1.0
  %v573 = vadd.f32 %v552, 1.0
  %v574 = vadd.f32 %v554, 1.0
  %v575 = vadd.f32 %v556, 1.0
  %v576 = vadd.f32 %v558, 1.0
  %v577 = vadd.f32 %v560, 1.0
  %v578 = vadd.f32 %v562, 1.0
  %v579 = vlog2.pop %v563
  %v580 = vmul.f32 %v579, 0.6931472
  %v581 = vlog2.pop %v564
  %v582 = vmul.f32 %v581, 0.6931472
  %v583 = vlog2.pop %v565
  %v584 = vmul.f32 %v583, 0.6931472
  %v585 = vlog2.pop %v566
  %v586 = vmul.f32 %v585, 0.6931472
  %v587 = vlog2.pop %v567
  %v588 = vmul.f32 %v587, 0.6931472
  %v589 = vlog2.pop %v568
  %v590 = vmul.f32 %v589, 0.6931472
  %v591 = vlog2.pop %v569
  %v592 = vmul.f32 %v591, 0.6931472
  %v593 = vlog2.pop %v570
  %v594 = vmul.f32 %v593, 0.6931472
  %v595 = vlog2.pop %v571
  %v596 = vmul.f32 %v595, 0.6931472
  %v597 = vlog2.pop %v572
  %v598 = vmul.f32 %v597, 0.6931472
  %v599 = vlog2.pop %v573
  %v600 = vmul.f32 %v599, 0.6931472
  %v601 = vlog2.pop %v574
  %v602 = vmul.f32 %v601, 0.6931472
  %v603 = vlog2.pop %v575
  %v604 = vmul.f32 %v603, 0.6931472
  %v605 = vlog2.pop %v576
  %v606 = vmul.f32 %v605, 0.6931472
  %v607 = vlog2.pop %v577
  %v608 = vmul.f32 %v607, 0.6931472
  %v609 = vlog2.pop %v578
  %v610 = vmul.f32 %v609, 0.6931472
  %v611 = vsel %vm499, %v483, %v580
  %v612 = vsel %vm500, %v484, %v582
  %v613 = vsel %vm501, %v485, %v584
  %v614 = vsel %vm502, %v486, %v586
  %v615 = vsel %vm503, %v487, %v588
  %v616 = vsel %vm504, %v488, %v590
  %v617 = vsel %vm505, %v489, %v592
  %v618 = vsel %vm506, %v490, %v594
  %v619 = vsel %vm507, %v491, %v596
  %v620 = vsel %vm508, %v492, %v598
  %v621 = vsel %vm509, %v493, %v600
  %v622 = vsel %vm510, %v494, %v602
  %v623 = vsel %vm511, %v495, %v604
  %v624 = vsel %vm512, %v496, %v606
  %v625 = vsel %vm513, %v497, %v608
  %v626 = vsel %vm514, %v498, %v610
  %vm643 = vcmask 1041409
  %v644 = vsel %vm643, %v613, %v611
  %vm645 = vcmask 1042434
  %v646 = vsel %vm645, %v615, %v644
  %vm647 = vcmask 1043459
  %v648 = vsel %vm647, %v617, %v646
  %vm649 = vcmask 1044484
  %v650 = vsel %vm649, %v619, %v648
  %vm651 = vcmask 1045509
  %v652 = vsel %vm651, %v621, %v650
  %vm653 = vcmask 1046534
  %v654 = vsel %vm653, %v623, %v652
  %vm655 = vcmask 1047559
  %v656 = vsel %vm655, %v625, %v654
  %v657 = vsel %vm643, %v614, %v612
  %v658 = vsel %vm645, %v616, %v657
  %v659 = vsel %vm647, %v618, %v658
  %v660 = vsel %vm649, %v620, %v659
  %v661 = vsel %vm651, %v622, %v660
  %v662 = vsel %vm653, %v624, %v661
  %v663 = vsel %vm655, %v626, %v662
  %666 = vst [vmem:[%s4] sm:$0xff] %v656
  %667 = vst.msk [vmem:[%s4 + $0x8] sm:$0xff] %vm354, %v663
  // Predicated region
  $region18: #{decoder_forward.11} parent=0 // pred_check
    _
  $region19: #{decoder_forward.11} parent=0 // pred_check_branch
    %669 = sbr.rel (0) target = $region21
  $region20: #{decoder_forward.11} parent=0 // pred_region
    _
  $region21: #{decoder_forward.11} parent=0 // pred_fallthru
    _
  // Predicated region
  $region22: #{decoder_forward.11} parent=0 // pred_check
    _
  $region23: #{decoder_forward.11} parent=0 // pred_check_branch
    %671 = sbr.rel (0) target = $region25
  $region24: #{decoder_forward.11} parent=0 // pred_region
    _
  $region25: #{decoder_forward.11} parent=0 // pred_fallthru
    _

</llo_original>
